<compile_context>
chip_gen: v7x
topology: tpu7x:2x2x1
jax: 0.10.0
libtpu: 0.0.40
codegen_flags: <defaults>
</compile_context>

<pallas_src>
import functools

import jax
import jax.numpy as jnp
from jax.experimental import pallas as pl
from jax.experimental.pallas import tpu as pltpu

_EPS = 1e-5


# ------------------------------ device / tiling -----------------------------

@functools.lru_cache(maxsize=None)
def _vmem_limit_bytes():
    """~60% of physical VMEM: ~38 MiB on v7x (64 MiB), ~76 MiB on v5e/v6e."""
    cap = 128 * 1024 * 1024
    try:
        info = pltpu.get_tpu_info()
        cap = int(getattr(info, "vmem_capacity_bytes", 0)) or cap
    except Exception:
        pass
    return min((cap * 3) // 5, 100 * 1024 * 1024)


def _round_up(x, m):
    return -(-x // m) * m


def _choose_tm(m):
    """Row tile: prefer large exactly-dividing tiles; else bound padding waste."""
    for c in (512, 256, 128):
        if m % c == 0:
            return c
    if m <= 512:
        return _round_up(m, 8)          # single (padded) tile
    for c in (512, 256, 128):
        if m >= 4 * c:                  # padded waste <= 25%
            return c
    return 128


def _choose_tn(n):
    """Column tile: multiples of 256/128 only (384 dropped for 256-wide MXUs)."""
    if n <= 512:
        return n                        # full dim is always a legal block
    for c in (512, 256, 128):
        if n % c == 0:
            return c
    return n                            # rare: full weight panel


def _pad_rows(x, tm):
    m = x.shape[0]
    mp = _round_up(m, tm)
    if mp == m:
        return x
    return jnp.pad(x, ((0, mp - m), (0, 0)))


# ----------------------------- Pallas kernels ------------------------------

def _matmul_bias_kernel(x_ref, w_ref, b_ref, o_ref):
    acc = jnp.dot(x_ref[...].astype(jnp.bfloat16), w_ref[...],
                  preferred_element_type=jnp.float32)
    o_ref[...] = (acc + b_ref[...].astype(jnp.float32)).astype(o_ref.dtype)


def _matmul_bias_residual_kernel(x_ref, w_ref, b_ref, r_ref, o_ref):
    acc = jnp.dot(x_ref[...].astype(jnp.bfloat16), w_ref[...],
                  preferred_element_type=jnp.float32)
    o_ref[...] = (acc + b_ref[...].astype(jnp.float32)
                  + r_ref[...].astype(jnp.float32)).astype(o_ref.dtype)


def _patch_embed_pos_kernel(p_ref, w_ref, b_ref, pe_ref, o_ref):
    # Patch embedding matmul with bias + fixed positional embedding fused into
    # the epilogue (pos add rides in VPU slack, saves one HBM round trip).
    acc = jnp.dot(p_ref[0].astype(jnp.bfloat16), w_ref[...],
                  preferred_element_type=jnp.float32)
    o_ref[0] = (acc + b_ref[...].astype(jnp.float32)
                + pe_ref[...].astype(jnp.float32)).astype(o_ref.dtype)


def _norm_matmul_bias_kernel(x_ref, g_ref, w_ref, b_ref, o_ref, rstd_ref, *, eps):
    # RMSNorm rstd computed once per row tile (j == 0), cached in VMEM scratch.
    @pl.when(pl.program_id(1) == 0)
    def _():
        xf = x_ref[...].astype(jnp.float32)
        rstd_ref[...] = jax.lax.rsqrt(jnp.mean(xf * xf, axis=-1, keepdims=True)
                                      + eps)
    xn = (x_ref[...].astype(jnp.float32) * rstd_ref[...]
          * g_ref[...].astype(jnp.float32)).astype(jnp.bfloat16)
    acc = jnp.dot(xn, w_ref[...], preferred_element_type=jnp.float32)
    o_ref[...] = (acc + b_ref[...].astype(jnp.float32)).astype(o_ref.dtype)


def _norm_swiglu_kernel(x_ref, g_ref, w1_ref, b1_ref, w2_ref, b2_ref, o_ref,
                        rstd_ref, *, eps):
    @pl.when(pl.program_id(1) == 0)
    def _():
        xf = x_ref[...].astype(jnp.float32)
        rstd_ref[...] = jax.lax.rsqrt(jnp.mean(xf * xf, axis=-1, keepdims=True)
                                      + eps)
    xn = (x_ref[...].astype(jnp.float32) * rstd_ref[...]
          * g_ref[...].astype(jnp.float32)).astype(jnp.bfloat16)
    x1 = jnp.dot(xn, w1_ref[...], preferred_element_type=jnp.float32) \
        + b1_ref[...].astype(jnp.float32)
    x2 = jnp.dot(xn, w2_ref[...], preferred_element_type=jnp.float32) \
        + b2_ref[...].astype(jnp.float32)
    o_ref[...] = (x1 * jax.nn.sigmoid(x1) * x2).astype(o_ref.dtype)   # SiLU(x1)*x2


def _rmsnorm_kernel(x_ref, g_ref, o_ref, *, eps):
    xf = x_ref[...].astype(jnp.float32)
    rstd = jax.lax.rsqrt(jnp.mean(xf * xf, axis=-1, keepdims=True) + eps)
    o_ref[...] = (xf * rstd * g_ref[...].astype(jnp.float32)).astype(o_ref.dtype)


def _attn_kernel(q_ref, k_ref, v_ref, o_ref, *, num_heads, head_dim):
    # Blocks: q (1, tq, D), k/v (1, N, D), out (1, tq, D).  The attention scale
    # is already folded into the qkv projection weights.
    q = q_ref[0]
    k = k_ref[0]
    v = v_ref[0]
    dn = (((1,), (1,)), ((), ()))        # contract last axes (no k transpose)
    for h in range(num_heads):           # static unroll over heads
        sl = slice(h * head_dim, (h + 1) * head_dim)
        s = jax.lax.dot_general(q[:, sl], k[:, sl], dn,
                                preferred_element_type=jnp.float32)   # (tq, N)
        m = jnp.max(s, axis=-1, keepdims=True)
        p = jnp.exp(s - m)
        # approx reciprocal (EUP slot): fine for inference, not bit-exact.
        p = p * pl.reciprocal(jnp.sum(p, axis=-1, keepdims=True), approx=True)
        oh = jnp.dot(p.astype(v.dtype), v[:, sl],
                     preferred_element_type=jnp.float32)
        o_ref[0, :, sl] = oh.astype(o_ref.dtype)     # bounded live range/head
    # TODO(synk): for N >~ 2k add a KV grid axis + online-softmax accumulators
    # (flash style); heads-on-grid needs a head-major (B, H, N, hd) layout
    # since head_dim < 128 cannot form a legal lane block.


# ----------------------------- Pallas wrappers ------------------------------

def linear(x, w, b, out_dtype=jnp.bfloat16):
    M, K = x.shape
    N = w.shape[1]
    tm, tn = _choose_tm(M), _choose_tn(N)
    xp = _pad_rows(x, tm)
    Mp = xp.shape[0]
    out = pl.pallas_call(
        _matmul_bias_kernel,
        out_shape=jax.ShapeDtypeStruct((Mp, N), out_dtype),
        grid=(Mp // tm, N // tn),
        in_specs=[
            pl.BlockSpec((tm, K), lambda i, j: (i, 0)),
            pl.BlockSpec((K, tn), lambda i, j: (0, j)),
            pl.BlockSpec((1, tn), lambda i, j: (0, j)),
        ],
        out_specs=pl.BlockSpec((tm, tn), lambda i, j: (i, j)),
        compiler_params=pltpu.CompilerParams(
            dimension_semantics=("parallel", "parallel"),
            vmem_limit_bytes=_vmem_limit_bytes()),
    )(xp, w, b.reshape(1, N))
    return out if Mp == M else out[:M]


def linear_residual(x, w, b, residual, out_dtype=jnp.bfloat16):
    M, K = x.shape
    N = w.shape[1]
    tm, tn = _choose_tm(M), _choose_tn(N)
    xp = _pad_rows(x, tm)
    rp = _pad_rows(residual, tm)
    Mp = xp.shape[0]
    out = pl.pallas_call(
        _matmul_bias_residual_kernel,
        out_shape=jax.ShapeDtypeStruct((Mp, N), out_dtype),
        grid=(Mp // tm, N // tn),
        in_specs=[
            pl.BlockSpec((tm, K), lambda i, j: (i, 0)),
            pl.BlockSpec((K, tn), lambda i, j: (0, j)),
            pl.BlockSpec((1, tn), lambda i, j: (0, j)),
            pl.BlockSpec((tm, tn), lambda i, j: (i, j)),
        ],
        out_specs=pl.BlockSpec((tm, tn), lambda i, j: (i, j)),
        compiler_params=pltpu.CompilerParams(
            dimension_semantics=("parallel", "parallel"),
            vmem_limit_bytes=_vmem_limit_bytes()),
    )(xp, w, b.reshape(1, N), rp)
    return out if Mp == M else out[:M]


def norm_linear(x, gamma, w, b, out_dtype=jnp.bfloat16, eps=_EPS):
    """RmsNorm fused as prologue into (M, K) @ (K, N) + b (rstd cached)."""
    M, K = x.shape
    N = w.shape[1]
    tm, tn = _choose_tm(M), _choose_tn(N)
    xp = _pad_rows(x, tm)
    Mp = xp.shape[0]
    out = pl.pallas_call(
        functools.partial(_norm_matmul_bias_kernel, eps=eps),
        out_shape=jax.ShapeDtypeStruct((Mp, N), out_dtype),
        grid=(Mp // tm, N // tn),
        in_specs=[
            pl.BlockSpec((tm, K), lambda i, j: (i, 0)),
            pl.BlockSpec((1, K), lambda i, j: (0, 0)),
            pl.BlockSpec((K, tn), lambda i, j: (0, j)),
            pl.BlockSpec((1, tn), lambda i, j: (0, j)),
        ],
        out_specs=pl.BlockSpec((tm, tn), lambda i, j: (i, j)),
        scratch_shapes=[pltpu.VMEM((tm, 1), jnp.float32)],
        compiler_params=pltpu.CompilerParams(
            dimension_semantics=("parallel", "arbitrary"),
            vmem_limit_bytes=_vmem_limit_bytes()),
    )(xp, gamma.reshape(1, K), w, b.reshape(1, N))
    return out if Mp == M else out[:M]


def norm_swiglu(x, gamma, w1, b1, w2, b2, out_dtype=jnp.bfloat16, eps=_EPS):
    """RmsNorm + both SwiGLU up-projections + SiLU(x1)*x2 gate in one kernel."""
    M, K = x.shape
    H = w1.shape[1]
    tm, tn = _choose_tm(M), _choose_tn(H)
    xp = _pad_rows(x, tm)
    Mp = xp.shape[0]
    out = pl.pallas_call(
        functools.partial(_norm_swiglu_kernel, eps=eps),
        out_shape=jax.ShapeDtypeStruct((Mp, H), out_dtype),
        grid=(Mp // tm, H // tn),
        in_specs=[
            pl.BlockSpec((tm, K), lambda i, j: (i, 0)),
            pl.BlockSpec((1, K), lambda i, j: (0, 0)),
            pl.BlockSpec((K, tn), lambda i, j: (0, j)),
            pl.BlockSpec((1, tn), lambda i, j: (0, j)),
            pl.BlockSpec((K, tn), lambda i, j: (0, j)),
            pl.BlockSpec((1, tn), lambda i, j: (0, j)),
        ],
        out_specs=pl.BlockSpec((tm, tn), lambda i, j: (i, j)),
        scratch_shapes=[pltpu.VMEM((tm, 1), jnp.float32)],
        compiler_params=pltpu.CompilerParams(
            dimension_semantics=("parallel", "arbitrary"),
            vmem_limit_bytes=_vmem_limit_bytes()),
    )(xp, gamma.reshape(1, K), w1, b1.reshape(1, H), w2, b2.reshape(1, H))
    return out if Mp == M else out[:M]


def rmsnorm(x, gamma, out_dtype=jnp.float32, eps=_EPS):
    M, D = x.shape
    tm = _choose_tm(M)
    xp = _pad_rows(x, tm)
    Mp = xp.shape[0]
    out = pl.pallas_call(
        functools.partial(_rmsnorm_kernel, eps=eps),
        out_shape=jax.ShapeDtypeStruct((Mp, D), out_dtype),
        grid=(Mp // tm,),
        in_specs=[pl.BlockSpec((tm, D), lambda i: (i, 0)),
                  pl.BlockSpec((1, D), lambda i: (0, 0))],
        out_specs=pl.BlockSpec((tm, D), lambda i: (i, 0)),
        compiler_params=pltpu.CompilerParams(
            dimension_semantics=("parallel",),
            vmem_limit_bytes=_vmem_limit_bytes()),
    )(xp, gamma.reshape(1, D))
    return out if Mp == M else out[:M]


def patch_embed_pos(patches, w, b, pe, out_dtype=jnp.bfloat16):
    """(B, N, K) patches -> (B, N, D) = patches @ w + b + pos_embedding."""
    B, N, K = patches.shape
    D = w.shape[1]
    tm = N
    for c in (256, 128, 64, 32, 16, 8):
        if N % c == 0:
            tm = c
            break
    tn = _choose_tn(D)
    return pl.pallas_call(
        _patch_embed_pos_kernel,
        out_shape=jax.ShapeDtypeStruct((B, N, D), out_dtype),
        grid=(B, N // tm, D // tn),
        in_specs=[
            pl.BlockSpec((1, tm, K), lambda bb, ri, j: (bb, ri, 0)),
            pl.BlockSpec((K, tn), lambda bb, ri, j: (0, j)),
            pl.BlockSpec((1, tn), lambda bb, ri, j: (0, j)),
            pl.BlockSpec((tm, tn), lambda bb, ri, j: (ri, j)),
        ],
        out_specs=pl.BlockSpec((1, tm, tn), lambda bb, ri, j: (bb, ri, j)),
        compiler_params=pltpu.CompilerParams(
            dimension_semantics=("parallel", "parallel", "parallel"),
            vmem_limit_bytes=_vmem_limit_bytes()),
    )(patches, w, b.reshape(1, D), pe)


def attention(qkv, num_heads, head_dim):
    """qkv: (B, N, 3*D) bf16 -> (B, N, D).  Grid over (batch, query tile).

    q / k / v are read as three D-wide lane-dense column blocks of qkv
    (block index 0 / 1 / 2 along the last axis), so no XLA-side transposes
    and no (1, N, 3D) monolithic VMEM block.  Requires D % 128 == 0.
    """
    B, N, _ = qkv.shape
    D = num_heads * head_dim
    tq = N
    for c in (512, 256, 128, 64, 32, 16, 8):
        if N % c == 0:
            tq = c
            break
    return pl.pallas_call(
        functools.partial(_attn_kernel, num_heads=num_heads,
                          head_dim=head_dim),
        out_shape=jax.ShapeDtypeStruct((B, N, D), qkv.dtype),
        grid=(B, N // tq),
        in_specs=[
            pl.BlockSpec((1, tq, D), lambda b, qi: (b, qi, 0)),   # q columns
            pl.BlockSpec((1, N, D), lambda b, qi: (b, 0, 1)),     # k columns
            pl.BlockSpec((1, N, D), lambda b, qi: (b, 0, 2)),     # v columns
        ],
        out_specs=pl.BlockSpec((1, tq, D), lambda b, qi: (b, qi, 0)),
        compiler_params=pltpu.CompilerParams(
            dimension_semantics=("parallel", "parallel"),
            vmem_limit_bytes=_vmem_limit_bytes()),
    )(qkv, qkv, qkv)


# ------------------------------ JAX glue ----------------------------------

def patchify(x, axial_patch_size, lateral_patch_size):
    """BZYXC -> (B, num_patches, patch_dim)."""
    B, Z, Y, X, C = x.shape
    az, lp = axial_patch_size, lateral_patch_size
    x = x.reshape(B, Z // az, az, Y // lp, lp, X // lp, lp, C)
    x = x.transpose(0, 1, 3, 5, 2, 4, 6, 7)
    return x.reshape(B, (Z // az) * (Y // lp) * (X // lp), az * lp * lp * C)


def sincos_pos_embedding(num_patches, embed_dim):
    # TODO(synk): exact 3D (Z,Y,X) sincos grid construction of PosEmbedding is
    # not visible in the reference; a deterministic 1D sincos over token index
    # with the same (num_patches, embed_dim) shape is used instead.
    pos = jnp.arange(num_patches, dtype=jnp.float32)[:, None]
    i = jnp.arange(embed_dim // 2, dtype=jnp.float32)[None, :]
    freq = jnp.exp(-jnp.log(10000.0) * (2.0 * i / embed_dim))
    ang = pos * freq
    return jnp.concatenate([jnp.sin(ang), jnp.cos(ang)], axis=-1).astype(jnp.float32)


def init_params(key, patch_dim, embed_dim, num_heads, depth, mlp_ratio,
                init_std=0.02):
    hidden = int(embed_dim * mlp_ratio)
    head_dim = embed_dim // num_heads
    scale = float(head_dim) ** -0.5
    keys = iter(jax.random.split(key, 1 + depth * 5))

    def wf(k, shape):
        return init_std * jax.random.normal(k, shape, dtype=jnp.float32)

    params = {
        # Matmul weights stored bf16 (MXU-native); f32 accumulation in-kernel.
        "patch_w": wf(next(keys), (patch_dim, embed_dim)).astype(jnp.bfloat16),
        "patch_b": jnp.zeros((embed_dim,), jnp.float32),
        "final_norm_w": jnp.ones((embed_dim,), jnp.float32),
        "blocks": [],
    }
    for _ in range(depth):
        qkv_w = wf(next(keys), (embed_dim, 3 * embed_dim))
        qkv_b = jnp.zeros((3 * embed_dim,), jnp.float32)
        # Fold attention scale (head_dim**-0.5) into the q-columns of the qkv
        # projection: zero runtime cost, removes an N*D multiply per layer.
        qkv_w = qkv_w.at[:, :embed_dim].multiply(scale)
        qkv_b = qkv_b.at[:embed_dim].multiply(scale)
        params["blocks"].append({
            "norm1_w": jnp.ones((embed_dim,), jnp.float32),
            "norm2_w": jnp.ones((embed_dim,), jnp.float32),
            "qkv_w": qkv_w.astype(jnp.bfloat16),
            "qkv_b": qkv_b,
            "proj_w": wf(next(keys), (embed_dim, embed_dim)).astype(jnp.bfloat16),
            "proj_b": jnp.zeros((embed_dim,), jnp.float32),
            "mlp_w1": wf(next(keys), (embed_dim, hidden)).astype(jnp.bfloat16),
            "mlp_b1": jnp.zeros((hidden,), jnp.float32),
            "mlp_w2": wf(next(keys), (embed_dim, hidden)).astype(jnp.bfloat16),
            "mlp_b2": jnp.zeros((hidden,), jnp.float32),
            "mlp_w3": wf(next(keys), (hidden, embed_dim)).astype(jnp.bfloat16),
            "mlp_b3": jnp.zeros((embed_dim,), jnp.float32),
        })
    return params


def encoder_block(x_flat, p, B, N, num_heads):
    D = x_flat.shape[-1]
    head_dim = D // num_heads

    # --- attention branch: norm fused into qkv proj; residual fused in proj ---
    qkv = norm_linear(x_flat, p["norm1_w"], p["qkv_w"], p["qkv_b"])     # (B*N, 3D)
    a = attention(qkv.reshape(B, N, 3 * D), num_heads, head_dim)        # (B, N, D)
    a = a.reshape(B * N, D)                                             # free reshape
    x_flat = linear_residual(a, p["proj_w"], p["proj_b"], x_flat)       # drop_path=id

    # --- SwiGLU MLP branch: norm + both up-projs + gate fused; residual fused ---
    g = norm_swiglu(x_flat, p["norm2_w"], p["mlp_w1"], p["mlp_b1"],
                    p["mlp_w2"], p["mlp_b2"])
    x_flat = linear_residual(g, p["mlp_w3"], p["mlp_b3"], x_flat)
    return x_flat


def masked_encoder_forward(params, inputs, *, axial_patch_size,
                           lateral_patch_size, num_heads):
    B = inputs.shape[0]
    patches = patchify(inputs, axial_patch_size, lateral_patch_size)
    _, N, patch_dim = patches.shape
    D = params["patch_w"].shape[1]

    # patch embedding matmul with the sincos positional embedding add fused
    # into its epilogue; residual stream kept in bf16 between kernels.
    pe = sincos_pos_embedding(N, D)
    x = patch_embed_pos(patches, params["patch_w"], params["patch_b"], pe)
    # masks=None -> apply_masks skipped.
    # TODO(synk): masked-token gather path (apply_masks) not implemented.
    x = x.reshape(B * N, D)

    for blk in params["blocks"]:
        x = encoder_block(x, blk, B, N, num_heads)

    x = rmsnorm(x, params["final_norm_w"], out_dtype=jnp.float32)
    return x.reshape(B, N, D), patches


# --------------------------------- main ------------------------------------

if __name__ == "__main__":
    # Small config consistent with MaskedEncoder(model_template='me', ...):
    # input_shape=(B, Z, Y, X, C), lateral_patch_size=16, axial_patch_size=1
    B, Z, Y, X, C = 2, 4, 64, 64, 1
    lateral_patch_size, axial_patch_size = 16, 1
    embed_dim, depth, num_heads, mlp_ratio = 128, 2, 4, 4.0
    patch_dim = axial_patch_size * lateral_patch_size * lateral_patch_size * C

    root = jax.random.PRNGKey(0)
    k_in, k_par = jax.random.split(root)
    inputs = jax.random.normal(k_in, (B, Z, Y, X, C), dtype=jnp.float32)
    params = init_params(k_par, patch_dim, embed_dim, num_heads, depth,
                         mlp_ratio)

    fwd = jax.jit(functools.partial(
        masked_encoder_forward,
        axial_patch_size=axial_patch_size,
        lateral_patch_size=lateral_patch_size,
        num_heads=num_heads))

    out, patches = fwd(params, inputs)
    jax.block_until_ready((out, patches))

    expected_tokens = (Z // axial_patch_size) * (Y // lateral_patch_size) * \
        (X // lateral_patch_size)
    assert out.shape == (B, expected_tokens, embed_dim)
    assert patches.shape == (B, expected_tokens, patch_dim)
    print("KERNEL_OK")
</pallas_src>

<mosaic_0001>
module attributes {stable_mosaic.version = 11 : i64} {
  func.func @_patch_embed_pos_kernel(%arg0: i32, %arg1: i32, %arg2: i32, %arg3: memref<1x64x256xf32, #tpu.memory_space<vmem>>, %arg4: memref<256x128xbf16, #tpu.memory_space<vmem>>, %arg5: memref<1x128xf32, #tpu.memory_space<vmem>>, %arg6: memref<64x128xf32, #tpu.memory_space<vmem>>, %arg7: memref<1x64x128xbf16, #tpu.memory_space<vmem>>) attributes {dimension_semantics = [#tpu.dimension_semantics<parallel>, #tpu.dimension_semantics<parallel>, #tpu.dimension_semantics<parallel>], iteration_bounds = array<i64: 2, 1, 1>, scalar_prefetch = 0 : i64, scratch_operands = 0 : i64, tpu.core_type = #tpu.core_type<tc>, window_params = [{transform_indices = @transform_0, window_bounds = array<i64: 1, 64, 256>}, {transform_indices = @transform_1, window_bounds = array<i64: 256, 128>}, {transform_indices = @transform_2, window_bounds = array<i64: 1, 128>}, {transform_indices = @transform_3, window_bounds = array<i64: 64, 128>}, {transform_indices = @transform_4, window_bounds = array<i64: 1, 64, 128>}]} {
    %c0 = arith.constant 0 : index
    %c0_0 = arith.constant 0 : index
    %c0_1 = arith.constant 0 : index
    %0 = vector.load %arg3[%c0, %c0_0, %c0_1] : memref<1x64x256xf32, #tpu.memory_space<vmem>>, vector<1x64x256xf32>
    %1 = vector.shape_cast %0 : vector<1x64x256xf32> to vector<64x256xf32>
    %2 = arith.truncf %1 : vector<64x256xf32> to vector<64x256xbf16>
    %c0_2 = arith.constant 0 : index
    %c0_3 = arith.constant 0 : index
    %3 = vector.load %arg4[%c0_2, %c0_3] : memref<256x128xbf16, #tpu.memory_space<vmem>>, vector<256x128xbf16>
    %cst = arith.constant dense<0.000000e+00> : vector<64x128xf32>
    %4 = tpu.matmul %2, %3, %cst {dimension_numbers = #tpu.dot_dimension_numbers<[1], [0], [0], [1], [0, 0, 1, 1], [], []>} : vector<64x256xbf16>, vector<256x128xbf16>, vector<64x128xf32> -> vector<64x128xf32>
    %c0_4 = arith.constant 0 : index
    %c0_5 = arith.constant 0 : index
    %5 = vector.load %arg5[%c0_4, %c0_5] : memref<1x128xf32, #tpu.memory_space<vmem>>, vector<1x128xf32>
    %6 = vector.broadcast %5 : vector<1x128xf32> to vector<64x128xf32>
    %7 = arith.addf %4, %6 : vector<64x128xf32>
    %c0_6 = arith.constant 0 : index
    %c0_7 = arith.constant 0 : index
    %8 = vector.load %arg6[%c0_6, %c0_7] : memref<64x128xf32, #tpu.memory_space<vmem>>, vector<64x128xf32>
    %9 = arith.addf %7, %8 : vector<64x128xf32>
    %10 = arith.truncf %9 : vector<64x128xf32> to vector<64x128xbf16>
    %c0_8 = arith.constant 0 : index
    %c0_9 = arith.constant 0 : index
    %c0_10 = arith.constant 0 : index
    %11 = vector.load %arg7[%c0_8, %c0_9, %c0_10] : memref<1x64x128xbf16, #tpu.memory_space<vmem>>, vector<1x64x128xbf16>
    %12 = vector.shape_cast %11 : vector<1x64x128xbf16> to vector<64x128xbf16>
    %13 = vector.shape_cast %10 : vector<64x128xbf16> to vector<1x64x128xbf16>
    tpu.vector_store %arg7[%c0_8, %c0_9, %c0_10], %13 {strides = array<i32>} : memref<1x64x128xbf16, #tpu.memory_space<vmem>>, vector<1x64x128xbf16>,
    return
  }
  func.func @transform_0(%arg0: i32, %arg1: i32, %arg2: i32) -> (i32, i32, i32) {
    %c0_i32 = arith.constant 0 : i32
    %c0_i32_0 = arith.constant 0 : i32
    return %arg0, %arg1, %c0_i32 : i32, i32, i32
  }
  func.func @transform_1(%arg0: i32, %arg1: i32, %arg2: i32) -> (i32, i32) {
    %c0_i32 = arith.constant 0 : i32
    %c0_i32_0 = arith.constant 0 : i32
    return %c0_i32, %arg2 : i32, i32
  }
  func.func @transform_2(%arg0: i32, %arg1: i32, %arg2: i32) -> (i32, i32) {
    %c0_i32 = arith.constant 0 : i32
    %c0_i32_0 = arith.constant 0 : i32
    return %c0_i32, %arg2 : i32, i32
  }
  func.func @transform_3(%arg0: i32, %arg1: i32, %arg2: i32) -> (i32, i32) {
    %c0_i32 = arith.constant 0 : i32
    return %arg1, %arg2 : i32, i32
  }
  func.func @transform_4(%arg0: i32, %arg1: i32, %arg2: i32) -> (i32, i32, i32) {
    %c0_i32 = arith.constant 0 : i32
    return %arg0, %arg1, %arg2 : i32, i32, i32
  }
}

module attributes {stable_mosaic.version = 11 : i64} {
  func.func @_norm_matmul_bias_kernel(%arg0: i32, %arg1: i32, %arg2: memref<128x128xbf16, #tpu.memory_space<vmem>>, %arg3: memref<1x128xf32, #tpu.memory_space<vmem>>, %arg4: memref<128x384xbf16, #tpu.memory_space<vmem>>, %arg5: memref<1x384xf32, #tpu.memory_space<vmem>>, %arg6: memref<128x384xbf16, #tpu.memory_space<vmem>>, %arg7: memref<128x1xf32, #tpu.memory_space<vmem>>) attributes {dimension_semantics = [#tpu.dimension_semantics<parallel>, #tpu.dimension_semantics<arbitrary>], iteration_bounds = array<i64: 1, 1>, scalar_prefetch = 0 : i64, scratch_operands = 1 : i64, tpu.core_type = #tpu.core_type<tc>, window_params = [{transform_indices = @transform_0, window_bounds = array<i64: 128, 128>}, {pipeline_mode = #tpu.pipeline_mode<synchronous>, transform_indices = @transform_1, window_bounds = array<i64: 1, 128>}, {transform_indices = @transform_2, window_bounds = array<i64: 128, 384>}, {transform_indices = @transform_3, window_bounds = array<i64: 1, 384>}, {transform_indices = @transform_4, window_bounds = array<i64: 128, 384>}]} {
    %c0_i32 = arith.constant 0 : i32
    %0 = arith.cmpi eq, %arg1, %c0_i32 : i32
    %1 = arith.extui %0 : i1 to i32
    %c0_i32_0 = arith.constant 0 : i32
    %2 = arith.cmpi ne, %1, %c0_i32_0 : i32
    scf.if %2 {
      %c0_12 = arith.constant 0 : index
      %c0_13 = arith.constant 0 : index
      %19 = vector.load %arg2[%c0_12, %c0_13] : memref<128x128xbf16, #tpu.memory_space<vmem>>, vector<128x128xbf16>
      %20 = arith.extf %19 : vector<128x128xbf16> to vector<128x128xf32>
      %21 = arith.mulf %20, %20 : vector<128x128xf32>
      %cst_14 = arith.constant dense<0.000000e+00> : vector<128xf32>
      %22 = vector.multi_reduction <add>, %21, %cst_14 [1] : vector<128x128xf32> to vector<128xf32>
      %23 = vector.shape_cast %22 : vector<128xf32> to vector<128x1xf32>
      %cst_15 = arith.constant 1.280000e+02 : f32
      %24 = vector.broadcast %cst_15 : f32 to vector<128x1xf32>
      %25 = arith.divf %23, %24 : vector<128x1xf32>
      %cst_16 = arith.constant 9.99999974E-6 : f32
      %26 = vector.broadcast %cst_16 : f32 to vector<128x1xf32>
      %27 = arith.addf %25, %26 : vector<128x1xf32>
      %28 = math.rsqrt %27 : vector<128x1xf32>
      %c0_17 = arith.constant 0 : index
      %c0_18 = arith.constant 0 : index
      %29 = vector.load %arg7[%c0_17, %c0_18] : memref<128x1xf32, #tpu.memory_space<vmem>>, vector<128x1xf32>
      tpu.vector_store %arg7[%c0_17, %c0_18], %28 {strides = array<i32>} : memref<128x1xf32, #tpu.memory_space<vmem>>, vector<128x1xf32>,
    } else {
    }
    %c0 = arith.constant 0 : index
    %c0_1 = arith.constant 0 : index
    %3 = vector.load %arg2[%c0, %c0_1] : memref<128x128xbf16, #tpu.memory_space<vmem>>, vector<128x128xbf16>
    %4 = arith.extf %3 : vector<128x128xbf16> to vector<128x128xf32>
    %c0_2 = arith.constant 0 : index
    %c0_3 = arith.constant 0 : index
    %5 = vector.load %arg7[%c0_2, %c0_3] : memref<128x1xf32, #tpu.memory_space<vmem>>, vector<128x1xf32>
    %6 = vector.broadcast %5 : vector<128x1xf32> to vector<128x128xf32>
    %7 = arith.mulf %4, %6 : vector<128x128xf32>
    %c0_4 = arith.constant 0 : index
    %c0_5 = arith.constant 0 : index
    %8 = vector.load %arg3[%c0_4, %c0_5] : memref<1x128xf32, #tpu.memory_space<vmem>>, vector<1x128xf32>
    %9 = vector.broadcast %8 : vector<1x128xf32> to vector<128x128xf32>
    %10 = arith.mulf %7, %9 : vector<128x128xf32>
    %11 = arith.truncf %10 : vector<128x128xf32> to vector<128x128xbf16>
    %c0_6 = arith.constant 0 : index
    %c0_7 = arith.constant 0 : index
    %12 = vector.load %arg4[%c0_6, %c0_7] : memref<128x384xbf16, #tpu.memory_space<vmem>>, vector<128x384xbf16>
    %cst = arith.constant dense<0.000000e+00> : vector<128x384xf32>
    %13 = tpu.matmul %11, %12, %cst {dimension_numbers = #tpu.dot_dimension_numbers<[1], [0], [0], [1], [0, 0, 1, 1], [], []>} : vector<128x128xbf16>, vector<128x384xbf16>, vector<128x384xf32> -> vector<128x384xf32>
    %c0_8 = arith.constant 0 : index
    %c0_9 = arith.constant 0 : index
    %14 = vector.load %arg5[%c0_8, %c0_9] : memref<1x384xf32, #tpu.memory_space<vmem>>, vector<1x384xf32>
    %15 = vector.broadcast %14 : vector<1x384xf32> to vector<128x384xf32>
    %16 = arith.addf %13, %15 : vector<128x384xf32>
    %17 = arith.truncf %16 : vector<128x384xf32> to vector<128x384xbf16>
    %c0_10 = arith.constant 0 : index
    %c0_11 = arith.constant 0 : index
    %18 = vector.load %arg6[%c0_10, %c0_11] : memref<128x384xbf16, #tpu.memory_space<vmem>>, vector<128x384xbf16>
    tpu.vector_store %arg6[%c0_10, %c0_11], %17 {strides = array<i32>} : memref<128x384xbf16, #tpu.memory_space<vmem>>, vector<128x384xbf16>,
    return
  }
  func.func @transform_0(%arg0: i32, %arg1: i32) -> (i32, i32) {
    %c0_i32 = arith.constant 0 : i32
    %c0_i32_0 = arith.constant 0 : i32
    return %arg0, %c0_i32 : i32, i32
  }
  func.func @transform_1(%arg0: i32, %arg1: i32) -> (i32, i32) {
    %c0_i32 = arith.constant 0 : i32
    %c0_i32_0 = arith.constant 0 : i32
    %c0_i32_1 = arith.constant 0 : i32
    return %c0_i32, %c0_i32_0 : i32, i32
  }
  func.func @transform_2(%arg0: i32, %arg1: i32) -> (i32, i32) {
    %c0_i32 = arith.constant 0 : i32
    %c0_i32_0 = arith.constant 0 : i32
    return %c0_i32, %arg1 : i32, i32
  }
  func.func @transform_3(%arg0: i32, %arg1: i32) -> (i32, i32) {
    %c0_i32 = arith.constant 0 : i32
    %c0_i32_0 = arith.constant 0 : i32
    return %c0_i32, %arg1 : i32, i32
  }
  func.func @transform_4(%arg0: i32, %arg1: i32) -> (i32, i32) {
    %c0_i32 = arith.constant 0 : i32
    return %arg0, %arg1 : i32, i32
  }
}

module attributes {stable_mosaic.version = 11 : i64} {
  func.func @_attn_kernel(%arg0: i32, %arg1: i32, %arg2: memref<1x64x128xbf16, #tpu.memory_space<vmem>>, %arg3: memref<1x64x128xbf16, #tpu.memory_space<vmem>>, %arg4: memref<1x64x128xbf16, #tpu.memory_space<vmem>>, %arg5: memref<1x64x128xbf16, #tpu.memory_space<vmem>>) attributes {dimension_semantics = [#tpu.dimension_semantics<parallel>, #tpu.dimension_semantics<parallel>], iteration_bounds = array<i64: 2, 1>, scalar_prefetch = 0 : i64, scratch_operands = 0 : i64, tpu.core_type = #tpu.core_type<tc>, window_params = [{transform_indices = @transform_0, window_bounds = array<i64: 1, 64, 128>}, {transform_indices = @transform_1, window_bounds = array<i64: 1, 64, 128>}, {transform_indices = @transform_2, window_bounds = array<i64: 1, 64, 128>}, {transform_indices = @transform_3, window_bounds = array<i64: 1, 64, 128>}]} {
    %c0 = arith.constant 0 : index
    %c0_0 = arith.constant 0 : index
    %c0_1 = arith.constant 0 : index
    %0 = vector.load %arg2[%c0, %c0_0, %c0_1] : memref<1x64x128xbf16, #tpu.memory_space<vmem>>, vector<1x64x128xbf16>
    %1 = vector.shape_cast %0 : vector<1x64x128xbf16> to vector<64x128xbf16>
    %c0_2 = arith.constant 0 : index
    %c0_3 = arith.constant 0 : index
    %c0_4 = arith.constant 0 : index
    %2 = vector.load %arg3[%c0_2, %c0_3, %c0_4] : memref<1x64x128xbf16, #tpu.memory_space<vmem>>, vector<1x64x128xbf16>
    %3 = vector.shape_cast %2 : vector<1x64x128xbf16> to vector<64x128xbf16>
    %c0_5 = arith.constant 0 : index
    %c0_6 = arith.constant 0 : index
    %c0_7 = arith.constant 0 : index
    %4 = vector.load %arg4[%c0_5, %c0_6, %c0_7] : memref<1x64x128xbf16, #tpu.memory_space<vmem>>, vector<1x64x128xbf16>
    %5 = vector.shape_cast %4 : vector<1x64x128xbf16> to vector<64x128xbf16>
    %6 = vector.extract_strided_slice %1 {offsets = [0, 0], sizes = [64, 32], strides = [1, 1]} : vector<64x128xbf16> to vector<64x32xbf16>
    %7 = vector.extract_strided_slice %3 {offsets = [0, 0], sizes = [64, 32], strides = [1, 1]} : vector<64x128xbf16> to vector<64x32xbf16>
    %cst = arith.constant dense<0.000000e+00> : vector<64x64xf32>
    %8 = tpu.matmul %6, %7, %cst {dimension_numbers = #tpu.dot_dimension_numbers<[1], [1], [0], [0], [0, 0, 1, 0], [], []>} : vector<64x32xbf16>, vector<64x32xbf16>, vector<64x64xf32> -> vector<64x64xf32>
    %cst_8 = arith.constant dense<0xFF800000> : vector<64xf32>
    %9 = vector.multi_reduction <maximumf>, %8, %cst_8 [1] : vector<64x64xf32> to vector<64xf32>
    %10 = vector.shape_cast %9 : vector<64xf32> to vector<64x1xf32>
    %11 = vector.broadcast %10 : vector<64x1xf32> to vector<64x64xf32>
    %12 = arith.subf %8, %11 : vector<64x64xf32>
    %13 = math.exp %12 : vector<64x64xf32>
    %cst_9 = arith.constant dense<0.000000e+00> : vector<64xf32>
    %14 = vector.multi_reduction <add>, %13, %cst_9 [1] : vector<64x64xf32> to vector<64xf32>
    %15 = vector.shape_cast %14 : vector<64xf32> to vector<64x1xf32>
    %16 = tpu.reciprocal %15 {approx = true} : vector<64x1xf32> -> vector<64x1xf32>
    %17 = vector.broadcast %16 : vector<64x1xf32> to vector<64x64xf32>
    %18 = arith.mulf %13, %17 : vector<64x64xf32>
    %19 = arith.truncf %18 : vector<64x64xf32> to vector<64x64xbf16>
    %20 = vector.extract_strided_slice %5 {offsets = [0, 0], sizes = [64, 32], strides = [1, 1]} : vector<64x128xbf16> to vector<64x32xbf16>
    %cst_10 = arith.constant dense<0.000000e+00> : vector<64x32xf32>
    %21 = tpu.matmul %19, %20, %cst_10 {dimension_numbers = #tpu.dot_dimension_numbers<[1], [0], [0], [1], [0, 0, 1, 1], [], []>} : vector<64x64xbf16>, vector<64x32xbf16>, vector<64x32xf32> -> vector<64x32xf32>
    %22 = arith.truncf %21 : vector<64x32xf32> to vector<64x32xbf16>
    %c0_11 = arith.constant 0 : index
    %c0_12 = arith.constant 0 : index
    %c0_13 = arith.constant 0 : index
    %23 = vector.load %arg5[%c0_11, %c0_12, %c0_13] : memref<1x64x128xbf16, #tpu.memory_space<vmem>>, vector<1x64x32xbf16>
    %24 = vector.shape_cast %23 : vector<1x64x32xbf16> to vector<64x32xbf16>
    %25 = vector.shape_cast %22 : vector<64x32xbf16> to vector<1x64x32xbf16>
    tpu.vector_store %arg5[%c0_11, %c0_12, %c0_13], %25 {strides = array<i32>} : memref<1x64x128xbf16, #tpu.memory_space<vmem>>, vector<1x64x32xbf16>,
    %26 = vector.extract_strided_slice %1 {offsets = [0, 32], sizes = [64, 32], strides = [1, 1]} : vector<64x128xbf16> to vector<64x32xbf16>
    %27 = vector.extract_strided_slice %3 {offsets = [0, 32], sizes = [64, 32], strides = [1, 1]} : vector<64x128xbf16> to vector<64x32xbf16>
    %cst_14 = arith.constant dense<0.000000e+00> : vector<64x64xf32>
    %28 = tpu.matmul %26, %27, %cst_14 {dimension_numbers = #tpu.dot_dimension_numbers<[1], [1], [0], [0], [0, 0, 1, 0], [], []>} : vector<64x32xbf16>, vector<64x32xbf16>, vector<64x64xf32> -> vector<64x64xf32>
    %cst_15 = arith.constant dense<0xFF800000> : vector<64xf32>
    %29 = vector.multi_reduction <maximumf>, %28, %cst_15 [1] : vector<64x64xf32> to vector<64xf32>
    %30 = vector.shape_cast %29 : vector<64xf32> to vector<64x1xf32>
    %31 = vector.broadcast %30 : vector<64x1xf32> to vector<64x64xf32>
    %32 = arith.subf %28, %31 : vector<64x64xf32>
    %33 = math.exp %32 : vector<64x64xf32>
    %cst_16 = arith.constant dense<0.000000e+00> : vector<64xf32>
    %34 = vector.multi_reduction <add>, %33, %cst_16 [1] : vector<64x64xf32> to vector<64xf32>
    %35 = vector.shape_cast %34 : vector<64xf32> to vector<64x1xf32>
    %36 = tpu.reciprocal %35 {approx = true} : vector<64x1xf32> -> vector<64x1xf32>
    %37 = vector.broadcast %36 : vector<64x1xf32> to vector<64x64xf32>
    %38 = arith.mulf %33, %37 : vector<64x64xf32>
    %39 = arith.truncf %38 : vector<64x64xf32> to vector<64x64xbf16>
    %40 = vector.extract_strided_slice %5 {offsets = [0, 32], sizes = [64, 32], strides = [1, 1]} : vector<64x128xbf16> to vector<64x32xbf16>
    %cst_17 = arith.constant dense<0.000000e+00> : vector<64x32xf32>
    %41 = tpu.matmul %39, %40, %cst_17 {dimension_numbers = #tpu.dot_dimension_numbers<[1], [0], [0], [1], [0, 0, 1, 1], [], []>} : vector<64x64xbf16>, vector<64x32xbf16>, vector<64x32xf32> -> vector<64x32xf32>
    %42 = arith.truncf %41 : vector<64x32xf32> to vector<64x32xbf16>
    %c0_18 = arith.constant 0 : index
    %c0_19 = arith.constant 0 : index
    %c32 = arith.constant 32 : index
    %43 = vector.load %arg5[%c0_18, %c0_19, %c32] : memref<1x64x128xbf16, #tpu.memory_space<vmem>>, vector<1x64x32xbf16>
    %44 = vector.shape_cast %43 : vector<1x64x32xbf16> to vector<64x32xbf16>
    %45 = vector.shape_cast %42 : vector<64x32xbf16> to vector<1x64x32xbf16>
    tpu.vector_store %arg5[%c0_18, %c0_19, %c32], %45 {strides = array<i32>} : memref<1x64x128xbf16, #tpu.memory_space<vmem>>, vector<1x64x32xbf16>,
    %46 = vector.extract_strided_slice %1 {offsets = [0, 64], sizes = [64, 32], strides = [1, 1]} : vector<64x128xbf16> to vector<64x32xbf16>
    %47 = vector.extract_strided_slice %3 {offsets = [0, 64], sizes = [64, 32], strides = [1, 1]} : vector<64x128xbf16> to vector<64x32xbf16>
    %cst_20 = arith.constant dense<0.000000e+00> : vector<64x64xf32>
    %48 = tpu.matmul %46, %47, %cst_20 {dimension_numbers = #tpu.dot_dimension_numbers<[1], [1], [0], [0], [0, 0, 1, 0], [], []>} : vector<64x32xbf16>, vector<64x32xbf16>, vector<64x64xf32> -> vector<64x64xf32>
    %cst_21 = arith.constant dense<0xFF800000> : vector<64xf32>
    %49 = vector.multi_reduction <maximumf>, %48, %cst_21 [1] : vector<64x64xf32> to vector<64xf32>
    %50 = vector.shape_cast %49 : vector<64xf32> to vector<64x1xf32>
    %51 = vector.broadcast %50 : vector<64x1xf32> to vector<64x64xf32>
    %52 = arith.subf %48, %51 : vector<64x64xf32>
    %53 = math.exp %52 : vector<64x64xf32>
    %cst_22 = arith.constant dense<0.000000e+00> : vector<64xf32>
    %54 = vector.multi_reduction <add>, %53, %cst_22 [1] : vector<64x64xf32> to vector<64xf32>
    %55 = vector.shape_cast %54 : vector<64xf32> to vector<64x1xf32>
    %56 = tpu.reciprocal %55 {approx = true} : vector<64x1xf32> -> vector<64x1xf32>
    %57 = vector.broadcast %56 : vector<64x1xf32> to vector<64x64xf32>
    %58 = arith.mulf %53, %57 : vector<64x64xf32>
    %59 = arith.truncf %58 : vector<64x64xf32> to vector<64x64xbf16>
    %60 = vector.extract_strided_slice %5 {offsets = [0, 64], sizes = [64, 32], strides = [1, 1]} : vector<64x128xbf16> to vector<64x32xbf16>
    %cst_23 = arith.constant dense<0.000000e+00> : vector<64x32xf32>
    %61 = tpu.matmul %59, %60, %cst_23 {dimension_numbers = #tpu.dot_dimension_numbers<[1], [0], [0], [1], [0, 0, 1, 1], [], []>} : vector<64x64xbf16>, vector<64x32xbf16>, vector<64x32xf32> -> vector<64x32xf32>
    %62 = arith.truncf %61 : vector<64x32xf32> to vector<64x32xbf16>
    %c0_24 = arith.constant 0 : index
    %c0_25 = arith.constant 0 : index
    %c64 = arith.constant 64 : index
    %63 = vector.load %arg5[%c0_24, %c0_25, %c64] : memref<1x64x128xbf16, #tpu.memory_space<vmem>>, vector<1x64x32xbf16>
    %64 = vector.shape_cast %63 : vector<1x64x32xbf16> to vector<64x32xbf16>
    %65 = vector.shape_cast %62 : vector<64x32xbf16> to vector<1x64x32xbf16>
    tpu.vector_store %arg5[%c0_24, %c0_25, %c64], %65 {strides = array<i32>} : memref<1x64x128xbf16, #tpu.memory_space<vmem>>, vector<1x64x32xbf16>,
    %66 = vector.extract_strided_slice %1 {offsets = [0, 96], sizes = [64, 32], strides = [1, 1]} : vector<64x128xbf16> to vector<64x32xbf16>
    %67 = vector.extract_strided_slice %3 {offsets = [0, 96], sizes = [64, 32], strides = [1, 1]} : vector<64x128xbf16> to vector<64x32xbf16>
    %cst_26 = arith.constant dense<0.000000e+00> : vector<64x64xf32>
    %68 = tpu.matmul %66, %67, %cst_26 {dimension_numbers = #tpu.dot_dimension_numbers<[1], [1], [0], [0], [0, 0, 1, 0], [], []>} : vector<64x32xbf16>, vector<64x32xbf16>, vector<64x64xf32> -> vector<64x64xf32>
    %cst_27 = arith.constant dense<0xFF800000> : vector<64xf32>
    %69 = vector.multi_reduction <maximumf>, %68, %cst_27 [1] : vector<64x64xf32> to vector<64xf32>
    %70 = vector.shape_cast %69 : vector<64xf32> to vector<64x1xf32>
    %71 = vector.broadcast %70 : vector<64x1xf32> to vector<64x64xf32>
    %72 = arith.subf %68, %71 : vector<64x64xf32>
    %73 = math.exp %72 : vector<64x64xf32>
    %cst_28 = arith.constant dense<0.000000e+00> : vector<64xf32>
    %74 = vector.multi_reduction <add>, %73, %cst_28 [1] : vector<64x64xf32> to vector<64xf32>
    %75 = vector.shape_cast %74 : vector<64xf32> to vector<64x1xf32>
    %76 = tpu.reciprocal %75 {approx = true} : vector<64x1xf32> -> vector<64x1xf32>
    %77 = vector.broadcast %76 : vector<64x1xf32> to vector<64x64xf32>
    %78 = arith.mulf %73, %77 : vector<64x64xf32>
    %79 = arith.truncf %78 : vector<64x64xf32> to vector<64x64xbf16>
    %80 = vector.extract_strided_slice %5 {offsets = [0, 96], sizes = [64, 32], strides = [1, 1]} : vector<64x128xbf16> to vector<64x32xbf16>
    %cst_29 = arith.constant dense<0.000000e+00> : vector<64x32xf32>
    %81 = tpu.matmul %79, %80, %cst_29 {dimension_numbers = #tpu.dot_dimension_numbers<[1], [0], [0], [1], [0, 0, 1, 1], [], []>} : vector<64x64xbf16>, vector<64x32xbf16>, vector<64x32xf32> -> vector<64x32xf32>
    %82 = arith.truncf %81 : vector<64x32xf32> to vector<64x32xbf16>
    %c0_30 = arith.constant 0 : index
    %c0_31 = arith.constant 0 : index
    %c96 = arith.constant 96 : index
    %83 = vector.load %arg5[%c0_30, %c0_31, %c96] : memref<1x64x128xbf16, #tpu.memory_space<vmem>>, vector<1x64x32xbf16>
    %84 = vector.shape_cast %83 : vector<1x64x32xbf16> to vector<64x32xbf16>
    %85 = vector.shape_cast %82 : vector<64x32xbf16> to vector<1x64x32xbf16>
    tpu.vector_store %arg5[%c0_30, %c0_31, %c96], %85 {strides = array<i32>} : memref<1x64x128xbf16, #tpu.memory_space<vmem>>, vector<1x64x32xbf16>,
    return
  }
  func.func @transform_0(%arg0: i32, %arg1: i32) -> (i32, i32, i32) {
    %c0_i32 = arith.constant 0 : i32
    %c0_i32_0 = arith.constant 0 : i32
    return %arg0, %arg1, %c0_i32 : i32, i32, i32
  }
  func.func @transform_1(%arg0: i32, %arg1: i32) -> (i32, i32, i32) {
    %c0_i32 = arith.constant 0 : i32
    %c1_i32 = arith.constant 1 : i32
    %c0_i32_0 = arith.constant 0 : i32
    return %arg0, %c0_i32, %c1_i32 : i32, i32, i32
  }
  func.func @transform_2(%arg0: i32, %arg1: i32) -> (i32, i32, i32) {
    %c0_i32 = arith.constant 0 : i32
    %c2_i32 = arith.constant 2 : i32
    %c0_i32_0 = arith.constant 0 : i32
    return %arg0, %c0_i32, %c2_i32 : i32, i32, i32
  }
  func.func @transform_3(%arg0: i32, %arg1: i32) -> (i32, i32, i32) {
    %c0_i32 = arith.constant 0 : i32
    %c0_i32_0 = arith.constant 0 : i32
    return %arg0, %arg1, %c0_i32 : i32, i32, i32
  }
}

module attributes {stable_mosaic.version = 11 : i64} {
  func.func @_matmul_bias_residual_kernel(%arg0: i32, %arg1: i32, %arg2: memref<128x128xbf16, #tpu.memory_space<vmem>>, %arg3: memref<128x128xbf16, #tpu.memory_space<vmem>>, %arg4: memref<1x128xf32, #tpu.memory_space<vmem>>, %arg5: memref<128x128xbf16, #tpu.memory_space<vmem>>, %arg6: memref<128x128xbf16, #tpu.memory_space<vmem>>) attributes {dimension_semantics = [#tpu.dimension_semantics<parallel>, #tpu.dimension_semantics<parallel>], iteration_bounds = array<i64: 1, 1>, scalar_prefetch = 0 : i64, scratch_operands = 0 : i64, tpu.core_type = #tpu.core_type<tc>, window_params = [{transform_indices = @transform_0, window_bounds = array<i64: 128, 128>}, {transform_indices = @transform_1, window_bounds = array<i64: 128, 128>}, {transform_indices = @transform_2, window_bounds = array<i64: 1, 128>}, {transform_indices = @transform_3, window_bounds = array<i64: 128, 128>}, {transform_indices = @transform_4, window_bounds = array<i64: 128, 128>}]} {
    %c0 = arith.constant 0 : index
    %c0_0 = arith.constant 0 : index
    %0 = vector.load %arg2[%c0, %c0_0] : memref<128x128xbf16, #tpu.memory_space<vmem>>, vector<128x128xbf16>
    %c0_1 = arith.constant 0 : index
    %c0_2 = arith.constant 0 : index
    %1 = vector.load %arg3[%c0_1, %c0_2] : memref<128x128xbf16, #tpu.memory_space<vmem>>, vector<128x128xbf16>
    %cst = arith.constant dense<0.000000e+00> : vector<128x128xf32>
    %2 = tpu.matmul %0, %1, %cst {dimension_numbers = #tpu.dot_dimension_numbers<[1], [0], [0], [1], [0, 0, 1, 1], [], []>} : vector<128x128xbf16>, vector<128x128xbf16>, vector<128x128xf32> -> vector<128x128xf32>
    %c0_3 = arith.constant 0 : index
    %c0_4 = arith.constant 0 : index
    %3 = vector.load %arg4[%c0_3, %c0_4] : memref<1x128xf32, #tpu.memory_space<vmem>>, vector<1x128xf32>
    %4 = vector.broadcast %3 : vector<1x128xf32> to vector<128x128xf32>
    %5 = arith.addf %2, %4 : vector<128x128xf32>
    %c0_5 = arith.constant 0 : index
    %c0_6 = arith.constant 0 : index
    %6 = vector.load %arg5[%c0_5, %c0_6] : memref<128x128xbf16, #tpu.memory_space<vmem>>, vector<128x128xbf16>
    %7 = arith.extf %6 : vector<128x128xbf16> to vector<128x128xf32>
    %8 = arith.addf %5, %7 : vector<128x128xf32>
    %9 = arith.truncf %8 : vector<128x128xf32> to vector<128x128xbf16>
    %c0_7 = arith.constant 0 : index
    %c0_8 = arith.constant 0 : index
    %10 = vector.load %arg6[%c0_7, %c0_8] : memref<128x128xbf16, #tpu.memory_space<vmem>>, vector<128x128xbf16>
    tpu.vector_store %arg6[%c0_7, %c0_8], %9 {strides = array<i32>} : memref<128x128xbf16, #tpu.memory_space<vmem>>, vector<128x128xbf16>,
    return
  }
  func.func @transform_0(%arg0: i32, %arg1: i32) -> (i32, i32) {
    %c0_i32 = arith.constant 0 : i32
    %c0_i32_0 = arith.constant 0 : i32
    return %arg0, %c0_i32 : i32, i32
  }
  func.func @transform_1(%arg0: i32, %arg1: i32) -> (i32, i32) {
    %c0_i32 = arith.constant 0 : i32
    %c0_i32_0 = arith.constant 0 : i32
    return %c0_i32, %arg1 : i32, i32
  }
  func.func @transform_2(%arg0: i32, %arg1: i32) -> (i32, i32) {
    %c0_i32 = arith.constant 0 : i32
    %c0_i32_0 = arith.constant 0 : i32
    return %c0_i32, %arg1 : i32, i32
  }
  func.func @transform_3(%arg0: i32, %arg1: i32) -> (i32, i32) {
    %c0_i32 = arith.constant 0 : i32
    return %arg0, %arg1 : i32, i32
  }
  func.func @transform_4(%arg0: i32, %arg1: i32) -> (i32, i32) {
    %c0_i32 = arith.constant 0 : i32
    return %arg0, %arg1 : i32, i32
  }
}

module attributes {stable_mosaic.version = 11 : i64} {
  func.func @_norm_swiglu_kernel(%arg0: i32, %arg1: i32, %arg2: memref<128x128xbf16, #tpu.memory_space<vmem>>, %arg3: memref<1x128xf32, #tpu.memory_space<vmem>>, %arg4: memref<128x512xbf16, #tpu.memory_space<vmem>>, %arg5: memref<1x512xf32, #tpu.memory_space<vmem>>, %arg6: memref<128x512xbf16, #tpu.memory_space<vmem>>, %arg7: memref<1x512xf32, #tpu.memory_space<vmem>>, %arg8: memref<128x512xbf16, #tpu.memory_space<vmem>>, %arg9: memref<128x1xf32, #tpu.memory_space<vmem>>) attributes {dimension_semantics = [#tpu.dimension_semantics<parallel>, #tpu.dimension_semantics<arbitrary>], iteration_bounds = array<i64: 1, 1>, scalar_prefetch = 0 : i64, scratch_operands = 1 : i64, tpu.core_type = #tpu.core_type<tc>, window_params = [{transform_indices = @transform_0, window_bounds = array<i64: 128, 128>}, {pipeline_mode = #tpu.pipeline_mode<synchronous>, transform_indices = @transform_1, window_bounds = array<i64: 1, 128>}, {transform_indices = @transform_2, window_bounds = array<i64: 128, 512>}, {transform_indices = @transform_3, window_bounds = array<i64: 1, 512>}, {transform_indices = @transform_4, window_bounds = array<i64: 128, 512>}, {transform_indices = @transform_5, window_bounds = array<i64: 1, 512>}, {transform_indices = @transform_6, window_bounds = array<i64: 128, 512>}]} {
    %c0_i32 = arith.constant 0 : i32
    %0 = arith.cmpi eq, %arg1, %c0_i32 : i32
    %1 = arith.extui %0 : i1 to i32
    %c0_i32_0 = arith.constant 0 : i32
    %2 = arith.cmpi ne, %1, %c0_i32_0 : i32
    scf.if %2 {
      %c0_18 = arith.constant 0 : index
      %c0_19 = arith.constant 0 : index
      %31 = vector.load %arg2[%c0_18, %c0_19] : memref<128x128xbf16, #tpu.memory_space<vmem>>, vector<128x128xbf16>
      %32 = arith.extf %31 : vector<128x128xbf16> to vector<128x128xf32>
      %33 = arith.mulf %32, %32 : vector<128x128xf32>
      %cst_20 = arith.constant dense<0.000000e+00> : vector<128xf32>
      %34 = vector.multi_reduction <add>, %33, %cst_20 [1] : vector<128x128xf32> to vector<128xf32>
      %35 = vector.shape_cast %34 : vector<128xf32> to vector<128x1xf32>
      %cst_21 = arith.constant 1.280000e+02 : f32
      %36 = vector.broadcast %cst_21 : f32 to vector<128x1xf32>
      %37 = arith.divf %35, %36 : vector<128x1xf32>
      %cst_22 = arith.constant 9.99999974E-6 : f32
      %38 = vector.broadcast %cst_22 : f32 to vector<128x1xf32>
      %39 = arith.addf %37, %38 : vector<128x1xf32>
      %40 = math.rsqrt %39 : vector<128x1xf32>
      %c0_23 = arith.constant 0 : index
      %c0_24 = arith.constant 0 : index
      %41 = vector.load %arg9[%c0_23, %c0_24] : memref<128x1xf32, #tpu.memory_space<vmem>>, vector<128x1xf32>
      tpu.vector_store %arg9[%c0_23, %c0_24], %40 {strides = array<i32>} : memref<128x1xf32, #tpu.memory_space<vmem>>, vector<128x1xf32>,
    } else {
    }
    %c0 = arith.constant 0 : index
    %c0_1 = arith.constant 0 : index
    %3 = vector.load %arg2[%c0, %c0_1] : memref<128x128xbf16, #tpu.memory_space<vmem>>, vector<128x128xbf16>
    %4 = arith.extf %3 : vector<128x128xbf16> to vector<128x128xf32>
    %c0_2 = arith.constant 0 : index
    %c0_3 = arith.constant 0 : index
    %5 = vector.load %arg9[%c0_2, %c0_3] : memref<128x1xf32, #tpu.memory_space<vmem>>, vector<128x1xf32>
    %6 = vector.broadcast %5 : vector<128x1xf32> to vector<128x128xf32>
    %7 = arith.mulf %4, %6 : vector<128x128xf32>
    %c0_4 = arith.constant 0 : index
    %c0_5 = arith.constant 0 : index
    %8 = vector.load %arg3[%c0_4, %c0_5] : memref<1x128xf32, #tpu.memory_space<vmem>>, vector<1x128xf32>
    %9 = vector.broadcast %8 : vector<1x128xf32> to vector<128x128xf32>
    %10 = arith.mulf %7, %9 : vector<128x128xf32>
    %11 = arith.truncf %10 : vector<128x128xf32> to vector<128x128xbf16>
    %c0_6 = arith.constant 0 : index
    %c0_7 = arith.constant 0 : index
    %12 = vector.load %arg4[%c0_6, %c0_7] : memref<128x512xbf16, #tpu.memory_space<vmem>>, vector<128x512xbf16>
    %cst = arith.constant dense<0.000000e+00> : vector<128x512xf32>
    %13 = tpu.matmul %11, %12, %cst {dimension_numbers = #tpu.dot_dimension_numbers<[1], [0], [0], [1], [0, 0, 1, 1], [], []>} : vector<128x128xbf16>, vector<128x512xbf16>, vector<128x512xf32> -> vector<128x512xf32>
    %c0_8 = arith.constant 0 : index
    %c0_9 = arith.constant 0 : index
    %14 = vector.load %arg5[%c0_8, %c0_9] : memref<1x512xf32, #tpu.memory_space<vmem>>, vector<1x512xf32>
    %15 = vector.broadcast %14 : vector<1x512xf32> to vector<128x512xf32>
    %16 = arith.addf %13, %15 : vector<128x512xf32>
    %c0_10 = arith.constant 0 : index
    %c0_11 = arith.constant 0 : index
    %17 = vector.load %arg6[%c0_10, %c0_11] : memref<128x512xbf16, #tpu.memory_space<vmem>>, vector<128x512xbf16>
    %cst_12 = arith.constant dense<0.000000e+00> : vector<128x512xf32>
    %18 = tpu.matmul %11, %17, %cst_12 {dimension_numbers = #tpu.dot_dimension_numbers<[1], [0], [0], [1], [0, 0, 1, 1], [], []>} : vector<128x128xbf16>, vector<128x512xbf16>, vector<128x512xf32> -> vector<128x512xf32>
    %c0_13 = arith.constant 0 : index
    %c0_14 = arith.constant 0 : index
    %19 = vector.load %arg7[%c0_13, %c0_14] : memref<1x512xf32, #tpu.memory_space<vmem>>, vector<1x512xf32>
    %20 = vector.broadcast %19 : vector<1x512xf32> to vector<128x512xf32>
    %21 = arith.addf %18, %20 : vector<128x512xf32>
    %22 = arith.negf %16 : vector<128x512xf32>
    %23 = math.exp %22 : vector<128x512xf32>
    %cst_15 = arith.constant 1.000000e+00 : f32
    %24 = vector.broadcast %cst_15 : f32 to vector<128x512xf32>
    %25 = arith.addf %24, %23 : vector<128x512xf32>
    %26 = arith.divf %24, %25 : vector<128x512xf32>
    %27 = arith.mulf %16, %26 : vector<128x512xf32>
    %28 = arith.mulf %27, %21 : vector<128x512xf32>
    %29 = arith.truncf %28 : vector<128x512xf32> to vector<128x512xbf16>
    %c0_16 = arith.constant 0 : index
    %c0_17 = arith.constant 0 : index
    %30 = vector.load %arg8[%c0_16, %c0_17] : memref<128x512xbf16, #tpu.memory_space<vmem>>, vector<128x512xbf16>
    tpu.vector_store %arg8[%c0_16, %c0_17], %29 {strides = array<i32>} : memref<128x512xbf16, #tpu.memory_space<vmem>>, vector<128x512xbf16>,
    return
  }
  func.func @transform_0(%arg0: i32, %arg1: i32) -> (i32, i32) {
    %c0_i32 = arith.constant 0 : i32
    %c0_i32_0 = arith.constant 0 : i32
    return %arg0, %c0_i32 : i32, i32
  }
  func.func @transform_1(%arg0: i32, %arg1: i32) -> (i32, i32) {
    %c0_i32 = arith.constant 0 : i32
    %c0_i32_0 = arith.constant 0 : i32
    %c0_i32_1 = arith.constant 0 : i32
    return %c0_i32, %c0_i32_0 : i32, i32
  }
  func.func @transform_2(%arg0: i32, %arg1: i32) -> (i32, i32) {
    %c0_i32 = arith.constant 0 : i32
    %c0_i32_0 = arith.constant 0 : i32
    return %c0_i32, %arg1 : i32, i32
  }
  func.func @transform_3(%arg0: i32, %arg1: i32) -> (i32, i32) {
    %c0_i32 = arith.constant 0 : i32
    %c0_i32_0 = arith.constant 0 : i32
    return %c0_i32, %arg1 : i32, i32
  }
  func.func @transform_4(%arg0: i32, %arg1: i32) -> (i32, i32) {
    %c0_i32 = arith.constant 0 : i32
    %c0_i32_0 = arith.constant 0 : i32
    return %c0_i32, %arg1 : i32, i32
  }
  func.func @transform_5(%arg0: i32, %arg1: i32) -> (i32, i32) {
    %c0_i32 = arith.constant 0 : i32
    %c0_i32_0 = arith.constant 0 : i32
    return %c0_i32, %arg1 : i32, i32
  }
  func.func @transform_6(%arg0: i32, %arg1: i32) -> (i32, i32) {
    %c0_i32 = arith.constant 0 : i32
    return %arg0, %arg1 : i32, i32
  }
}

module attributes {stable_mosaic.version = 11 : i64} {
  func.func @_matmul_bias_residual_kernel(%arg0: i32, %arg1: i32, %arg2: memref<128x512xbf16, #tpu.memory_space<vmem>>, %arg3: memref<512x128xbf16, #tpu.memory_space<vmem>>, %arg4: memref<1x128xf32, #tpu.memory_space<vmem>>, %arg5: memref<128x128xbf16, #tpu.memory_space<vmem>>, %arg6: memref<128x128xbf16, #tpu.memory_space<vmem>>) attributes {dimension_semantics = [#tpu.dimension_semantics<parallel>, #tpu.dimension_semantics<parallel>], iteration_bounds = array<i64: 1, 1>, scalar_prefetch = 0 : i64, scratch_operands = 0 : i64, tpu.core_type = #tpu.core_type<tc>, window_params = [{transform_indices = @transform_0, window_bounds = array<i64: 128, 512>}, {transform_indices = @transform_1, window_bounds = array<i64: 512, 128>}, {transform_indices = @transform_2, window_bounds = array<i64: 1, 128>}, {transform_indices = @transform_3, window_bounds = array<i64: 128, 128>}, {transform_indices = @transform_4, window_bounds = array<i64: 128, 128>}]} {
    %c0 = arith.constant 0 : index
    %c0_0 = arith.constant 0 : index
    %0 = vector.load %arg2[%c0, %c0_0] : memref<128x512xbf16, #tpu.memory_space<vmem>>, vector<128x512xbf16>
    %c0_1 = arith.constant 0 : index
    %c0_2 = arith.constant 0 : index
    %1 = vector.load %arg3[%c0_1, %c0_2] : memref<512x128xbf16, #tpu.memory_space<vmem>>, vector<512x128xbf16>
    %cst = arith.constant dense<0.000000e+00> : vector<128x128xf32>
    %2 = tpu.matmul %0, %1, %cst {dimension_numbers = #tpu.dot_dimension_numbers<[1], [0], [0], [1], [0, 0, 1, 1], [], []>} : vector<128x512xbf16>, vector<512x128xbf16>, vector<128x128xf32> -> vector<128x128xf32>
    %c0_3 = arith.constant 0 : index
    %c0_4 = arith.constant 0 : index
    %3 = vector.load %arg4[%c0_3, %c0_4] : memref<1x128xf32, #tpu.memory_space<vmem>>, vector<1x128xf32>
    %4 = vector.broadcast %3 : vector<1x128xf32> to vector<128x128xf32>
    %5 = arith.addf %2, %4 : vector<128x128xf32>
    %c0_5 = arith.constant 0 : index
    %c0_6 = arith.constant 0 : index
    %6 = vector.load %arg5[%c0_5, %c0_6] : memref<128x128xbf16, #tpu.memory_space<vmem>>, vector<128x128xbf16>
    %7 = arith.extf %6 : vector<128x128xbf16> to vector<128x128xf32>
    %8 = arith.addf %5, %7 : vector<128x128xf32>
    %9 = arith.truncf %8 : vector<128x128xf32> to vector<128x128xbf16>
    %c0_7 = arith.constant 0 : index
    %c0_8 = arith.constant 0 : index
    %10 = vector.load %arg6[%c0_7, %c0_8] : memref<128x128xbf16, #tpu.memory_space<vmem>>, vector<128x128xbf16>
    tpu.vector_store %arg6[%c0_7, %c0_8], %9 {strides = array<i32>} : memref<128x128xbf16, #tpu.memory_space<vmem>>, vector<128x128xbf16>,
    return
  }
  func.func @transform_0(%arg0: i32, %arg1: i32) -> (i32, i32) {
    %c0_i32 = arith.constant 0 : i32
    %c0_i32_0 = arith.constant 0 : i32
    return %arg0, %c0_i32 : i32, i32
  }
  func.func @transform_1(%arg0: i32, %arg1: i32) -> (i32, i32) {
    %c0_i32 = arith.constant 0 : i32
    %c0_i32_0 = arith.constant 0 : i32
    return %c0_i32, %arg1 : i32, i32
  }
  func.func @transform_2(%arg0: i32, %arg1: i32) -> (i32, i32) {
    %c0_i32 = arith.constant 0 : i32
    %c0_i32_0 = arith.constant 0 : i32
    return %c0_i32, %arg1 : i32, i32
  }
  func.func @transform_3(%arg0: i32, %arg1: i32) -> (i32, i32) {
    %c0_i32 = arith.constant 0 : i32
    return %arg0, %arg1 : i32, i32
  }
  func.func @transform_4(%arg0: i32, %arg1: i32) -> (i32, i32) {
    %c0_i32 = arith.constant 0 : i32
    return %arg0, %arg1 : i32, i32
  }
}

module attributes {stable_mosaic.version = 11 : i64} {
  func.func @_rmsnorm_kernel(%arg0: i32, %arg1: memref<128x128xbf16, #tpu.memory_space<vmem>>, %arg2: memref<1x128xf32, #tpu.memory_space<vmem>>, %arg3: memref<128x128xf32, #tpu.memory_space<vmem>>) attributes {dimension_semantics = [#tpu.dimension_semantics<parallel>], iteration_bounds = array<i64: 1>, scalar_prefetch = 0 : i64, scratch_operands = 0 : i64, tpu.core_type = #tpu.core_type<tc>, window_params = [{transform_indices = @transform_0, window_bounds = array<i64: 128, 128>}, {pipeline_mode = #tpu.pipeline_mode<synchronous>, transform_indices = @transform_1, window_bounds = array<i64: 1, 128>}, {transform_indices = @transform_2, window_bounds = array<i64: 128, 128>}]} {
    %c0 = arith.constant 0 : index
    %c0_0 = arith.constant 0 : index
    %0 = vector.load %arg1[%c0, %c0_0] : memref<128x128xbf16, #tpu.memory_space<vmem>>, vector<128x128xbf16>
    %1 = arith.extf %0 : vector<128x128xbf16> to vector<128x128xf32>
    %2 = arith.mulf %1, %1 : vector<128x128xf32>
    %cst = arith.constant dense<0.000000e+00> : vector<128xf32>
    %3 = vector.multi_reduction <add>, %2, %cst [1] : vector<128x128xf32> to vector<128xf32>
    %4 = vector.shape_cast %3 : vector<128xf32> to vector<128x1xf32>
    %cst_1 = arith.constant 1.280000e+02 : f32
    %5 = vector.broadcast %cst_1 : f32 to vector<128x1xf32>
    %6 = arith.divf %4, %5 : vector<128x1xf32>
    %cst_2 = arith.constant 9.99999974E-6 : f32
    %7 = vector.broadcast %cst_2 : f32 to vector<128x1xf32>
    %8 = arith.addf %6, %7 : vector<128x1xf32>
    %9 = math.rsqrt %8 : vector<128x1xf32>
    %10 = vector.broadcast %9 : vector<128x1xf32> to vector<128x128xf32>
    %11 = arith.mulf %1, %10 : vector<128x128xf32>
    %c0_3 = arith.constant 0 : index
    %c0_4 = arith.constant 0 : index
    %12 = vector.load %arg2[%c0_3, %c0_4] : memref<1x128xf32, #tpu.memory_space<vmem>>, vector<1x128xf32>
    %13 = vector.broadcast %12 : vector<1x128xf32> to vector<128x128xf32>
    %14 = arith.mulf %11, %13 : vector<128x128xf32>
    %c0_5 = arith.constant 0 : index
    %c0_6 = arith.constant 0 : index
    %15 = vector.load %arg3[%c0_5, %c0_6] : memref<128x128xf32, #tpu.memory_space<vmem>>, vector<128x128xf32>
    tpu.vector_store %arg3[%c0_5, %c0_6], %14 {strides = array<i32>} : memref<128x128xf32, #tpu.memory_space<vmem>>, vector<128x128xf32>,
    return
  }
  func.func @transform_0(%arg0: i32) -> (i32, i32) {
    %c0_i32 = arith.constant 0 : i32
    %c0_i32_0 = arith.constant 0 : i32
    return %arg0, %c0_i32 : i32, i32
  }
  func.func @transform_1(%arg0: i32) -> (i32, i32) {
    %c0_i32 = arith.constant 0 : i32
    %c0_i32_0 = arith.constant 0 : i32
    %c0_i32_1 = arith.constant 0 : i32
    return %c0_i32, %c0_i32_0 : i32, i32
  }
  func.func @transform_2(%arg0: i32) -> (i32, i32) {
    %c0_i32 = arith.constant 0 : i32
    %c0_i32_0 = arith.constant 0 : i32
    return %arg0, %c0_i32 : i32, i32
  }
}

</mosaic_0001>

<llo_original>
// kernel: masked_encoder_forward.12
$region0: #{masked_encoder_forward.12}
  #allocation0 [shape = 'u32[]', space=smem, size = 0x4, offset = 0x4, fixed_abs, tag = 'smem constant byte address 0x4 - core index']
  #allocation1 [shape = 'u32[144,128]{1,0:T(1,128)}', space=vmem, size = 0x12000, scoped, tag = 'internal scratch']
  %s0 = inlined_call_operand.hbm [shape: f32[2,64,256], index: 0, kind: input, shape index: {}]
  %s1 = inlined_call_operand.hbm [shape: bf16[256,128], index: 1, kind: input, shape index: {}]
  %s2 = inlined_call_operand.hbm [shape: f32[1,128], index: 2, kind: input, shape index: {}]
  %s3 = inlined_call_operand.hbm [shape: f32[64,128], index: 3, kind: input, shape index: {}]
  %s4 = inlined_call_operand.hbm [shape: bf16[2,64,128], index: 4, kind: output, shape index: {}]
  %s5 = sld [smem:[#allocation0]]
  $region65: #{masked_encoder_forward.12} parent=0
    _
  %s7 = ssub.s32 1, %s5
  %s8 = scalar_select 0, %s7, %s5
  $region1: #{masked_encoder_forward.12} parent=0
    #allocation2 [shape = 'u8[131072]{0}', space=vmem, size = 0x20000, scoped, tag = 'input window, operand 0']
    #allocation3 [shape = 's32[2]{0}', space=sflag, size = 0x8, scoped, tag = 'scoped memory for masked_encoder_forward.12']
    #allocation4 [shape = 's32[2]{0}', space=sflag, size = 0x8, scoped, tag = 'scoped memory for masked_encoder_forward.12']
    #allocation5 [shape = 'u8[65536]{0}', space=vmem, size = 0x10000, scoped, tag = 'input window, operand 1, single buffered']
    #allocation6 [shape = 's32[1]{0}', space=sflag, size = 0x4, scoped, tag = 'scoped memory for masked_encoder_forward.12']
    #allocation7 [shape = 'u8[512]{0}', space=vmem, size = 0x400, scoped, tag = 'input window, operand 2, single buffered']
    #allocation8 [shape = 'u8[32768]{0}', space=vmem, size = 0x8000, scoped, tag = 'input window, operand 3, single buffered']
    #allocation9 [shape = 's32[1]{0}', space=sflag, size = 0x4, scoped, tag = 'scoped memory for masked_encoder_forward.12']
    #allocation10 [shape = 'u8[32768]{0}', space=vmem, size = 0x8000, scoped, tag = 'output window, operand 0']
    %9 = vsyncpa [#allocation3], 0
    %s10 = scalar_lea.sflag [#allocation3], 1
    %11 = vsyncpa %s10, 0
    %12 = vsyncpa [#allocation6], 0
    %13 = vsyncpa [#allocation9], 0
    %14 = vsyncpa [#allocation4], 0
    %s15 = scalar_lea.sflag [#allocation4], 1
    %16 = vsyncpa %s15, 0
    loop: start=0, step=1, limit=4
    $region2: #{masked_encoder_forward.12} parent=1 // loop_pre_header
      _
    $region3: #{masked_encoder_forward.12} parent=1 // loop_header
      %s18 = sphi 0, %s22
      %p19 = scmp.ge.s32.totalorder %s18, 4
      %s25 = sphi 0, %s44
      %s26 = sphi 0, %s40
      %s27 = sphi 0, %s36
      %s28 = sphi 0, %s25
      %s29 = sphi 0, %s26
      %s30 = sphi 0, %s27
      %s31 = sphi 0, %s28
      %s32 = sphi 0, %s29
      %s33 = sphi 0, %s30
      %s49 = sphi 0, %s51
      %s52 = sphi 0, %s49
      %s53 = sphi 0, %s52
      %s69 = sphi 0, %s53
      %s75 = sphi 0, %s77
      %s78 = sphi 0, %s75
      %s79 = sphi 0, %s78
      %s95 = sphi 0, %s79
      %s101 = sphi 0, %s103
      %s104 = sphi 0, %s101
      %s105 = sphi 0, %s104
      %s121 = sphi 0, %s105
      %s129 = sphi 0, %s131
      %s132 = sphi 0, %s129
      %s133 = sphi 0, %s132
      %s149 = sphi 0, %s133
      %s159 = sphi 0, %s161
      %s162 = sphi 0, %s159
      %s163 = sphi 0, %s162
      %s179 = sphi 0, %s163
    $region4: #{masked_encoder_forward.12} parent=1 // loop_header_branch
      %21 = sbr.rel (%p19) target = $region8
    $region5: #{masked_encoder_forward.12} parent=1 // loop_body
      %s23 = ssub.s32 %s18, 1
      %s24 = ssub.s32 %s18, 2
      %s34 = sadd.s32 1, %s27
      %p35 = scmp.ge.s32.totalorder %s34, 1
      %s36 = scalar_select %p35, 0, %s34
      %s37 = sadd.s32 1, %s26
      %s38 = scalar_select %p35, %s37, %s26
      %p39 = scmp.ge.s32.totalorder %s38, 1
      %s40 = scalar_select %p39, 0, %s38
      %s41 = sadd.s32 1, %s25
      %s42 = scalar_select %p39, %s41, %s25
      %p43 = scmp.ge.s32.totalorder %s42, 2
      %s44 = scalar_select %p43, 0, %s42
      %s45 = ssub.s32 %s25, %s44
      %s46 = ssub.s32 %s26, %s40
      %s47 = sor.u32 %s45, %s46
      %p48 = scmp.eq.s32.totalorder %s47, 0
      %s50 = sadd.s32 %s49, 1
      %s51 = scalar_select %p48, %s49, %s50
      %p54 = pneg %p48
      %p55 = scmp.eq.s32.totalorder %s18, 1
      %p56 = por %p54, %p55
      %p57 = scmp.ne.s32.totalorder %s49, %s52
      %p58 = scmp.eq.s32.totalorder %s18, 0
      %p59 = por %p57, %p58
      %p60 = scmp.ne.s32.totalorder %s49, %s52
      %p61 = scmp.eq.s32.totalorder %s23, 1
      %p62 = por %p60, %p61
      %p63 = scmp.ne.s32.totalorder %s52, %s53
      %p64 = scmp.eq.s32.totalorder %s23, 0
      %p65 = por %p63, %p64
      %p66 = scmp.ne.s32.totalorder %s52, %s53
      %p67 = scmp.eq.s32.totalorder %s24, 1
      %p68 = por %p66, %p67
      %p70 = scmp.ne.s32.totalorder %s53, %s69
      %p71 = scmp.eq.s32.totalorder %s24, 0
      %p72 = por %p70, %p71
      %s73 = ssub.s32 %s27, %s36
      %p74 = scmp.eq.s32.totalorder %s73, 0
      %s76 = sadd.s32 %s75, 1
      %s77 = scalar_select %p74, %s75, %s76
      %p80 = pneg %p74
      %p81 = scmp.eq.s32.totalorder %s18, 1
      %p82 = por %p80, %p81
      %p83 = scmp.ne.s32.totalorder %s75, %s78
      %p84 = scmp.eq.s32.totalorder %s18, 0
      %p85 = por %p83, %p84
      %p86 = scmp.ne.s32.totalorder %s75, %s78
      %p87 = scmp.eq.s32.totalorder %s23, 1
      %p88 = por %p86, %p87
      %p89 = scmp.ne.s32.totalorder %s78, %s79
      %p90 = scmp.eq.s32.totalorder %s23, 0
      %p91 = por %p89, %p90
      %p92 = scmp.ne.s32.totalorder %s78, %s79
      %p93 = scmp.eq.s32.totalorder %s24, 1
      %p94 = por %p92, %p93
      %p96 = scmp.ne.s32.totalorder %s79, %s95
      %p97 = scmp.eq.s32.totalorder %s24, 0
      %p98 = por %p96, %p97
      %s99 = ssub.s32 %s27, %s36
      %p100 = scmp.eq.s32.totalorder %s99, 0
      %s102 = sadd.s32 %s101, 1
      %s103 = scalar_select %p100, %s101, %s102
      %p106 = pneg %p100
      %p107 = scmp.eq.s32.totalorder %s18, 1
      %p108 = por %p106, %p107
      %p109 = scmp.ne.s32.totalorder %s101, %s104
      %p110 = scmp.eq.s32.totalorder %s18, 0
      %p111 = por %p109, %p110
      %p112 = scmp.ne.s32.totalorder %s101, %s104
      %p113 = scmp.eq.s32.totalorder %s23, 1
      %p114 = por %p112, %p113
      %p115 = scmp.ne.s32.totalorder %s104, %s105
      %p116 = scmp.eq.s32.totalorder %s23, 0
      %p117 = por %p115, %p116
      %p118 = scmp.ne.s32.totalorder %s104, %s105
      %p119 = scmp.eq.s32.totalorder %s24, 1
      %p120 = por %p118, %p119
      %p122 = scmp.ne.s32.totalorder %s105, %s121
      %p123 = scmp.eq.s32.totalorder %s24, 0
      %p124 = por %p122, %p123
      %s125 = ssub.s32 %s26, %s40
      %s126 = ssub.s32 %s27, %s36
      %s127 = sor.u32 %s125, %s126
      %p128 = scmp.eq.s32.totalorder %s127, 0
      %s130 = sadd.s32 %s129, 1
      %s131 = scalar_select %p128, %s129, %s130
      %p134 = pneg %p128
      %p135 = scmp.eq.s32.totalorder %s18, 1
      %p136 = por %p134, %p135
      %p137 = scmp.ne.s32.totalorder %s129, %s132
      %p138 = scmp.eq.s32.totalorder %s18, 0
      %p139 = por %p137, %p138
      %p140 = scmp.ne.s32.totalorder %s129, %s132
      %p141 = scmp.eq.s32.totalorder %s23, 1
      %p142 = por %p140, %p141
      %p143 = scmp.ne.s32.totalorder %s132, %s133
      %p144 = scmp.eq.s32.totalorder %s23, 0
      %p145 = por %p143, %p144
      %p146 = scmp.ne.s32.totalorder %s132, %s133
      %p147 = scmp.eq.s32.totalorder %s24, 1
      %p148 = por %p146, %p147
      %p150 = scmp.ne.s32.totalorder %s133, %s149
      %p151 = scmp.eq.s32.totalorder %s24, 0
      %p152 = por %p150, %p151
      %s153 = ssub.s32 %s25, %s44
      %s154 = ssub.s32 %s26, %s40
      %s155 = sor.u32 %s153, %s154
      %s156 = ssub.s32 %s27, %s36
      %s157 = sor.u32 %s155, %s156
      %p158 = scmp.eq.s32.totalorder %s157, 0
      %s160 = sadd.s32 %s159, 1
      %s161 = scalar_select %p158, %s159, %s160
      %p164 = pneg %p158
      %p165 = scmp.eq.s32.totalorder %s18, 1
      %p166 = por %p164, %p165
      %p167 = scmp.ne.s32.totalorder %s159, %s162
      %p168 = scmp.eq.s32.totalorder %s18, 0
      %p169 = por %p167, %p168
      %p170 = scmp.ne.s32.totalorder %s159, %s162
      %p171 = scmp.eq.s32.totalorder %s23, 1
      %p172 = por %p170, %p171
      %p173 = scmp.ne.s32.totalorder %s162, %s163
      %p174 = scmp.eq.s32.totalorder %s23, 0
      %p175 = por %p173, %p174
      %p176 = scmp.ne.s32.totalorder %s162, %s163
      %p177 = scmp.eq.s32.totalorder %s24, 1
      %p178 = por %p176, %p177
      %p180 = scmp.ne.s32.totalorder %s163, %s179
      %p181 = scmp.eq.s32.totalorder %s24, 0
      %p182 = por %p180, %p181
      %p183 = scmp.le.s32.totalorder 1, %s18
      %p184 = scmp.lt.s32.totalorder %s18, 3
      %p185 = pnand %p183, %p184
      %p186 = pneg %p185
      // Predicated region
      $region9: #{masked_encoder_forward.12} parent=5 // pred_check
        _
      $region10: #{masked_encoder_forward.12} parent=5 // pred_check_branch
        %188 = sbr.rel (%p185) target = $region12
      $region11: #{masked_encoder_forward.12} parent=5 // pred_region
        %s189 = ssub.s32 %s18, 1
        // Predicated region
        $region13: #{masked_encoder_forward.12} parent=11 // pred_check
          %p190 = pneg %p91
        $region14: #{masked_encoder_forward.12} parent=11 // pred_check_branch
          %192 = sbr.rel (%p190) target = $region16
        $region15: #{masked_encoder_forward.12} parent=11 // pred_region
          %s194 = ssub.s32 2048, 2048
          %195 = vsyncadd [#allocation6], %s194
          %s196 = smul.addr %s30, 64
          %s197 = scalar_lea.hbm %s1, %s196
          %s198 = sshll.u32 [#allocation5], 4
          %s199 = int_to_ptr.vmem [resolvable:$true] %s198
          %204 = dma.hbm_to_vmem [thread:$0]  %s197, 2048, %s199, [#allocation6], 64, 64, 4
        $region16: #{masked_encoder_forward.12} parent=11 // pred_fallthru
          _
        // Predicated region
        $region17: #{masked_encoder_forward.12} parent=11 // pred_check
          %p205 = pneg %p117
        $region18: #{masked_encoder_forward.12} parent=11 // pred_check_branch
          %207 = sbr.rel (%p205) target = $region20
        $region19: #{masked_encoder_forward.12} parent=11 // pred_region
          %s209 = ssub.s32 16, 16
          %210 = vsyncadd [#allocation6], %s209
          %s211 = smul.addr %s30, 16
          %s212 = scalar_lea.hbm %s2, %s211
          %s214 = sshll.u32 [#allocation7], 4
          %s215 = int_to_ptr.vmem [resolvable:$true] %s214
          %217 = dma.hbm_to_vmem [thread:$0]  %s212, 16, %s215, [#allocation6]
        $region20: #{masked_encoder_forward.12} parent=11 // pred_fallthru
          _
        // Predicated region
        $region21: #{masked_encoder_forward.12} parent=11 // pred_check
          %p218 = pneg %p145
        $region22: #{masked_encoder_forward.12} parent=11 // pred_check_branch
          %220 = sbr.rel (%p218) target = $region24
        $region23: #{masked_encoder_forward.12} parent=11 // pred_region
          %s221 = smul.u32 8, %s29
          %s223 = ssub.s32 1024, 1024
          %224 = vsyncadd [#allocation9], %s223
          %s225 = sadd.s32 %s30, %s221
          %s226 = smul.addr %s225, 128
          %s227 = scalar_lea.hbm %s3, %s226
          %s228 = sshll.u32 [#allocation8], 4
          %s229 = int_to_ptr.vmem [resolvable:$true] %s228
          %234 = dma.hbm_to_vmem [thread:$0]  %s227, 1024, %s229, [#allocation9], 128, 128, 8
        $region24: #{masked_encoder_forward.12} parent=11 // pred_fallthru
          _
      $region12: #{masked_encoder_forward.12} parent=5 // pred_fallthru
        _
      %p235 = scmp.lt.s32.totalorder %s18, 2
      // Predicated region
      $region25: #{masked_encoder_forward.12} parent=5 // pred_check
        %p236 = pneg %p235
      $region26: #{masked_encoder_forward.12} parent=5 // pred_check_branch
        %238 = sbr.rel (%p236) target = $region28
      $region27: #{masked_encoder_forward.12} parent=5 // pred_region
        // Predicated region
        $region29: #{masked_encoder_forward.12} parent=27 // pred_check
          %p239 = pneg %p59
        $region30: #{masked_encoder_forward.12} parent=27 // pred_check_branch
          %241 = sbr.rel (%p239) target = $region32
        $region31: #{masked_encoder_forward.12} parent=27 // pred_region
          %s242 = sand.u32 %s49, 1
          %s243 = scalar_lea.sflag [#allocation3], %s242
          %s244 = sand.u32 %s49, 1
          %s245 = smul.addr %s244, 128
          %s246 = scalar_lea.vmem [#allocation2], %s245
          %s247 = smul.u32 8, %s26
          %s249 = ssub.s32 2048, 2048
          %250 = vsyncadd %s243, %s249
          %s251 = smul.addr %s247, 2
          %s252 = smul.addr %s25, 16
          %s253 = sadd.s32 %s251, %s252
          %s254 = smul.addr %s253, 128
          %s255 = scalar_lea.hbm %s0, %s254
          %s256 = sshll.u32 %s246, 4
          %s257 = int_to_ptr.vmem [resolvable:$true] %s256
          %262 = dma.hbm_to_vmem [thread:$0]  %s255, 2048, %s257, %s243, 256, 256, 16
        $region32: #{masked_encoder_forward.12} parent=27 // pred_fallthru
          _
      $region28: #{masked_encoder_forward.12} parent=5 // pred_fallthru
        _
      %p263 = scmp.le.s32.totalorder 1, %s18
      %p264 = scmp.lt.s32.totalorder %s18, 3
      %p265 = pnand %p263, %p264
      %p266 = pneg %p265
      // Predicated region
      $region33: #{masked_encoder_forward.12} parent=5 // pred_check
        _
      $region34: #{masked_encoder_forward.12} parent=5 // pred_check_branch
        %268 = sbr.rel (%p265) target = $region36
      $region35: #{masked_encoder_forward.12} parent=5 // pred_region
        %s269 = ssub.s32 %s18, 1
        %s270 = sand.u32 %s52, 1
        %s271 = scalar_lea.sflag [#allocation3], %s270
        %s272 = sand.u32 %s52, 1
        %s273 = smul.addr %s272, 128
        %s274 = scalar_lea.vmem [#allocation2], %s273
        // Predicated region
        $region37: #{masked_encoder_forward.12} parent=35 // pred_check
          %p275 = pneg %p65
        $region38: #{masked_encoder_forward.12} parent=35 // pred_check_branch
          %277 = sbr.rel (%p275) target = $region40
        $region39: #{masked_encoder_forward.12} parent=35 // pred_region
          %278 = dma.done %s271, 2048
        $region40: #{masked_encoder_forward.12} parent=35 // pred_fallthru
          _
        // Predicated region
        $region41: #{masked_encoder_forward.12} parent=35 // pred_check
          %p279 = pneg %p91
        $region42: #{masked_encoder_forward.12} parent=35 // pred_check_branch
          %281 = sbr.rel (%p279) target = $region44
        $region43: #{masked_encoder_forward.12} parent=35 // pred_region
          %282 = dma.done [#allocation6], 2048
        $region44: #{masked_encoder_forward.12} parent=35 // pred_fallthru
          _
        // Predicated region
        $region45: #{masked_encoder_forward.12} parent=35 // pred_check
          %p283 = pneg %p117
        $region46: #{masked_encoder_forward.12} parent=35 // pred_check_branch
          %285 = sbr.rel (%p283) target = $region48
        $region47: #{masked_encoder_forward.12} parent=35 // pred_region
          %286 = dma.done [#allocation6], 16
        $region48: #{masked_encoder_forward.12} parent=35 // pred_fallthru
          _
        // Predicated region
        $region49: #{masked_encoder_forward.12} parent=35 // pred_check
          %p287 = pneg %p145
        $region50: #{masked_encoder_forward.12} parent=35 // pred_check_branch
          %289 = sbr.rel (%p287) target = $region52
        $region51: #{masked_encoder_forward.12} parent=35 // pred_region
          %290 = dma.done [#allocation9], 1024
        $region52: #{masked_encoder_forward.12} parent=35 // pred_fallthru
          _
        %s291 = sand.u32 %s52, 1
        %s292 = scalar_lea.sflag [#allocation3], %s291
        %s293 = sand.u32 %s52, 1
        %s294 = smul.addr %s293, 128
        %s295 = scalar_lea.vmem [#allocation2], %s294
        %p296 = pneg %p65
        %p297 = pneg %p62
        %p298 = pneg %p91
        %p299 = pneg %p88
        %p300 = pneg %p117
        %p301 = pneg %p114
        %p302 = pneg %p145
        %p303 = pneg %p142
        %p304 = pneg %p175
        %p305 = pneg %p172
        %s306 = sand.u32 %s162, 1
        %s307 = scalar_lea.sflag [#allocation4], %s306
        %s308 = sand.u32 %s162, 1
        %s309 = smul.addr %s308, 32
        %s310 = scalar_lea.vmem [#allocation10], %s309
        %s311 = smul.u32 8, %s29
        %s312 = smul.u32 8, %s29
        %s313 = smul.u32 8, %s29
        %v315 = vld [vmem:[%s274] sm:$0xff]
        %v316 = vld [vmem:[%s274 + $0x8] sm:$0xff]
        %v317 = vld [vmem:[%s274 + $0x10] sm:$0xff]
        %v318 = vld [vmem:[%s274 + $0x18] sm:$0xff]
        %v319 = vld [vmem:[%s274 + $0x20] sm:$0xff]
        %v320 = vld [vmem:[%s274 + $0x28] sm:$0xff]
        %v321 = vld [vmem:[%s274 + $0x30] sm:$0xff]
        %v322 = vld [vmem:[%s274 + $0x38] sm:$0xff]
        %v323 = vld [vmem:[%s274 + $0x40] sm:$0xff]
        %v324 = vld [vmem:[%s274 + $0x48] sm:$0xff]
        %v325 = vld [vmem:[%s274 + $0x50] sm:$0xff]
        %v326 = vld [vmem:[%s274 + $0x58] sm:$0xff]
        %v327 = vld [vmem:[%s274 + $0x60] sm:$0xff]
        %v328 = vld [vmem:[%s274 + $0x68] sm:$0xff]
        %v329 = vld [vmem:[%s274 + $0x70] sm:$0xff]
        %v330 = vld [vmem:[%s274 + $0x78] sm:$0xff]
        %v331 = vpack.c.bf16 %v317, %v315
        %v332 = vpack.c.bf16 %v318, %v316
        %v333 = vpack.c.bf16 %v321, %v319
        %v334 = vpack.c.bf16 %v322, %v320
        %v335 = vpack.c.bf16 %v325, %v323
        %v336 = vpack.c.bf16 %v326, %v324
        %v337 = vpack.c.bf16 %v329, %v327
        %v338 = vpack.c.bf16 %v330, %v328
        %v339 = vld [vmem:[#allocation5] sm:$0xf]
        %v340 = vld [vmem:[#allocation5 + $0x4] sm:$0xf]
        %v341 = vld [vmem:[#allocation5 + $0x8] sm:$0xf]
        %v342 = vld [vmem:[#allocation5 + $0xc] sm:$0xf]
        %v343 = vld [vmem:[#allocation5 + $0x10] sm:$0xf]
        %v344 = vld [vmem:[#allocation5 + $0x14] sm:$0xf]
        %v345 = vld [vmem:[#allocation5 + $0x18] sm:$0xf]
        %v346 = vld [vmem:[#allocation5 + $0x1c] sm:$0xf]
        %v347 = vld [vmem:[#allocation5 + $0x20] sm:$0xf]
        %v348 = vld [vmem:[#allocation5 + $0x24] sm:$0xf]
        %v349 = vld [vmem:[#allocation5 + $0x28] sm:$0xf]
        %v350 = vld [vmem:[#allocation5 + $0x2c] sm:$0xf]
        %v351 = vld [vmem:[#allocation5 + $0x30] sm:$0xf]
        %v352 = vld [vmem:[#allocation5 + $0x34] sm:$0xf]
        %v353 = vld [vmem:[#allocation5 + $0x38] sm:$0xf]
        %v354 = vld [vmem:[#allocation5 + $0x3c] sm:$0xf]
        %v355 = vld [vmem:[#allocation5 + $0x40] sm:$0xf]
        %v356 = vld [vmem:[#allocation5 + $0x44] sm:$0xf]
        %v357 = vld [vmem:[#allocation5 + $0x48] sm:$0xf]
        %v358 = vld [vmem:[#allocation5 + $0x4c] sm:$0xf]
        %v359 = vld [vmem:[#allocation5 + $0x50] sm:$0xf]
        %v360 = vld [vmem:[#allocation5 + $0x54] sm:$0xf]
        %v361 = vld [vmem:[#allocation5 + $0x58] sm:$0xf]
        %v362 = vld [vmem:[#allocation5 + $0x5c] sm:$0xf]
        %v363 = vld [vmem:[#allocation5 + $0x60] sm:$0xf]
        %v364 = vld [vmem:[#allocation5 + $0x64] sm:$0xf]
        %v365 = vld [vmem:[#allocation5 + $0x68] sm:$0xf]
        %v366 = vld [vmem:[#allocation5 + $0x6c] sm:$0xf]
        %v367 = vld [vmem:[#allocation5 + $0x70] sm:$0xf]
        %v368 = vld [vmem:[#allocation5 + $0x74] sm:$0xf]
        %v369 = vld [vmem:[#allocation5 + $0x78] sm:$0xf]
        %v370 = vld [vmem:[#allocation5 + $0x7c] sm:$0xf]
        %v371 = vld [vmem:[#allocation7] sm:$0x1]
        %v373 = vlaneseq
        %v374 = vshrl.u32 %v373, 7
        %v375 = vsub.s32 0, %v374
        %v376 = vrot.slane %v371, %v375
        %v410 = vunpack.c.l.b16 %v339
        %v411 = vunpack.c.l.b16 %v340
        %v412 = vunpack.c.l.b16 %v341
        %v413 = vunpack.c.l.b16 %v342
        %v414 = vunpack.c.l.b16 %v343
        %v415 = vunpack.c.l.b16 %v344
        %v416 = vunpack.c.l.b16 %v345
        %v417 = vunpack.c.l.b16 %v346
        %v418 = vunpack.c.l.b16 %v347
        %v419 = vunpack.c.l.b16 %v348
        %v420 = vunpack.c.l.b16 %v349
        %v421 = vunpack.c.l.b16 %v350
        %v422 = vunpack.c.l.b16 %v351
        %v423 = vunpack.c.l.b16 %v352
        %v424 = vunpack.c.l.b16 %v353
        %v425 = vunpack.c.l.b16 %v354
        %v426 = vunpack.c.l.b16 %v355
        %v427 = vunpack.c.l.b16 %v356
        %v428 = vunpack.c.l.b16 %v357
        %v429 = vunpack.c.l.b16 %v358
        %v430 = vunpack.c.l.b16 %v359
        %v431 = vunpack.c.l.b16 %v360
        %v432 = vunpack.c.l.b16 %v361
        %v433 = vunpack.c.l.b16 %v362
        %v434 = vunpack.c.l.b16 %v363
        %v435 = vunpack.c.l.b16 %v364
        %v436 = vunpack.c.l.b16 %v365
        %v437 = vunpack.c.l.b16 %v366
        %v438 = vunpack.c.l.b16 %v367
        %v439 = vunpack.c.l.b16 %v368
        %v440 = vunpack.c.l.b16 %v369
        %v441 = vunpack.c.l.b16 %v370
        %v442 = vpack.c.b16 %v411, %v410
        %v443 = vpack.c.b16 %v413, %v412
        %v444 = vpack.c.b16 %v415, %v414
        %v445 = vpack.c.b16 %v417, %v416
        %v446 = vpack.c.b16 %v419, %v418
        %v447 = vpack.c.b16 %v421, %v420
        %v448 = vpack.c.b16 %v423, %v422
        %v449 = vpack.c.b16 %v425, %v424
        %v450 = vpack.c.b16 %v427, %v426
        %v451 = vpack.c.b16 %v429, %v428
        %v452 = vpack.c.b16 %v431, %v430
        %v453 = vpack.c.b16 %v433, %v432
        %v454 = vpack.c.b16 %v435, %v434
        %v455 = vpack.c.b16 %v437, %v436
        %v456 = vpack.c.b16 %v439, %v438
        %v457 = vpack.c.b16 %v441, %v440
        %474 = vmatprep.subr.bf16.mxu0 0
        %475 = vmatpush1.bf16.msra.mxu0 %v442
        %476 = vmatprep.subr.bf16.mxu0 0
        %477 = vmatpush1.bf16.msra.mxu0 %v443
        %478 = vmatprep.subr.bf16.mxu0 0
        %479 = vmatpush1.bf16.msra.mxu0 %v444
        %480 = vmatprep.subr.bf16.mxu0 0
        %481 = vmatpush1.bf16.msra.mxu0 %v445
        %482 = vmatprep.subr.bf16.mxu0 0
        %483 = vmatpush1.bf16.msra.mxu0 %v446
        %484 = vmatprep.subr.bf16.mxu0 0
        %485 = vmatpush1.bf16.msra.mxu0 %v447
        %486 = vmatprep.subr.bf16.mxu0 0
        %487 = vmatpush1.bf16.msra.mxu0 %v448
        %488 = vmatprep.subr.bf16.mxu0 0
        %489 = vmatpush1.bf16.msra.mxu0 %v449
        %490 = vmatprep.subr.bf16.mxu0 0
        %491 = vmatpush1.bf16.msra.mxu0 %v450
        %492 = vmatprep.subr.bf16.mxu0 0
        %493 = vmatpush1.bf16.msra.mxu0 %v451
        %494 = vmatprep.subr.bf16.mxu0 0
        %495 = vmatpush1.bf16.msra.mxu0 %v452
        %496 = vmatprep.subr.bf16.mxu0 0
        %497 = vmatpush1.bf16.msra.mxu0 %v453
        %498 = vmatprep.subr.bf16.mxu0 0
        %499 = vmatpush1.bf16.msra.mxu0 %v454
        %500 = vmatprep.subr.bf16.mxu0 0
        %501 = vmatpush1.bf16.msra.mxu0 %v455
        %502 = vmatprep.subr.bf16.mxu0 0
        %503 = vmatpush1.bf16.msra.mxu0 %v456
        %504 = vmatprep.subr.bf16.mxu0 0
        %505 = vmatpush1.bf16.msra.mxu0 %v457
        %506 = vmatprep.mubr.bf16.mxu0 %v332
        %507 = vmatmul.mubr.bf16.gmra.mrb[0].mxu0 %v331
        %v508 = vpop.f32.mrb[0].mxu0
        %v509 = vadd.f32 %v376, %v508
        %v510 = vpop.f32.mrb[0].mxu0
        %v511 = vpop.f32.mrb[0].mxu0
        %v512 = vadd.f32 %v376, %v511
        %v513 = vpop.f32.mrb[0].mxu0
        %514 = vmatprep.mubr.bf16.mxu0 %v334
        %515 = vmatmul.mubr.bf16.gmra.mrb[0].mxu0 %v333
        %v516 = vpop.f32.mrb[0].mxu0
        %v517 = vadd.f32 %v376, %v516
        %v518 = vpop.f32.mrb[0].mxu0
        %v519 = vpop.f32.mrb[0].mxu0
        %v520 = vadd.f32 %v376, %v519
        %v521 = vpop.f32.mrb[0].mxu0
        %522 = vmatprep.mubr.bf16.mxu0 %v336
        %523 = vmatmul.mubr.bf16.gmra.mrb[0].mxu0 %v335
        %v524 = vpop.f32.mrb[0].mxu0
        %v525 = vadd.f32 %v376, %v524
        %v526 = vpop.f32.mrb[0].mxu0
        %v527 = vpop.f32.mrb[0].mxu0
        %v528 = vadd.f32 %v376, %v527
        %v529 = vpop.f32.mrb[0].mxu0
        %530 = vmatprep.mubr.bf16.mxu0 %v338
        %531 = vmatmul.mubr.bf16.gmra.mrb[0].mxu0 %v337
        %v532 = vpop.f32.mrb[0].mxu0
        %v533 = vadd.f32 %v376, %v532
        %v534 = vpop.f32.mrb[0].mxu0
        %v535 = vpop.f32.mrb[0].mxu0
        %v536 = vadd.f32 %v376, %v535
        %v537 = vpop.f32.mrb[0].mxu0
        %538 = vdwg.mxu0
        %v539 = vld [vmem:[#allocation8] sm:$0xff]
        %v540 = vld [vmem:[#allocation8 + $0x8] sm:$0xff]
        %v541 = vld [vmem:[#allocation8 + $0x10] sm:$0xff]
        %v542 = vld [vmem:[#allocation8 + $0x18] sm:$0xff]
        %v543 = vld [vmem:[#allocation8 + $0x20] sm:$0xff]
        %v544 = vld [vmem:[#allocation8 + $0x28] sm:$0xff]
        %v545 = vld [vmem:[#allocation8 + $0x30] sm:$0xff]
        %v546 = vld [vmem:[#allocation8 + $0x38] sm:$0xff]
        %v547 = vadd.f32 %v509, %v539
        %v548 = vadd.f32 %v512, %v540
        %v549 = vadd.f32 %v517, %v541
        %v550 = vadd.f32 %v520, %v542
        %v551 = vadd.f32 %v525, %v543
        %v552 = vadd.f32 %v528, %v544
        %v553 = vadd.f32 %v533, %v545
        %v554 = vadd.f32 %v536, %v546
        %v555 = vpack.c.bf16 %v548, %v547
        %v556 = vpack.c.bf16 %v550, %v549
        %v557 = vpack.c.bf16 %v552, %v551
        %v558 = vpack.c.bf16 %v554, %v553
        %v563 = vunpack.c.l.b16 %v555
        %v564 = vunpack.c.h.b16 %v555
        %v565 = vunpack.c.l.b16 %v556
        %v566 = vunpack.c.h.b16 %v556
        %v567 = vunpack.c.l.b16 %v557
        %v568 = vunpack.c.h.b16 %v557
        %v569 = vunpack.c.l.b16 %v558
        %v570 = vunpack.c.h.b16 %v558
        %v571 = vpack.c.b16 %v563, %v563
        %v572 = vpack.c.b16 %v564, %v564
        %v573 = vpack.c.b16 %v565, %v565
        %v574 = vpack.c.b16 %v566, %v566
        %v575 = vpack.c.b16 %v567, %v567
        %v576 = vpack.c.b16 %v568, %v568
        %v577 = vpack.c.b16 %v569, %v569
        %v578 = vpack.c.b16 %v570, %v570
        %587 = vst [vmem:[%s310] sm:$0xf] %v571
        %588 = vst [vmem:[%s310 + $0x4] sm:$0xf] %v572
        %589 = vst [vmem:[%s310 + $0x8] sm:$0xf] %v573
        %590 = vst [vmem:[%s310 + $0xc] sm:$0xf] %v574
        %591 = vst [vmem:[%s310 + $0x10] sm:$0xf] %v575
        %592 = vst [vmem:[%s310 + $0x14] sm:$0xf] %v576
        %593 = vst [vmem:[%s310 + $0x18] sm:$0xf] %v577
        %594 = vst [vmem:[%s310 + $0x1c] sm:$0xf] %v578
        %s595 = sand.u32 %s162, 1
        %s596 = scalar_lea.sflag [#allocation4], %s595
        %s597 = sand.u32 %s162, 1
        %s598 = smul.addr %s597, 32
        %s599 = scalar_lea.vmem [#allocation10], %s598
        // Predicated region
        $region53: #{masked_encoder_forward.12} parent=35 // pred_check
          %p600 = pneg %p172
        $region54: #{masked_encoder_forward.12} parent=35 // pred_check_branch
          %602 = sbr.rel (%p600) target = $region56
        $region55: #{masked_encoder_forward.12} parent=35 // pred_region
          %s603 = smul.u32 8, %s29
          %s605 = ssub.s32 512, 512
          %606 = vsyncadd %s596, %s605
          %s607 = sadd.s32 %s30, %s603
          %s608 = smul.addr %s28, 8
          %s609 = sadd.s32 %s607, %s608
          %s610 = smul.addr %s609, 64
          %s611 = scalar_lea.hbm %s4, %s610
          %s612 = sshll.u32 %s599, 4
          %s613 = int_to_ptr.vmem [resolvable:$true] %s612
          %618 = dma.vmem_to_hbm [thread:$0]  %s613, 512, %s611, %s596, 64, 64, 4
        $region56: #{masked_encoder_forward.12} parent=35 // pred_fallthru
          _
      $region36: #{masked_encoder_forward.12} parent=5 // pred_fallthru
        _
      %p619 = scmp.le.s32.totalorder 2, %s18
      // Predicated region
      $region57: #{masked_encoder_forward.12} parent=5 // pred_check
        %p620 = pneg %p619
      $region58: #{masked_encoder_forward.12} parent=5 // pred_check_branch
        %622 = sbr.rel (%p620) target = $region60
      $region59: #{masked_encoder_forward.12} parent=5 // pred_region
        %s623 = ssub.s32 %s18, 2
        // Predicated region
        $region61: #{masked_encoder_forward.12} parent=59 // pred_check
          %p624 = pneg %p178
        $region62: #{masked_encoder_forward.12} parent=59 // pred_check_branch
          %626 = sbr.rel (%p624) target = $region64
        $region63: #{masked_encoder_forward.12} parent=59 // pred_region
          %s627 = sand.u32 %s163, 1
          %s628 = scalar_lea.sflag [#allocation4], %s627
          %s629 = sand.u32 %s163, 1
          %s630 = smul.addr %s629, 32
          %s631 = scalar_lea.vmem [#allocation10], %s630
          %632 = dma.done %s628, 512
        $region64: #{masked_encoder_forward.12} parent=59 // pred_fallthru
          _
      $region60: #{masked_encoder_forward.12} parent=5 // pred_fallthru
        _
    $region6: #{masked_encoder_forward.12} parent=1 // loop_footer
      %s22 = sadd.s32 1, %s18
    $region7: #{masked_encoder_forward.12} parent=1 // loop_footer_branch
      %17 = sbr.rel target = $region3
    $region8: #{masked_encoder_forward.12} parent=1 // loop_exit
      _
    %633 = vsyncpa [#allocation3], 1
    %s634 = scalar_lea.sflag [#allocation3], 1
    %635 = vsyncpa %s634, 1
    %636 = vsyncpa [#allocation6], 1
    %637 = vsyncpa [#allocation9], 1
    %638 = vsyncpa [#allocation4], 1
    %s639 = scalar_lea.sflag [#allocation4], 1
    %640 = vsyncpa %s639, 1

// kernel: masked_encoder_forward.13
$region0: #{masked_encoder_forward.13}
  #allocation0 [shape = 'u32[]', space=smem, size = 0x4, offset = 0x4, fixed_abs, tag = 'smem constant byte address 0x4 - core index']
  #allocation1 [shape = 'u32[144,128]{1,0:T(1,128)}', space=vmem, size = 0x12000, scoped, tag = 'internal scratch']
  #allocation2 [shape = 'f32[128,1]{1,0:T(8,128)}', space=vmem, size = 0x10000, scoped, tag = 'scratch operand']
  %s0 = inlined_call_operand.hbm [shape: bf16[128,128], index: 0, kind: input, shape index: {}]
  %s1 = inlined_call_operand.hbm [shape: f32[1,128], index: 1, kind: input, shape index: {}]
  %s2 = inlined_call_operand.hbm [shape: bf16[128,384], index: 2, kind: input, shape index: {}]
  %s3 = inlined_call_operand.hbm [shape: f32[1,384], index: 3, kind: input, shape index: {}]
  %s4 = inlined_call_operand.hbm [shape: bf16[128,384], index: 4, kind: output, shape index: {}]
  %s5 = sld [smem:[#allocation0]]
  $region46: #{masked_encoder_forward.13} parent=0
    _
  %s7 = ssub.s32 1, %s5
  %s8 = scalar_select 0, %s7, %s5
  $region1: #{masked_encoder_forward.13} parent=0
    #allocation3 [shape = 'u8[32768]{0}', space=vmem, size = 0x8000, scoped, tag = 'input window, operand 0, single buffered']
    #allocation4 [shape = 's32[1]{0}', space=sflag, size = 0x4, scoped, tag = 'scoped memory for masked_encoder_forward.13']
    #allocation5 [shape = 's32[1]{0}', space=sflag, size = 0x4, scoped, tag = 'scoped memory for masked_encoder_forward.13']
    #allocation6 [shape = 'u8[512]{0}', space=vmem, size = 0x400, scoped, tag = 'input window, operand 1, single buffered']
    #allocation7 [shape = 's32[1]{0}', space=sflag, size = 0x4, scoped, tag = 'scoped memory for masked_encoder_forward.13']
    #allocation8 [shape = 'u8[98304]{0}', space=vmem, size = 0x18000, scoped, tag = 'input window, operand 2, single buffered']
    #allocation9 [shape = 'u8[1536]{0}', space=vmem, size = 0x800, scoped, tag = 'input window, operand 3, single buffered']
    #allocation10 [shape = 's32[1]{0}', space=sflag, size = 0x4, scoped, tag = 'scoped memory for masked_encoder_forward.13']
    #allocation11 [shape = 'u8[98304]{0}', space=vmem, size = 0x18000, scoped, tag = 'output window, operand 0, single buffered']
    %9 = vsyncpa [#allocation4], 0
    %10 = vsyncpa [#allocation7], 0
    %11 = vsyncpa [#allocation10], 0
    %12 = vsyncpa [#allocation5], 0
    // Predicated region
    $region2: #{masked_encoder_forward.13} parent=1 // pred_check
      _
    $region3: #{masked_encoder_forward.13} parent=1 // pred_check_branch
      %14 = sbr.rel (0) target = $region5
    $region4: #{masked_encoder_forward.13} parent=1 // pred_region
      %s16 = ssub.s32 1024, 1024
      %17 = vsyncadd [#allocation4], %s16
      %s18 = sshll.u32 [#allocation3], 4
      %s19 = int_to_ptr.vmem [resolvable:$true] %s18
      %24 = dma.hbm_to_vmem [thread:$0]  %s0, 1024, %s19, [#allocation4], 64, 64, 4
    $region5: #{masked_encoder_forward.13} parent=1 // pred_fallthru
      _
    // Predicated region
    $region6: #{masked_encoder_forward.13} parent=1 // pred_check
      _
    $region7: #{masked_encoder_forward.13} parent=1 // pred_check_branch
      %26 = sbr.rel (0) target = $region9
    $region8: #{masked_encoder_forward.13} parent=1 // pred_region
      %s28 = ssub.s32 16, 16
      %29 = vsyncadd [#allocation7], %s28
      %s31 = sshll.u32 [#allocation6], 4
      %s32 = int_to_ptr.vmem [resolvable:$true] %s31
      %34 = dma.hbm_to_vmem [thread:$0]  %s1, 16, %s32, [#allocation7]
    $region9: #{masked_encoder_forward.13} parent=1 // pred_fallthru
      _
    // Predicated region
    $region10: #{masked_encoder_forward.13} parent=1 // pred_check
      _
    $region11: #{masked_encoder_forward.13} parent=1 // pred_check_branch
      %36 = sbr.rel (0) target = $region13
    $region12: #{masked_encoder_forward.13} parent=1 // pred_region
      %s38 = ssub.s32 3072, 3072
      %39 = vsyncadd [#allocation7], %s38
      %s40 = sshll.u32 [#allocation8], 4
      %s41 = int_to_ptr.vmem [resolvable:$true] %s40
      %46 = dma.hbm_to_vmem [thread:$0]  %s2, 3072, %s41, [#allocation7], 192, 192, 12
    $region13: #{masked_encoder_forward.13} parent=1 // pred_fallthru
      _
    // Predicated region
    $region14: #{masked_encoder_forward.13} parent=1 // pred_check
      _
    $region15: #{masked_encoder_forward.13} parent=1 // pred_check_branch
      %48 = sbr.rel (0) target = $region17
    $region16: #{masked_encoder_forward.13} parent=1 // pred_region
      %s50 = ssub.s32 48, 48
      %51 = vsyncadd [#allocation10], %s50
      %s53 = sshll.u32 [#allocation9], 4
      %s54 = int_to_ptr.vmem [resolvable:$true] %s53
      %56 = dma.hbm_to_vmem [thread:$0]  %s3, 48, %s54, [#allocation10]
    $region17: #{masked_encoder_forward.13} parent=1 // pred_fallthru
      _
    // Predicated region
    $region18: #{masked_encoder_forward.13} parent=1 // pred_check
      _
    $region19: #{masked_encoder_forward.13} parent=1 // pred_check_branch
      %58 = sbr.rel (0) target = $region21
    $region20: #{masked_encoder_forward.13} parent=1 // pred_region
      %59 = dma.done [#allocation4], 1024
    $region21: #{masked_encoder_forward.13} parent=1 // pred_fallthru
      _
    // Predicated region
    $region22: #{masked_encoder_forward.13} parent=1 // pred_check
      _
    $region23: #{masked_encoder_forward.13} parent=1 // pred_check_branch
      %61 = sbr.rel (0) target = $region25
    $region24: #{masked_encoder_forward.13} parent=1 // pred_region
      %62 = dma.done [#allocation7], 16
    $region25: #{masked_encoder_forward.13} parent=1 // pred_fallthru
      _
    // Predicated region
    $region26: #{masked_encoder_forward.13} parent=1 // pred_check
      _
    $region27: #{masked_encoder_forward.13} parent=1 // pred_check_branch
      %64 = sbr.rel (0) target = $region29
    $region28: #{masked_encoder_forward.13} parent=1 // pred_region
      %65 = dma.done [#allocation7], 3072
    $region29: #{masked_encoder_forward.13} parent=1 // pred_fallthru
      _
    // Predicated region
    $region30: #{masked_encoder_forward.13} parent=1 // pred_check
      _
    $region31: #{masked_encoder_forward.13} parent=1 // pred_check_branch
      %67 = sbr.rel (0) target = $region33
    $region32: #{masked_encoder_forward.13} parent=1 // pred_region
      %68 = dma.done [#allocation10], 48
    $region33: #{masked_encoder_forward.13} parent=1 // pred_fallthru
      _
    %p70 = scmp.eq.s32.totalorder 0, 0
    // Predicated region
    $region34: #{masked_encoder_forward.13} parent=1 // pred_check
      %p71 = pneg %p70
    $region35: #{masked_encoder_forward.13} parent=1 // pred_check_branch
      %73 = sbr.rel (%p71) target = $region37
    $region36: #{masked_encoder_forward.13} parent=1 // pred_region
      %v74 = vld [vmem:[#allocation3] sm:$0xf]
      %v75 = vld [vmem:[#allocation3 + $0x4] sm:$0xf]
      %v76 = vld [vmem:[#allocation3 + $0x8] sm:$0xf]
      %v77 = vld [vmem:[#allocation3 + $0xc] sm:$0xf]
      %v78 = vld [vmem:[#allocation3 + $0x10] sm:$0xf]
      %v79 = vld [vmem:[#allocation3 + $0x14] sm:$0xf]
      %v80 = vld [vmem:[#allocation3 + $0x18] sm:$0xf]
      %v81 = vld [vmem:[#allocation3 + $0x1c] sm:$0xf]
      %v82 = vld [vmem:[#allocation3 + $0x20] sm:$0xf]
      %v83 = vld [vmem:[#allocation3 + $0x24] sm:$0xf]
      %v84 = vld [vmem:[#allocation3 + $0x28] sm:$0xf]
      %v85 = vld [vmem:[#allocation3 + $0x2c] sm:$0xf]
      %v86 = vld [vmem:[#allocation3 + $0x30] sm:$0xf]
      %v87 = vld [vmem:[#allocation3 + $0x34] sm:$0xf]
      %v88 = vld [vmem:[#allocation3 + $0x38] sm:$0xf]
      %v89 = vld [vmem:[#allocation3 + $0x3c] sm:$0xf]
      %v90 = vunpack.c.l.bf16 %v74
      %v91 = vunpack.c.l.bf16 %v75
      %v92 = vunpack.c.l.bf16 %v76
      %v93 = vunpack.c.l.bf16 %v77
      %v94 = vunpack.c.l.bf16 %v78
      %v95 = vunpack.c.l.bf16 %v79
      %v96 = vunpack.c.l.bf16 %v80
      %v97 = vunpack.c.l.bf16 %v81
      %v98 = vunpack.c.l.bf16 %v82
      %v99 = vunpack.c.l.bf16 %v83
      %v100 = vunpack.c.l.bf16 %v84
      %v101 = vunpack.c.l.bf16 %v85
      %v102 = vunpack.c.l.bf16 %v86
      %v103 = vunpack.c.l.bf16 %v87
      %v104 = vunpack.c.l.bf16 %v88
      %v105 = vunpack.c.l.bf16 %v89
      %v106 = vmul.f32 %v90, %v90
      %v107 = vmul.f32 %v91, %v91
      %v108 = vmul.f32 %v92, %v92
      %v109 = vmul.f32 %v93, %v93
      %v110 = vmul.f32 %v94, %v94
      %v111 = vmul.f32 %v95, %v95
      %v112 = vmul.f32 %v96, %v96
      %v113 = vmul.f32 %v97, %v97
      %v114 = vmul.f32 %v98, %v98
      %v115 = vmul.f32 %v99, %v99
      %v116 = vmul.f32 %v100, %v100
      %v117 = vmul.f32 %v101, %v101
      %v118 = vmul.f32 %v102, %v102
      %v119 = vmul.f32 %v103, %v103
      %v120 = vmul.f32 %v104, %v104
      %v121 = vmul.f32 %v105, %v105
      %122 = vadd.xlane.f32.xlu0 %v106
      %v123 = vpop.xlane.xlu0 %122
      %124 = vadd.xlane.f32.xlu0 %v107
      %v125 = vpop.xlane.xlu0 %124
      %126 = vadd.xlane.f32.xlu0 %v108
      %v127 = vpop.xlane.xlu0 %126
      %128 = vadd.xlane.f32.xlu0 %v109
      %v129 = vpop.xlane.xlu0 %128
      %130 = vadd.xlane.f32.xlu0 %v110
      %v131 = vpop.xlane.xlu0 %130
      %132 = vadd.xlane.f32.xlu0 %v111
      %v133 = vpop.xlane.xlu0 %132
      %134 = vadd.xlane.f32.xlu0 %v112
      %v135 = vpop.xlane.xlu0 %134
      %136 = vadd.xlane.f32.xlu0 %v113
      %v137 = vpop.xlane.xlu0 %136
      %138 = vadd.xlane.f32.xlu0 %v114
      %v139 = vpop.xlane.xlu0 %138
      %140 = vadd.xlane.f32.xlu0 %v115
      %v141 = vpop.xlane.xlu0 %140
      %142 = vadd.xlane.f32.xlu0 %v116
      %v143 = vpop.xlane.xlu0 %142
      %144 = vadd.xlane.f32.xlu0 %v117
      %v145 = vpop.xlane.xlu0 %144
      %146 = vadd.xlane.f32.xlu0 %v118
      %v147 = vpop.xlane.xlu0 %146
      %148 = vadd.xlane.f32.xlu0 %v119
      %v149 = vpop.xlane.xlu0 %148
      %150 = vadd.xlane.f32.xlu0 %v120
      %v151 = vpop.xlane.xlu0 %150
      %152 = vadd.xlane.f32.xlu0 %v121
      %v153 = vpop.xlane.xlu0 %152
      %v154 = vrcp.pop 128.0
      %v155 = vmul.f32 %v123, %v154
      %v156 = vmul.f32 %v125, %v154
      %v157 = vmul.f32 %v127, %v154
      %v158 = vmul.f32 %v129, %v154
      %v159 = vmul.f32 %v131, %v154
      %v160 = vmul.f32 %v133, %v154
      %v161 = vmul.f32 %v135, %v154
      %v162 = vmul.f32 %v137, %v154
      %v163 = vmul.f32 %v139, %v154
      %v164 = vmul.f32 %v141, %v154
      %v165 = vmul.f32 %v143, %v154
      %v166 = vmul.f32 %v145, %v154
      %v167 = vmul.f32 %v147, %v154
      %v168 = vmul.f32 %v149, %v154
      %v169 = vmul.f32 %v151, %v154
      %v170 = vmul.f32 %v153, %v154
      %v171 = vadd.f32 %v155, 1e-05
      %v172 = vadd.f32 %v156, 1e-05
      %v173 = vadd.f32 %v157, 1e-05
      %v174 = vadd.f32 %v158, 1e-05
      %v175 = vadd.f32 %v159, 1e-05
      %v176 = vadd.f32 %v160, 1e-05
      %v177 = vadd.f32 %v161, 1e-05
      %v178 = vadd.f32 %v162, 1e-05
      %v179 = vadd.f32 %v163, 1e-05
      %v180 = vadd.f32 %v164, 1e-05
      %v181 = vadd.f32 %v165, 1e-05
      %v182 = vadd.f32 %v166, 1e-05
      %v183 = vadd.f32 %v167, 1e-05
      %v184 = vadd.f32 %v168, 1e-05
      %v185 = vadd.f32 %v169, 1e-05
      %v186 = vadd.f32 %v170, 1e-05
      %v187 = vrsqrt.pop %v171
      %v188 = vrsqrt.pop %v172
      %v189 = vrsqrt.pop %v173
      %v190 = vrsqrt.pop %v174
      %v191 = vrsqrt.pop %v175
      %v192 = vrsqrt.pop %v176
      %v193 = vrsqrt.pop %v177
      %v194 = vrsqrt.pop %v178
      %v195 = vrsqrt.pop %v179
      %v196 = vrsqrt.pop %v180
      %v197 = vrsqrt.pop %v181
      %v198 = vrsqrt.pop %v182
      %v199 = vrsqrt.pop %v183
      %v200 = vrsqrt.pop %v184
      %v201 = vrsqrt.pop %v185
      %v202 = vrsqrt.pop %v186
      %vm203 = vcmask 7168
      %204 = vst.msk [vmem:[#allocation2] sm:$0xff] %vm203, %v187
      %205 = vst.msk [vmem:[#allocation2 + $0x8] sm:$0xff] %vm203, %v188
      %206 = vst.msk [vmem:[#allocation2 + $0x10] sm:$0xff] %vm203, %v189
      %207 = vst.msk [vmem:[#allocation2 + $0x18] sm:$0xff] %vm203, %v190
      %208 = vst.msk [vmem:[#allocation2 + $0x20] sm:$0xff] %vm203, %v191
      %209 = vst.msk [vmem:[#allocation2 + $0x28] sm:$0xff] %vm203, %v192
      %210 = vst.msk [vmem:[#allocation2 + $0x30] sm:$0xff] %vm203, %v193
      %211 = vst.msk [vmem:[#allocation2 + $0x38] sm:$0xff] %vm203, %v194
      %212 = vst.msk [vmem:[#allocation2 + $0x40] sm:$0xff] %vm203, %v195
      %213 = vst.msk [vmem:[#allocation2 + $0x48] sm:$0xff] %vm203, %v196
      %214 = vst.msk [vmem:[#allocation2 + $0x50] sm:$0xff] %vm203, %v197
      %215 = vst.msk [vmem:[#allocation2 + $0x58] sm:$0xff] %vm203, %v198
      %216 = vst.msk [vmem:[#allocation2 + $0x60] sm:$0xff] %vm203, %v199
      %217 = vst.msk [vmem:[#allocation2 + $0x68] sm:$0xff] %vm203, %v200
      %218 = vst.msk [vmem:[#allocation2 + $0x70] sm:$0xff] %vm203, %v201
      %219 = vst.msk [vmem:[#allocation2 + $0x78] sm:$0xff] %vm203, %v202
    $region37: #{masked_encoder_forward.13} parent=1 // pred_fallthru
      _
    %v220 = vld [vmem:[#allocation3] sm:$0xf]
    %v221 = vld [vmem:[#allocation3 + $0x4] sm:$0xf]
    %v222 = vld [vmem:[#allocation3 + $0x8] sm:$0xf]
    %v223 = vld [vmem:[#allocation3 + $0xc] sm:$0xf]
    %v224 = vld [vmem:[#allocation3 + $0x10] sm:$0xf]
    %v225 = vld [vmem:[#allocation3 + $0x14] sm:$0xf]
    %v226 = vld [vmem:[#allocation3 + $0x18] sm:$0xf]
    %v227 = vld [vmem:[#allocation3 + $0x1c] sm:$0xf]
    %v228 = vld [vmem:[#allocation3 + $0x20] sm:$0xf]
    %v229 = vld [vmem:[#allocation3 + $0x24] sm:$0xf]
    %v230 = vld [vmem:[#allocation3 + $0x28] sm:$0xf]
    %v231 = vld [vmem:[#allocation3 + $0x2c] sm:$0xf]
    %v232 = vld [vmem:[#allocation3 + $0x30] sm:$0xf]
    %v233 = vld [vmem:[#allocation3 + $0x34] sm:$0xf]
    %v234 = vld [vmem:[#allocation3 + $0x38] sm:$0xf]
    %v235 = vld [vmem:[#allocation3 + $0x3c] sm:$0xf]
    %v236 = vunpack.c.l.bf16 %v220
    %v237 = vunpack.c.l.bf16 %v221
    %v238 = vunpack.c.l.bf16 %v222
    %v239 = vunpack.c.l.bf16 %v223
    %v240 = vunpack.c.l.bf16 %v224
    %v241 = vunpack.c.l.bf16 %v225
    %v242 = vunpack.c.l.bf16 %v226
    %v243 = vunpack.c.l.bf16 %v227
    %v244 = vunpack.c.l.bf16 %v228
    %v245 = vunpack.c.l.bf16 %v229
    %v246 = vunpack.c.l.bf16 %v230
    %v247 = vunpack.c.l.bf16 %v231
    %v248 = vunpack.c.l.bf16 %v232
    %v249 = vunpack.c.l.bf16 %v233
    %v250 = vunpack.c.l.bf16 %v234
    %v251 = vunpack.c.l.bf16 %v235
    %v252 = vld [vmem:[#allocation2] sm:$0xff]
    %v253 = vld [vmem:[#allocation2 + $0x8] sm:$0xff]
    %v254 = vld [vmem:[#allocation2 + $0x10] sm:$0xff]
    %v255 = vld [vmem:[#allocation2 + $0x18] sm:$0xff]
    %v256 = vld [vmem:[#allocation2 + $0x20] sm:$0xff]
    %v257 = vld [vmem:[#allocation2 + $0x28] sm:$0xff]
    %v258 = vld [vmem:[#allocation2 + $0x30] sm:$0xff]
    %v259 = vld [vmem:[#allocation2 + $0x38] sm:$0xff]
    %v260 = vld [vmem:[#allocation2 + $0x40] sm:$0xff]
    %v261 = vld [vmem:[#allocation2 + $0x48] sm:$0xff]
    %v262 = vld [vmem:[#allocation2 + $0x50] sm:$0xff]
    %v263 = vld [vmem:[#allocation2 + $0x58] sm:$0xff]
    %v264 = vld [vmem:[#allocation2 + $0x60] sm:$0xff]
    %v265 = vld [vmem:[#allocation2 + $0x68] sm:$0xff]
    %v266 = vld [vmem:[#allocation2 + $0x70] sm:$0xff]
    %v267 = vld [vmem:[#allocation2 + $0x78] sm:$0xff]
    %269 = vset.pattern.permute.xlu0 0
    %270 = vperm.xlu0 %269, %v252
    %v271 = vpop.permute.xlu0 %270
    %274 = vset.pattern.permute.xlu0 0
    %275 = vperm.xlu0 %274, %v253
    %v276 = vpop.permute.xlu0 %275
    %279 = vset.pattern.permute.xlu0 0
    %280 = vperm.xlu0 %279, %v254
    %v281 = vpop.permute.xlu0 %280
    %284 = vset.pattern.permute.xlu0 0
    %285 = vperm.xlu0 %284, %v255
    %v286 = vpop.permute.xlu0 %285
    %289 = vset.pattern.permute.xlu0 0
    %290 = vperm.xlu0 %289, %v256
    %v291 = vpop.permute.xlu0 %290
    %294 = vset.pattern.permute.xlu0 0
    %295 = vperm.xlu0 %294, %v257
    %v296 = vpop.permute.xlu0 %295
    %299 = vset.pattern.permute.xlu0 0
    %300 = vperm.xlu0 %299, %v258
    %v301 = vpop.permute.xlu0 %300
    %304 = vset.pattern.permute.xlu0 0
    %305 = vperm.xlu0 %304, %v259
    %v306 = vpop.permute.xlu0 %305
    %309 = vset.pattern.permute.xlu0 0
    %310 = vperm.xlu0 %309, %v260
    %v311 = vpop.permute.xlu0 %310
    %314 = vset.pattern.permute.xlu0 0
    %315 = vperm.xlu0 %314, %v261
    %v316 = vpop.permute.xlu0 %315
    %319 = vset.pattern.permute.xlu0 0
    %320 = vperm.xlu0 %319, %v262
    %v321 = vpop.permute.xlu0 %320
    %324 = vset.pattern.permute.xlu0 0
    %325 = vperm.xlu0 %324, %v263
    %v326 = vpop.permute.xlu0 %325
    %329 = vset.pattern.permute.xlu0 0
    %330 = vperm.xlu0 %329, %v264
    %v331 = vpop.permute.xlu0 %330
    %334 = vset.pattern.permute.xlu0 0
    %335 = vperm.xlu0 %334, %v265
    %v336 = vpop.permute.xlu0 %335
    %339 = vset.pattern.permute.xlu0 0
    %340 = vperm.xlu0 %339, %v266
    %v341 = vpop.permute.xlu0 %340
    %344 = vset.pattern.permute.xlu0 0
    %345 = vperm.xlu0 %344, %v267
    %v346 = vpop.permute.xlu0 %345
    %v348 = vmul.f32 %v236, %v271
    %v349 = vmul.f32 %v237, %v276
    %v350 = vmul.f32 %v238, %v281
    %v351 = vmul.f32 %v239, %v286
    %v352 = vmul.f32 %v240, %v291
    %v353 = vmul.f32 %v241, %v296
    %v354 = vmul.f32 %v242, %v301
    %v355 = vmul.f32 %v243, %v306
    %v356 = vmul.f32 %v244, %v311
    %v357 = vmul.f32 %v245, %v316
    %v358 = vmul.f32 %v246, %v321
    %v359 = vmul.f32 %v247, %v326
    %v360 = vmul.f32 %v248, %v331
    %v361 = vmul.f32 %v249, %v336
    %v362 = vmul.f32 %v250, %v341
    %v363 = vmul.f32 %v251, %v346
    %v364 = vld [vmem:[#allocation6] sm:$0x1]
    %v366 = vlaneseq
    %v367 = vshrl.u32 %v366, 7
    %v368 = vsub.s32 0, %v367
    %v369 = vrot.slane %v364, %v368
    %v371 = vmul.f32 %v348, %v369
    %v372 = vmul.f32 %v349, %v369
    %v373 = vmul.f32 %v350, %v369
    %v374 = vmul.f32 %v351, %v369
    %v375 = vmul.f32 %v352, %v369
    %v376 = vmul.f32 %v353, %v369
    %v377 = vmul.f32 %v354, %v369
    %v378 = vmul.f32 %v355, %v369
    %v379 = vmul.f32 %v356, %v369
    %v380 = vmul.f32 %v357, %v369
    %v381 = vmul.f32 %v358, %v369
    %v382 = vmul.f32 %v359, %v369
    %v383 = vmul.f32 %v360, %v369
    %v384 = vmul.f32 %v361, %v369
    %v385 = vmul.f32 %v362, %v369
    %v386 = vmul.f32 %v363, %v369
    %v387 = vpack.c.bf16 %v372, %v371
    %v388 = vpack.c.bf16 %v374, %v373
    %v389 = vpack.c.bf16 %v376, %v375
    %v390 = vpack.c.bf16 %v378, %v377
    %v391 = vpack.c.bf16 %v380, %v379
    %v392 = vpack.c.bf16 %v382, %v381
    %v393 = vpack.c.bf16 %v384, %v383
    %v394 = vpack.c.bf16 %v386, %v385
    %v395 = vld [vmem:[#allocation8] sm:$0xff]
    %v396 = vld [vmem:[#allocation8 + $0x8] sm:$0xf]
    %v397 = vld [vmem:[#allocation8 + $0xc] sm:$0xff]
    %v398 = vld [vmem:[#allocation8 + $0x14] sm:$0xf]
    %v399 = vld [vmem:[#allocation8 + $0x18] sm:$0xff]
    %v400 = vld [vmem:[#allocation8 + $0x20] sm:$0xf]
    %v401 = vld [vmem:[#allocation8 + $0x24] sm:$0xff]
    %v402 = vld [vmem:[#allocation8 + $0x2c] sm:$0xf]
    %v403 = vld [vmem:[#allocation8 + $0x30] sm:$0xff]
    %v404 = vld [vmem:[#allocation8 + $0x38] sm:$0xf]
    %v405 = vld [vmem:[#allocation8 + $0x3c] sm:$0xff]
    %v406 = vld [vmem:[#allocation8 + $0x44] sm:$0xf]
    %v407 = vld [vmem:[#allocation8 + $0x48] sm:$0xff]
    %v408 = vld [vmem:[#allocation8 + $0x50] sm:$0xf]
    %v409 = vld [vmem:[#allocation8 + $0x54] sm:$0xff]
    %v410 = vld [vmem:[#allocation8 + $0x5c] sm:$0xf]
    %v411 = vld [vmem:[#allocation8 + $0x60] sm:$0xff]
    %v412 = vld [vmem:[#allocation8 + $0x68] sm:$0xf]
    %v413 = vld [vmem:[#allocation8 + $0x6c] sm:$0xff]
    %v414 = vld [vmem:[#allocation8 + $0x74] sm:$0xf]
    %v415 = vld [vmem:[#allocation8 + $0x78] sm:$0xff]
    %v416 = vld [vmem:[#allocation8 + $0x80] sm:$0xf]
    %v417 = vld [vmem:[#allocation8 + $0x84] sm:$0xff]
    %v418 = vld [vmem:[#allocation8 + $0x8c] sm:$0xf]
    %v419 = vld [vmem:[#allocation8 + $0x90] sm:$0xff]
    %v420 = vld [vmem:[#allocation8 + $0x98] sm:$0xf]
    %v421 = vld [vmem:[#allocation8 + $0x9c] sm:$0xff]
    %v422 = vld [vmem:[#allocation8 + $0xa4] sm:$0xf]
    %v423 = vld [vmem:[#allocation8 + $0xa8] sm:$0xff]
    %v424 = vld [vmem:[#allocation8 + $0xb0] sm:$0xf]
    %v425 = vld [vmem:[#allocation8 + $0xb4] sm:$0xff]
    %v426 = vld [vmem:[#allocation8 + $0xbc] sm:$0xf]
    %v427 = vld [vmem:[#allocation9] sm:$0x7]
    %v429 = vlaneseq
    %v430 = vshrl.u32 %v429, 7
    %v431 = vsub.s32 0, %v430
    %v432 = vrot.slane %v427, %v431
    %v433 = vlaneseq
    %v434 = vshrl.u32 %v433, 7
    %v435 = vsub.s32 1, %v434
    %v436 = vrot.slane %v427, %v435
    %v437 = vlaneseq
    %v438 = vshrl.u32 %v437, 7
    %v439 = vsub.s32 2, %v438
    %v440 = vrot.slane %v427, %v439
    %v476 = vunpack.c.l.b16 %v395
    %v477 = vunpack.c.h.b16 %v395
    %v478 = vunpack.c.l.b16 %v396
    %v479 = vunpack.c.l.b16 %v397
    %v480 = vunpack.c.h.b16 %v397
    %v481 = vunpack.c.l.b16 %v398
    %v482 = vunpack.c.l.b16 %v399
    %v483 = vunpack.c.h.b16 %v399
    %v484 = vunpack.c.l.b16 %v400
    %v485 = vunpack.c.l.b16 %v401
    %v486 = vunpack.c.h.b16 %v401
    %v487 = vunpack.c.l.b16 %v402
    %v488 = vunpack.c.l.b16 %v403
    %v489 = vunpack.c.h.b16 %v403
    %v490 = vunpack.c.l.b16 %v404
    %v491 = vunpack.c.l.b16 %v405
    %v492 = vunpack.c.h.b16 %v405
    %v493 = vunpack.c.l.b16 %v406
    %v494 = vunpack.c.l.b16 %v407
    %v495 = vunpack.c.h.b16 %v407
    %v496 = vunpack.c.l.b16 %v408
    %v497 = vunpack.c.l.b16 %v409
    %v498 = vunpack.c.h.b16 %v409
    %v499 = vunpack.c.l.b16 %v410
    %v500 = vunpack.c.l.b16 %v411
    %v501 = vunpack.c.h.b16 %v411
    %v502 = vunpack.c.l.b16 %v412
    %v503 = vunpack.c.l.b16 %v413
    %v504 = vunpack.c.h.b16 %v413
    %v505 = vunpack.c.l.b16 %v414
    %v506 = vunpack.c.l.b16 %v415
    %v507 = vunpack.c.h.b16 %v415
    %v508 = vunpack.c.l.b16 %v416
    %v509 = vunpack.c.l.b16 %v417
    %v510 = vunpack.c.h.b16 %v417
    %v511 = vunpack.c.l.b16 %v418
    %v512 = vunpack.c.l.b16 %v419
    %v513 = vunpack.c.h.b16 %v419
    %v514 = vunpack.c.l.b16 %v420
    %v515 = vunpack.c.l.b16 %v421
    %v516 = vunpack.c.h.b16 %v421
    %v517 = vunpack.c.l.b16 %v422
    %v518 = vunpack.c.l.b16 %v423
    %v519 = vunpack.c.h.b16 %v423
    %v520 = vunpack.c.l.b16 %v424
    %v521 = vunpack.c.l.b16 %v425
    %v522 = vunpack.c.h.b16 %v425
    %v523 = vunpack.c.l.b16 %v426
    %v524 = vpack.c.b16 %v479, %v476
    %v525 = vpack.c.b16 %v480, %v477
    %v526 = vpack.c.b16 %v481, %v478
    %v527 = vpack.c.b16 %v485, %v482
    %v528 = vpack.c.b16 %v486, %v483
    %v529 = vpack.c.b16 %v487, %v484
    %v530 = vpack.c.b16 %v491, %v488
    %v531 = vpack.c.b16 %v492, %v489
    %v532 = vpack.c.b16 %v493, %v490
    %v533 = vpack.c.b16 %v497, %v494
    %v534 = vpack.c.b16 %v498, %v495
    %v535 = vpack.c.b16 %v499, %v496
    %v536 = vpack.c.b16 %v503, %v500
    %v537 = vpack.c.b16 %v504, %v501
    %v538 = vpack.c.b16 %v505, %v502
    %v539 = vpack.c.b16 %v509, %v506
    %v540 = vpack.c.b16 %v510, %v507
    %v541 = vpack.c.b16 %v511, %v508
    %v542 = vpack.c.b16 %v515, %v512
    %v543 = vpack.c.b16 %v516, %v513
    %v544 = vpack.c.b16 %v517, %v514
    %v545 = vpack.c.b16 %v521, %v518
    %v546 = vpack.c.b16 %v522, %v519
    %v547 = vpack.c.b16 %v523, %v520
    %572 = vmatprep.subr.bf16.mxu0 %v525
    %573 = vmatpush1.bf16.msra.mxu0 %v524
    %574 = vmatprep.subr.bf16.mxu0 %v528
    %575 = vmatpush1.bf16.msra.mxu0 %v527
    %576 = vmatprep.subr.bf16.mxu0 %v531
    %577 = vmatpush1.bf16.msra.mxu0 %v530
    %578 = vmatprep.subr.bf16.mxu0 %v534
    %579 = vmatpush1.bf16.msra.mxu0 %v533
    %580 = vmatprep.subr.bf16.mxu0 %v537
    %581 = vmatpush1.bf16.msra.mxu0 %v536
    %582 = vmatprep.subr.bf16.mxu0 %v540
    %583 = vmatpush1.bf16.msra.mxu0 %v539
    %584 = vmatprep.subr.bf16.mxu0 %v543
    %585 = vmatpush1.bf16.msra.mxu0 %v542
    %586 = vmatprep.subr.bf16.mxu0 %v546
    %587 = vmatpush1.bf16.msra.mxu0 %v545
    %588 = vmatprep.subr.bf16.mxu0 0
    %589 = vmatpush1.bf16.msra.mxu0 0
    %590 = vmatprep.subr.bf16.mxu0 0
    %591 = vmatpush1.bf16.msra.mxu0 0
    %592 = vmatprep.subr.bf16.mxu0 0
    %593 = vmatpush1.bf16.msra.mxu0 0
    %594 = vmatprep.subr.bf16.mxu0 0
    %595 = vmatpush1.bf16.msra.mxu0 0
    %596 = vmatprep.subr.bf16.mxu0 0
    %597 = vmatpush1.bf16.msra.mxu0 0
    %598 = vmatprep.subr.bf16.mxu0 0
    %599 = vmatpush1.bf16.msra.mxu0 0
    %600 = vmatprep.subr.bf16.mxu0 0
    %601 = vmatpush1.bf16.msra.mxu0 0
    %602 = vmatprep.subr.bf16.mxu0 0
    %603 = vmatpush1.bf16.msra.mxu0 0
    %604 = vmatprep.mubr.bf16.mxu0 0
    %605 = vmatmul.mubr.bf16.gmra.mrb[0].mxu0 %v387
    %v606 = vpop.f32.mrb[0].mxu0
    %v607 = vadd.f32 %v432, %v606
    %v608 = vpop.f32.mrb[0].mxu0
    %v609 = vadd.f32 %v436, %v608
    %v610 = vpop.f32.mrb[0].mxu0
    %v611 = vadd.f32 %v432, %v610
    %v612 = vpop.f32.mrb[0].mxu0
    %v613 = vadd.f32 %v436, %v612
    %614 = vmatprep.mubr.bf16.mxu0 0
    %615 = vmatmul.mubr.bf16.gmra.mrb[0].mxu0 %v388
    %v616 = vpop.f32.mrb[0].mxu0
    %v617 = vadd.f32 %v432, %v616
    %v618 = vpop.f32.mrb[0].mxu0
    %v619 = vadd.f32 %v436, %v618
    %v620 = vpop.f32.mrb[0].mxu0
    %v621 = vadd.f32 %v432, %v620
    %v622 = vpop.f32.mrb[0].mxu0
    %v623 = vadd.f32 %v436, %v622
    %624 = vmatprep.mubr.bf16.mxu0 0
    %625 = vmatmul.mubr.bf16.gmra.mrb[0].mxu0 %v389
    %v626 = vpop.f32.mrb[0].mxu0
    %v627 = vadd.f32 %v432, %v626
    %v628 = vpop.f32.mrb[0].mxu0
    %v629 = vadd.f32 %v436, %v628
    %v630 = vpop.f32.mrb[0].mxu0
    %v631 = vadd.f32 %v432, %v630
    %v632 = vpop.f32.mrb[0].mxu0
    %v633 = vadd.f32 %v436, %v632
    %634 = vmatprep.mubr.bf16.mxu0 0
    %635 = vmatmul.mubr.bf16.gmra.mrb[0].mxu0 %v390
    %v636 = vpop.f32.mrb[0].mxu0
    %v637 = vadd.f32 %v432, %v636
    %v638 = vpop.f32.mrb[0].mxu0
    %v639 = vadd.f32 %v436, %v638
    %v640 = vpop.f32.mrb[0].mxu0
    %v641 = vadd.f32 %v432, %v640
    %v642 = vpop.f32.mrb[0].mxu0
    %v643 = vadd.f32 %v436, %v642
    %644 = vmatprep.mubr.bf16.mxu0 0
    %645 = vmatmul.mubr.bf16.gmra.mrb[0].mxu0 %v391
    %v646 = vpop.f32.mrb[0].mxu0
    %v647 = vadd.f32 %v432, %v646
    %v648 = vpop.f32.mrb[0].mxu0
    %v649 = vadd.f32 %v436, %v648
    %v650 = vpop.f32.mrb[0].mxu0
    %v651 = vadd.f32 %v432, %v650
    %v652 = vpop.f32.mrb[0].mxu0
    %v653 = vadd.f32 %v436, %v652
    %654 = vmatprep.mubr.bf16.mxu0 0
    %655 = vmatmul.mubr.bf16.gmra.mrb[0].mxu0 %v392
    %v656 = vpop.f32.mrb[0].mxu0
    %v657 = vadd.f32 %v432, %v656
    %v658 = vpop.f32.mrb[0].mxu0
    %v659 = vadd.f32 %v436, %v658
    %v660 = vpop.f32.mrb[0].mxu0
    %v661 = vadd.f32 %v432, %v660
    %v662 = vpop.f32.mrb[0].mxu0
    %v663 = vadd.f32 %v436, %v662
    %664 = vmatprep.mubr.bf16.mxu0 0
    %665 = vmatmul.mubr.bf16.gmra.mrb[0].mxu0 %v393
    %v666 = vpop.f32.mrb[0].mxu0
    %v667 = vadd.f32 %v432, %v666
    %v668 = vpop.f32.mrb[0].mxu0
    %v669 = vadd.f32 %v436, %v668
    %v670 = vpop.f32.mrb[0].mxu0
    %v671 = vadd.f32 %v432, %v670
    %v672 = vpop.f32.mrb[0].mxu0
    %v673 = vadd.f32 %v436, %v672
    %674 = vmatprep.mubr.bf16.mxu0 0
    %675 = vmatmul.mubr.bf16.gmra.mrb[0].mxu0 %v394
    %v676 = vpop.f32.mrb[0].mxu0
    %v677 = vadd.f32 %v432, %v676
    %v678 = vpop.f32.mrb[0].mxu0
    %v679 = vadd.f32 %v436, %v678
    %v680 = vpop.f32.mrb[0].mxu0
    %v681 = vadd.f32 %v432, %v680
    %v682 = vpop.f32.mrb[0].mxu0
    %v683 = vadd.f32 %v436, %v682
    %684 = vdwg.mxu0
    %685 = vmatprep.subr.bf16.mxu0 0
    %686 = vmatpush1.bf16.msra.mxu0 %v526
    %687 = vmatprep.subr.bf16.mxu0 0
    %688 = vmatpush1.bf16.msra.mxu0 %v529
    %689 = vmatprep.subr.bf16.mxu0 0
    %690 = vmatpush1.bf16.msra.mxu0 %v532
    %691 = vmatprep.subr.bf16.mxu0 0
    %692 = vmatpush1.bf16.msra.mxu0 %v535
    %693 = vmatprep.subr.bf16.mxu0 0
    %694 = vmatpush1.bf16.msra.mxu0 %v538
    %695 = vmatprep.subr.bf16.mxu0 0
    %696 = vmatpush1.bf16.msra.mxu0 %v541
    %697 = vmatprep.subr.bf16.mxu0 0
    %698 = vmatpush1.bf16.msra.mxu0 %v544
    %699 = vmatprep.subr.bf16.mxu0 0
    %700 = vmatpush1.bf16.msra.mxu0 %v547
    %701 = vmatprep.subr.bf16.mxu0 0
    %702 = vmatpush1.bf16.msra.mxu0 0
    %703 = vmatprep.subr.bf16.mxu0 0
    %704 = vmatpush1.bf16.msra.mxu0 0
    %705 = vmatprep.subr.bf16.mxu0 0
    %706 = vmatpush1.bf16.msra.mxu0 0
    %707 = vmatprep.subr.bf16.mxu0 0
    %708 = vmatpush1.bf16.msra.mxu0 0
    %709 = vmatprep.subr.bf16.mxu0 0
    %710 = vmatpush1.bf16.msra.mxu0 0
    %711 = vmatprep.subr.bf16.mxu0 0
    %712 = vmatpush1.bf16.msra.mxu0 0
    %713 = vmatprep.subr.bf16.mxu0 0
    %714 = vmatpush1.bf16.msra.mxu0 0
    %715 = vmatprep.subr.bf16.mxu0 0
    %716 = vmatpush1.bf16.msra.mxu0 0
    %717 = vmatprep.mubr.bf16.mxu0 0
    %718 = vmatmul.mubr.bf16.gmra.mrb[0].mxu0 %v387
    %v719 = vpop.f32.mrb[0].mxu0
    %v720 = vadd.f32 %v440, %v719
    %v721 = vpop.f32.mrb[0].mxu0
    %v722 = vpop.f32.mrb[0].mxu0
    %v723 = vadd.f32 %v440, %v722
    %v724 = vpop.f32.mrb[0].mxu0
    %725 = vmatprep.mubr.bf16.mxu0 0
    %726 = vmatmul.mubr.bf16.gmra.mrb[0].mxu0 %v388
    %v727 = vpop.f32.mrb[0].mxu0
    %v728 = vadd.f32 %v440, %v727
    %v729 = vpop.f32.mrb[0].mxu0
    %v730 = vpop.f32.mrb[0].mxu0
    %v731 = vadd.f32 %v440, %v730
    %v732 = vpop.f32.mrb[0].mxu0
    %733 = vmatprep.mubr.bf16.mxu0 0
    %734 = vmatmul.mubr.bf16.gmra.mrb[0].mxu0 %v389
    %v735 = vpop.f32.mrb[0].mxu0
    %v736 = vadd.f32 %v440, %v735
    %v737 = vpop.f32.mrb[0].mxu0
    %v738 = vpop.f32.mrb[0].mxu0
    %v739 = vadd.f32 %v440, %v738
    %v740 = vpop.f32.mrb[0].mxu0
    %741 = vmatprep.mubr.bf16.mxu0 0
    %742 = vmatmul.mubr.bf16.gmra.mrb[0].mxu0 %v390
    %v743 = vpop.f32.mrb[0].mxu0
    %v744 = vadd.f32 %v440, %v743
    %v745 = vpop.f32.mrb[0].mxu0
    %v746 = vpop.f32.mrb[0].mxu0
    %v747 = vadd.f32 %v440, %v746
    %v748 = vpop.f32.mrb[0].mxu0
    %749 = vmatprep.mubr.bf16.mxu0 0
    %750 = vmatmul.mubr.bf16.gmra.mrb[0].mxu0 %v391
    %v751 = vpop.f32.mrb[0].mxu0
    %v752 = vadd.f32 %v440, %v751
    %v753 = vpop.f32.mrb[0].mxu0
    %v754 = vpop.f32.mrb[0].mxu0
    %v755 = vadd.f32 %v440, %v754
    %v756 = vpop.f32.mrb[0].mxu0
    %757 = vmatprep.mubr.bf16.mxu0 0
    %758 = vmatmul.mubr.bf16.gmra.mrb[0].mxu0 %v392
    %v759 = vpop.f32.mrb[0].mxu0
    %v760 = vadd.f32 %v440, %v759
    %v761 = vpop.f32.mrb[0].mxu0
    %v762 = vpop.f32.mrb[0].mxu0
    %v763 = vadd.f32 %v440, %v762
    %v764 = vpop.f32.mrb[0].mxu0
    %765 = vmatprep.mubr.bf16.mxu0 0
    %766 = vmatmul.mubr.bf16.gmra.mrb[0].mxu0 %v393
    %v767 = vpop.f32.mrb[0].mxu0
    %v768 = vadd.f32 %v440, %v767
    %v769 = vpop.f32.mrb[0].mxu0
    %v770 = vpop.f32.mrb[0].mxu0
    %v771 = vadd.f32 %v440, %v770
    %v772 = vpop.f32.mrb[0].mxu0
    %773 = vmatprep.mubr.bf16.mxu0 0
    %774 = vmatmul.mubr.bf16.gmra.mrb[0].mxu0 %v394
    %v775 = vpop.f32.mrb[0].mxu0
    %v776 = vadd.f32 %v440, %v775
    %v777 = vpop.f32.mrb[0].mxu0
    %v778 = vpop.f32.mrb[0].mxu0
    %v779 = vadd.f32 %v440, %v778
    %v780 = vpop.f32.mrb[0].mxu0
    %781 = vdwg.mxu0
    %v782 = vpack.c.bf16 %v611, %v607
    %v783 = vpack.c.bf16 %v613, %v609
    %v784 = vpack.c.bf16 %v723, %v720
    %v785 = vpack.c.bf16 %v621, %v617
    %v786 = vpack.c.bf16 %v623, %v619
    %v787 = vpack.c.bf16 %v731, %v728
    %v788 = vpack.c.bf16 %v631, %v627
    %v789 = vpack.c.bf16 %v633, %v629
    %v790 = vpack.c.bf16 %v739, %v736
    %v791 = vpack.c.bf16 %v641, %v637
    %v792 = vpack.c.bf16 %v643, %v639
    %v793 = vpack.c.bf16 %v747, %v744
    %v794 = vpack.c.bf16 %v651, %v647
    %v795 = vpack.c.bf16 %v653, %v649
    %v796 = vpack.c.bf16 %v755, %v752
    %v797 = vpack.c.bf16 %v661, %v657
    %v798 = vpack.c.bf16 %v663, %v659
    %v799 = vpack.c.bf16 %v763, %v760
    %v800 = vpack.c.bf16 %v671, %v667
    %v801 = vpack.c.bf16 %v673, %v669
    %v802 = vpack.c.bf16 %v771, %v768
    %v803 = vpack.c.bf16 %v681, %v677
    %v804 = vpack.c.bf16 %v683, %v679
    %v805 = vpack.c.bf16 %v779, %v776
    %v830 = vunpack.c.l.b16 %v782
    %v831 = vunpack.c.l.b16 %v783
    %v832 = vunpack.c.l.b16 %v784
    %v833 = vunpack.c.h.b16 %v782
    %v834 = vunpack.c.h.b16 %v783
    %v835 = vunpack.c.h.b16 %v784
    %v836 = vunpack.c.l.b16 %v785
    %v837 = vunpack.c.l.b16 %v786
    %v838 = vunpack.c.l.b16 %v787
    %v839 = vunpack.c.h.b16 %v785
    %v840 = vunpack.c.h.b16 %v786
    %v841 = vunpack.c.h.b16 %v787
    %v842 = vunpack.c.l.b16 %v788
    %v843 = vunpack.c.l.b16 %v789
    %v844 = vunpack.c.l.b16 %v790
    %v845 = vunpack.c.h.b16 %v788
    %v846 = vunpack.c.h.b16 %v789
    %v847 = vunpack.c.h.b16 %v790
    %v848 = vunpack.c.l.b16 %v791
    %v849 = vunpack.c.l.b16 %v792
    %v850 = vunpack.c.l.b16 %v793
    %v851 = vunpack.c.h.b16 %v791
    %v852 = vunpack.c.h.b16 %v792
    %v853 = vunpack.c.h.b16 %v793
    %v854 = vunpack.c.l.b16 %v794
    %v855 = vunpack.c.l.b16 %v795
    %v856 = vunpack.c.l.b16 %v796
    %v857 = vunpack.c.h.b16 %v794
    %v858 = vunpack.c.h.b16 %v795
    %v859 = vunpack.c.h.b16 %v796
    %v860 = vunpack.c.l.b16 %v797
    %v861 = vunpack.c.l.b16 %v798
    %v862 = vunpack.c.l.b16 %v799
    %v863 = vunpack.c.h.b16 %v797
    %v864 = vunpack.c.h.b16 %v798
    %v865 = vunpack.c.h.b16 %v799
    %v866 = vunpack.c.l.b16 %v800
    %v867 = vunpack.c.l.b16 %v801
    %v868 = vunpack.c.l.b16 %v802
    %v869 = vunpack.c.h.b16 %v800
    %v870 = vunpack.c.h.b16 %v801
    %v871 = vunpack.c.h.b16 %v802
    %v872 = vunpack.c.l.b16 %v803
    %v873 = vunpack.c.l.b16 %v804
    %v874 = vunpack.c.l.b16 %v805
    %v875 = vunpack.c.h.b16 %v803
    %v876 = vunpack.c.h.b16 %v804
    %v877 = vunpack.c.h.b16 %v805
    %v878 = vpack.c.b16 %v831, %v830
    %v879 = vpack.c.b16 %v832, %v832
    %v880 = vpack.c.b16 %v834, %v833
    %v881 = vpack.c.b16 %v835, %v835
    %v882 = vpack.c.b16 %v837, %v836
    %v883 = vpack.c.b16 %v838, %v838
    %v884 = vpack.c.b16 %v840, %v839
    %v885 = vpack.c.b16 %v841, %v841
    %v886 = vpack.c.b16 %v843, %v842
    %v887 = vpack.c.b16 %v844, %v844
    %v888 = vpack.c.b16 %v846, %v845
    %v889 = vpack.c.b16 %v847, %v847
    %v890 = vpack.c.b16 %v849, %v848
    %v891 = vpack.c.b16 %v850, %v850
    %v892 = vpack.c.b16 %v852, %v851
    %v893 = vpack.c.b16 %v853, %v853
    %v894 = vpack.c.b16 %v855, %v854
    %v895 = vpack.c.b16 %v856, %v856
    %v896 = vpack.c.b16 %v858, %v857
    %v897 = vpack.c.b16 %v859, %v859
    %v898 = vpack.c.b16 %v861, %v860
    %v899 = vpack.c.b16 %v862, %v862
    %v900 = vpack.c.b16 %v864, %v863
    %v901 = vpack.c.b16 %v865, %v865
    %v902 = vpack.c.b16 %v867, %v866
    %v903 = vpack.c.b16 %v868, %v868
    %v904 = vpack.c.b16 %v870, %v869
    %v905 = vpack.c.b16 %v871, %v871
    %v906 = vpack.c.b16 %v873, %v872
    %v907 = vpack.c.b16 %v874, %v874
    %v908 = vpack.c.b16 %v876, %v875
    %v909 = vpack.c.b16 %v877, %v877
    %942 = vst [vmem:[#allocation11] sm:$0xff] %v878
    %943 = vst [vmem:[#allocation11 + $0x8] sm:$0xf] %v879
    %944 = vst [vmem:[#allocation11 + $0xc] sm:$0xff] %v880
    %945 = vst [vmem:[#allocation11 + $0x14] sm:$0xf] %v881
    %946 = vst [vmem:[#allocation11 + $0x18] sm:$0xff] %v882
    %947 = vst [vmem:[#allocation11 + $0x20] sm:$0xf] %v883
    %948 = vst [vmem:[#allocation11 + $0x24] sm:$0xff] %v884
    %949 = vst [vmem:[#allocation11 + $0x2c] sm:$0xf] %v885
    %950 = vst [vmem:[#allocation11 + $0x30] sm:$0xff] %v886
    %951 = vst [vmem:[#allocation11 + $0x38] sm:$0xf] %v887
    %952 = vst [vmem:[#allocation11 + $0x3c] sm:$0xff] %v888
    %953 = vst [vmem:[#allocation11 + $0x44] sm:$0xf] %v889
    %954 = vst [vmem:[#allocation11 + $0x48] sm:$0xff] %v890
    %955 = vst [vmem:[#allocation11 + $0x50] sm:$0xf] %v891
    %956 = vst [vmem:[#allocation11 + $0x54] sm:$0xff] %v892
    %957 = vst [vmem:[#allocation11 + $0x5c] sm:$0xf] %v893
    %958 = vst [vmem:[#allocation11 + $0x60] sm:$0xff] %v894
    %959 = vst [vmem:[#allocation11 + $0x68] sm:$0xf] %v895
    %960 = vst [vmem:[#allocation11 + $0x6c] sm:$0xff] %v896
    %961 = vst [vmem:[#allocation11 + $0x74] sm:$0xf] %v897
    %962 = vst [vmem:[#allocation11 + $0x78] sm:$0xff] %v898
    %963 = vst [vmem:[#allocation11 + $0x80] sm:$0xf] %v899
    %964 = vst [vmem:[#allocation11 + $0x84] sm:$0xff] %v900
    %965 = vst [vmem:[#allocation11 + $0x8c] sm:$0xf] %v901
    %966 = vst [vmem:[#allocation11 + $0x90] sm:$0xff] %v902
    %967 = vst [vmem:[#allocation11 + $0x98] sm:$0xf] %v903
    %968 = vst [vmem:[#allocation11 + $0x9c] sm:$0xff] %v904
    %969 = vst [vmem:[#allocation11 + $0xa4] sm:$0xf] %v905
    %970 = vst [vmem:[#allocation11 + $0xa8] sm:$0xff] %v906
    %971 = vst [vmem:[#allocation11 + $0xb0] sm:$0xf] %v907
    %972 = vst [vmem:[#allocation11 + $0xb4] sm:$0xff] %v908
    %973 = vst [vmem:[#allocation11 + $0xbc] sm:$0xf] %v909
    // Predicated region
    $region38: #{masked_encoder_forward.13} parent=1 // pred_check
      _
    $region39: #{masked_encoder_forward.13} parent=1 // pred_check_branch
      %975 = sbr.rel (0) target = $region41
    $region40: #{masked_encoder_forward.13} parent=1 // pred_region
      %s977 = ssub.s32 3072, 3072
      %978 = vsyncadd [#allocation5], %s977
      %s979 = sshll.u32 [#allocation11], 4
      %s980 = int_to_ptr.vmem [resolvable:$true] %s979
      %985 = dma.vmem_to_hbm [thread:$0]  %s980, 3072, %s4, [#allocation5], 192, 192, 12
    $region41: #{masked_encoder_forward.13} parent=1 // pred_fallthru
      _
    // Predicated region
    $region42: #{masked_encoder_forward.13} parent=1 // pred_check
      _
    $region43: #{masked_encoder_forward.13} parent=1 // pred_check_branch
      %987 = sbr.rel (0) target = $region45
    $region44: #{masked_encoder_forward.13} parent=1 // pred_region
      %988 = dma.done [#allocation5], 3072
    $region45: #{masked_encoder_forward.13} parent=1 // pred_fallthru
      _
    %989 = vsyncpa [#allocation4], 1
    %990 = vsyncpa [#allocation7], 1
    %991 = vsyncpa [#allocation10], 1
    %992 = vsyncpa [#allocation5], 1

// kernel: masked_encoder_forward.14
$region0: #{masked_encoder_forward.14}
  #allocation0 [shape = 'u32[]', space=smem, size = 0x4, offset = 0x4, fixed_abs, tag = 'smem constant byte address 0x4 - core index']
  #allocation1 [shape = 'u32[144,128]{1,0:T(1,128)}', space=vmem, size = 0x12000, scoped, tag = 'internal scratch']
  %s0 = inlined_call_operand.hbm [shape: bf16[2,64,384], index: 0, kind: input, shape index: {}, may-alias: {0,1,2}]
  %s1 = inlined_call_operand.hbm [shape: bf16[2,64,384], index: 1, kind: input, shape index: {}, may-alias: {0,1,2}]
  %s2 = inlined_call_operand.hbm [shape: bf16[2,64,384], index: 2, kind: input, shape index: {}, may-alias: {0,1,2}]
  %s3 = inlined_call_operand.hbm [shape: bf16[2,64,128], index: 3, kind: output, shape index: {}]
  %s4 = sld [smem:[#allocation0]]
  $region57: #{masked_encoder_forward.14} parent=0
    _
  %s6 = ssub.s32 1, %s4
  %s7 = scalar_select 0, %s6, %s4
  $region1: #{masked_encoder_forward.14} parent=0
    #allocation2 [shape = 'u8[32768]{0}', space=vmem, size = 0x8000, scoped, tag = 'input window, operand 0']
    #allocation3 [shape = 's32[2]{0}', space=sflag, size = 0x8, scoped, tag = 'scoped memory for masked_encoder_forward.14']
    #allocation4 [shape = 's32[2]{0}', space=sflag, size = 0x8, scoped, tag = 'scoped memory for masked_encoder_forward.14']
    #allocation5 [shape = 'u8[32768]{0}', space=vmem, size = 0x8000, scoped, tag = 'input window, operand 1']
    #allocation6 [shape = 's32[2]{0}', space=sflag, size = 0x8, scoped, tag = 'scoped memory for masked_encoder_forward.14']
    #allocation7 [shape = 'u8[32768]{0}', space=vmem, size = 0x8000, scoped, tag = 'input window, operand 2']
    #allocation8 [shape = 'u8[32768]{0}', space=vmem, size = 0x8000, scoped, tag = 'output window, operand 0']
    %8 = vsyncpa [#allocation3], 0
    %s9 = scalar_lea.sflag [#allocation3], 1
    %10 = vsyncpa %s9, 0
    %11 = vsyncpa [#allocation6], 0
    %s12 = scalar_lea.sflag [#allocation6], 1
    %13 = vsyncpa %s12, 0
    %14 = vsyncpa [#allocation4], 0
    %s15 = scalar_lea.sflag [#allocation4], 1
    %16 = vsyncpa %s15, 0
    loop: start=0, step=1, limit=4
    $region2: #{masked_encoder_forward.14} parent=1 // loop_pre_header
      _
    $region3: #{masked_encoder_forward.14} parent=1 // loop_header
      %s18 = sphi 0, %s22
      %p19 = scmp.ge.s32.totalorder %s18, 4
      %s25 = sphi 0, %s37
      %s26 = sphi 0, %s33
      %s27 = sphi 0, %s25
      %s28 = sphi 0, %s26
      %s29 = sphi 0, %s27
      %s30 = sphi 0, %s28
      %s42 = sphi 0, %s44
      %s45 = sphi 0, %s42
      %s46 = sphi 0, %s45
      %s62 = sphi 0, %s46
      %s68 = sphi 0, %s70
      %s71 = sphi 0, %s68
      %s72 = sphi 0, %s71
      %s88 = sphi 0, %s72
      %s94 = sphi 0, %s96
      %s97 = sphi 0, %s94
      %s98 = sphi 0, %s97
      %s114 = sphi 0, %s98
      %s122 = sphi 0, %s124
      %s125 = sphi 0, %s122
      %s126 = sphi 0, %s125
      %s142 = sphi 0, %s126
    $region4: #{masked_encoder_forward.14} parent=1 // loop_header_branch
      %21 = sbr.rel (%p19) target = $region8
    $region5: #{masked_encoder_forward.14} parent=1 // loop_body
      %s23 = ssub.s32 %s18, 1
      %s24 = ssub.s32 %s18, 2
      %s31 = sadd.s32 1, %s26
      %p32 = scmp.ge.s32.totalorder %s31, 1
      %s33 = scalar_select %p32, 0, %s31
      %s34 = sadd.s32 1, %s25
      %s35 = scalar_select %p32, %s34, %s25
      %p36 = scmp.ge.s32.totalorder %s35, 2
      %s37 = scalar_select %p36, 0, %s35
      %s38 = ssub.s32 %s25, %s37
      %s39 = ssub.s32 %s26, %s33
      %s40 = sor.u32 %s38, %s39
      %p41 = scmp.eq.s32.totalorder %s40, 0
      %s43 = sadd.s32 %s42, 1
      %s44 = scalar_select %p41, %s42, %s43
      %p47 = pneg %p41
      %p48 = scmp.eq.s32.totalorder %s18, 1
      %p49 = por %p47, %p48
      %p50 = scmp.ne.s32.totalorder %s42, %s45
      %p51 = scmp.eq.s32.totalorder %s18, 0
      %p52 = por %p50, %p51
      %p53 = scmp.ne.s32.totalorder %s42, %s45
      %p54 = scmp.eq.s32.totalorder %s23, 1
      %p55 = por %p53, %p54
      %p56 = scmp.ne.s32.totalorder %s45, %s46
      %p57 = scmp.eq.s32.totalorder %s23, 0
      %p58 = por %p56, %p57
      %p59 = scmp.ne.s32.totalorder %s45, %s46
      %p60 = scmp.eq.s32.totalorder %s24, 1
      %p61 = por %p59, %p60
      %p63 = scmp.ne.s32.totalorder %s46, %s62
      %p64 = scmp.eq.s32.totalorder %s24, 0
      %p65 = por %p63, %p64
      %s66 = ssub.s32 %s25, %s37
      %p67 = scmp.eq.s32.totalorder %s66, 0
      %s69 = sadd.s32 %s68, 1
      %s70 = scalar_select %p67, %s68, %s69
      %p73 = pneg %p67
      %p74 = scmp.eq.s32.totalorder %s18, 1
      %p75 = por %p73, %p74
      %p76 = scmp.ne.s32.totalorder %s68, %s71
      %p77 = scmp.eq.s32.totalorder %s18, 0
      %p78 = por %p76, %p77
      %p79 = scmp.ne.s32.totalorder %s68, %s71
      %p80 = scmp.eq.s32.totalorder %s23, 1
      %p81 = por %p79, %p80
      %p82 = scmp.ne.s32.totalorder %s71, %s72
      %p83 = scmp.eq.s32.totalorder %s23, 0
      %p84 = por %p82, %p83
      %p85 = scmp.ne.s32.totalorder %s71, %s72
      %p86 = scmp.eq.s32.totalorder %s24, 1
      %p87 = por %p85, %p86
      %p89 = scmp.ne.s32.totalorder %s72, %s88
      %p90 = scmp.eq.s32.totalorder %s24, 0
      %p91 = por %p89, %p90
      %s92 = ssub.s32 %s25, %s37
      %p93 = scmp.eq.s32.totalorder %s92, 0
      %s95 = sadd.s32 %s94, 1
      %s96 = scalar_select %p93, %s94, %s95
      %p99 = pneg %p93
      %p100 = scmp.eq.s32.totalorder %s18, 1
      %p101 = por %p99, %p100
      %p102 = scmp.ne.s32.totalorder %s94, %s97
      %p103 = scmp.eq.s32.totalorder %s18, 0
      %p104 = por %p102, %p103
      %p105 = scmp.ne.s32.totalorder %s94, %s97
      %p106 = scmp.eq.s32.totalorder %s23, 1
      %p107 = por %p105, %p106
      %p108 = scmp.ne.s32.totalorder %s97, %s98
      %p109 = scmp.eq.s32.totalorder %s23, 0
      %p110 = por %p108, %p109
      %p111 = scmp.ne.s32.totalorder %s97, %s98
      %p112 = scmp.eq.s32.totalorder %s24, 1
      %p113 = por %p111, %p112
      %p115 = scmp.ne.s32.totalorder %s98, %s114
      %p116 = scmp.eq.s32.totalorder %s24, 0
      %p117 = por %p115, %p116
      %s118 = ssub.s32 %s25, %s37
      %s119 = ssub.s32 %s26, %s33
      %s120 = sor.u32 %s118, %s119
      %p121 = scmp.eq.s32.totalorder %s120, 0
      %s123 = sadd.s32 %s122, 1
      %s124 = scalar_select %p121, %s122, %s123
      %p127 = pneg %p121
      %p128 = scmp.eq.s32.totalorder %s18, 1
      %p129 = por %p127, %p128
      %p130 = scmp.ne.s32.totalorder %s122, %s125
      %p131 = scmp.eq.s32.totalorder %s18, 0
      %p132 = por %p130, %p131
      %p133 = scmp.ne.s32.totalorder %s122, %s125
      %p134 = scmp.eq.s32.totalorder %s23, 1
      %p135 = por %p133, %p134
      %p136 = scmp.ne.s32.totalorder %s125, %s126
      %p137 = scmp.eq.s32.totalorder %s23, 0
      %p138 = por %p136, %p137
      %p139 = scmp.ne.s32.totalorder %s125, %s126
      %p140 = scmp.eq.s32.totalorder %s24, 1
      %p141 = por %p139, %p140
      %p143 = scmp.ne.s32.totalorder %s126, %s142
      %p144 = scmp.eq.s32.totalorder %s24, 0
      %p145 = por %p143, %p144
      %p146 = scmp.le.s32.totalorder 1, %s18
      %p147 = scmp.lt.s32.totalorder %s18, 3
      %p148 = pnand %p146, %p147
      %p149 = pneg %p148
      // Predicated region
      $region9: #{masked_encoder_forward.14} parent=5 // pred_check
        _
      $region10: #{masked_encoder_forward.14} parent=5 // pred_check_branch
        %151 = sbr.rel (%p148) target = $region12
      $region11: #{masked_encoder_forward.14} parent=5 // pred_region
        %s152 = ssub.s32 %s18, 1
      $region12: #{masked_encoder_forward.14} parent=5 // pred_fallthru
        _
      %p153 = scmp.lt.s32.totalorder %s18, 2
      // Predicated region
      $region13: #{masked_encoder_forward.14} parent=5 // pred_check
        %p154 = pneg %p153
      $region14: #{masked_encoder_forward.14} parent=5 // pred_check_branch
        %156 = sbr.rel (%p154) target = $region16
      $region15: #{masked_encoder_forward.14} parent=5 // pred_region
        // Predicated region
        $region17: #{masked_encoder_forward.14} parent=15 // pred_check
          %p157 = pneg %p52
        $region18: #{masked_encoder_forward.14} parent=15 // pred_check_branch
          %159 = sbr.rel (%p157) target = $region20
        $region19: #{masked_encoder_forward.14} parent=15 // pred_region
          %s160 = sand.u32 %s42, 1
          %s161 = scalar_lea.sflag [#allocation3], %s160
          %s162 = sand.u32 %s42, 1
          %s163 = smul.addr %s162, 32
          %s164 = scalar_lea.vmem [#allocation2], %s163
          %s165 = smul.u32 8, %s26
          %s167 = ssub.s32 512, 512
          %168 = vsyncadd %s161, %s167
          %s169 = smul.addr %s165, 3
          %s170 = smul.addr %s25, 24
          %s171 = sadd.s32 %s169, %s170
          %s172 = smul.addr %s171, 64
          %s173 = scalar_lea.hbm %s0, %s172
          %s174 = sshll.u32 %s164, 4
          %s175 = int_to_ptr.vmem [resolvable:$true] %s174
          %180 = dma.hbm_to_vmem [thread:$0]  %s173, 512, %s175, %s161, 192, 64, 4
        $region20: #{masked_encoder_forward.14} parent=15 // pred_fallthru
          _
        // Predicated region
        $region21: #{masked_encoder_forward.14} parent=15 // pred_check
          %p181 = pneg %p78
        $region22: #{masked_encoder_forward.14} parent=15 // pred_check_branch
          %183 = sbr.rel (%p181) target = $region24
        $region23: #{masked_encoder_forward.14} parent=15 // pred_region
          %s184 = sand.u32 %s18, 1
          %s185 = scalar_lea.sflag [#allocation6], %s184
          %s186 = sand.u32 %s68, 1
          %s187 = smul.addr %s186, 32
          %s188 = scalar_lea.vmem [#allocation5], %s187
          %s190 = ssub.s32 512, 512
          %191 = vsyncadd %s185, %s190
          %s192 = smul.addr %s25, 24
          %s193 = sadd.s32 1, %s192
          %s194 = smul.addr %s193, 64
          %s195 = scalar_lea.hbm %s1, %s194
          %s196 = sshll.u32 %s188, 4
          %s197 = int_to_ptr.vmem [resolvable:$true] %s196
          %202 = dma.hbm_to_vmem [thread:$0]  %s195, 512, %s197, %s185, 192, 64, 4
        $region24: #{masked_encoder_forward.14} parent=15 // pred_fallthru
          _
        // Predicated region
        $region25: #{masked_encoder_forward.14} parent=15 // pred_check
          %p203 = pneg %p104
        $region26: #{masked_encoder_forward.14} parent=15 // pred_check_branch
          %205 = sbr.rel (%p203) target = $region28
        $region27: #{masked_encoder_forward.14} parent=15 // pred_region
          %s206 = sand.u32 %s18, 1
          %s207 = scalar_lea.sflag [#allocation6], %s206
          %s208 = sand.u32 %s94, 1
          %s209 = smul.addr %s208, 32
          %s210 = scalar_lea.vmem [#allocation7], %s209
          %s212 = ssub.s32 512, 512
          %213 = vsyncadd %s207, %s212
          %s214 = smul.addr %s25, 24
          %s215 = sadd.s32 2, %s214
          %s216 = smul.addr %s215, 64
          %s217 = scalar_lea.hbm %s2, %s216
          %s218 = sshll.u32 %s210, 4
          %s219 = int_to_ptr.vmem [resolvable:$true] %s218
          %224 = dma.hbm_to_vmem [thread:$0]  %s217, 512, %s219, %s207, 192, 64, 4
        $region28: #{masked_encoder_forward.14} parent=15 // pred_fallthru
          _
      $region16: #{masked_encoder_forward.14} parent=5 // pred_fallthru
        _
      %p225 = scmp.le.s32.totalorder 1, %s18
      %p226 = scmp.lt.s32.totalorder %s18, 3
      %p227 = pnand %p225, %p226
      %p228 = pneg %p227
      // Predicated region
      $region29: #{masked_encoder_forward.14} parent=5 // pred_check
        _
      $region30: #{masked_encoder_forward.14} parent=5 // pred_check_branch
        %230 = sbr.rel (%p227) target = $region32
      $region31: #{masked_encoder_forward.14} parent=5 // pred_region
        %s231 = ssub.s32 %s18, 1
        %s232 = sand.u32 %s45, 1
        %s233 = scalar_lea.sflag [#allocation3], %s232
        %s234 = sand.u32 %s45, 1
        %s235 = smul.addr %s234, 32
        %s236 = scalar_lea.vmem [#allocation2], %s235
        // Predicated region
        $region33: #{masked_encoder_forward.14} parent=31 // pred_check
          %p237 = pneg %p58
        $region34: #{masked_encoder_forward.14} parent=31 // pred_check_branch
          %239 = sbr.rel (%p237) target = $region36
        $region35: #{masked_encoder_forward.14} parent=31 // pred_region
          %240 = dma.done %s233, 512
        $region36: #{masked_encoder_forward.14} parent=31 // pred_fallthru
          _
        %s241 = sand.u32 %s23, 1
        %s242 = scalar_lea.sflag [#allocation6], %s241
        %s243 = sand.u32 %s71, 1
        %s244 = smul.addr %s243, 32
        %s245 = scalar_lea.vmem [#allocation5], %s244
        // Predicated region
        $region37: #{masked_encoder_forward.14} parent=31 // pred_check
          %p246 = pneg %p84
        $region38: #{masked_encoder_forward.14} parent=31 // pred_check_branch
          %248 = sbr.rel (%p246) target = $region40
        $region39: #{masked_encoder_forward.14} parent=31 // pred_region
          %249 = dma.done %s242, 512
        $region40: #{masked_encoder_forward.14} parent=31 // pred_fallthru
          _
        %s250 = sand.u32 %s23, 1
        %s251 = scalar_lea.sflag [#allocation6], %s250
        %s252 = sand.u32 %s97, 1
        %s253 = smul.addr %s252, 32
        %s254 = scalar_lea.vmem [#allocation7], %s253
        // Predicated region
        $region41: #{masked_encoder_forward.14} parent=31 // pred_check
          %p255 = pneg %p110
        $region42: #{masked_encoder_forward.14} parent=31 // pred_check_branch
          %257 = sbr.rel (%p255) target = $region44
        $region43: #{masked_encoder_forward.14} parent=31 // pred_region
          %258 = dma.done %s251, 512
        $region44: #{masked_encoder_forward.14} parent=31 // pred_fallthru
          _
        %s259 = sand.u32 %s45, 1
        %s260 = scalar_lea.sflag [#allocation3], %s259
        %s261 = sand.u32 %s45, 1
        %s262 = smul.addr %s261, 32
        %s263 = scalar_lea.vmem [#allocation2], %s262
        %p264 = pneg %p58
        %p265 = pneg %p55
        %s266 = sand.u32 %s23, 1
        %s267 = scalar_lea.sflag [#allocation6], %s266
        %s268 = sand.u32 %s71, 1
        %s269 = smul.addr %s268, 32
        %s270 = scalar_lea.vmem [#allocation5], %s269
        %p271 = pneg %p84
        %p272 = pneg %p81
        %s273 = sand.u32 %s23, 1
        %s274 = scalar_lea.sflag [#allocation6], %s273
        %s275 = sand.u32 %s97, 1
        %s276 = smul.addr %s275, 32
        %s277 = scalar_lea.vmem [#allocation7], %s276
        %p278 = pneg %p110
        %p279 = pneg %p107
        %p280 = pneg %p138
        %p281 = pneg %p135
        %s282 = sand.u32 %s125, 1
        %s283 = scalar_lea.sflag [#allocation4], %s282
        %s284 = sand.u32 %s125, 1
        %s285 = smul.addr %s284, 32
        %s286 = scalar_lea.vmem [#allocation8], %s285
        %s287 = smul.u32 8, %s28
        %s288 = smul.u32 8, %s28
        %v290 = vld [vmem:[%s236] sm:$0xf]
        %v291 = vld [vmem:[%s236 + $0x4] sm:$0xf]
        %v292 = vld [vmem:[%s236 + $0x8] sm:$0xf]
        %v293 = vld [vmem:[%s236 + $0xc] sm:$0xf]
        %v294 = vld [vmem:[%s236 + $0x10] sm:$0xf]
        %v295 = vld [vmem:[%s236 + $0x14] sm:$0xf]
        %v296 = vld [vmem:[%s236 + $0x18] sm:$0xf]
        %v297 = vld [vmem:[%s236 + $0x1c] sm:$0xf]
        %v298 = vld [vmem:[%s245] sm:$0xf]
        %v299 = vld [vmem:[%s245 + $0x4] sm:$0xf]
        %v300 = vld [vmem:[%s245 + $0x8] sm:$0xf]
        %v301 = vld [vmem:[%s245 + $0xc] sm:$0xf]
        %v302 = vld [vmem:[%s245 + $0x10] sm:$0xf]
        %v303 = vld [vmem:[%s245 + $0x14] sm:$0xf]
        %v304 = vld [vmem:[%s245 + $0x18] sm:$0xf]
        %v305 = vld [vmem:[%s245 + $0x1c] sm:$0xf]
        %v306 = vld [vmem:[%s254] sm:$0xf]
        %v307 = vld [vmem:[%s254 + $0x4] sm:$0xf]
        %v308 = vld [vmem:[%s254 + $0x8] sm:$0xf]
        %v309 = vld [vmem:[%s254 + $0xc] sm:$0xf]
        %v310 = vld [vmem:[%s254 + $0x10] sm:$0xf]
        %v311 = vld [vmem:[%s254 + $0x14] sm:$0xf]
        %v312 = vld [vmem:[%s254 + $0x18] sm:$0xf]
        %v313 = vld [vmem:[%s254 + $0x1c] sm:$0xf]
        %v322 = vunpack.c.l.b16 %v290
        %v323 = vunpack.c.l.b16 %v291
        %v324 = vunpack.c.l.b16 %v292
        %v325 = vunpack.c.l.b16 %v293
        %v326 = vunpack.c.l.b16 %v294
        %v327 = vunpack.c.l.b16 %v295
        %v328 = vunpack.c.l.b16 %v296
        %v329 = vunpack.c.l.b16 %v297
        %v330 = vpack.c.b16 %v323, %v322
        %v331 = vpack.c.b16 %v325, %v324
        %v332 = vpack.c.b16 %v327, %v326
        %v333 = vpack.c.b16 %v329, %v328
        %v342 = vunpack.c.l.b16 %v298
        %v343 = vunpack.c.l.b16 %v299
        %v344 = vunpack.c.l.b16 %v300
        %v345 = vunpack.c.l.b16 %v301
        %v346 = vunpack.c.l.b16 %v302
        %v347 = vunpack.c.l.b16 %v303
        %v348 = vunpack.c.l.b16 %v304
        %v349 = vunpack.c.l.b16 %v305
        %v350 = vpack.c.b16 %v343, %v342
        %v351 = vpack.c.b16 %v345, %v344
        %v352 = vpack.c.b16 %v347, %v346
        %v353 = vpack.c.b16 %v349, %v348
        %vm354 = vcmask 261120
        %v356 = vsel %vm354, %v330, 0
        %v359 = vsel %vm354, %v331, 0
        %v362 = vsel %vm354, %v332, 0
        %v365 = vsel %vm354, %v333, 0
        %v368 = vsel %vm354, %v350, 0
        %v371 = vsel %vm354, %v351, 0
        %v374 = vsel %vm354, %v352, 0
        %v377 = vsel %vm354, %v353, 0
        %379 = vmatprep.subr.bf16.mxu0 0
        %380 = vmatpush1.bf16.xpose.msra.mxu0 %v368
        %381 = vmatprep.subr.bf16.mxu0 0
        %382 = vmatpush1.bf16.xpose.msra.mxu0 %v371
        %383 = vmatprep.subr.bf16.mxu0 0
        %384 = vmatpush1.bf16.xpose.msra.mxu0 %v374
        %385 = vmatprep.subr.bf16.mxu0 0
        %386 = vmatpush1.bf16.xpose.msra.mxu0 %v377
        %387 = vmatprep.subr.bf16.mxu0 0
        %388 = vmatpush1.bf16.xpose.msra.mxu0 0
        %389 = vmatprep.subr.bf16.mxu0 0
        %390 = vmatpush1.bf16.xpose.msra.mxu0 0
        %391 = vmatprep.subr.bf16.mxu0 0
        %392 = vmatpush1.bf16.xpose.msra.mxu0 0
        %393 = vmatprep.subr.bf16.mxu0 0
        %394 = vmatpush1.bf16.xpose.msra.mxu0 0
        %395 = vmatprep.subr.bf16.mxu0 0
        %396 = vmatpush1.bf16.xpose.msra.mxu0 0
        %397 = vmatprep.subr.bf16.mxu0 0
        %398 = vmatpush1.bf16.xpose.msra.mxu0 0
        %399 = vmatprep.subr.bf16.mxu0 0
        %400 = vmatpush1.bf16.xpose.msra.mxu0 0
        %401 = vmatprep.subr.bf16.mxu0 0
        %402 = vmatpush1.bf16.xpose.msra.mxu0 0
        %403 = vmatprep.subr.bf16.mxu0 0
        %404 = vmatpush1.bf16.xpose.msra.mxu0 0
        %405 = vmatprep.subr.bf16.mxu0 0
        %406 = vmatpush1.bf16.xpose.msra.mxu0 0
        %407 = vmatprep.subr.bf16.mxu0 0
        %408 = vmatpush1.bf16.xpose.msra.mxu0 0
        %409 = vmatprep.subr.bf16.mxu0 0
        %410 = vmatpush1.bf16.xpose.msra.mxu0 0
        %411 = vmatprep.mubr.bf16.mxu0 0
        %412 = vmatmul.mubr.bf16.gmra.mrb[0].mxu0 %v356
        %v413 = vpop.f32.mrb[0].mxu0
        %v414 = vadd.f32 0.0, %v413
        %v415 = vpop.f32.mrb[0].mxu0
        %v416 = vpop.f32.mrb[0].mxu0
        %v417 = vadd.f32 0.0, %v416
        %v418 = vpop.f32.mrb[0].mxu0
        %419 = vmatprep.mubr.bf16.mxu0 0
        %420 = vmatmul.mubr.bf16.gmra.mrb[0].mxu0 %v359
        %v421 = vpop.f32.mrb[0].mxu0
        %v422 = vadd.f32 0.0, %v421
        %v423 = vpop.f32.mrb[0].mxu0
        %v424 = vpop.f32.mrb[0].mxu0
        %v425 = vadd.f32 0.0, %v424
        %v426 = vpop.f32.mrb[0].mxu0
        %427 = vmatprep.mubr.bf16.mxu0 0
        %428 = vmatmul.mubr.bf16.gmra.mrb[0].mxu0 %v362
        %v429 = vpop.f32.mrb[0].mxu0
        %v430 = vadd.f32 0.0, %v429
        %v431 = vpop.f32.mrb[0].mxu0
        %v432 = vpop.f32.mrb[0].mxu0
        %v433 = vadd.f32 0.0, %v432
        %v434 = vpop.f32.mrb[0].mxu0
        %435 = vmatprep.mubr.bf16.mxu0 0
        %436 = vmatmul.mubr.bf16.gmra.mrb[0].mxu0 %v365
        %v437 = vpop.f32.mrb[0].mxu0
        %v438 = vadd.f32 0.0, %v437
        %v439 = vpop.f32.mrb[0].mxu0
        %v440 = vpop.f32.mrb[0].mxu0
        %v441 = vadd.f32 0.0, %v440
        %v442 = vpop.f32.mrb[0].mxu0
        %443 = vdwg.mxu0
        %vm444 = vcmask 523264
        %v445 = vsel %vm444, %v414, -inf
        %446 = vmax.xlane.f32.xlu0 %v445
        %v447 = vpop.xlane.xlu0 %446
        %v448 = vsel %vm444, %v417, -inf
        %449 = vmax.xlane.f32.xlu0 %v448
        %v450 = vpop.xlane.xlu0 %449
        %v451 = vsel %vm444, %v422, -inf
        %452 = vmax.xlane.f32.xlu0 %v451
        %v453 = vpop.xlane.xlu0 %452
        %v454 = vsel %vm444, %v425, -inf
        %455 = vmax.xlane.f32.xlu0 %v454
        %v456 = vpop.xlane.xlu0 %455
        %v457 = vsel %vm444, %v430, -inf
        %458 = vmax.xlane.f32.xlu0 %v457
        %v459 = vpop.xlane.xlu0 %458
        %v460 = vsel %vm444, %v433, -inf
        %461 = vmax.xlane.f32.xlu0 %v460
        %v462 = vpop.xlane.xlu0 %461
        %v463 = vsel %vm444, %v438, -inf
        %464 = vmax.xlane.f32.xlu0 %v463
        %v465 = vpop.xlane.xlu0 %464
        %v466 = vsel %vm444, %v441, -inf
        %467 = vmax.xlane.f32.xlu0 %v466
        %v468 = vpop.xlane.xlu0 %467
        %v469 = vsub.f32 %v414, %v447
        %v470 = vsub.f32 %v417, %v450
        %v471 = vsub.f32 %v422, %v453
        %v472 = vsub.f32 %v425, %v456
        %v473 = vsub.f32 %v430, %v459
        %v474 = vsub.f32 %v433, %v462
        %v475 = vsub.f32 %v438, %v465
        %v476 = vsub.f32 %v441, %v468
        %v477 = vmul.f32 %v469, 1.442695
        %v478 = vpow.pop %v477
        %v479 = vmul.f32 %v470, 1.442695
        %v480 = vpow.pop %v479
        %v481 = vmul.f32 %v471, 1.442695
        %v482 = vpow.pop %v481
        %v483 = vmul.f32 %v472, 1.442695
        %v484 = vpow.pop %v483
        %v485 = vmul.f32 %v473, 1.442695
        %v486 = vpow.pop %v485
        %v487 = vmul.f32 %v474, 1.442695
        %v488 = vpow.pop %v487
        %v489 = vmul.f32 %v475, 1.442695
        %v490 = vpow.pop %v489
        %v491 = vmul.f32 %v476, 1.442695
        %v492 = vpow.pop %v491
        %v493 = vsel %vm444, %v478, 0.0
        %494 = vadd.xlane.f32.xlu0 %v493
        %v495 = vpop.xlane.xlu0 %494
        %v496 = vsel %vm444, %v480, 0.0
        %497 = vadd.xlane.f32.xlu0 %v496
        %v498 = vpop.xlane.xlu0 %497
        %v499 = vsel %vm444, %v482, 0.0
        %500 = vadd.xlane.f32.xlu0 %v499
        %v501 = vpop.xlane.xlu0 %500
        %v502 = vsel %vm444, %v484, 0.0
        %503 = vadd.xlane.f32.xlu0 %v502
        %v504 = vpop.xlane.xlu0 %503
        %v505 = vsel %vm444, %v486, 0.0
        %506 = vadd.xlane.f32.xlu0 %v505
        %v507 = vpop.xlane.xlu0 %506
        %v508 = vsel %vm444, %v488, 0.0
        %509 = vadd.xlane.f32.xlu0 %v508
        %v510 = vpop.xlane.xlu0 %509
        %v511 = vsel %vm444, %v490, 0.0
        %512 = vadd.xlane.f32.xlu0 %v511
        %v513 = vpop.xlane.xlu0 %512
        %v514 = vsel %vm444, %v492, 0.0
        %515 = vadd.xlane.f32.xlu0 %v514
        %v516 = vpop.xlane.xlu0 %515
        %v517 = vrcp.pop %v495
        %v518 = vrcp.pop %v498
        %v519 = vrcp.pop %v501
        %v520 = vrcp.pop %v504
        %v521 = vrcp.pop %v507
        %v522 = vrcp.pop %v510
        %v523 = vrcp.pop %v513
        %v524 = vrcp.pop %v516
        %v525 = vmul.f32 %v478, %v517
        %v526 = vmul.f32 %v480, %v518
        %v527 = vmul.f32 %v482, %v519
        %v528 = vmul.f32 %v484, %v520
        %v529 = vmul.f32 %v486, %v521
        %v530 = vmul.f32 %v488, %v522
        %v531 = vmul.f32 %v490, %v523
        %v532 = vmul.f32 %v492, %v524
        %v533 = vpack.c.bf16 %v526, %v525
        %v534 = vpack.c.bf16 %v528, %v527
        %v535 = vpack.c.bf16 %v530, %v529
        %v536 = vpack.c.bf16 %v532, %v531
        %v545 = vunpack.c.l.b16 %v306
        %v546 = vunpack.c.l.b16 %v307
        %v547 = vunpack.c.l.b16 %v308
        %v548 = vunpack.c.l.b16 %v309
        %v549 = vunpack.c.l.b16 %v310
        %v550 = vunpack.c.l.b16 %v311
        %v551 = vunpack.c.l.b16 %v312
        %v552 = vunpack.c.l.b16 %v313
        %v553 = vpack.c.b16 %v546, %v545
        %v554 = vpack.c.b16 %v548, %v547
        %v555 = vpack.c.b16 %v550, %v549
        %v556 = vpack.c.b16 %v552, %v551
        %v562 = vsel %vm444, %v533, 0
        %v565 = vsel %vm444, %v534, 0
        %v568 = vsel %vm444, %v535, 0
        %v571 = vsel %vm444, %v536, 0
        %573 = vmatprep.subr.bf16.mxu0 0
        %574 = vmatpush1.bf16.msra.mxu0 %v553
        %575 = vmatprep.subr.bf16.mxu0 0
        %576 = vmatpush1.bf16.msra.mxu0 %v554
        %577 = vmatprep.subr.bf16.mxu0 0
        %578 = vmatpush1.bf16.msra.mxu0 %v555
        %579 = vmatprep.subr.bf16.mxu0 0
        %580 = vmatpush1.bf16.msra.mxu0 %v556
        %581 = vmatprep.subr.bf16.mxu0 0
        %582 = vmatpush1.bf16.msra.mxu0 0
        %583 = vmatprep.subr.bf16.mxu0 0
        %584 = vmatpush1.bf16.msra.mxu0 0
        %585 = vmatprep.subr.bf16.mxu0 0
        %586 = vmatpush1.bf16.msra.mxu0 0
        %587 = vmatprep.subr.bf16.mxu0 0
        %588 = vmatpush1.bf16.msra.mxu0 0
        %589 = vmatprep.subr.bf16.mxu0 0
        %590 = vmatpush1.bf16.msra.mxu0 0
        %591 = vmatprep.subr.bf16.mxu0 0
        %592 = vmatpush1.bf16.msra.mxu0 0
        %593 = vmatprep.subr.bf16.mxu0 0
        %594 = vmatpush1.bf16.msra.mxu0 0
        %595 = vmatprep.subr.bf16.mxu0 0
        %596 = vmatpush1.bf16.msra.mxu0 0
        %597 = vmatprep.subr.bf16.mxu0 0
        %598 = vmatpush1.bf16.msra.mxu0 0
        %599 = vmatprep.subr.bf16.mxu0 0
        %600 = vmatpush1.bf16.msra.mxu0 0
        %601 = vmatprep.subr.bf16.mxu0 0
        %602 = vmatpush1.bf16.msra.mxu0 0
        %603 = vmatprep.subr.bf16.mxu0 0
        %604 = vmatpush1.bf16.msra.mxu0 0
        %605 = vmatprep.mubr.bf16.mxu0 0
        %606 = vmatmul.mubr.bf16.gmra.mrb[0].mxu0 %v562
        %v607 = vpop.f32.mrb[0].mxu0
        %v608 = vadd.f32 0.0, %v607
        %v609 = vpop.f32.mrb[0].mxu0
        %v610 = vpop.f32.mrb[0].mxu0
        %v611 = vadd.f32 0.0, %v610
        %v612 = vpop.f32.mrb[0].mxu0
        %613 = vmatprep.mubr.bf16.mxu0 0
        %614 = vmatmul.mubr.bf16.gmra.mrb[0].mxu0 %v565
        %v615 = vpop.f32.mrb[0].mxu0
        %v616 = vadd.f32 0.0, %v615
        %v617 = vpop.f32.mrb[0].mxu0
        %v618 = vpop.f32.mrb[0].mxu0
        %v619 = vadd.f32 0.0, %v618
        %v620 = vpop.f32.mrb[0].mxu0
        %621 = vmatprep.mubr.bf16.mxu0 0
        %622 = vmatmul.mubr.bf16.gmra.mrb[0].mxu0 %v568
        %v623 = vpop.f32.mrb[0].mxu0
        %v624 = vadd.f32 0.0, %v623
        %v625 = vpop.f32.mrb[0].mxu0
        %v626 = vpop.f32.mrb[0].mxu0
        %v627 = vadd.f32 0.0, %v626
        %v628 = vpop.f32.mrb[0].mxu0
        %629 = vmatprep.mubr.bf16.mxu0 0
        %630 = vmatmul.mubr.bf16.gmra.mrb[0].mxu0 %v571
        %v631 = vpop.f32.mrb[0].mxu0
        %v632 = vadd.f32 0.0, %v631
        %v633 = vpop.f32.mrb[0].mxu0
        %v634 = vpop.f32.mrb[0].mxu0
        %v635 = vadd.f32 0.0, %v634
        %v636 = vpop.f32.mrb[0].mxu0
        %637 = vdwg.mxu0
        %v638 = vpack.c.bf16 %v611, %v608
        %v639 = vpack.c.bf16 %v619, %v616
        %v640 = vpack.c.bf16 %v627, %v624
        %v641 = vpack.c.bf16 %v635, %v632
        %v646 = vunpack.c.l.b16 %v638
        %v647 = vunpack.c.h.b16 %v638
        %v648 = vunpack.c.l.b16 %v639
        %v649 = vunpack.c.h.b16 %v639
        %v650 = vunpack.c.l.b16 %v640
        %v651 = vunpack.c.h.b16 %v640
        %v652 = vunpack.c.l.b16 %v641
        %v653 = vunpack.c.h.b16 %v641
        %v654 = vpack.c.b16 %v646, %v646
        %v655 = vpack.c.b16 %v647, %v647
        %v656 = vpack.c.b16 %v648, %v648
        %v657 = vpack.c.b16 %v649, %v649
        %v658 = vpack.c.b16 %v650, %v650
        %v659 = vpack.c.b16 %v651, %v651
        %v660 = vpack.c.b16 %v652, %v652
        %v661 = vpack.c.b16 %v653, %v653
        %vm670 = vcmask 257024
        %671 = vst.msk [vmem:[%s286] sm:$0xf] %vm670, %v654
        %672 = vst.msk [vmem:[%s286 + $0x4] sm:$0xf] %vm670, %v655
        %673 = vst.msk [vmem:[%s286 + $0x8] sm:$0xf] %vm670, %v656
        %674 = vst.msk [vmem:[%s286 + $0xc] sm:$0xf] %vm670, %v657
        %675 = vst.msk [vmem:[%s286 + $0x10] sm:$0xf] %vm670, %v658
        %676 = vst.msk [vmem:[%s286 + $0x14] sm:$0xf] %vm670, %v659
        %677 = vst.msk [vmem:[%s286 + $0x18] sm:$0xf] %vm670, %v660
        %678 = vst.msk [vmem:[%s286 + $0x1c] sm:$0xf] %vm670, %v661
        %679 = vrot.lane.b32.xlu0 %v330, 96
        %v680 = vpop.permute.xlu0 %679
        %681 = vrot.lane.b32.xlu0 %v331, 96
        %v682 = vpop.permute.xlu0 %681
        %683 = vrot.lane.b32.xlu0 %v332, 96
        %v684 = vpop.permute.xlu0 %683
        %685 = vrot.lane.b32.xlu0 %v333, 96
        %v686 = vpop.permute.xlu0 %685
        %687 = vrot.lane.b32.xlu0 %v350, 96
        %v688 = vpop.permute.xlu0 %687
        %689 = vrot.lane.b32.xlu0 %v351, 96
        %v690 = vpop.permute.xlu0 %689
        %691 = vrot.lane.b32.xlu0 %v352, 96
        %v692 = vpop.permute.xlu0 %691
        %693 = vrot.lane.b32.xlu0 %v353, 96
        %v694 = vpop.permute.xlu0 %693
        %v696 = vsel %vm354, %v680, 0
        %v699 = vsel %vm354, %v682, 0
        %v702 = vsel %vm354, %v684, 0
        %v705 = vsel %vm354, %v686, 0
        %v708 = vsel %vm354, %v688, 0
        %v711 = vsel %vm354, %v690, 0
        %v714 = vsel %vm354, %v692, 0
        %v717 = vsel %vm354, %v694, 0
        %719 = vmatprep.subr.bf16.mxu0 0
        %720 = vmatpush1.bf16.xpose.msra.mxu0 %v708
        %721 = vmatprep.subr.bf16.mxu0 0
        %722 = vmatpush1.bf16.xpose.msra.mxu0 %v711
        %723 = vmatprep.subr.bf16.mxu0 0
        %724 = vmatpush1.bf16.xpose.msra.mxu0 %v714
        %725 = vmatprep.subr.bf16.mxu0 0
        %726 = vmatpush1.bf16.xpose.msra.mxu0 %v717
        %727 = vmatprep.subr.bf16.mxu0 0
        %728 = vmatpush1.bf16.xpose.msra.mxu0 0
        %729 = vmatprep.subr.bf16.mxu0 0
        %730 = vmatpush1.bf16.xpose.msra.mxu0 0
        %731 = vmatprep.subr.bf16.mxu0 0
        %732 = vmatpush1.bf16.xpose.msra.mxu0 0
        %733 = vmatprep.subr.bf16.mxu0 0
        %734 = vmatpush1.bf16.xpose.msra.mxu0 0
        %735 = vmatprep.subr.bf16.mxu0 0
        %736 = vmatpush1.bf16.xpose.msra.mxu0 0
        %737 = vmatprep.subr.bf16.mxu0 0
        %738 = vmatpush1.bf16.xpose.msra.mxu0 0
        %739 = vmatprep.subr.bf16.mxu0 0
        %740 = vmatpush1.bf16.xpose.msra.mxu0 0
        %741 = vmatprep.subr.bf16.mxu0 0
        %742 = vmatpush1.bf16.xpose.msra.mxu0 0
        %743 = vmatprep.subr.bf16.mxu0 0
        %744 = vmatpush1.bf16.xpose.msra.mxu0 0
        %745 = vmatprep.subr.bf16.mxu0 0
        %746 = vmatpush1.bf16.xpose.msra.mxu0 0
        %747 = vmatprep.subr.bf16.mxu0 0
        %748 = vmatpush1.bf16.xpose.msra.mxu0 0
        %749 = vmatprep.subr.bf16.mxu0 0
        %750 = vmatpush1.bf16.xpose.msra.mxu0 0
        %751 = vmatprep.mubr.bf16.mxu0 0
        %752 = vmatmul.mubr.bf16.gmra.mrb[0].mxu0 %v696
        %v753 = vpop.f32.mrb[0].mxu0
        %v754 = vadd.f32 0.0, %v753
        %v755 = vpop.f32.mrb[0].mxu0
        %v756 = vpop.f32.mrb[0].mxu0
        %v757 = vadd.f32 0.0, %v756
        %v758 = vpop.f32.mrb[0].mxu0
        %759 = vmatprep.mubr.bf16.mxu0 0
        %760 = vmatmul.mubr.bf16.gmra.mrb[0].mxu0 %v699
        %v761 = vpop.f32.mrb[0].mxu0
        %v762 = vadd.f32 0.0, %v761
        %v763 = vpop.f32.mrb[0].mxu0
        %v764 = vpop.f32.mrb[0].mxu0
        %v765 = vadd.f32 0.0, %v764
        %v766 = vpop.f32.mrb[0].mxu0
        %767 = vmatprep.mubr.bf16.mxu0 0
        %768 = vmatmul.mubr.bf16.gmra.mrb[0].mxu0 %v702
        %v769 = vpop.f32.mrb[0].mxu0
        %v770 = vadd.f32 0.0, %v769
        %v771 = vpop.f32.mrb[0].mxu0
        %v772 = vpop.f32.mrb[0].mxu0
        %v773 = vadd.f32 0.0, %v772
        %v774 = vpop.f32.mrb[0].mxu0
        %775 = vmatprep.mubr.bf16.mxu0 0
        %776 = vmatmul.mubr.bf16.gmra.mrb[0].mxu0 %v705
        %v777 = vpop.f32.mrb[0].mxu0
        %v778 = vadd.f32 0.0, %v777
        %v779 = vpop.f32.mrb[0].mxu0
        %v780 = vpop.f32.mrb[0].mxu0
        %v781 = vadd.f32 0.0, %v780
        %v782 = vpop.f32.mrb[0].mxu0
        %783 = vdwg.mxu0
        %v784 = vsel %vm444, %v754, -inf
        %785 = vmax.xlane.f32.xlu0 %v784
        %v786 = vpop.xlane.xlu0 %785
        %v787 = vsel %vm444, %v757, -inf
        %788 = vmax.xlane.f32.xlu0 %v787
        %v789 = vpop.xlane.xlu0 %788
        %v790 = vsel %vm444, %v762, -inf
        %791 = vmax.xlane.f32.xlu0 %v790
        %v792 = vpop.xlane.xlu0 %791
        %v793 = vsel %vm444, %v765, -inf
        %794 = vmax.xlane.f32.xlu0 %v793
        %v795 = vpop.xlane.xlu0 %794
        %v796 = vsel %vm444, %v770, -inf
        %797 = vmax.xlane.f32.xlu0 %v796
        %v798 = vpop.xlane.xlu0 %797
        %v799 = vsel %vm444, %v773, -inf
        %800 = vmax.xlane.f32.xlu0 %v799
        %v801 = vpop.xlane.xlu0 %800
        %v802 = vsel %vm444, %v778, -inf
        %803 = vmax.xlane.f32.xlu0 %v802
        %v804 = vpop.xlane.xlu0 %803
        %v805 = vsel %vm444, %v781, -inf
        %806 = vmax.xlane.f32.xlu0 %v805
        %v807 = vpop.xlane.xlu0 %806
        %v808 = vsub.f32 %v754, %v786
        %v809 = vsub.f32 %v757, %v789
        %v810 = vsub.f32 %v762, %v792
        %v811 = vsub.f32 %v765, %v795
        %v812 = vsub.f32 %v770, %v798
        %v813 = vsub.f32 %v773, %v801
        %v814 = vsub.f32 %v778, %v804
        %v815 = vsub.f32 %v781, %v807
        %v816 = vmul.f32 %v808, 1.442695
        %v817 = vpow.pop %v816
        %v818 = vmul.f32 %v809, 1.442695
        %v819 = vpow.pop %v818
        %v820 = vmul.f32 %v810, 1.442695
        %v821 = vpow.pop %v820
        %v822 = vmul.f32 %v811, 1.442695
        %v823 = vpow.pop %v822
        %v824 = vmul.f32 %v812, 1.442695
        %v825 = vpow.pop %v824
        %v826 = vmul.f32 %v813, 1.442695
        %v827 = vpow.pop %v826
        %v828 = vmul.f32 %v814, 1.442695
        %v829 = vpow.pop %v828
        %v830 = vmul.f32 %v815, 1.442695
        %v831 = vpow.pop %v830
        %v832 = vsel %vm444, %v817, 0.0
        %833 = vadd.xlane.f32.xlu0 %v832
        %v834 = vpop.xlane.xlu0 %833
        %v835 = vsel %vm444, %v819, 0.0
        %836 = vadd.xlane.f32.xlu0 %v835
        %v837 = vpop.xlane.xlu0 %836
        %v838 = vsel %vm444, %v821, 0.0
        %839 = vadd.xlane.f32.xlu0 %v838
        %v840 = vpop.xlane.xlu0 %839
        %v841 = vsel %vm444, %v823, 0.0
        %842 = vadd.xlane.f32.xlu0 %v841
        %v843 = vpop.xlane.xlu0 %842
        %v844 = vsel %vm444, %v825, 0.0
        %845 = vadd.xlane.f32.xlu0 %v844
        %v846 = vpop.xlane.xlu0 %845
        %v847 = vsel %vm444, %v827, 0.0
        %848 = vadd.xlane.f32.xlu0 %v847
        %v849 = vpop.xlane.xlu0 %848
        %v850 = vsel %vm444, %v829, 0.0
        %851 = vadd.xlane.f32.xlu0 %v850
        %v852 = vpop.xlane.xlu0 %851
        %v853 = vsel %vm444, %v831, 0.0
        %854 = vadd.xlane.f32.xlu0 %v853
        %v855 = vpop.xlane.xlu0 %854
        %v856 = vrcp.pop %v834
        %v857 = vrcp.pop %v837
        %v858 = vrcp.pop %v840
        %v859 = vrcp.pop %v843
        %v860 = vrcp.pop %v846
        %v861 = vrcp.pop %v849
        %v862 = vrcp.pop %v852
        %v863 = vrcp.pop %v855
        %v864 = vmul.f32 %v817, %v856
        %v865 = vmul.f32 %v819, %v857
        %v866 = vmul.f32 %v821, %v858
        %v867 = vmul.f32 %v823, %v859
        %v868 = vmul.f32 %v825, %v860
        %v869 = vmul.f32 %v827, %v861
        %v870 = vmul.f32 %v829, %v862
        %v871 = vmul.f32 %v831, %v863
        %v872 = vpack.c.bf16 %v865, %v864
        %v873 = vpack.c.bf16 %v867, %v866
        %v874 = vpack.c.bf16 %v869, %v868
        %v875 = vpack.c.bf16 %v871, %v870
        %876 = vrot.lane.b32.xlu0 %v553, 96
        %v877 = vpop.permute.xlu0 %876
        %878 = vrot.lane.b32.xlu0 %v554, 96
        %v879 = vpop.permute.xlu0 %878
        %880 = vrot.lane.b32.xlu0 %v555, 96
        %v881 = vpop.permute.xlu0 %880
        %882 = vrot.lane.b32.xlu0 %v556, 96
        %v883 = vpop.permute.xlu0 %882
        %v889 = vsel %vm444, %v872, 0
        %v892 = vsel %vm444, %v873, 0
        %v895 = vsel %vm444, %v874, 0
        %v898 = vsel %vm444, %v875, 0
        %900 = vmatprep.subr.bf16.mxu0 0
        %901 = vmatpush1.bf16.msra.mxu0 %v877
        %902 = vmatprep.subr.bf16.mxu0 0
        %903 = vmatpush1.bf16.msra.mxu0 %v879
        %904 = vmatprep.subr.bf16.mxu0 0
        %905 = vmatpush1.bf16.msra.mxu0 %v881
        %906 = vmatprep.subr.bf16.mxu0 0
        %907 = vmatpush1.bf16.msra.mxu0 %v883
        %908 = vmatprep.subr.bf16.mxu0 0
        %909 = vmatpush1.bf16.msra.mxu0 0
        %910 = vmatprep.subr.bf16.mxu0 0
        %911 = vmatpush1.bf16.msra.mxu0 0
        %912 = vmatprep.subr.bf16.mxu0 0
        %913 = vmatpush1.bf16.msra.mxu0 0
        %914 = vmatprep.subr.bf16.mxu0 0
        %915 = vmatpush1.bf16.msra.mxu0 0
        %916 = vmatprep.subr.bf16.mxu0 0
        %917 = vmatpush1.bf16.msra.mxu0 0
        %918 = vmatprep.subr.bf16.mxu0 0
        %919 = vmatpush1.bf16.msra.mxu0 0
        %920 = vmatprep.subr.bf16.mxu0 0
        %921 = vmatpush1.bf16.msra.mxu0 0
        %922 = vmatprep.subr.bf16.mxu0 0
        %923 = vmatpush1.bf16.msra.mxu0 0
        %924 = vmatprep.subr.bf16.mxu0 0
        %925 = vmatpush1.bf16.msra.mxu0 0
        %926 = vmatprep.subr.bf16.mxu0 0
        %927 = vmatpush1.bf16.msra.mxu0 0
        %928 = vmatprep.subr.bf16.mxu0 0
        %929 = vmatpush1.bf16.msra.mxu0 0
        %930 = vmatprep.subr.bf16.mxu0 0
        %931 = vmatpush1.bf16.msra.mxu0 0
        %932 = vmatprep.mubr.bf16.mxu0 0
        %933 = vmatmul.mubr.bf16.gmra.mrb[0].mxu0 %v889
        %v934 = vpop.f32.mrb[0].mxu0
        %v935 = vadd.f32 0.0, %v934
        %v936 = vpop.f32.mrb[0].mxu0
        %v937 = vpop.f32.mrb[0].mxu0
        %v938 = vadd.f32 0.0, %v937
        %v939 = vpop.f32.mrb[0].mxu0
        %940 = vmatprep.mubr.bf16.mxu0 0
        %941 = vmatmul.mubr.bf16.gmra.mrb[0].mxu0 %v892
        %v942 = vpop.f32.mrb[0].mxu0
        %v943 = vadd.f32 0.0, %v942
        %v944 = vpop.f32.mrb[0].mxu0
        %v945 = vpop.f32.mrb[0].mxu0
        %v946 = vadd.f32 0.0, %v945
        %v947 = vpop.f32.mrb[0].mxu0
        %948 = vmatprep.mubr.bf16.mxu0 0
        %949 = vmatmul.mubr.bf16.gmra.mrb[0].mxu0 %v895
        %v950 = vpop.f32.mrb[0].mxu0
        %v951 = vadd.f32 0.0, %v950
        %v952 = vpop.f32.mrb[0].mxu0
        %v953 = vpop.f32.mrb[0].mxu0
        %v954 = vadd.f32 0.0, %v953
        %v955 = vpop.f32.mrb[0].mxu0
        %956 = vmatprep.mubr.bf16.mxu0 0
        %957 = vmatmul.mubr.bf16.gmra.mrb[0].mxu0 %v898
        %v958 = vpop.f32.mrb[0].mxu0
        %v959 = vadd.f32 0.0, %v958
        %v960 = vpop.f32.mrb[0].mxu0
        %v961 = vpop.f32.mrb[0].mxu0
        %v962 = vadd.f32 0.0, %v961
        %v963 = vpop.f32.mrb[0].mxu0
        %964 = vdwg.mxu0
        %v965 = vpack.c.bf16 %v938, %v935
        %v966 = vpack.c.bf16 %v946, %v943
        %v967 = vpack.c.bf16 %v954, %v951
        %v968 = vpack.c.bf16 %v962, %v959
        %v973 = vunpack.c.l.b16 %v965
        %v974 = vunpack.c.h.b16 %v965
        %v975 = vunpack.c.l.b16 %v966
        %v976 = vunpack.c.h.b16 %v966
        %v977 = vunpack.c.l.b16 %v967
        %v978 = vunpack.c.h.b16 %v967
        %v979 = vunpack.c.l.b16 %v968
        %v980 = vunpack.c.h.b16 %v968
        %v981 = vpack.c.b16 %v973, %v973
        %v982 = vpack.c.b16 %v974, %v974
        %v983 = vpack.c.b16 %v975, %v975
        %v984 = vpack.c.b16 %v976, %v976
        %v985 = vpack.c.b16 %v977, %v977
        %v986 = vpack.c.b16 %v978, %v978
        %v987 = vpack.c.b16 %v979, %v979
        %v988 = vpack.c.b16 %v980, %v980
        %989 = vrot.lane.b32.xlu0 %v981, 32
        %v990 = vpop.permute.xlu0 %989
        %991 = vrot.lane.b32.xlu0 %v982, 32
        %v992 = vpop.permute.xlu0 %991
        %993 = vrot.lane.b32.xlu0 %v983, 32
        %v994 = vpop.permute.xlu0 %993
        %995 = vrot.lane.b32.xlu0 %v984, 32
        %v996 = vpop.permute.xlu0 %995
        %997 = vrot.lane.b32.xlu0 %v985, 32
        %v998 = vpop.permute.xlu0 %997
        %999 = vrot.lane.b32.xlu0 %v986, 32
        %v1000 = vpop.permute.xlu0 %999
        %1001 = vrot.lane.b32.xlu0 %v987, 32
        %v1002 = vpop.permute.xlu0 %1001
        %1003 = vrot.lane.b32.xlu0 %v988, 32
        %v1004 = vpop.permute.xlu0 %1003
        %vm1013 = vcmask 519424
        %1014 = vst.msk [vmem:[%s286] sm:$0xf] %vm1013, %v990
        %1015 = vst.msk [vmem:[%s286 + $0x4] sm:$0xf] %vm1013, %v992
        %1016 = vst.msk [vmem:[%s286 + $0x8] sm:$0xf] %vm1013, %v994
        %1017 = vst.msk [vmem:[%s286 + $0xc] sm:$0xf] %vm1013, %v996
        %1018 = vst.msk [vmem:[%s286 + $0x10] sm:$0xf] %vm1013, %v998
        %1019 = vst.msk [vmem:[%s286 + $0x14] sm:$0xf] %vm1013, %v1000
        %1020 = vst.msk [vmem:[%s286 + $0x18] sm:$0xf] %vm1013, %v1002
        %1021 = vst.msk [vmem:[%s286 + $0x1c] sm:$0xf] %vm1013, %v1004
        %1022 = vrot.lane.b32.xlu0 %v330, 64
        %v1023 = vpop.permute.xlu0 %1022
        %1024 = vrot.lane.b32.xlu0 %v331, 64
        %v1025 = vpop.permute.xlu0 %1024
        %1026 = vrot.lane.b32.xlu0 %v332, 64
        %v1027 = vpop.permute.xlu0 %1026
        %1028 = vrot.lane.b32.xlu0 %v333, 64
        %v1029 = vpop.permute.xlu0 %1028
        %1030 = vrot.lane.b32.xlu0 %v350, 64
        %v1031 = vpop.permute.xlu0 %1030
        %1032 = vrot.lane.b32.xlu0 %v351, 64
        %v1033 = vpop.permute.xlu0 %1032
        %1034 = vrot.lane.b32.xlu0 %v352, 64
        %v1035 = vpop.permute.xlu0 %1034
        %1036 = vrot.lane.b32.xlu0 %v353, 64
        %v1037 = vpop.permute.xlu0 %1036
        %v1039 = vsel %vm354, %v1023, 0
        %v1042 = vsel %vm354, %v1025, 0
        %v1045 = vsel %vm354, %v1027, 0
        %v1048 = vsel %vm354, %v1029, 0
        %v1051 = vsel %vm354, %v1031, 0
        %v1054 = vsel %vm354, %v1033, 0
        %v1057 = vsel %vm354, %v1035, 0
        %v1060 = vsel %vm354, %v1037, 0
        %1062 = vmatprep.subr.bf16.mxu0 0
        %1063 = vmatpush1.bf16.xpose.msra.mxu0 %v1051
        %1064 = vmatprep.subr.bf16.mxu0 0
        %1065 = vmatpush1.bf16.xpose.msra.mxu0 %v1054
        %1066 = vmatprep.subr.bf16.mxu0 0
        %1067 = vmatpush1.bf16.xpose.msra.mxu0 %v1057
        %1068 = vmatprep.subr.bf16.mxu0 0
        %1069 = vmatpush1.bf16.xpose.msra.mxu0 %v1060
        %1070 = vmatprep.subr.bf16.mxu0 0
        %1071 = vmatpush1.bf16.xpose.msra.mxu0 0
        %1072 = vmatprep.subr.bf16.mxu0 0
        %1073 = vmatpush1.bf16.xpose.msra.mxu0 0
        %1074 = vmatprep.subr.bf16.mxu0 0
        %1075 = vmatpush1.bf16.xpose.msra.mxu0 0
        %1076 = vmatprep.subr.bf16.mxu0 0
        %1077 = vmatpush1.bf16.xpose.msra.mxu0 0
        %1078 = vmatprep.subr.bf16.mxu0 0
        %1079 = vmatpush1.bf16.xpose.msra.mxu0 0
        %1080 = vmatprep.subr.bf16.mxu0 0
        %1081 = vmatpush1.bf16.xpose.msra.mxu0 0
        %1082 = vmatprep.subr.bf16.mxu0 0
        %1083 = vmatpush1.bf16.xpose.msra.mxu0 0
        %1084 = vmatprep.subr.bf16.mxu0 0
        %1085 = vmatpush1.bf16.xpose.msra.mxu0 0
        %1086 = vmatprep.subr.bf16.mxu0 0
        %1087 = vmatpush1.bf16.xpose.msra.mxu0 0
        %1088 = vmatprep.subr.bf16.mxu0 0
        %1089 = vmatpush1.bf16.xpose.msra.mxu0 0
        %1090 = vmatprep.subr.bf16.mxu0 0
        %1091 = vmatpush1.bf16.xpose.msra.mxu0 0
        %1092 = vmatprep.subr.bf16.mxu0 0
        %1093 = vmatpush1.bf16.xpose.msra.mxu0 0
        %1094 = vmatprep.mubr.bf16.mxu0 0
        %1095 = vmatmul.mubr.bf16.gmra.mrb[0].mxu0 %v1039
        %v1096 = vpop.f32.mrb[0].mxu0
        %v1097 = vadd.f32 0.0, %v1096
        %v1098 = vpop.f32.mrb[0].mxu0
        %v1099 = vpop.f32.mrb[0].mxu0
        %v1100 = vadd.f32 0.0, %v1099
        %v1101 = vpop.f32.mrb[0].mxu0
        %1102 = vmatprep.mubr.bf16.mxu0 0
        %1103 = vmatmul.mubr.bf16.gmra.mrb[0].mxu0 %v1042
        %v1104 = vpop.f32.mrb[0].mxu0
        %v1105 = vadd.f32 0.0, %v1104
        %v1106 = vpop.f32.mrb[0].mxu0
        %v1107 = vpop.f32.mrb[0].mxu0
        %v1108 = vadd.f32 0.0, %v1107
        %v1109 = vpop.f32.mrb[0].mxu0
        %1110 = vmatprep.mubr.bf16.mxu0 0
        %1111 = vmatmul.mubr.bf16.gmra.mrb[0].mxu0 %v1045
        %v1112 = vpop.f32.mrb[0].mxu0
        %v1113 = vadd.f32 0.0, %v1112
        %v1114 = vpop.f32.mrb[0].mxu0
        %v1115 = vpop.f32.mrb[0].mxu0
        %v1116 = vadd.f32 0.0, %v1115
        %v1117 = vpop.f32.mrb[0].mxu0
        %1118 = vmatprep.mubr.bf16.mxu0 0
        %1119 = vmatmul.mubr.bf16.gmra.mrb[0].mxu0 %v1048
        %v1120 = vpop.f32.mrb[0].mxu0
        %v1121 = vadd.f32 0.0, %v1120
        %v1122 = vpop.f32.mrb[0].mxu0
        %v1123 = vpop.f32.mrb[0].mxu0
        %v1124 = vadd.f32 0.0, %v1123
        %v1125 = vpop.f32.mrb[0].mxu0
        %1126 = vdwg.mxu0
        %v1127 = vsel %vm444, %v1097, -inf
        %1128 = vmax.xlane.f32.xlu0 %v1127
        %v1129 = vpop.xlane.xlu0 %1128
        %v1130 = vsel %vm444, %v1100, -inf
        %1131 = vmax.xlane.f32.xlu0 %v1130
        %v1132 = vpop.xlane.xlu0 %1131
        %v1133 = vsel %vm444, %v1105, -inf
        %1134 = vmax.xlane.f32.xlu0 %v1133
        %v1135 = vpop.xlane.xlu0 %1134
        %v1136 = vsel %vm444, %v1108, -inf
        %1137 = vmax.xlane.f32.xlu0 %v1136
        %v1138 = vpop.xlane.xlu0 %1137
        %v1139 = vsel %vm444, %v1113, -inf
        %1140 = vmax.xlane.f32.xlu0 %v1139
        %v1141 = vpop.xlane.xlu0 %1140
        %v1142 = vsel %vm444, %v1116, -inf
        %1143 = vmax.xlane.f32.xlu0 %v1142
        %v1144 = vpop.xlane.xlu0 %1143
        %v1145 = vsel %vm444, %v1121, -inf
        %1146 = vmax.xlane.f32.xlu0 %v1145
        %v1147 = vpop.xlane.xlu0 %1146
        %v1148 = vsel %vm444, %v1124, -inf
        %1149 = vmax.xlane.f32.xlu0 %v1148
        %v1150 = vpop.xlane.xlu0 %1149
        %v1151 = vsub.f32 %v1097, %v1129
        %v1152 = vsub.f32 %v1100, %v1132
        %v1153 = vsub.f32 %v1105, %v1135
        %v1154 = vsub.f32 %v1108, %v1138
        %v1155 = vsub.f32 %v1113, %v1141
        %v1156 = vsub.f32 %v1116, %v1144
        %v1157 = vsub.f32 %v1121, %v1147
        %v1158 = vsub.f32 %v1124, %v1150
        %v1159 = vmul.f32 %v1151, 1.442695
        %v1160 = vpow.pop %v1159
        %v1161 = vmul.f32 %v1152, 1.442695
        %v1162 = vpow.pop %v1161
        %v1163 = vmul.f32 %v1153, 1.442695
        %v1164 = vpow.pop %v1163
        %v1165 = vmul.f32 %v1154, 1.442695
        %v1166 = vpow.pop %v1165
        %v1167 = vmul.f32 %v1155, 1.442695
        %v1168 = vpow.pop %v1167
        %v1169 = vmul.f32 %v1156, 1.442695
        %v1170 = vpow.pop %v1169
        %v1171 = vmul.f32 %v1157, 1.442695
        %v1172 = vpow.pop %v1171
        %v1173 = vmul.f32 %v1158, 1.442695
        %v1174 = vpow.pop %v1173
        %v1175 = vsel %vm444, %v1160, 0.0
        %1176 = vadd.xlane.f32.xlu0 %v1175
        %v1177 = vpop.xlane.xlu0 %1176
        %v1178 = vsel %vm444, %v1162, 0.0
        %1179 = vadd.xlane.f32.xlu0 %v1178
        %v1180 = vpop.xlane.xlu0 %1179
        %v1181 = vsel %vm444, %v1164, 0.0
        %1182 = vadd.xlane.f32.xlu0 %v1181
        %v1183 = vpop.xlane.xlu0 %1182
        %v1184 = vsel %vm444, %v1166, 0.0
        %1185 = vadd.xlane.f32.xlu0 %v1184
        %v1186 = vpop.xlane.xlu0 %1185
        %v1187 = vsel %vm444, %v1168, 0.0
        %1188 = vadd.xlane.f32.xlu0 %v1187
        %v1189 = vpop.xlane.xlu0 %1188
        %v1190 = vsel %vm444, %v1170, 0.0
        %1191 = vadd.xlane.f32.xlu0 %v1190
        %v1192 = vpop.xlane.xlu0 %1191
        %v1193 = vsel %vm444, %v1172, 0.0
        %1194 = vadd.xlane.f32.xlu0 %v1193
        %v1195 = vpop.xlane.xlu0 %1194
        %v1196 = vsel %vm444, %v1174, 0.0
        %1197 = vadd.xlane.f32.xlu0 %v1196
        %v1198 = vpop.xlane.xlu0 %1197
        %v1199 = vrcp.pop %v1177
        %v1200 = vrcp.pop %v1180
        %v1201 = vrcp.pop %v1183
        %v1202 = vrcp.pop %v1186
        %v1203 = vrcp.pop %v1189
        %v1204 = vrcp.pop %v1192
        %v1205 = vrcp.pop %v1195
        %v1206 = vrcp.pop %v1198
        %v1207 = vmul.f32 %v1160, %v1199
        %v1208 = vmul.f32 %v1162, %v1200
        %v1209 = vmul.f32 %v1164, %v1201
        %v1210 = vmul.f32 %v1166, %v1202
        %v1211 = vmul.f32 %v1168, %v1203
        %v1212 = vmul.f32 %v1170, %v1204
        %v1213 = vmul.f32 %v1172, %v1205
        %v1214 = vmul.f32 %v1174, %v1206
        %v1215 = vpack.c.bf16 %v1208, %v1207
        %v1216 = vpack.c.bf16 %v1210, %v1209
        %v1217 = vpack.c.bf16 %v1212, %v1211
        %v1218 = vpack.c.bf16 %v1214, %v1213
        %1219 = vrot.lane.b32.xlu0 %v553, 64
        %v1220 = vpop.permute.xlu0 %1219
        %1221 = vrot.lane.b32.xlu0 %v554, 64
        %v1222 = vpop.permute.xlu0 %1221
        %1223 = vrot.lane.b32.xlu0 %v555, 64
        %v1224 = vpop.permute.xlu0 %1223
        %1225 = vrot.lane.b32.xlu0 %v556, 64
        %v1226 = vpop.permute.xlu0 %1225
        %v1232 = vsel %vm444, %v1215, 0
        %v1235 = vsel %vm444, %v1216, 0
        %v1238 = vsel %vm444, %v1217, 0
        %v1241 = vsel %vm444, %v1218, 0
        %1243 = vmatprep.subr.bf16.mxu0 0
        %1244 = vmatpush1.bf16.msra.mxu0 %v1220
        %1245 = vmatprep.subr.bf16.mxu0 0
        %1246 = vmatpush1.bf16.msra.mxu0 %v1222
        %1247 = vmatprep.subr.bf16.mxu0 0
        %1248 = vmatpush1.bf16.msra.mxu0 %v1224
        %1249 = vmatprep.subr.bf16.mxu0 0
        %1250 = vmatpush1.bf16.msra.mxu0 %v1226
        %1251 = vmatprep.subr.bf16.mxu0 0
        %1252 = vmatpush1.bf16.msra.mxu0 0
        %1253 = vmatprep.subr.bf16.mxu0 0
        %1254 = vmatpush1.bf16.msra.mxu0 0
        %1255 = vmatprep.subr.bf16.mxu0 0
        %1256 = vmatpush1.bf16.msra.mxu0 0
        %1257 = vmatprep.subr.bf16.mxu0 0
        %1258 = vmatpush1.bf16.msra.mxu0 0
        %1259 = vmatprep.subr.bf16.mxu0 0
        %1260 = vmatpush1.bf16.msra.mxu0 0
        %1261 = vmatprep.subr.bf16.mxu0 0
        %1262 = vmatpush1.bf16.msra.mxu0 0
        %1263 = vmatprep.subr.bf16.mxu0 0
        %1264 = vmatpush1.bf16.msra.mxu0 0
        %1265 = vmatprep.subr.bf16.mxu0 0
        %1266 = vmatpush1.bf16.msra.mxu0 0
        %1267 = vmatprep.subr.bf16.mxu0 0
        %1268 = vmatpush1.bf16.msra.mxu0 0
        %1269 = vmatprep.subr.bf16.mxu0 0
        %1270 = vmatpush1.bf16.msra.mxu0 0
        %1271 = vmatprep.subr.bf16.mxu0 0
        %1272 = vmatpush1.bf16.msra.mxu0 0
        %1273 = vmatprep.subr.bf16.mxu0 0
        %1274 = vmatpush1.bf16.msra.mxu0 0
        %1275 = vmatprep.mubr.bf16.mxu0 0
        %1276 = vmatmul.mubr.bf16.gmra.mrb[0].mxu0 %v1232
        %v1277 = vpop.f32.mrb[0].mxu0
        %v1278 = vadd.f32 0.0, %v1277
        %v1279 = vpop.f32.mrb[0].mxu0
        %v1280 = vpop.f32.mrb[0].mxu0
        %v1281 = vadd.f32 0.0, %v1280
        %v1282 = vpop.f32.mrb[0].mxu0
        %1283 = vmatprep.mubr.bf16.mxu0 0
        %1284 = vmatmul.mubr.bf16.gmra.mrb[0].mxu0 %v1235
        %v1285 = vpop.f32.mrb[0].mxu0
        %v1286 = vadd.f32 0.0, %v1285
        %v1287 = vpop.f32.mrb[0].mxu0
        %v1288 = vpop.f32.mrb[0].mxu0
        %v1289 = vadd.f32 0.0, %v1288
        %v1290 = vpop.f32.mrb[0].mxu0
        %1291 = vmatprep.mubr.bf16.mxu0 0
        %1292 = vmatmul.mubr.bf16.gmra.mrb[0].mxu0 %v1238
        %v1293 = vpop.f32.mrb[0].mxu0
        %v1294 = vadd.f32 0.0, %v1293
        %v1295 = vpop.f32.mrb[0].mxu0
        %v1296 = vpop.f32.mrb[0].mxu0
        %v1297 = vadd.f32 0.0, %v1296
        %v1298 = vpop.f32.mrb[0].mxu0
        %1299 = vmatprep.mubr.bf16.mxu0 0
        %1300 = vmatmul.mubr.bf16.gmra.mrb[0].mxu0 %v1241
        %v1301 = vpop.f32.mrb[0].mxu0
        %v1302 = vadd.f32 0.0, %v1301
        %v1303 = vpop.f32.mrb[0].mxu0
        %v1304 = vpop.f32.mrb[0].mxu0
        %v1305 = vadd.f32 0.0, %v1304
        %v1306 = vpop.f32.mrb[0].mxu0
        %1307 = vdwg.mxu0
        %v1308 = vpack.c.bf16 %v1281, %v1278
        %v1309 = vpack.c.bf16 %v1289, %v1286
        %v1310 = vpack.c.bf16 %v1297, %v1294
        %v1311 = vpack.c.bf16 %v1305, %v1302
        %v1316 = vunpack.c.l.b16 %v1308
        %v1317 = vunpack.c.h.b16 %v1308
        %v1318 = vunpack.c.l.b16 %v1309
        %v1319 = vunpack.c.h.b16 %v1309
        %v1320 = vunpack.c.l.b16 %v1310
        %v1321 = vunpack.c.h.b16 %v1310
        %v1322 = vunpack.c.l.b16 %v1311
        %v1323 = vunpack.c.h.b16 %v1311
        %v1324 = vpack.c.b16 %v1316, %v1316
        %v1325 = vpack.c.b16 %v1317, %v1317
        %v1326 = vpack.c.b16 %v1318, %v1318
        %v1327 = vpack.c.b16 %v1319, %v1319
        %v1328 = vpack.c.b16 %v1320, %v1320
        %v1329 = vpack.c.b16 %v1321, %v1321
        %v1330 = vpack.c.b16 %v1322, %v1322
        %v1331 = vpack.c.b16 %v1323, %v1323
        %1332 = vrot.lane.b32.xlu0 %v1324, 64
        %v1333 = vpop.permute.xlu0 %1332
        %1334 = vrot.lane.b32.xlu0 %v1325, 64
        %v1335 = vpop.permute.xlu0 %1334
        %1336 = vrot.lane.b32.xlu0 %v1326, 64
        %v1337 = vpop.permute.xlu0 %1336
        %1338 = vrot.lane.b32.xlu0 %v1327, 64
        %v1339 = vpop.permute.xlu0 %1338
        %1340 = vrot.lane.b32.xlu0 %v1328, 64
        %v1341 = vpop.permute.xlu0 %1340
        %1342 = vrot.lane.b32.xlu0 %v1329, 64
        %v1343 = vpop.permute.xlu0 %1342
        %1344 = vrot.lane.b32.xlu0 %v1330, 64
        %v1345 = vpop.permute.xlu0 %1344
        %1346 = vrot.lane.b32.xlu0 %v1331, 64
        %v1347 = vpop.permute.xlu0 %1346
        %vm1356 = vcmask 781824
        %1357 = vst.msk [vmem:[%s286] sm:$0xf] %vm1356, %v1333
        %1358 = vst.msk [vmem:[%s286 + $0x4] sm:$0xf] %vm1356, %v1335
        %1359 = vst.msk [vmem:[%s286 + $0x8] sm:$0xf] %vm1356, %v1337
        %1360 = vst.msk [vmem:[%s286 + $0xc] sm:$0xf] %vm1356, %v1339
        %1361 = vst.msk [vmem:[%s286 + $0x10] sm:$0xf] %vm1356, %v1341
        %1362 = vst.msk [vmem:[%s286 + $0x14] sm:$0xf] %vm1356, %v1343
        %1363 = vst.msk [vmem:[%s286 + $0x18] sm:$0xf] %vm1356, %v1345
        %1364 = vst.msk [vmem:[%s286 + $0x1c] sm:$0xf] %vm1356, %v1347
        %1365 = vrot.lane.b32.xlu0 %v330, 32
        %v1366 = vpop.permute.xlu0 %1365
        %1367 = vrot.lane.b32.xlu0 %v331, 32
        %v1368 = vpop.permute.xlu0 %1367
        %1369 = vrot.lane.b32.xlu0 %v332, 32
        %v1370 = vpop.permute.xlu0 %1369
        %1371 = vrot.lane.b32.xlu0 %v333, 32
        %v1372 = vpop.permute.xlu0 %1371
        %1373 = vrot.lane.b32.xlu0 %v350, 32
        %v1374 = vpop.permute.xlu0 %1373
        %1375 = vrot.lane.b32.xlu0 %v351, 32
        %v1376 = vpop.permute.xlu0 %1375
        %1377 = vrot.lane.b32.xlu0 %v352, 32
        %v1378 = vpop.permute.xlu0 %1377
        %1379 = vrot.lane.b32.xlu0 %v353, 32
        %v1380 = vpop.permute.xlu0 %1379
        %v1382 = vsel %vm354, %v1366, 0
        %v1385 = vsel %vm354, %v1368, 0
        %v1388 = vsel %vm354, %v1370, 0
        %v1391 = vsel %vm354, %v1372, 0
        %v1394 = vsel %vm354, %v1374, 0
        %v1397 = vsel %vm354, %v1376, 0
        %v1400 = vsel %vm354, %v1378, 0
        %v1403 = vsel %vm354, %v1380, 0
        %1405 = vmatprep.subr.bf16.mxu0 0
        %1406 = vmatpush1.bf16.xpose.msra.mxu0 %v1394
        %1407 = vmatprep.subr.bf16.mxu0 0
        %1408 = vmatpush1.bf16.xpose.msra.mxu0 %v1397
        %1409 = vmatprep.subr.bf16.mxu0 0
        %1410 = vmatpush1.bf16.xpose.msra.mxu0 %v1400
        %1411 = vmatprep.subr.bf16.mxu0 0
        %1412 = vmatpush1.bf16.xpose.msra.mxu0 %v1403
        %1413 = vmatprep.subr.bf16.mxu0 0
        %1414 = vmatpush1.bf16.xpose.msra.mxu0 0
        %1415 = vmatprep.subr.bf16.mxu0 0
        %1416 = vmatpush1.bf16.xpose.msra.mxu0 0
        %1417 = vmatprep.subr.bf16.mxu0 0
        %1418 = vmatpush1.bf16.xpose.msra.mxu0 0
        %1419 = vmatprep.subr.bf16.mxu0 0
        %1420 = vmatpush1.bf16.xpose.msra.mxu0 0
        %1421 = vmatprep.subr.bf16.mxu0 0
        %1422 = vmatpush1.bf16.xpose.msra.mxu0 0
        %1423 = vmatprep.subr.bf16.mxu0 0
        %1424 = vmatpush1.bf16.xpose.msra.mxu0 0
        %1425 = vmatprep.subr.bf16.mxu0 0
        %1426 = vmatpush1.bf16.xpose.msra.mxu0 0
        %1427 = vmatprep.subr.bf16.mxu0 0
        %1428 = vmatpush1.bf16.xpose.msra.mxu0 0
        %1429 = vmatprep.subr.bf16.mxu0 0
        %1430 = vmatpush1.bf16.xpose.msra.mxu0 0
        %1431 = vmatprep.subr.bf16.mxu0 0
        %1432 = vmatpush1.bf16.xpose.msra.mxu0 0
        %1433 = vmatprep.subr.bf16.mxu0 0
        %1434 = vmatpush1.bf16.xpose.msra.mxu0 0
        %1435 = vmatprep.subr.bf16.mxu0 0
        %1436 = vmatpush1.bf16.xpose.msra.mxu0 0
        %1437 = vmatprep.mubr.bf16.mxu0 0
        %1438 = vmatmul.mubr.bf16.gmra.mrb[0].mxu0 %v1382
        %v1439 = vpop.f32.mrb[0].mxu0
        %v1440 = vadd.f32 0.0, %v1439
        %v1441 = vpop.f32.mrb[0].mxu0
        %v1442 = vpop.f32.mrb[0].mxu0
        %v1443 = vadd.f32 0.0, %v1442
        %v1444 = vpop.f32.mrb[0].mxu0
        %1445 = vmatprep.mubr.bf16.mxu0 0
        %1446 = vmatmul.mubr.bf16.gmra.mrb[0].mxu0 %v1385
        %v1447 = vpop.f32.mrb[0].mxu0
        %v1448 = vadd.f32 0.0, %v1447
        %v1449 = vpop.f32.mrb[0].mxu0
        %v1450 = vpop.f32.mrb[0].mxu0
        %v1451 = vadd.f32 0.0, %v1450
        %v1452 = vpop.f32.mrb[0].mxu0
        %1453 = vmatprep.mubr.bf16.mxu0 0
        %1454 = vmatmul.mubr.bf16.gmra.mrb[0].mxu0 %v1388
        %v1455 = vpop.f32.mrb[0].mxu0
        %v1456 = vadd.f32 0.0, %v1455
        %v1457 = vpop.f32.mrb[0].mxu0
        %v1458 = vpop.f32.mrb[0].mxu0
        %v1459 = vadd.f32 0.0, %v1458
        %v1460 = vpop.f32.mrb[0].mxu0
        %1461 = vmatprep.mubr.bf16.mxu0 0
        %1462 = vmatmul.mubr.bf16.gmra.mrb[0].mxu0 %v1391
        %v1463 = vpop.f32.mrb[0].mxu0
        %v1464 = vadd.f32 0.0, %v1463
        %v1465 = vpop.f32.mrb[0].mxu0
        %v1466 = vpop.f32.mrb[0].mxu0
        %v1467 = vadd.f32 0.0, %v1466
        %v1468 = vpop.f32.mrb[0].mxu0
        %1469 = vdwg.mxu0
        %v1470 = vsel %vm444, %v1440, -inf
        %1471 = vmax.xlane.f32.xlu0 %v1470
        %v1472 = vpop.xlane.xlu0 %1471
        %v1473 = vsel %vm444, %v1443, -inf
        %1474 = vmax.xlane.f32.xlu0 %v1473
        %v1475 = vpop.xlane.xlu0 %1474
        %v1476 = vsel %vm444, %v1448, -inf
        %1477 = vmax.xlane.f32.xlu0 %v1476
        %v1478 = vpop.xlane.xlu0 %1477
        %v1479 = vsel %vm444, %v1451, -inf
        %1480 = vmax.xlane.f32.xlu0 %v1479
        %v1481 = vpop.xlane.xlu0 %1480
        %v1482 = vsel %vm444, %v1456, -inf
        %1483 = vmax.xlane.f32.xlu0 %v1482
        %v1484 = vpop.xlane.xlu0 %1483
        %v1485 = vsel %vm444, %v1459, -inf
        %1486 = vmax.xlane.f32.xlu0 %v1485
        %v1487 = vpop.xlane.xlu0 %1486
        %v1488 = vsel %vm444, %v1464, -inf
        %1489 = vmax.xlane.f32.xlu0 %v1488
        %v1490 = vpop.xlane.xlu0 %1489
        %v1491 = vsel %vm444, %v1467, -inf
        %1492 = vmax.xlane.f32.xlu0 %v1491
        %v1493 = vpop.xlane.xlu0 %1492
        %v1494 = vsub.f32 %v1440, %v1472
        %v1495 = vsub.f32 %v1443, %v1475
        %v1496 = vsub.f32 %v1448, %v1478
        %v1497 = vsub.f32 %v1451, %v1481
        %v1498 = vsub.f32 %v1456, %v1484
        %v1499 = vsub.f32 %v1459, %v1487
        %v1500 = vsub.f32 %v1464, %v1490
        %v1501 = vsub.f32 %v1467, %v1493
        %v1502 = vmul.f32 %v1494, 1.442695
        %v1503 = vpow.pop %v1502
        %v1504 = vmul.f32 %v1495, 1.442695
        %v1505 = vpow.pop %v1504
        %v1506 = vmul.f32 %v1496, 1.442695
        %v1507 = vpow.pop %v1506
        %v1508 = vmul.f32 %v1497, 1.442695
        %v1509 = vpow.pop %v1508
        %v1510 = vmul.f32 %v1498, 1.442695
        %v1511 = vpow.pop %v1510
        %v1512 = vmul.f32 %v1499, 1.442695
        %v1513 = vpow.pop %v1512
        %v1514 = vmul.f32 %v1500, 1.442695
        %v1515 = vpow.pop %v1514
        %v1516 = vmul.f32 %v1501, 1.442695
        %v1517 = vpow.pop %v1516
        %v1518 = vsel %vm444, %v1503, 0.0
        %1519 = vadd.xlane.f32.xlu0 %v1518
        %v1520 = vpop.xlane.xlu0 %1519
        %v1521 = vsel %vm444, %v1505, 0.0
        %1522 = vadd.xlane.f32.xlu0 %v1521
        %v1523 = vpop.xlane.xlu0 %1522
        %v1524 = vsel %vm444, %v1507, 0.0
        %1525 = vadd.xlane.f32.xlu0 %v1524
        %v1526 = vpop.xlane.xlu0 %1525
        %v1527 = vsel %vm444, %v1509, 0.0
        %1528 = vadd.xlane.f32.xlu0 %v1527
        %v1529 = vpop.xlane.xlu0 %1528
        %v1530 = vsel %vm444, %v1511, 0.0
        %1531 = vadd.xlane.f32.xlu0 %v1530
        %v1532 = vpop.xlane.xlu0 %1531
        %v1533 = vsel %vm444, %v1513, 0.0
        %1534 = vadd.xlane.f32.xlu0 %v1533
        %v1535 = vpop.xlane.xlu0 %1534
        %v1536 = vsel %vm444, %v1515, 0.0
        %1537 = vadd.xlane.f32.xlu0 %v1536
        %v1538 = vpop.xlane.xlu0 %1537
        %v1539 = vsel %vm444, %v1517, 0.0
        %1540 = vadd.xlane.f32.xlu0 %v1539
        %v1541 = vpop.xlane.xlu0 %1540
        %v1542 = vrcp.pop %v1520
        %v1543 = vrcp.pop %v1523
        %v1544 = vrcp.pop %v1526
        %v1545 = vrcp.pop %v1529
        %v1546 = vrcp.pop %v1532
        %v1547 = vrcp.pop %v1535
        %v1548 = vrcp.pop %v1538
        %v1549 = vrcp.pop %v1541
        %v1550 = vmul.f32 %v1503, %v1542
        %v1551 = vmul.f32 %v1505, %v1543
        %v1552 = vmul.f32 %v1507, %v1544
        %v1553 = vmul.f32 %v1509, %v1545
        %v1554 = vmul.f32 %v1511, %v1546
        %v1555 = vmul.f32 %v1513, %v1547
        %v1556 = vmul.f32 %v1515, %v1548
        %v1557 = vmul.f32 %v1517, %v1549
        %v1558 = vpack.c.bf16 %v1551, %v1550
        %v1559 = vpack.c.bf16 %v1553, %v1552
        %v1560 = vpack.c.bf16 %v1555, %v1554
        %v1561 = vpack.c.bf16 %v1557, %v1556
        %1562 = vrot.lane.b32.xlu0 %v553, 32
        %v1563 = vpop.permute.xlu0 %1562
        %1564 = vrot.lane.b32.xlu0 %v554, 32
        %v1565 = vpop.permute.xlu0 %1564
        %1566 = vrot.lane.b32.xlu0 %v555, 32
        %v1567 = vpop.permute.xlu0 %1566
        %1568 = vrot.lane.b32.xlu0 %v556, 32
        %v1569 = vpop.permute.xlu0 %1568
        %v1575 = vsel %vm444, %v1558, 0
        %v1578 = vsel %vm444, %v1559, 0
        %v1581 = vsel %vm444, %v1560, 0
        %v1584 = vsel %vm444, %v1561, 0
        %1586 = vmatprep.subr.bf16.mxu0 0
        %1587 = vmatpush1.bf16.msra.mxu0 %v1563
        %1588 = vmatprep.subr.bf16.mxu0 0
        %1589 = vmatpush1.bf16.msra.mxu0 %v1565
        %1590 = vmatprep.subr.bf16.mxu0 0
        %1591 = vmatpush1.bf16.msra.mxu0 %v1567
        %1592 = vmatprep.subr.bf16.mxu0 0
        %1593 = vmatpush1.bf16.msra.mxu0 %v1569
        %1594 = vmatprep.subr.bf16.mxu0 0
        %1595 = vmatpush1.bf16.msra.mxu0 0
        %1596 = vmatprep.subr.bf16.mxu0 0
        %1597 = vmatpush1.bf16.msra.mxu0 0
        %1598 = vmatprep.subr.bf16.mxu0 0
        %1599 = vmatpush1.bf16.msra.mxu0 0
        %1600 = vmatprep.subr.bf16.mxu0 0
        %1601 = vmatpush1.bf16.msra.mxu0 0
        %1602 = vmatprep.subr.bf16.mxu0 0
        %1603 = vmatpush1.bf16.msra.mxu0 0
        %1604 = vmatprep.subr.bf16.mxu0 0
        %1605 = vmatpush1.bf16.msra.mxu0 0
        %1606 = vmatprep.subr.bf16.mxu0 0
        %1607 = vmatpush1.bf16.msra.mxu0 0
        %1608 = vmatprep.subr.bf16.mxu0 0
        %1609 = vmatpush1.bf16.msra.mxu0 0
        %1610 = vmatprep.subr.bf16.mxu0 0
        %1611 = vmatpush1.bf16.msra.mxu0 0
        %1612 = vmatprep.subr.bf16.mxu0 0
        %1613 = vmatpush1.bf16.msra.mxu0 0
        %1614 = vmatprep.subr.bf16.mxu0 0
        %1615 = vmatpush1.bf16.msra.mxu0 0
        %1616 = vmatprep.subr.bf16.mxu0 0
        %1617 = vmatpush1.bf16.msra.mxu0 0
        %1618 = vmatprep.mubr.bf16.mxu0 0
        %1619 = vmatmul.mubr.bf16.gmra.mrb[0].mxu0 %v1575
        %v1620 = vpop.f32.mrb[0].mxu0
        %v1621 = vadd.f32 0.0, %v1620
        %v1622 = vpop.f32.mrb[0].mxu0
        %v1623 = vpop.f32.mrb[0].mxu0
        %v1624 = vadd.f32 0.0, %v1623
        %v1625 = vpop.f32.mrb[0].mxu0
        %1626 = vmatprep.mubr.bf16.mxu0 0
        %1627 = vmatmul.mubr.bf16.gmra.mrb[0].mxu0 %v1578
        %v1628 = vpop.f32.mrb[0].mxu0
        %v1629 = vadd.f32 0.0, %v1628
        %v1630 = vpop.f32.mrb[0].mxu0
        %v1631 = vpop.f32.mrb[0].mxu0
        %v1632 = vadd.f32 0.0, %v1631
        %v1633 = vpop.f32.mrb[0].mxu0
        %1634 = vmatprep.mubr.bf16.mxu0 0
        %1635 = vmatmul.mubr.bf16.gmra.mrb[0].mxu0 %v1581
        %v1636 = vpop.f32.mrb[0].mxu0
        %v1637 = vadd.f32 0.0, %v1636
        %v1638 = vpop.f32.mrb[0].mxu0
        %v1639 = vpop.f32.mrb[0].mxu0
        %v1640 = vadd.f32 0.0, %v1639
        %v1641 = vpop.f32.mrb[0].mxu0
        %1642 = vmatprep.mubr.bf16.mxu0 0
        %1643 = vmatmul.mubr.bf16.gmra.mrb[0].mxu0 %v1584
        %v1644 = vpop.f32.mrb[0].mxu0
        %v1645 = vadd.f32 0.0, %v1644
        %v1646 = vpop.f32.mrb[0].mxu0
        %v1647 = vpop.f32.mrb[0].mxu0
        %v1648 = vadd.f32 0.0, %v1647
        %v1649 = vpop.f32.mrb[0].mxu0
        %1650 = vdwg.mxu0
        %v1651 = vpack.c.bf16 %v1624, %v1621
        %v1652 = vpack.c.bf16 %v1632, %v1629
        %v1653 = vpack.c.bf16 %v1640, %v1637
        %v1654 = vpack.c.bf16 %v1648, %v1645
        %v1659 = vunpack.c.l.b16 %v1651
        %v1660 = vunpack.c.h.b16 %v1651
        %v1661 = vunpack.c.l.b16 %v1652
        %v1662 = vunpack.c.h.b16 %v1652
        %v1663 = vunpack.c.l.b16 %v1653
        %v1664 = vunpack.c.h.b16 %v1653
        %v1665 = vunpack.c.l.b16 %v1654
        %v1666 = vunpack.c.h.b16 %v1654
        %v1667 = vpack.c.b16 %v1659, %v1659
        %v1668 = vpack.c.b16 %v1660, %v1660
        %v1669 = vpack.c.b16 %v1661, %v1661
        %v1670 = vpack.c.b16 %v1662, %v1662
        %v1671 = vpack.c.b16 %v1663, %v1663
        %v1672 = vpack.c.b16 %v1664, %v1664
        %v1673 = vpack.c.b16 %v1665, %v1665
        %v1674 = vpack.c.b16 %v1666, %v1666
        %1675 = vrot.lane.b32.xlu0 %v1667, 96
        %v1676 = vpop.permute.xlu0 %1675
        %1677 = vrot.lane.b32.xlu0 %v1668, 96
        %v1678 = vpop.permute.xlu0 %1677
        %1679 = vrot.lane.b32.xlu0 %v1669, 96
        %v1680 = vpop.permute.xlu0 %1679
        %1681 = vrot.lane.b32.xlu0 %v1670, 96
        %v1682 = vpop.permute.xlu0 %1681
        %1683 = vrot.lane.b32.xlu0 %v1671, 96
        %v1684 = vpop.permute.xlu0 %1683
        %1685 = vrot.lane.b32.xlu0 %v1672, 96
        %v1686 = vpop.permute.xlu0 %1685
        %1687 = vrot.lane.b32.xlu0 %v1673, 96
        %v1688 = vpop.permute.xlu0 %1687
        %1689 = vrot.lane.b32.xlu0 %v1674, 96
        %v1690 = vpop.permute.xlu0 %1689
        %vm1699 = vcmask 1044224
        %1700 = vst.msk [vmem:[%s286] sm:$0xf] %vm1699, %v1676
        %1701 = vst.msk [vmem:[%s286 + $0x4] sm:$0xf] %vm1699, %v1678
        %1702 = vst.msk [vmem:[%s286 + $0x8] sm:$0xf] %vm1699, %v1680
        %1703 = vst.msk [vmem:[%s286 + $0xc] sm:$0xf] %vm1699, %v1682
        %1704 = vst.msk [vmem:[%s286 + $0x10] sm:$0xf] %vm1699, %v1684
        %1705 = vst.msk [vmem:[%s286 + $0x14] sm:$0xf] %vm1699, %v1686
        %1706 = vst.msk [vmem:[%s286 + $0x18] sm:$0xf] %vm1699, %v1688
        %1707 = vst.msk [vmem:[%s286 + $0x1c] sm:$0xf] %vm1699, %v1690
        %s1708 = sand.u32 %s125, 1
        %s1709 = scalar_lea.sflag [#allocation4], %s1708
        %s1710 = sand.u32 %s125, 1
        %s1711 = smul.addr %s1710, 32
        %s1712 = scalar_lea.vmem [#allocation8], %s1711
        // Predicated region
        $region45: #{masked_encoder_forward.14} parent=31 // pred_check
          %p1713 = pneg %p135
        $region46: #{masked_encoder_forward.14} parent=31 // pred_check_branch
          %1715 = sbr.rel (%p1713) target = $region48
        $region47: #{masked_encoder_forward.14} parent=31 // pred_region
          %s1716 = smul.u32 8, %s28
          %s1718 = ssub.s32 512, 512
          %1719 = vsyncadd %s1709, %s1718
          %s1720 = smul.addr %s27, 8
          %s1721 = sadd.s32 %s1716, %s1720
          %s1722 = smul.addr %s1721, 64
          %s1723 = scalar_lea.hbm %s3, %s1722
          %s1724 = sshll.u32 %s1712, 4
          %s1725 = int_to_ptr.vmem [resolvable:$true] %s1724
          %1730 = dma.vmem_to_hbm [thread:$0]  %s1725, 512, %s1723, %s1709, 64, 64, 4
        $region48: #{masked_encoder_forward.14} parent=31 // pred_fallthru
          _
      $region32: #{masked_encoder_forward.14} parent=5 // pred_fallthru
        _
      %p1731 = scmp.le.s32.totalorder 2, %s18
      // Predicated region
      $region49: #{masked_encoder_forward.14} parent=5 // pred_check
        %p1732 = pneg %p1731
      $region50: #{masked_encoder_forward.14} parent=5 // pred_check_branch
        %1734 = sbr.rel (%p1732) target = $region52
      $region51: #{masked_encoder_forward.14} parent=5 // pred_region
        %s1735 = ssub.s32 %s18, 2
        // Predicated region
        $region53: #{masked_encoder_forward.14} parent=51 // pred_check
          %p1736 = pneg %p141
        $region54: #{masked_encoder_forward.14} parent=51 // pred_check_branch
          %1738 = sbr.rel (%p1736) target = $region56
        $region55: #{masked_encoder_forward.14} parent=51 // pred_region
          %s1739 = sand.u32 %s126, 1
          %s1740 = scalar_lea.sflag [#allocation4], %s1739
          %s1741 = sand.u32 %s126, 1
          %s1742 = smul.addr %s1741, 32
          %s1743 = scalar_lea.vmem [#allocation8], %s1742
          %1744 = dma.done %s1740, 512
        $region56: #{masked_encoder_forward.14} parent=51 // pred_fallthru
          _
      $region52: #{masked_encoder_forward.14} parent=5 // pred_fallthru
        _
    $region6: #{masked_encoder_forward.14} parent=1 // loop_footer
      %s22 = sadd.s32 1, %s18
    $region7: #{masked_encoder_forward.14} parent=1 // loop_footer_branch
      %17 = sbr.rel target = $region3
    $region8: #{masked_encoder_forward.14} parent=1 // loop_exit
      _
    %1745 = vsyncpa [#allocation3], 1
    %s1746 = scalar_lea.sflag [#allocation3], 1
    %1747 = vsyncpa %s1746, 1
    %1748 = vsyncpa [#allocation6], 1
    %s1749 = scalar_lea.sflag [#allocation6], 1
    %1750 = vsyncpa %s1749, 1
    %1751 = vsyncpa [#allocation4], 1
    %s1752 = scalar_lea.sflag [#allocation4], 1
    %1753 = vsyncpa %s1752, 1

// kernel: masked_encoder_forward.15
$region0: #{masked_encoder_forward.15}
  #allocation0 [shape = 'u32[]', space=smem, size = 0x4, offset = 0x4, fixed_abs, tag = 'smem constant byte address 0x4 - core index']
  #allocation1 [shape = 'u32[144,128]{1,0:T(1,128)}', space=vmem, size = 0x12000, scoped, tag = 'internal scratch']
  %s0 = inlined_call_operand.hbm [shape: bf16[128,128], index: 0, kind: input, shape index: {}]
  %s1 = inlined_call_operand.hbm [shape: bf16[128,128], index: 1, kind: input, shape index: {}]
  %s2 = inlined_call_operand.hbm [shape: f32[1,128], index: 2, kind: input, shape index: {}]
  %s3 = inlined_call_operand.hbm [shape: bf16[128,128], index: 3, kind: input, shape index: {}]
  %s4 = inlined_call_operand.hbm [shape: bf16[128,128], index: 4, kind: output, shape index: {}]
  %s5 = sld [smem:[#allocation0]]
  $region42: #{masked_encoder_forward.15} parent=0
    _
  %s7 = ssub.s32 1, %s5
  %s8 = scalar_select 0, %s7, %s5
  $region1: #{masked_encoder_forward.15} parent=0
    #allocation2 [shape = 'u8[32768]{0}', space=vmem, size = 0x8000, scoped, tag = 'input window, operand 0, single buffered']
    #allocation3 [shape = 's32[1]{0}', space=sflag, size = 0x4, scoped, tag = 'scoped memory for masked_encoder_forward.15']
    #allocation4 [shape = 's32[1]{0}', space=sflag, size = 0x4, scoped, tag = 'scoped memory for masked_encoder_forward.15']
    #allocation5 [shape = 'u8[32768]{0}', space=vmem, size = 0x8000, scoped, tag = 'input window, operand 1, single buffered']
    #allocation6 [shape = 's32[1]{0}', space=sflag, size = 0x4, scoped, tag = 'scoped memory for masked_encoder_forward.15']
    #allocation7 [shape = 'u8[512]{0}', space=vmem, size = 0x400, scoped, tag = 'input window, operand 2, single buffered']
    #allocation8 [shape = 'u8[32768]{0}', space=vmem, size = 0x8000, scoped, tag = 'input window, operand 3, single buffered']
    #allocation9 [shape = 's32[1]{0}', space=sflag, size = 0x4, scoped, tag = 'scoped memory for masked_encoder_forward.15']
    #allocation10 [shape = 'u8[32768]{0}', space=vmem, size = 0x8000, scoped, tag = 'output window, operand 0, single buffered']
    %9 = vsyncpa [#allocation3], 0
    %10 = vsyncpa [#allocation6], 0
    %11 = vsyncpa [#allocation9], 0
    %12 = vsyncpa [#allocation4], 0
    // Predicated region
    $region2: #{masked_encoder_forward.15} parent=1 // pred_check
      _
    $region3: #{masked_encoder_forward.15} parent=1 // pred_check_branch
      %14 = sbr.rel (0) target = $region5
    $region4: #{masked_encoder_forward.15} parent=1 // pred_region
      %s16 = ssub.s32 1024, 1024
      %17 = vsyncadd [#allocation3], %s16
      %s18 = sshll.u32 [#allocation2], 4
      %s19 = int_to_ptr.vmem [resolvable:$true] %s18
      %24 = dma.hbm_to_vmem [thread:$0]  %s0, 1024, %s19, [#allocation3], 64, 64, 4
    $region5: #{masked_encoder_forward.15} parent=1 // pred_fallthru
      _
    // Predicated region
    $region6: #{masked_encoder_forward.15} parent=1 // pred_check
      _
    $region7: #{masked_encoder_forward.15} parent=1 // pred_check_branch
      %26 = sbr.rel (0) target = $region9
    $region8: #{masked_encoder_forward.15} parent=1 // pred_region
      %s28 = ssub.s32 1024, 1024
      %29 = vsyncadd [#allocation6], %s28
      %s30 = sshll.u32 [#allocation5], 4
      %s31 = int_to_ptr.vmem [resolvable:$true] %s30
      %36 = dma.hbm_to_vmem [thread:$0]  %s1, 1024, %s31, [#allocation6], 64, 64, 4
    $region9: #{masked_encoder_forward.15} parent=1 // pred_fallthru
      _
    // Predicated region
    $region10: #{masked_encoder_forward.15} parent=1 // pred_check
      _
    $region11: #{masked_encoder_forward.15} parent=1 // pred_check_branch
      %38 = sbr.rel (0) target = $region13
    $region12: #{masked_encoder_forward.15} parent=1 // pred_region
      %s40 = ssub.s32 16, 16
      %41 = vsyncadd [#allocation6], %s40
      %s43 = sshll.u32 [#allocation7], 4
      %s44 = int_to_ptr.vmem [resolvable:$true] %s43
      %46 = dma.hbm_to_vmem [thread:$0]  %s2, 16, %s44, [#allocation6]
    $region13: #{masked_encoder_forward.15} parent=1 // pred_fallthru
      _
    // Predicated region
    $region14: #{masked_encoder_forward.15} parent=1 // pred_check
      _
    $region15: #{masked_encoder_forward.15} parent=1 // pred_check_branch
      %48 = sbr.rel (0) target = $region17
    $region16: #{masked_encoder_forward.15} parent=1 // pred_region
      %s50 = ssub.s32 1024, 1024
      %51 = vsyncadd [#allocation9], %s50
      %s52 = sshll.u32 [#allocation8], 4
      %s53 = int_to_ptr.vmem [resolvable:$true] %s52
      %58 = dma.hbm_to_vmem [thread:$0]  %s3, 1024, %s53, [#allocation9], 64, 64, 4
    $region17: #{masked_encoder_forward.15} parent=1 // pred_fallthru
      _
    // Predicated region
    $region18: #{masked_encoder_forward.15} parent=1 // pred_check
      _
    $region19: #{masked_encoder_forward.15} parent=1 // pred_check_branch
      %60 = sbr.rel (0) target = $region21
    $region20: #{masked_encoder_forward.15} parent=1 // pred_region
      %61 = dma.done [#allocation3], 1024
    $region21: #{masked_encoder_forward.15} parent=1 // pred_fallthru
      _
    // Predicated region
    $region22: #{masked_encoder_forward.15} parent=1 // pred_check
      _
    $region23: #{masked_encoder_forward.15} parent=1 // pred_check_branch
      %63 = sbr.rel (0) target = $region25
    $region24: #{masked_encoder_forward.15} parent=1 // pred_region
      %64 = dma.done [#allocation6], 1024
    $region25: #{masked_encoder_forward.15} parent=1 // pred_fallthru
      _
    // Predicated region
    $region26: #{masked_encoder_forward.15} parent=1 // pred_check
      _
    $region27: #{masked_encoder_forward.15} parent=1 // pred_check_branch
      %66 = sbr.rel (0) target = $region29
    $region28: #{masked_encoder_forward.15} parent=1 // pred_region
      %67 = dma.done [#allocation6], 16
    $region29: #{masked_encoder_forward.15} parent=1 // pred_fallthru
      _
    // Predicated region
    $region30: #{masked_encoder_forward.15} parent=1 // pred_check
      _
    $region31: #{masked_encoder_forward.15} parent=1 // pred_check_branch
      %69 = sbr.rel (0) target = $region33
    $region32: #{masked_encoder_forward.15} parent=1 // pred_region
      %70 = dma.done [#allocation9], 1024
    $region33: #{masked_encoder_forward.15} parent=1 // pred_fallthru
      _
    %v72 = vld [vmem:[#allocation2] sm:$0xf]
    %v73 = vld [vmem:[#allocation2 + $0x4] sm:$0xf]
    %v74 = vld [vmem:[#allocation2 + $0x8] sm:$0xf]
    %v75 = vld [vmem:[#allocation2 + $0xc] sm:$0xf]
    %v76 = vld [vmem:[#allocation2 + $0x10] sm:$0xf]
    %v77 = vld [vmem:[#allocation2 + $0x14] sm:$0xf]
    %v78 = vld [vmem:[#allocation2 + $0x18] sm:$0xf]
    %v79 = vld [vmem:[#allocation2 + $0x1c] sm:$0xf]
    %v80 = vld [vmem:[#allocation2 + $0x20] sm:$0xf]
    %v81 = vld [vmem:[#allocation2 + $0x24] sm:$0xf]
    %v82 = vld [vmem:[#allocation2 + $0x28] sm:$0xf]
    %v83 = vld [vmem:[#allocation2 + $0x2c] sm:$0xf]
    %v84 = vld [vmem:[#allocation2 + $0x30] sm:$0xf]
    %v85 = vld [vmem:[#allocation2 + $0x34] sm:$0xf]
    %v86 = vld [vmem:[#allocation2 + $0x38] sm:$0xf]
    %v87 = vld [vmem:[#allocation2 + $0x3c] sm:$0xf]
    %v88 = vld [vmem:[#allocation5] sm:$0xf]
    %v89 = vld [vmem:[#allocation5 + $0x4] sm:$0xf]
    %v90 = vld [vmem:[#allocation5 + $0x8] sm:$0xf]
    %v91 = vld [vmem:[#allocation5 + $0xc] sm:$0xf]
    %v92 = vld [vmem:[#allocation5 + $0x10] sm:$0xf]
    %v93 = vld [vmem:[#allocation5 + $0x14] sm:$0xf]
    %v94 = vld [vmem:[#allocation5 + $0x18] sm:$0xf]
    %v95 = vld [vmem:[#allocation5 + $0x1c] sm:$0xf]
    %v96 = vld [vmem:[#allocation5 + $0x20] sm:$0xf]
    %v97 = vld [vmem:[#allocation5 + $0x24] sm:$0xf]
    %v98 = vld [vmem:[#allocation5 + $0x28] sm:$0xf]
    %v99 = vld [vmem:[#allocation5 + $0x2c] sm:$0xf]
    %v100 = vld [vmem:[#allocation5 + $0x30] sm:$0xf]
    %v101 = vld [vmem:[#allocation5 + $0x34] sm:$0xf]
    %v102 = vld [vmem:[#allocation5 + $0x38] sm:$0xf]
    %v103 = vld [vmem:[#allocation5 + $0x3c] sm:$0xf]
    %v104 = vld [vmem:[#allocation7] sm:$0x1]
    %v106 = vlaneseq
    %v107 = vshrl.u32 %v106, 7
    %v108 = vsub.s32 0, %v107
    %v109 = vrot.slane %v104, %v108
    %v127 = vunpack.c.l.b16 %v72
    %v128 = vunpack.c.l.b16 %v73
    %v129 = vunpack.c.l.b16 %v74
    %v130 = vunpack.c.l.b16 %v75
    %v131 = vunpack.c.l.b16 %v76
    %v132 = vunpack.c.l.b16 %v77
    %v133 = vunpack.c.l.b16 %v78
    %v134 = vunpack.c.l.b16 %v79
    %v135 = vunpack.c.l.b16 %v80
    %v136 = vunpack.c.l.b16 %v81
    %v137 = vunpack.c.l.b16 %v82
    %v138 = vunpack.c.l.b16 %v83
    %v139 = vunpack.c.l.b16 %v84
    %v140 = vunpack.c.l.b16 %v85
    %v141 = vunpack.c.l.b16 %v86
    %v142 = vunpack.c.l.b16 %v87
    %v143 = vpack.c.b16 %v128, %v127
    %v144 = vpack.c.b16 %v130, %v129
    %v145 = vpack.c.b16 %v132, %v131
    %v146 = vpack.c.b16 %v134, %v133
    %v147 = vpack.c.b16 %v136, %v135
    %v148 = vpack.c.b16 %v138, %v137
    %v149 = vpack.c.b16 %v140, %v139
    %v150 = vpack.c.b16 %v142, %v141
    %v175 = vunpack.c.l.b16 %v88
    %v176 = vunpack.c.l.b16 %v89
    %v177 = vunpack.c.l.b16 %v90
    %v178 = vunpack.c.l.b16 %v91
    %v179 = vunpack.c.l.b16 %v92
    %v180 = vunpack.c.l.b16 %v93
    %v181 = vunpack.c.l.b16 %v94
    %v182 = vunpack.c.l.b16 %v95
    %v183 = vunpack.c.l.b16 %v96
    %v184 = vunpack.c.l.b16 %v97
    %v185 = vunpack.c.l.b16 %v98
    %v186 = vunpack.c.l.b16 %v99
    %v187 = vunpack.c.l.b16 %v100
    %v188 = vunpack.c.l.b16 %v101
    %v189 = vunpack.c.l.b16 %v102
    %v190 = vunpack.c.l.b16 %v103
    %v191 = vpack.c.b16 %v176, %v175
    %v192 = vpack.c.b16 %v178, %v177
    %v193 = vpack.c.b16 %v180, %v179
    %v194 = vpack.c.b16 %v182, %v181
    %v195 = vpack.c.b16 %v184, %v183
    %v196 = vpack.c.b16 %v186, %v185
    %v197 = vpack.c.b16 %v188, %v187
    %v198 = vpack.c.b16 %v190, %v189
    %207 = vmatprep.subr.bf16.mxu0 0
    %208 = vmatpush1.bf16.msra.mxu0 %v191
    %209 = vmatprep.subr.bf16.mxu0 0
    %210 = vmatpush1.bf16.msra.mxu0 %v192
    %211 = vmatprep.subr.bf16.mxu0 0
    %212 = vmatpush1.bf16.msra.mxu0 %v193
    %213 = vmatprep.subr.bf16.mxu0 0
    %214 = vmatpush1.bf16.msra.mxu0 %v194
    %215 = vmatprep.subr.bf16.mxu0 0
    %216 = vmatpush1.bf16.msra.mxu0 %v195
    %217 = vmatprep.subr.bf16.mxu0 0
    %218 = vmatpush1.bf16.msra.mxu0 %v196
    %219 = vmatprep.subr.bf16.mxu0 0
    %220 = vmatpush1.bf16.msra.mxu0 %v197
    %221 = vmatprep.subr.bf16.mxu0 0
    %222 = vmatpush1.bf16.msra.mxu0 %v198
    %223 = vmatprep.subr.bf16.mxu0 0
    %224 = vmatpush1.bf16.msra.mxu0 0
    %225 = vmatprep.subr.bf16.mxu0 0
    %226 = vmatpush1.bf16.msra.mxu0 0
    %227 = vmatprep.subr.bf16.mxu0 0
    %228 = vmatpush1.bf16.msra.mxu0 0
    %229 = vmatprep.subr.bf16.mxu0 0
    %230 = vmatpush1.bf16.msra.mxu0 0
    %231 = vmatprep.subr.bf16.mxu0 0
    %232 = vmatpush1.bf16.msra.mxu0 0
    %233 = vmatprep.subr.bf16.mxu0 0
    %234 = vmatpush1.bf16.msra.mxu0 0
    %235 = vmatprep.subr.bf16.mxu0 0
    %236 = vmatpush1.bf16.msra.mxu0 0
    %237 = vmatprep.subr.bf16.mxu0 0
    %238 = vmatpush1.bf16.msra.mxu0 0
    %239 = vmatprep.mubr.bf16.mxu0 0
    %240 = vmatmul.mubr.bf16.gmra.mrb[0].mxu0 %v143
    %v241 = vpop.f32.mrb[0].mxu0
    %v242 = vadd.f32 %v109, %v241
    %v243 = vpop.f32.mrb[0].mxu0
    %v244 = vpop.f32.mrb[0].mxu0
    %v245 = vadd.f32 %v109, %v244
    %v246 = vpop.f32.mrb[0].mxu0
    %247 = vmatprep.mubr.bf16.mxu0 0
    %248 = vmatmul.mubr.bf16.gmra.mrb[0].mxu0 %v144
    %v249 = vpop.f32.mrb[0].mxu0
    %v250 = vadd.f32 %v109, %v249
    %v251 = vpop.f32.mrb[0].mxu0
    %v252 = vpop.f32.mrb[0].mxu0
    %v253 = vadd.f32 %v109, %v252
    %v254 = vpop.f32.mrb[0].mxu0
    %255 = vmatprep.mubr.bf16.mxu0 0
    %256 = vmatmul.mubr.bf16.gmra.mrb[0].mxu0 %v145
    %v257 = vpop.f32.mrb[0].mxu0
    %v258 = vadd.f32 %v109, %v257
    %v259 = vpop.f32.mrb[0].mxu0
    %v260 = vpop.f32.mrb[0].mxu0
    %v261 = vadd.f32 %v109, %v260
    %v262 = vpop.f32.mrb[0].mxu0
    %263 = vmatprep.mubr.bf16.mxu0 0
    %264 = vmatmul.mubr.bf16.gmra.mrb[0].mxu0 %v146
    %v265 = vpop.f32.mrb[0].mxu0
    %v266 = vadd.f32 %v109, %v265
    %v267 = vpop.f32.mrb[0].mxu0
    %v268 = vpop.f32.mrb[0].mxu0
    %v269 = vadd.f32 %v109, %v268
    %v270 = vpop.f32.mrb[0].mxu0
    %271 = vmatprep.mubr.bf16.mxu0 0
    %272 = vmatmul.mubr.bf16.gmra.mrb[0].mxu0 %v147
    %v273 = vpop.f32.mrb[0].mxu0
    %v274 = vadd.f32 %v109, %v273
    %v275 = vpop.f32.mrb[0].mxu0
    %v276 = vpop.f32.mrb[0].mxu0
    %v277 = vadd.f32 %v109, %v276
    %v278 = vpop.f32.mrb[0].mxu0
    %279 = vmatprep.mubr.bf16.mxu0 0
    %280 = vmatmul.mubr.bf16.gmra.mrb[0].mxu0 %v148
    %v281 = vpop.f32.mrb[0].mxu0
    %v282 = vadd.f32 %v109, %v281
    %v283 = vpop.f32.mrb[0].mxu0
    %v284 = vpop.f32.mrb[0].mxu0
    %v285 = vadd.f32 %v109, %v284
    %v286 = vpop.f32.mrb[0].mxu0
    %287 = vmatprep.mubr.bf16.mxu0 0
    %288 = vmatmul.mubr.bf16.gmra.mrb[0].mxu0 %v149
    %v289 = vpop.f32.mrb[0].mxu0
    %v290 = vadd.f32 %v109, %v289
    %v291 = vpop.f32.mrb[0].mxu0
    %v292 = vpop.f32.mrb[0].mxu0
    %v293 = vadd.f32 %v109, %v292
    %v294 = vpop.f32.mrb[0].mxu0
    %295 = vmatprep.mubr.bf16.mxu0 0
    %296 = vmatmul.mubr.bf16.gmra.mrb[0].mxu0 %v150
    %v297 = vpop.f32.mrb[0].mxu0
    %v298 = vadd.f32 %v109, %v297
    %v299 = vpop.f32.mrb[0].mxu0
    %v300 = vpop.f32.mrb[0].mxu0
    %v301 = vadd.f32 %v109, %v300
    %v302 = vpop.f32.mrb[0].mxu0
    %303 = vdwg.mxu0
    %v304 = vld [vmem:[#allocation8] sm:$0xf]
    %v305 = vld [vmem:[#allocation8 + $0x4] sm:$0xf]
    %v306 = vld [vmem:[#allocation8 + $0x8] sm:$0xf]
    %v307 = vld [vmem:[#allocation8 + $0xc] sm:$0xf]
    %v308 = vld [vmem:[#allocation8 + $0x10] sm:$0xf]
    %v309 = vld [vmem:[#allocation8 + $0x14] sm:$0xf]
    %v310 = vld [vmem:[#allocation8 + $0x18] sm:$0xf]
    %v311 = vld [vmem:[#allocation8 + $0x1c] sm:$0xf]
    %v312 = vld [vmem:[#allocation8 + $0x20] sm:$0xf]
    %v313 = vld [vmem:[#allocation8 + $0x24] sm:$0xf]
    %v314 = vld [vmem:[#allocation8 + $0x28] sm:$0xf]
    %v315 = vld [vmem:[#allocation8 + $0x2c] sm:$0xf]
    %v316 = vld [vmem:[#allocation8 + $0x30] sm:$0xf]
    %v317 = vld [vmem:[#allocation8 + $0x34] sm:$0xf]
    %v318 = vld [vmem:[#allocation8 + $0x38] sm:$0xf]
    %v319 = vld [vmem:[#allocation8 + $0x3c] sm:$0xf]
    %v320 = vunpack.c.l.bf16 %v304
    %v321 = vunpack.c.l.bf16 %v305
    %v322 = vunpack.c.l.bf16 %v306
    %v323 = vunpack.c.l.bf16 %v307
    %v324 = vunpack.c.l.bf16 %v308
    %v325 = vunpack.c.l.bf16 %v309
    %v326 = vunpack.c.l.bf16 %v310
    %v327 = vunpack.c.l.bf16 %v311
    %v328 = vunpack.c.l.bf16 %v312
    %v329 = vunpack.c.l.bf16 %v313
    %v330 = vunpack.c.l.bf16 %v314
    %v331 = vunpack.c.l.bf16 %v315
    %v332 = vunpack.c.l.bf16 %v316
    %v333 = vunpack.c.l.bf16 %v317
    %v334 = vunpack.c.l.bf16 %v318
    %v335 = vunpack.c.l.bf16 %v319
    %v336 = vadd.f32 %v242, %v320
    %v337 = vadd.f32 %v245, %v321
    %v338 = vadd.f32 %v250, %v322
    %v339 = vadd.f32 %v253, %v323
    %v340 = vadd.f32 %v258, %v324
    %v341 = vadd.f32 %v261, %v325
    %v342 = vadd.f32 %v266, %v326
    %v343 = vadd.f32 %v269, %v327
    %v344 = vadd.f32 %v274, %v328
    %v345 = vadd.f32 %v277, %v329
    %v346 = vadd.f32 %v282, %v330
    %v347 = vadd.f32 %v285, %v331
    %v348 = vadd.f32 %v290, %v332
    %v349 = vadd.f32 %v293, %v333
    %v350 = vadd.f32 %v298, %v334
    %v351 = vadd.f32 %v301, %v335
    %v352 = vpack.c.bf16 %v337, %v336
    %v353 = vpack.c.bf16 %v339, %v338
    %v354 = vpack.c.bf16 %v341, %v340
    %v355 = vpack.c.bf16 %v343, %v342
    %v356 = vpack.c.bf16 %v345, %v344
    %v357 = vpack.c.bf16 %v347, %v346
    %v358 = vpack.c.bf16 %v349, %v348
    %v359 = vpack.c.bf16 %v351, %v350
    %v368 = vunpack.c.l.b16 %v352
    %v369 = vunpack.c.h.b16 %v352
    %v370 = vunpack.c.l.b16 %v353
    %v371 = vunpack.c.h.b16 %v353
    %v372 = vunpack.c.l.b16 %v354
    %v373 = vunpack.c.h.b16 %v354
    %v374 = vunpack.c.l.b16 %v355
    %v375 = vunpack.c.h.b16 %v355
    %v376 = vunpack.c.l.b16 %v356
    %v377 = vunpack.c.h.b16 %v356
    %v378 = vunpack.c.l.b16 %v357
    %v379 = vunpack.c.h.b16 %v357
    %v380 = vunpack.c.l.b16 %v358
    %v381 = vunpack.c.h.b16 %v358
    %v382 = vunpack.c.l.b16 %v359
    %v383 = vunpack.c.h.b16 %v359
    %v384 = vpack.c.b16 %v368, %v368
    %v385 = vpack.c.b16 %v369, %v369
    %v386 = vpack.c.b16 %v370, %v370
    %v387 = vpack.c.b16 %v371, %v371
    %v388 = vpack.c.b16 %v372, %v372
    %v389 = vpack.c.b16 %v373, %v373
    %v390 = vpack.c.b16 %v374, %v374
    %v391 = vpack.c.b16 %v375, %v375
    %v392 = vpack.c.b16 %v376, %v376
    %v393 = vpack.c.b16 %v377, %v377
    %v394 = vpack.c.b16 %v378, %v378
    %v395 = vpack.c.b16 %v379, %v379
    %v396 = vpack.c.b16 %v380, %v380
    %v397 = vpack.c.b16 %v381, %v381
    %v398 = vpack.c.b16 %v382, %v382
    %v399 = vpack.c.b16 %v383, %v383
    %416 = vst [vmem:[#allocation10] sm:$0xf] %v384
    %417 = vst [vmem:[#allocation10 + $0x4] sm:$0xf] %v385
    %418 = vst [vmem:[#allocation10 + $0x8] sm:$0xf] %v386
    %419 = vst [vmem:[#allocation10 + $0xc] sm:$0xf] %v387
    %420 = vst [vmem:[#allocation10 + $0x10] sm:$0xf] %v388
    %421 = vst [vmem:[#allocation10 + $0x14] sm:$0xf] %v389
    %422 = vst [vmem:[#allocation10 + $0x18] sm:$0xf] %v390
    %423 = vst [vmem:[#allocation10 + $0x1c] sm:$0xf] %v391
    %424 = vst [vmem:[#allocation10 + $0x20] sm:$0xf] %v392
    %425 = vst [vmem:[#allocation10 + $0x24] sm:$0xf] %v393
    %426 = vst [vmem:[#allocation10 + $0x28] sm:$0xf] %v394
    %427 = vst [vmem:[#allocation10 + $0x2c] sm:$0xf] %v395
    %428 = vst [vmem:[#allocation10 + $0x30] sm:$0xf] %v396
    %429 = vst [vmem:[#allocation10 + $0x34] sm:$0xf] %v397
    %430 = vst [vmem:[#allocation10 + $0x38] sm:$0xf] %v398
    %431 = vst [vmem:[#allocation10 + $0x3c] sm:$0xf] %v399
    // Predicated region
    $region34: #{masked_encoder_forward.15} parent=1 // pred_check
      _
    $region35: #{masked_encoder_forward.15} parent=1 // pred_check_branch
      %433 = sbr.rel (0) target = $region37
    $region36: #{masked_encoder_forward.15} parent=1 // pred_region
      %s435 = ssub.s32 1024, 1024
      %436 = vsyncadd [#allocation4], %s435
      %s437 = sshll.u32 [#allocation10], 4
      %s438 = int_to_ptr.vmem [resolvable:$true] %s437
      %443 = dma.vmem_to_hbm [thread:$0]  %s438, 1024, %s4, [#allocation4], 64, 64, 4
    $region37: #{masked_encoder_forward.15} parent=1 // pred_fallthru
      _
    // Predicated region
    $region38: #{masked_encoder_forward.15} parent=1 // pred_check
      _
    $region39: #{masked_encoder_forward.15} parent=1 // pred_check_branch
      %445 = sbr.rel (0) target = $region41
    $region40: #{masked_encoder_forward.15} parent=1 // pred_region
      %446 = dma.done [#allocation4], 1024
    $region41: #{masked_encoder_forward.15} parent=1 // pred_fallthru
      _
    %447 = vsyncpa [#allocation3], 1
    %448 = vsyncpa [#allocation6], 1
    %449 = vsyncpa [#allocation9], 1
    %450 = vsyncpa [#allocation4], 1

// kernel: masked_encoder_forward.16
$region0: #{masked_encoder_forward.16}
  #allocation0 [shape = 'u32[]', space=smem, size = 0x4, offset = 0x4, fixed_abs, tag = 'smem constant byte address 0x4 - core index']
  #allocation1 [shape = 'u32[144,128]{1,0:T(1,128)}', space=vmem, size = 0x12000, scoped, tag = 'internal scratch']
  #allocation2 [shape = 'f32[128,1]{1,0:T(8,128)}', space=vmem, size = 0x10000, scoped, tag = 'scratch operand']
  %s0 = inlined_call_operand.hbm [shape: bf16[128,128], index: 0, kind: input, shape index: {}]
  %s1 = inlined_call_operand.hbm [shape: f32[1,128], index: 1, kind: input, shape index: {}]
  %s2 = inlined_call_operand.hbm [shape: bf16[128,512], index: 2, kind: input, shape index: {}]
  %s3 = inlined_call_operand.hbm [shape: f32[1,512], index: 3, kind: input, shape index: {}]
  %s4 = inlined_call_operand.hbm [shape: bf16[128,512], index: 4, kind: input, shape index: {}]
  %s5 = inlined_call_operand.hbm [shape: f32[1,512], index: 5, kind: input, shape index: {}]
  %s6 = inlined_call_operand.hbm [shape: bf16[128,512], index: 6, kind: output, shape index: {}]
  %s7 = sld [smem:[#allocation0]]
  $region62: #{masked_encoder_forward.16} parent=0
    _
  %s9 = ssub.s32 1, %s7
  %s10 = scalar_select 0, %s9, %s7
  $region1: #{masked_encoder_forward.16} parent=0
    #allocation3 [shape = 'u8[32768]{0}', space=vmem, size = 0x8000, scoped, tag = 'input window, operand 0, single buffered']
    #allocation4 [shape = 's32[1]{0}', space=sflag, size = 0x4, scoped, tag = 'scoped memory for masked_encoder_forward.16']
    #allocation5 [shape = 's32[1]{0}', space=sflag, size = 0x4, scoped, tag = 'scoped memory for masked_encoder_forward.16']
    #allocation6 [shape = 'u8[512]{0}', space=vmem, size = 0x400, scoped, tag = 'input window, operand 1, single buffered']
    #allocation7 [shape = 's32[1]{0}', space=sflag, size = 0x4, scoped, tag = 'scoped memory for masked_encoder_forward.16']
    #allocation8 [shape = 'u8[131072]{0}', space=vmem, size = 0x20000, scoped, tag = 'input window, operand 2, single buffered']
    #allocation9 [shape = 'u8[2048]{0}', space=vmem, size = 0x800, scoped, tag = 'input window, operand 3, single buffered']
    #allocation10 [shape = 's32[1]{0}', space=sflag, size = 0x4, scoped, tag = 'scoped memory for masked_encoder_forward.16']
    #allocation11 [shape = 'u8[131072]{0}', space=vmem, size = 0x20000, scoped, tag = 'input window, operand 4, single buffered']
    #allocation12 [shape = 'u8[2048]{0}', space=vmem, size = 0x800, scoped, tag = 'input window, operand 5, single buffered']
    #allocation13 [shape = 's32[1]{0}', space=sflag, size = 0x4, scoped, tag = 'scoped memory for masked_encoder_forward.16']
    #allocation14 [shape = 'u8[131072]{0}', space=vmem, size = 0x20000, scoped, tag = 'output window, operand 0, single buffered']
    %11 = vsyncpa [#allocation4], 0
    %12 = vsyncpa [#allocation7], 0
    %13 = vsyncpa [#allocation10], 0
    %14 = vsyncpa [#allocation13], 0
    %15 = vsyncpa [#allocation5], 0
    // Predicated region
    $region2: #{masked_encoder_forward.16} parent=1 // pred_check
      _
    $region3: #{masked_encoder_forward.16} parent=1 // pred_check_branch
      %17 = sbr.rel (0) target = $region5
    $region4: #{masked_encoder_forward.16} parent=1 // pred_region
      %s19 = ssub.s32 1024, 1024
      %20 = vsyncadd [#allocation4], %s19
      %s21 = sshll.u32 [#allocation3], 4
      %s22 = int_to_ptr.vmem [resolvable:$true] %s21
      %27 = dma.hbm_to_vmem [thread:$0]  %s0, 1024, %s22, [#allocation4], 64, 64, 4
    $region5: #{masked_encoder_forward.16} parent=1 // pred_fallthru
      _
    // Predicated region
    $region6: #{masked_encoder_forward.16} parent=1 // pred_check
      _
    $region7: #{masked_encoder_forward.16} parent=1 // pred_check_branch
      %29 = sbr.rel (0) target = $region9
    $region8: #{masked_encoder_forward.16} parent=1 // pred_region
      %s31 = ssub.s32 16, 16
      %32 = vsyncadd [#allocation7], %s31
      %s34 = sshll.u32 [#allocation6], 4
      %s35 = int_to_ptr.vmem [resolvable:$true] %s34
      %37 = dma.hbm_to_vmem [thread:$0]  %s1, 16, %s35, [#allocation7]
    $region9: #{masked_encoder_forward.16} parent=1 // pred_fallthru
      _
    // Predicated region
    $region10: #{masked_encoder_forward.16} parent=1 // pred_check
      _
    $region11: #{masked_encoder_forward.16} parent=1 // pred_check_branch
      %39 = sbr.rel (0) target = $region13
    $region12: #{masked_encoder_forward.16} parent=1 // pred_region
      %s41 = ssub.s32 4096, 4096
      %42 = vsyncadd [#allocation7], %s41
      %s43 = sshll.u32 [#allocation8], 4
      %s44 = int_to_ptr.vmem [resolvable:$true] %s43
      %49 = dma.hbm_to_vmem [thread:$0]  %s2, 4096, %s44, [#allocation7], 256, 256, 16
    $region13: #{masked_encoder_forward.16} parent=1 // pred_fallthru
      _
    // Predicated region
    $region14: #{masked_encoder_forward.16} parent=1 // pred_check
      _
    $region15: #{masked_encoder_forward.16} parent=1 // pred_check_branch
      %51 = sbr.rel (0) target = $region17
    $region16: #{masked_encoder_forward.16} parent=1 // pred_region
      %s53 = ssub.s32 64, 64
      %54 = vsyncadd [#allocation10], %s53
      %s56 = sshll.u32 [#allocation9], 4
      %s57 = int_to_ptr.vmem [resolvable:$true] %s56
      %59 = dma.hbm_to_vmem [thread:$0]  %s3, 64, %s57, [#allocation10]
    $region17: #{masked_encoder_forward.16} parent=1 // pred_fallthru
      _
    // Predicated region
    $region18: #{masked_encoder_forward.16} parent=1 // pred_check
      _
    $region19: #{masked_encoder_forward.16} parent=1 // pred_check_branch
      %61 = sbr.rel (0) target = $region21
    $region20: #{masked_encoder_forward.16} parent=1 // pred_region
      %s63 = ssub.s32 4096, 4096
      %64 = vsyncadd [#allocation10], %s63
      %s65 = sshll.u32 [#allocation11], 4
      %s66 = int_to_ptr.vmem [resolvable:$true] %s65
      %71 = dma.hbm_to_vmem [thread:$0]  %s4, 4096, %s66, [#allocation10], 256, 256, 16
    $region21: #{masked_encoder_forward.16} parent=1 // pred_fallthru
      _
    // Predicated region
    $region22: #{masked_encoder_forward.16} parent=1 // pred_check
      _
    $region23: #{masked_encoder_forward.16} parent=1 // pred_check_branch
      %73 = sbr.rel (0) target = $region25
    $region24: #{masked_encoder_forward.16} parent=1 // pred_region
      %s75 = ssub.s32 64, 64
      %76 = vsyncadd [#allocation13], %s75
      %s78 = sshll.u32 [#allocation12], 4
      %s79 = int_to_ptr.vmem [resolvable:$true] %s78
      %81 = dma.hbm_to_vmem [thread:$0]  %s5, 64, %s79, [#allocation13]
    $region25: #{masked_encoder_forward.16} parent=1 // pred_fallthru
      _
    // Predicated region
    $region26: #{masked_encoder_forward.16} parent=1 // pred_check
      _
    $region27: #{masked_encoder_forward.16} parent=1 // pred_check_branch
      %83 = sbr.rel (0) target = $region29
    $region28: #{masked_encoder_forward.16} parent=1 // pred_region
      %84 = dma.done [#allocation4], 1024
    $region29: #{masked_encoder_forward.16} parent=1 // pred_fallthru
      _
    // Predicated region
    $region30: #{masked_encoder_forward.16} parent=1 // pred_check
      _
    $region31: #{masked_encoder_forward.16} parent=1 // pred_check_branch
      %86 = sbr.rel (0) target = $region33
    $region32: #{masked_encoder_forward.16} parent=1 // pred_region
      %87 = dma.done [#allocation7], 16
    $region33: #{masked_encoder_forward.16} parent=1 // pred_fallthru
      _
    // Predicated region
    $region34: #{masked_encoder_forward.16} parent=1 // pred_check
      _
    $region35: #{masked_encoder_forward.16} parent=1 // pred_check_branch
      %89 = sbr.rel (0) target = $region37
    $region36: #{masked_encoder_forward.16} parent=1 // pred_region
      %90 = dma.done [#allocation7], 4096
    $region37: #{masked_encoder_forward.16} parent=1 // pred_fallthru
      _
    // Predicated region
    $region38: #{masked_encoder_forward.16} parent=1 // pred_check
      _
    $region39: #{masked_encoder_forward.16} parent=1 // pred_check_branch
      %92 = sbr.rel (0) target = $region41
    $region40: #{masked_encoder_forward.16} parent=1 // pred_region
      %93 = dma.done [#allocation10], 64
    $region41: #{masked_encoder_forward.16} parent=1 // pred_fallthru
      _
    // Predicated region
    $region42: #{masked_encoder_forward.16} parent=1 // pred_check
      _
    $region43: #{masked_encoder_forward.16} parent=1 // pred_check_branch
      %95 = sbr.rel (0) target = $region45
    $region44: #{masked_encoder_forward.16} parent=1 // pred_region
      %96 = dma.done [#allocation10], 4096
    $region45: #{masked_encoder_forward.16} parent=1 // pred_fallthru
      _
    // Predicated region
    $region46: #{masked_encoder_forward.16} parent=1 // pred_check
      _
    $region47: #{masked_encoder_forward.16} parent=1 // pred_check_branch
      %98 = sbr.rel (0) target = $region49
    $region48: #{masked_encoder_forward.16} parent=1 // pred_region
      %99 = dma.done [#allocation13], 64
    $region49: #{masked_encoder_forward.16} parent=1 // pred_fallthru
      _
    %p101 = scmp.eq.s32.totalorder 0, 0
    // Predicated region
    $region50: #{masked_encoder_forward.16} parent=1 // pred_check
      %p102 = pneg %p101
    $region51: #{masked_encoder_forward.16} parent=1 // pred_check_branch
      %104 = sbr.rel (%p102) target = $region53
    $region52: #{masked_encoder_forward.16} parent=1 // pred_region
      %v105 = vld [vmem:[#allocation3] sm:$0xf]
      %v106 = vld [vmem:[#allocation3 + $0x4] sm:$0xf]
      %v107 = vld [vmem:[#allocation3 + $0x8] sm:$0xf]
      %v108 = vld [vmem:[#allocation3 + $0xc] sm:$0xf]
      %v109 = vld [vmem:[#allocation3 + $0x10] sm:$0xf]
      %v110 = vld [vmem:[#allocation3 + $0x14] sm:$0xf]
      %v111 = vld [vmem:[#allocation3 + $0x18] sm:$0xf]
      %v112 = vld [vmem:[#allocation3 + $0x1c] sm:$0xf]
      %v113 = vld [vmem:[#allocation3 + $0x20] sm:$0xf]
      %v114 = vld [vmem:[#allocation3 + $0x24] sm:$0xf]
      %v115 = vld [vmem:[#allocation3 + $0x28] sm:$0xf]
      %v116 = vld [vmem:[#allocation3 + $0x2c] sm:$0xf]
      %v117 = vld [vmem:[#allocation3 + $0x30] sm:$0xf]
      %v118 = vld [vmem:[#allocation3 + $0x34] sm:$0xf]
      %v119 = vld [vmem:[#allocation3 + $0x38] sm:$0xf]
      %v120 = vld [vmem:[#allocation3 + $0x3c] sm:$0xf]
      %v121 = vunpack.c.l.bf16 %v105
      %v122 = vunpack.c.l.bf16 %v106
      %v123 = vunpack.c.l.bf16 %v107
      %v124 = vunpack.c.l.bf16 %v108
      %v125 = vunpack.c.l.bf16 %v109
      %v126 = vunpack.c.l.bf16 %v110
      %v127 = vunpack.c.l.bf16 %v111
      %v128 = vunpack.c.l.bf16 %v112
      %v129 = vunpack.c.l.bf16 %v113
      %v130 = vunpack.c.l.bf16 %v114
      %v131 = vunpack.c.l.bf16 %v115
      %v132 = vunpack.c.l.bf16 %v116
      %v133 = vunpack.c.l.bf16 %v117
      %v134 = vunpack.c.l.bf16 %v118
      %v135 = vunpack.c.l.bf16 %v119
      %v136 = vunpack.c.l.bf16 %v120
      %v137 = vmul.f32 %v121, %v121
      %v138 = vmul.f32 %v122, %v122
      %v139 = vmul.f32 %v123, %v123
      %v140 = vmul.f32 %v124, %v124
      %v141 = vmul.f32 %v125, %v125
      %v142 = vmul.f32 %v126, %v126
      %v143 = vmul.f32 %v127, %v127
      %v144 = vmul.f32 %v128, %v128
      %v145 = vmul.f32 %v129, %v129
      %v146 = vmul.f32 %v130, %v130
      %v147 = vmul.f32 %v131, %v131
      %v148 = vmul.f32 %v132, %v132
      %v149 = vmul.f32 %v133, %v133
      %v150 = vmul.f32 %v134, %v134
      %v151 = vmul.f32 %v135, %v135
      %v152 = vmul.f32 %v136, %v136
      %153 = vadd.xlane.f32.xlu0 %v137
      %v154 = vpop.xlane.xlu0 %153
      %155 = vadd.xlane.f32.xlu0 %v138
      %v156 = vpop.xlane.xlu0 %155
      %157 = vadd.xlane.f32.xlu0 %v139
      %v158 = vpop.xlane.xlu0 %157
      %159 = vadd.xlane.f32.xlu0 %v140
      %v160 = vpop.xlane.xlu0 %159
      %161 = vadd.xlane.f32.xlu0 %v141
      %v162 = vpop.xlane.xlu0 %161
      %163 = vadd.xlane.f32.xlu0 %v142
      %v164 = vpop.xlane.xlu0 %163
      %165 = vadd.xlane.f32.xlu0 %v143
      %v166 = vpop.xlane.xlu0 %165
      %167 = vadd.xlane.f32.xlu0 %v144
      %v168 = vpop.xlane.xlu0 %167
      %169 = vadd.xlane.f32.xlu0 %v145
      %v170 = vpop.xlane.xlu0 %169
      %171 = vadd.xlane.f32.xlu0 %v146
      %v172 = vpop.xlane.xlu0 %171
      %173 = vadd.xlane.f32.xlu0 %v147
      %v174 = vpop.xlane.xlu0 %173
      %175 = vadd.xlane.f32.xlu0 %v148
      %v176 = vpop.xlane.xlu0 %175
      %177 = vadd.xlane.f32.xlu0 %v149
      %v178 = vpop.xlane.xlu0 %177
      %179 = vadd.xlane.f32.xlu0 %v150
      %v180 = vpop.xlane.xlu0 %179
      %181 = vadd.xlane.f32.xlu0 %v151
      %v182 = vpop.xlane.xlu0 %181
      %183 = vadd.xlane.f32.xlu0 %v152
      %v184 = vpop.xlane.xlu0 %183
      %v185 = vrcp.pop 128.0
      %v186 = vmul.f32 %v154, %v185
      %v187 = vmul.f32 %v156, %v185
      %v188 = vmul.f32 %v158, %v185
      %v189 = vmul.f32 %v160, %v185
      %v190 = vmul.f32 %v162, %v185
      %v191 = vmul.f32 %v164, %v185
      %v192 = vmul.f32 %v166, %v185
      %v193 = vmul.f32 %v168, %v185
      %v194 = vmul.f32 %v170, %v185
      %v195 = vmul.f32 %v172, %v185
      %v196 = vmul.f32 %v174, %v185
      %v197 = vmul.f32 %v176, %v185
      %v198 = vmul.f32 %v178, %v185
      %v199 = vmul.f32 %v180, %v185
      %v200 = vmul.f32 %v182, %v185
      %v201 = vmul.f32 %v184, %v185
      %v202 = vadd.f32 %v186, 1e-05
      %v203 = vadd.f32 %v187, 1e-05
      %v204 = vadd.f32 %v188, 1e-05
      %v205 = vadd.f32 %v189, 1e-05
      %v206 = vadd.f32 %v190, 1e-05
      %v207 = vadd.f32 %v191, 1e-05
      %v208 = vadd.f32 %v192, 1e-05
      %v209 = vadd.f32 %v193, 1e-05
      %v210 = vadd.f32 %v194, 1e-05
      %v211 = vadd.f32 %v195, 1e-05
      %v212 = vadd.f32 %v196, 1e-05
      %v213 = vadd.f32 %v197, 1e-05
      %v214 = vadd.f32 %v198, 1e-05
      %v215 = vadd.f32 %v199, 1e-05
      %v216 = vadd.f32 %v200, 1e-05
      %v217 = vadd.f32 %v201, 1e-05
      %v218 = vrsqrt.pop %v202
      %v219 = vrsqrt.pop %v203
      %v220 = vrsqrt.pop %v204
      %v221 = vrsqrt.pop %v205
      %v222 = vrsqrt.pop %v206
      %v223 = vrsqrt.pop %v207
      %v224 = vrsqrt.pop %v208
      %v225 = vrsqrt.pop %v209
      %v226 = vrsqrt.pop %v210
      %v227 = vrsqrt.pop %v211
      %v228 = vrsqrt.pop %v212
      %v229 = vrsqrt.pop %v213
      %v230 = vrsqrt.pop %v214
      %v231 = vrsqrt.pop %v215
      %v232 = vrsqrt.pop %v216
      %v233 = vrsqrt.pop %v217
      %vm234 = vcmask 7168
      %235 = vst.msk [vmem:[#allocation2] sm:$0xff] %vm234, %v218
      %236 = vst.msk [vmem:[#allocation2 + $0x8] sm:$0xff] %vm234, %v219
      %237 = vst.msk [vmem:[#allocation2 + $0x10] sm:$0xff] %vm234, %v220
      %238 = vst.msk [vmem:[#allocation2 + $0x18] sm:$0xff] %vm234, %v221
      %239 = vst.msk [vmem:[#allocation2 + $0x20] sm:$0xff] %vm234, %v222
      %240 = vst.msk [vmem:[#allocation2 + $0x28] sm:$0xff] %vm234, %v223
      %241 = vst.msk [vmem:[#allocation2 + $0x30] sm:$0xff] %vm234, %v224
      %242 = vst.msk [vmem:[#allocation2 + $0x38] sm:$0xff] %vm234, %v225
      %243 = vst.msk [vmem:[#allocation2 + $0x40] sm:$0xff] %vm234, %v226
      %244 = vst.msk [vmem:[#allocation2 + $0x48] sm:$0xff] %vm234, %v227
      %245 = vst.msk [vmem:[#allocation2 + $0x50] sm:$0xff] %vm234, %v228
      %246 = vst.msk [vmem:[#allocation2 + $0x58] sm:$0xff] %vm234, %v229
      %247 = vst.msk [vmem:[#allocation2 + $0x60] sm:$0xff] %vm234, %v230
      %248 = vst.msk [vmem:[#allocation2 + $0x68] sm:$0xff] %vm234, %v231
      %249 = vst.msk [vmem:[#allocation2 + $0x70] sm:$0xff] %vm234, %v232
      %250 = vst.msk [vmem:[#allocation2 + $0x78] sm:$0xff] %vm234, %v233
    $region53: #{masked_encoder_forward.16} parent=1 // pred_fallthru
      _
    %v251 = vld [vmem:[#allocation3] sm:$0xf]
    %v252 = vld [vmem:[#allocation3 + $0x4] sm:$0xf]
    %v253 = vld [vmem:[#allocation3 + $0x8] sm:$0xf]
    %v254 = vld [vmem:[#allocation3 + $0xc] sm:$0xf]
    %v255 = vld [vmem:[#allocation3 + $0x10] sm:$0xf]
    %v256 = vld [vmem:[#allocation3 + $0x14] sm:$0xf]
    %v257 = vld [vmem:[#allocation3 + $0x18] sm:$0xf]
    %v258 = vld [vmem:[#allocation3 + $0x1c] sm:$0xf]
    %v259 = vld [vmem:[#allocation3 + $0x20] sm:$0xf]
    %v260 = vld [vmem:[#allocation3 + $0x24] sm:$0xf]
    %v261 = vld [vmem:[#allocation3 + $0x28] sm:$0xf]
    %v262 = vld [vmem:[#allocation3 + $0x2c] sm:$0xf]
    %v263 = vld [vmem:[#allocation3 + $0x30] sm:$0xf]
    %v264 = vld [vmem:[#allocation3 + $0x34] sm:$0xf]
    %v265 = vld [vmem:[#allocation3 + $0x38] sm:$0xf]
    %v266 = vld [vmem:[#allocation3 + $0x3c] sm:$0xf]
    %v267 = vunpack.c.l.bf16 %v251
    %v268 = vunpack.c.l.bf16 %v252
    %v269 = vunpack.c.l.bf16 %v253
    %v270 = vunpack.c.l.bf16 %v254
    %v271 = vunpack.c.l.bf16 %v255
    %v272 = vunpack.c.l.bf16 %v256
    %v273 = vunpack.c.l.bf16 %v257
    %v274 = vunpack.c.l.bf16 %v258
    %v275 = vunpack.c.l.bf16 %v259
    %v276 = vunpack.c.l.bf16 %v260
    %v277 = vunpack.c.l.bf16 %v261
    %v278 = vunpack.c.l.bf16 %v262
    %v279 = vunpack.c.l.bf16 %v263
    %v280 = vunpack.c.l.bf16 %v264
    %v281 = vunpack.c.l.bf16 %v265
    %v282 = vunpack.c.l.bf16 %v266
    %v283 = vld [vmem:[#allocation2] sm:$0xff]
    %v284 = vld [vmem:[#allocation2 + $0x8] sm:$0xff]
    %v285 = vld [vmem:[#allocation2 + $0x10] sm:$0xff]
    %v286 = vld [vmem:[#allocation2 + $0x18] sm:$0xff]
    %v287 = vld [vmem:[#allocation2 + $0x20] sm:$0xff]
    %v288 = vld [vmem:[#allocation2 + $0x28] sm:$0xff]
    %v289 = vld [vmem:[#allocation2 + $0x30] sm:$0xff]
    %v290 = vld [vmem:[#allocation2 + $0x38] sm:$0xff]
    %v291 = vld [vmem:[#allocation2 + $0x40] sm:$0xff]
    %v292 = vld [vmem:[#allocation2 + $0x48] sm:$0xff]
    %v293 = vld [vmem:[#allocation2 + $0x50] sm:$0xff]
    %v294 = vld [vmem:[#allocation2 + $0x58] sm:$0xff]
    %v295 = vld [vmem:[#allocation2 + $0x60] sm:$0xff]
    %v296 = vld [vmem:[#allocation2 + $0x68] sm:$0xff]
    %v297 = vld [vmem:[#allocation2 + $0x70] sm:$0xff]
    %v298 = vld [vmem:[#allocation2 + $0x78] sm:$0xff]
    %300 = vset.pattern.permute.xlu0 0
    %301 = vperm.xlu0 %300, %v283
    %v302 = vpop.permute.xlu0 %301
    %305 = vset.pattern.permute.xlu0 0
    %306 = vperm.xlu0 %305, %v284
    %v307 = vpop.permute.xlu0 %306
    %310 = vset.pattern.permute.xlu0 0
    %311 = vperm.xlu0 %310, %v285
    %v312 = vpop.permute.xlu0 %311
    %315 = vset.pattern.permute.xlu0 0
    %316 = vperm.xlu0 %315, %v286
    %v317 = vpop.permute.xlu0 %316
    %320 = vset.pattern.permute.xlu0 0
    %321 = vperm.xlu0 %320, %v287
    %v322 = vpop.permute.xlu0 %321
    %325 = vset.pattern.permute.xlu0 0
    %326 = vperm.xlu0 %325, %v288
    %v327 = vpop.permute.xlu0 %326
    %330 = vset.pattern.permute.xlu0 0
    %331 = vperm.xlu0 %330, %v289
    %v332 = vpop.permute.xlu0 %331
    %335 = vset.pattern.permute.xlu0 0
    %336 = vperm.xlu0 %335, %v290
    %v337 = vpop.permute.xlu0 %336
    %340 = vset.pattern.permute.xlu0 0
    %341 = vperm.xlu0 %340, %v291
    %v342 = vpop.permute.xlu0 %341
    %345 = vset.pattern.permute.xlu0 0
    %346 = vperm.xlu0 %345, %v292
    %v347 = vpop.permute.xlu0 %346
    %350 = vset.pattern.permute.xlu0 0
    %351 = vperm.xlu0 %350, %v293
    %v352 = vpop.permute.xlu0 %351
    %355 = vset.pattern.permute.xlu0 0
    %356 = vperm.xlu0 %355, %v294
    %v357 = vpop.permute.xlu0 %356
    %360 = vset.pattern.permute.xlu0 0
    %361 = vperm.xlu0 %360, %v295
    %v362 = vpop.permute.xlu0 %361
    %365 = vset.pattern.permute.xlu0 0
    %366 = vperm.xlu0 %365, %v296
    %v367 = vpop.permute.xlu0 %366
    %370 = vset.pattern.permute.xlu0 0
    %371 = vperm.xlu0 %370, %v297
    %v372 = vpop.permute.xlu0 %371
    %375 = vset.pattern.permute.xlu0 0
    %376 = vperm.xlu0 %375, %v298
    %v377 = vpop.permute.xlu0 %376
    %v379 = vmul.f32 %v267, %v302
    %v380 = vmul.f32 %v268, %v307
    %v381 = vmul.f32 %v269, %v312
    %v382 = vmul.f32 %v270, %v317
    %v383 = vmul.f32 %v271, %v322
    %v384 = vmul.f32 %v272, %v327
    %v385 = vmul.f32 %v273, %v332
    %v386 = vmul.f32 %v274, %v337
    %v387 = vmul.f32 %v275, %v342
    %v388 = vmul.f32 %v276, %v347
    %v389 = vmul.f32 %v277, %v352
    %v390 = vmul.f32 %v278, %v357
    %v391 = vmul.f32 %v279, %v362
    %v392 = vmul.f32 %v280, %v367
    %v393 = vmul.f32 %v281, %v372
    %v394 = vmul.f32 %v282, %v377
    %v395 = vld [vmem:[#allocation6] sm:$0x1]
    %v397 = vlaneseq
    %v398 = vshrl.u32 %v397, 7
    %v399 = vsub.s32 0, %v398
    %v400 = vrot.slane %v395, %v399
    %v402 = vmul.f32 %v379, %v400
    %v403 = vmul.f32 %v380, %v400
    %v404 = vmul.f32 %v381, %v400
    %v405 = vmul.f32 %v382, %v400
    %v406 = vmul.f32 %v383, %v400
    %v407 = vmul.f32 %v384, %v400
    %v408 = vmul.f32 %v385, %v400
    %v409 = vmul.f32 %v386, %v400
    %v410 = vmul.f32 %v387, %v400
    %v411 = vmul.f32 %v388, %v400
    %v412 = vmul.f32 %v389, %v400
    %v413 = vmul.f32 %v390, %v400
    %v414 = vmul.f32 %v391, %v400
    %v415 = vmul.f32 %v392, %v400
    %v416 = vmul.f32 %v393, %v400
    %v417 = vmul.f32 %v394, %v400
    %v418 = vpack.c.bf16 %v403, %v402
    %v419 = vpack.c.bf16 %v405, %v404
    %v420 = vpack.c.bf16 %v407, %v406
    %v421 = vpack.c.bf16 %v409, %v408
    %v422 = vpack.c.bf16 %v411, %v410
    %v423 = vpack.c.bf16 %v413, %v412
    %v424 = vpack.c.bf16 %v415, %v414
    %v425 = vpack.c.bf16 %v417, %v416
    %v426 = vld [vmem:[#allocation8] sm:$0xff]
    %v427 = vld [vmem:[#allocation8 + $0x8] sm:$0xff]
    %v428 = vld [vmem:[#allocation8 + $0x10] sm:$0xff]
    %v429 = vld [vmem:[#allocation8 + $0x18] sm:$0xff]
    %v430 = vld [vmem:[#allocation8 + $0x20] sm:$0xff]
    %v431 = vld [vmem:[#allocation8 + $0x28] sm:$0xff]
    %v432 = vld [vmem:[#allocation8 + $0x30] sm:$0xff]
    %v433 = vld [vmem:[#allocation8 + $0x38] sm:$0xff]
    %v434 = vld [vmem:[#allocation8 + $0x40] sm:$0xff]
    %v435 = vld [vmem:[#allocation8 + $0x48] sm:$0xff]
    %v436 = vld [vmem:[#allocation8 + $0x50] sm:$0xff]
    %v437 = vld [vmem:[#allocation8 + $0x58] sm:$0xff]
    %v438 = vld [vmem:[#allocation8 + $0x60] sm:$0xff]
    %v439 = vld [vmem:[#allocation8 + $0x68] sm:$0xff]
    %v440 = vld [vmem:[#allocation8 + $0x70] sm:$0xff]
    %v441 = vld [vmem:[#allocation8 + $0x78] sm:$0xff]
    %v442 = vld [vmem:[#allocation8 + $0x80] sm:$0xff]
    %v443 = vld [vmem:[#allocation8 + $0x88] sm:$0xff]
    %v444 = vld [vmem:[#allocation8 + $0x90] sm:$0xff]
    %v445 = vld [vmem:[#allocation8 + $0x98] sm:$0xff]
    %v446 = vld [vmem:[#allocation8 + $0xa0] sm:$0xff]
    %v447 = vld [vmem:[#allocation8 + $0xa8] sm:$0xff]
    %v448 = vld [vmem:[#allocation8 + $0xb0] sm:$0xff]
    %v449 = vld [vmem:[#allocation8 + $0xb8] sm:$0xff]
    %v450 = vld [vmem:[#allocation8 + $0xc0] sm:$0xff]
    %v451 = vld [vmem:[#allocation8 + $0xc8] sm:$0xff]
    %v452 = vld [vmem:[#allocation8 + $0xd0] sm:$0xff]
    %v453 = vld [vmem:[#allocation8 + $0xd8] sm:$0xff]
    %v454 = vld [vmem:[#allocation8 + $0xe0] sm:$0xff]
    %v455 = vld [vmem:[#allocation8 + $0xe8] sm:$0xff]
    %v456 = vld [vmem:[#allocation8 + $0xf0] sm:$0xff]
    %v457 = vld [vmem:[#allocation8 + $0xf8] sm:$0xff]
    %v458 = vld [vmem:[#allocation9] sm:$0xf]
    %v460 = vlaneseq
    %v461 = vshrl.u32 %v460, 7
    %v462 = vsub.s32 0, %v461
    %v463 = vrot.slane %v458, %v462
    %v464 = vlaneseq
    %v465 = vshrl.u32 %v464, 7
    %v466 = vsub.s32 1, %v465
    %v467 = vrot.slane %v458, %v466
    %v468 = vlaneseq
    %v469 = vshrl.u32 %v468, 7
    %v470 = vsub.s32 2, %v469
    %v471 = vrot.slane %v458, %v470
    %v472 = vlaneseq
    %v473 = vshrl.u32 %v472, 7
    %v474 = vsub.s32 3, %v473
    %v475 = vrot.slane %v458, %v474
    %v512 = vunpack.c.l.b16 %v426
    %v513 = vunpack.c.h.b16 %v426
    %v514 = vunpack.c.l.b16 %v427
    %v515 = vunpack.c.h.b16 %v427
    %v516 = vunpack.c.l.b16 %v428
    %v517 = vunpack.c.h.b16 %v428
    %v518 = vunpack.c.l.b16 %v429
    %v519 = vunpack.c.h.b16 %v429
    %v520 = vunpack.c.l.b16 %v430
    %v521 = vunpack.c.h.b16 %v430
    %v522 = vunpack.c.l.b16 %v431
    %v523 = vunpack.c.h.b16 %v431
    %v524 = vunpack.c.l.b16 %v432
    %v525 = vunpack.c.h.b16 %v432
    %v526 = vunpack.c.l.b16 %v433
    %v527 = vunpack.c.h.b16 %v433
    %v528 = vunpack.c.l.b16 %v434
    %v529 = vunpack.c.h.b16 %v434
    %v530 = vunpack.c.l.b16 %v435
    %v531 = vunpack.c.h.b16 %v435
    %v532 = vunpack.c.l.b16 %v436
    %v533 = vunpack.c.h.b16 %v436
    %v534 = vunpack.c.l.b16 %v437
    %v535 = vunpack.c.h.b16 %v437
    %v536 = vunpack.c.l.b16 %v438
    %v537 = vunpack.c.h.b16 %v438
    %v538 = vunpack.c.l.b16 %v439
    %v539 = vunpack.c.h.b16 %v439
    %v540 = vunpack.c.l.b16 %v440
    %v541 = vunpack.c.h.b16 %v440
    %v542 = vunpack.c.l.b16 %v441
    %v543 = vunpack.c.h.b16 %v441
    %v544 = vunpack.c.l.b16 %v442
    %v545 = vunpack.c.h.b16 %v442
    %v546 = vunpack.c.l.b16 %v443
    %v547 = vunpack.c.h.b16 %v443
    %v548 = vunpack.c.l.b16 %v444
    %v549 = vunpack.c.h.b16 %v444
    %v550 = vunpack.c.l.b16 %v445
    %v551 = vunpack.c.h.b16 %v445
    %v552 = vunpack.c.l.b16 %v446
    %v553 = vunpack.c.h.b16 %v446
    %v554 = vunpack.c.l.b16 %v447
    %v555 = vunpack.c.h.b16 %v447
    %v556 = vunpack.c.l.b16 %v448
    %v557 = vunpack.c.h.b16 %v448
    %v558 = vunpack.c.l.b16 %v449
    %v559 = vunpack.c.h.b16 %v449
    %v560 = vunpack.c.l.b16 %v450
    %v561 = vunpack.c.h.b16 %v450
    %v562 = vunpack.c.l.b16 %v451
    %v563 = vunpack.c.h.b16 %v451
    %v564 = vunpack.c.l.b16 %v452
    %v565 = vunpack.c.h.b16 %v452
    %v566 = vunpack.c.l.b16 %v453
    %v567 = vunpack.c.h.b16 %v453
    %v568 = vunpack.c.l.b16 %v454
    %v569 = vunpack.c.h.b16 %v454
    %v570 = vunpack.c.l.b16 %v455
    %v571 = vunpack.c.h.b16 %v455
    %v572 = vunpack.c.l.b16 %v456
    %v573 = vunpack.c.h.b16 %v456
    %v574 = vunpack.c.l.b16 %v457
    %v575 = vunpack.c.h.b16 %v457
    %v576 = vpack.c.b16 %v516, %v512
    %v577 = vpack.c.b16 %v517, %v513
    %v578 = vpack.c.b16 %v518, %v514
    %v579 = vpack.c.b16 %v519, %v515
    %v580 = vpack.c.b16 %v524, %v520
    %v581 = vpack.c.b16 %v525, %v521
    %v582 = vpack.c.b16 %v526, %v522
    %v583 = vpack.c.b16 %v527, %v523
    %v584 = vpack.c.b16 %v532, %v528
    %v585 = vpack.c.b16 %v533, %v529
    %v586 = vpack.c.b16 %v534, %v530
    %v587 = vpack.c.b16 %v535, %v531
    %v588 = vpack.c.b16 %v540, %v536
    %v589 = vpack.c.b16 %v541, %v537
    %v590 = vpack.c.b16 %v542, %v538
    %v591 = vpack.c.b16 %v543, %v539
    %v592 = vpack.c.b16 %v548, %v544
    %v593 = vpack.c.b16 %v549, %v545
    %v594 = vpack.c.b16 %v550, %v546
    %v595 = vpack.c.b16 %v551, %v547
    %v596 = vpack.c.b16 %v556, %v552
    %v597 = vpack.c.b16 %v557, %v553
    %v598 = vpack.c.b16 %v558, %v554
    %v599 = vpack.c.b16 %v559, %v555
    %v600 = vpack.c.b16 %v564, %v560
    %v601 = vpack.c.b16 %v565, %v561
    %v602 = vpack.c.b16 %v566, %v562
    %v603 = vpack.c.b16 %v567, %v563
    %v604 = vpack.c.b16 %v572, %v568
    %v605 = vpack.c.b16 %v573, %v569
    %v606 = vpack.c.b16 %v574, %v570
    %v607 = vpack.c.b16 %v575, %v571
    %640 = vmatprep.subr.bf16.mxu0 %v577
    %641 = vmatpush1.bf16.msra.mxu0 %v576
    %642 = vmatprep.subr.bf16.mxu0 %v581
    %643 = vmatpush1.bf16.msra.mxu0 %v580
    %644 = vmatprep.subr.bf16.mxu0 %v585
    %645 = vmatpush1.bf16.msra.mxu0 %v584
    %646 = vmatprep.subr.bf16.mxu0 %v589
    %647 = vmatpush1.bf16.msra.mxu0 %v588
    %648 = vmatprep.subr.bf16.mxu0 %v593
    %649 = vmatpush1.bf16.msra.mxu0 %v592
    %650 = vmatprep.subr.bf16.mxu0 %v597
    %651 = vmatpush1.bf16.msra.mxu0 %v596
    %652 = vmatprep.subr.bf16.mxu0 %v601
    %653 = vmatpush1.bf16.msra.mxu0 %v600
    %654 = vmatprep.subr.bf16.mxu0 %v605
    %655 = vmatpush1.bf16.msra.mxu0 %v604
    %656 = vmatprep.subr.bf16.mxu0 0
    %657 = vmatpush1.bf16.msra.mxu0 0
    %658 = vmatprep.subr.bf16.mxu0 0
    %659 = vmatpush1.bf16.msra.mxu0 0
    %660 = vmatprep.subr.bf16.mxu0 0
    %661 = vmatpush1.bf16.msra.mxu0 0
    %662 = vmatprep.subr.bf16.mxu0 0
    %663 = vmatpush1.bf16.msra.mxu0 0
    %664 = vmatprep.subr.bf16.mxu0 0
    %665 = vmatpush1.bf16.msra.mxu0 0
    %666 = vmatprep.subr.bf16.mxu0 0
    %667 = vmatpush1.bf16.msra.mxu0 0
    %668 = vmatprep.subr.bf16.mxu0 0
    %669 = vmatpush1.bf16.msra.mxu0 0
    %670 = vmatprep.subr.bf16.mxu0 0
    %671 = vmatpush1.bf16.msra.mxu0 0
    %672 = vmatprep.mubr.bf16.mxu0 0
    %673 = vmatmul.mubr.bf16.gmra.mrb[0].mxu0 %v418
    %v674 = vpop.f32.mrb[0].mxu0
    %v675 = vadd.f32 %v463, %v674
    %v676 = vpop.f32.mrb[0].mxu0
    %v677 = vadd.f32 %v467, %v676
    %v678 = vpop.f32.mrb[0].mxu0
    %v679 = vadd.f32 %v463, %v678
    %v680 = vpop.f32.mrb[0].mxu0
    %v681 = vadd.f32 %v467, %v680
    %682 = vmatprep.mubr.bf16.mxu0 0
    %683 = vmatmul.mubr.bf16.gmra.mrb[0].mxu0 %v419
    %v684 = vpop.f32.mrb[0].mxu0
    %v685 = vadd.f32 %v463, %v684
    %v686 = vpop.f32.mrb[0].mxu0
    %v687 = vadd.f32 %v467, %v686
    %v688 = vpop.f32.mrb[0].mxu0
    %v689 = vadd.f32 %v463, %v688
    %v690 = vpop.f32.mrb[0].mxu0
    %v691 = vadd.f32 %v467, %v690
    %692 = vmatprep.mubr.bf16.mxu0 0
    %693 = vmatmul.mubr.bf16.gmra.mrb[0].mxu0 %v420
    %v694 = vpop.f32.mrb[0].mxu0
    %v695 = vadd.f32 %v463, %v694
    %v696 = vpop.f32.mrb[0].mxu0
    %v697 = vadd.f32 %v467, %v696
    %v698 = vpop.f32.mrb[0].mxu0
    %v699 = vadd.f32 %v463, %v698
    %v700 = vpop.f32.mrb[0].mxu0
    %v701 = vadd.f32 %v467, %v700
    %702 = vmatprep.mubr.bf16.mxu0 0
    %703 = vmatmul.mubr.bf16.gmra.mrb[0].mxu0 %v421
    %v704 = vpop.f32.mrb[0].mxu0
    %v705 = vadd.f32 %v463, %v704
    %v706 = vpop.f32.mrb[0].mxu0
    %v707 = vadd.f32 %v467, %v706
    %v708 = vpop.f32.mrb[0].mxu0
    %v709 = vadd.f32 %v463, %v708
    %v710 = vpop.f32.mrb[0].mxu0
    %v711 = vadd.f32 %v467, %v710
    %712 = vmatprep.mubr.bf16.mxu0 0
    %713 = vmatmul.mubr.bf16.gmra.mrb[0].mxu0 %v422
    %v714 = vpop.f32.mrb[0].mxu0
    %v715 = vadd.f32 %v463, %v714
    %v716 = vpop.f32.mrb[0].mxu0
    %v717 = vadd.f32 %v467, %v716
    %v718 = vpop.f32.mrb[0].mxu0
    %v719 = vadd.f32 %v463, %v718
    %v720 = vpop.f32.mrb[0].mxu0
    %v721 = vadd.f32 %v467, %v720
    %722 = vmatprep.mubr.bf16.mxu0 0
    %723 = vmatmul.mubr.bf16.gmra.mrb[0].mxu0 %v423
    %v724 = vpop.f32.mrb[0].mxu0
    %v725 = vadd.f32 %v463, %v724
    %v726 = vpop.f32.mrb[0].mxu0
    %v727 = vadd.f32 %v467, %v726
    %v728 = vpop.f32.mrb[0].mxu0
    %v729 = vadd.f32 %v463, %v728
    %v730 = vpop.f32.mrb[0].mxu0
    %v731 = vadd.f32 %v467, %v730
    %732 = vmatprep.mubr.bf16.mxu0 0
    %733 = vmatmul.mubr.bf16.gmra.mrb[0].mxu0 %v424
    %v734 = vpop.f32.mrb[0].mxu0
    %v735 = vadd.f32 %v463, %v734
    %v736 = vpop.f32.mrb[0].mxu0
    %v737 = vadd.f32 %v467, %v736
    %v738 = vpop.f32.mrb[0].mxu0
    %v739 = vadd.f32 %v463, %v738
    %v740 = vpop.f32.mrb[0].mxu0
    %v741 = vadd.f32 %v467, %v740
    %742 = vmatprep.mubr.bf16.mxu0 0
    %743 = vmatmul.mubr.bf16.gmra.mrb[0].mxu0 %v425
    %v744 = vpop.f32.mrb[0].mxu0
    %v745 = vadd.f32 %v463, %v744
    %v746 = vpop.f32.mrb[0].mxu0
    %v747 = vadd.f32 %v467, %v746
    %v748 = vpop.f32.mrb[0].mxu0
    %v749 = vadd.f32 %v463, %v748
    %v750 = vpop.f32.mrb[0].mxu0
    %v751 = vadd.f32 %v467, %v750
    %752 = vdwg.mxu0
    %753 = vmatprep.subr.bf16.mxu0 %v579
    %754 = vmatpush1.bf16.msra.mxu0 %v578
    %755 = vmatprep.subr.bf16.mxu0 %v583
    %756 = vmatpush1.bf16.msra.mxu0 %v582
    %757 = vmatprep.subr.bf16.mxu0 %v587
    %758 = vmatpush1.bf16.msra.mxu0 %v586
    %759 = vmatprep.subr.bf16.mxu0 %v591
    %760 = vmatpush1.bf16.msra.mxu0 %v590
    %761 = vmatprep.subr.bf16.mxu0 %v595
    %762 = vmatpush1.bf16.msra.mxu0 %v594
    %763 = vmatprep.subr.bf16.mxu0 %v599
    %764 = vmatpush1.bf16.msra.mxu0 %v598
    %765 = vmatprep.subr.bf16.mxu0 %v603
    %766 = vmatpush1.bf16.msra.mxu0 %v602
    %767 = vmatprep.subr.bf16.mxu0 %v607
    %768 = vmatpush1.bf16.msra.mxu0 %v606
    %769 = vmatprep.subr.bf16.mxu0 0
    %770 = vmatpush1.bf16.msra.mxu0 0
    %771 = vmatprep.subr.bf16.mxu0 0
    %772 = vmatpush1.bf16.msra.mxu0 0
    %773 = vmatprep.subr.bf16.mxu0 0
    %774 = vmatpush1.bf16.msra.mxu0 0
    %775 = vmatprep.subr.bf16.mxu0 0
    %776 = vmatpush1.bf16.msra.mxu0 0
    %777 = vmatprep.subr.bf16.mxu0 0
    %778 = vmatpush1.bf16.msra.mxu0 0
    %779 = vmatprep.subr.bf16.mxu0 0
    %780 = vmatpush1.bf16.msra.mxu0 0
    %781 = vmatprep.subr.bf16.mxu0 0
    %782 = vmatpush1.bf16.msra.mxu0 0
    %783 = vmatprep.subr.bf16.mxu0 0
    %784 = vmatpush1.bf16.msra.mxu0 0
    %785 = vmatprep.mubr.bf16.mxu0 0
    %786 = vmatmul.mubr.bf16.gmra.mrb[0].mxu0 %v418
    %v787 = vpop.f32.mrb[0].mxu0
    %v788 = vadd.f32 %v471, %v787
    %v789 = vpop.f32.mrb[0].mxu0
    %v790 = vadd.f32 %v475, %v789
    %v791 = vpop.f32.mrb[0].mxu0
    %v792 = vadd.f32 %v471, %v791
    %v793 = vpop.f32.mrb[0].mxu0
    %v794 = vadd.f32 %v475, %v793
    %795 = vmatprep.mubr.bf16.mxu0 0
    %796 = vmatmul.mubr.bf16.gmra.mrb[0].mxu0 %v419
    %v797 = vpop.f32.mrb[0].mxu0
    %v798 = vadd.f32 %v471, %v797
    %v799 = vpop.f32.mrb[0].mxu0
    %v800 = vadd.f32 %v475, %v799
    %v801 = vpop.f32.mrb[0].mxu0
    %v802 = vadd.f32 %v471, %v801
    %v803 = vpop.f32.mrb[0].mxu0
    %v804 = vadd.f32 %v475, %v803
    %805 = vmatprep.mubr.bf16.mxu0 0
    %806 = vmatmul.mubr.bf16.gmra.mrb[0].mxu0 %v420
    %v807 = vpop.f32.mrb[0].mxu0
    %v808 = vadd.f32 %v471, %v807
    %v809 = vpop.f32.mrb[0].mxu0
    %v810 = vadd.f32 %v475, %v809
    %v811 = vpop.f32.mrb[0].mxu0
    %v812 = vadd.f32 %v471, %v811
    %v813 = vpop.f32.mrb[0].mxu0
    %v814 = vadd.f32 %v475, %v813
    %815 = vmatprep.mubr.bf16.mxu0 0
    %816 = vmatmul.mubr.bf16.gmra.mrb[0].mxu0 %v421
    %v817 = vpop.f32.mrb[0].mxu0
    %v818 = vadd.f32 %v471, %v817
    %v819 = vpop.f32.mrb[0].mxu0
    %v820 = vadd.f32 %v475, %v819
    %v821 = vpop.f32.mrb[0].mxu0
    %v822 = vadd.f32 %v471, %v821
    %v823 = vpop.f32.mrb[0].mxu0
    %v824 = vadd.f32 %v475, %v823
    %825 = vmatprep.mubr.bf16.mxu0 0
    %826 = vmatmul.mubr.bf16.gmra.mrb[0].mxu0 %v422
    %v827 = vpop.f32.mrb[0].mxu0
    %v828 = vadd.f32 %v471, %v827
    %v829 = vpop.f32.mrb[0].mxu0
    %v830 = vadd.f32 %v475, %v829
    %v831 = vpop.f32.mrb[0].mxu0
    %v832 = vadd.f32 %v471, %v831
    %v833 = vpop.f32.mrb[0].mxu0
    %v834 = vadd.f32 %v475, %v833
    %835 = vmatprep.mubr.bf16.mxu0 0
    %836 = vmatmul.mubr.bf16.gmra.mrb[0].mxu0 %v423
    %v837 = vpop.f32.mrb[0].mxu0
    %v838 = vadd.f32 %v471, %v837
    %v839 = vpop.f32.mrb[0].mxu0
    %v840 = vadd.f32 %v475, %v839
    %v841 = vpop.f32.mrb[0].mxu0
    %v842 = vadd.f32 %v471, %v841
    %v843 = vpop.f32.mrb[0].mxu0
    %v844 = vadd.f32 %v475, %v843
    %845 = vmatprep.mubr.bf16.mxu0 0
    %846 = vmatmul.mubr.bf16.gmra.mrb[0].mxu0 %v424
    %v847 = vpop.f32.mrb[0].mxu0
    %v848 = vadd.f32 %v471, %v847
    %v849 = vpop.f32.mrb[0].mxu0
    %v850 = vadd.f32 %v475, %v849
    %v851 = vpop.f32.mrb[0].mxu0
    %v852 = vadd.f32 %v471, %v851
    %v853 = vpop.f32.mrb[0].mxu0
    %v854 = vadd.f32 %v475, %v853
    %855 = vmatprep.mubr.bf16.mxu0 0
    %856 = vmatmul.mubr.bf16.gmra.mrb[0].mxu0 %v425
    %v857 = vpop.f32.mrb[0].mxu0
    %v858 = vadd.f32 %v471, %v857
    %v859 = vpop.f32.mrb[0].mxu0
    %v860 = vadd.f32 %v475, %v859
    %v861 = vpop.f32.mrb[0].mxu0
    %v862 = vadd.f32 %v471, %v861
    %v863 = vpop.f32.mrb[0].mxu0
    %v864 = vadd.f32 %v475, %v863
    %865 = vdwg.mxu0
    %v866 = vld [vmem:[#allocation11] sm:$0xff]
    %v867 = vld [vmem:[#allocation11 + $0x8] sm:$0xff]
    %v868 = vld [vmem:[#allocation11 + $0x10] sm:$0xff]
    %v869 = vld [vmem:[#allocation11 + $0x18] sm:$0xff]
    %v870 = vld [vmem:[#allocation11 + $0x20] sm:$0xff]
    %v871 = vld [vmem:[#allocation11 + $0x28] sm:$0xff]
    %v872 = vld [vmem:[#allocation11 + $0x30] sm:$0xff]
    %v873 = vld [vmem:[#allocation11 + $0x38] sm:$0xff]
    %v874 = vld [vmem:[#allocation11 + $0x40] sm:$0xff]
    %v875 = vld [vmem:[#allocation11 + $0x48] sm:$0xff]
    %v876 = vld [vmem:[#allocation11 + $0x50] sm:$0xff]
    %v877 = vld [vmem:[#allocation11 + $0x58] sm:$0xff]
    %v878 = vld [vmem:[#allocation11 + $0x60] sm:$0xff]
    %v879 = vld [vmem:[#allocation11 + $0x68] sm:$0xff]
    %v880 = vld [vmem:[#allocation11 + $0x70] sm:$0xff]
    %v881 = vld [vmem:[#allocation11 + $0x78] sm:$0xff]
    %v882 = vld [vmem:[#allocation11 + $0x80] sm:$0xff]
    %v883 = vld [vmem:[#allocation11 + $0x88] sm:$0xff]
    %v884 = vld [vmem:[#allocation11 + $0x90] sm:$0xff]
    %v885 = vld [vmem:[#allocation11 + $0x98] sm:$0xff]
    %v886 = vld [vmem:[#allocation11 + $0xa0] sm:$0xff]
    %v887 = vld [vmem:[#allocation11 + $0xa8] sm:$0xff]
    %v888 = vld [vmem:[#allocation11 + $0xb0] sm:$0xff]
    %v889 = vld [vmem:[#allocation11 + $0xb8] sm:$0xff]
    %v890 = vld [vmem:[#allocation11 + $0xc0] sm:$0xff]
    %v891 = vld [vmem:[#allocation11 + $0xc8] sm:$0xff]
    %v892 = vld [vmem:[#allocation11 + $0xd0] sm:$0xff]
    %v893 = vld [vmem:[#allocation11 + $0xd8] sm:$0xff]
    %v894 = vld [vmem:[#allocation11 + $0xe0] sm:$0xff]
    %v895 = vld [vmem:[#allocation11 + $0xe8] sm:$0xff]
    %v896 = vld [vmem:[#allocation11 + $0xf0] sm:$0xff]
    %v897 = vld [vmem:[#allocation11 + $0xf8] sm:$0xff]
    %v898 = vld [vmem:[#allocation12] sm:$0xf]
    %v900 = vlaneseq
    %v901 = vshrl.u32 %v900, 7
    %v902 = vsub.s32 0, %v901
    %v903 = vrot.slane %v898, %v902
    %v904 = vlaneseq
    %v905 = vshrl.u32 %v904, 7
    %v906 = vsub.s32 1, %v905
    %v907 = vrot.slane %v898, %v906
    %v908 = vlaneseq
    %v909 = vshrl.u32 %v908, 7
    %v910 = vsub.s32 2, %v909
    %v911 = vrot.slane %v898, %v910
    %v912 = vlaneseq
    %v913 = vshrl.u32 %v912, 7
    %v914 = vsub.s32 3, %v913
    %v915 = vrot.slane %v898, %v914
    %v952 = vunpack.c.l.b16 %v866
    %v953 = vunpack.c.h.b16 %v866
    %v954 = vunpack.c.l.b16 %v867
    %v955 = vunpack.c.h.b16 %v867
    %v956 = vunpack.c.l.b16 %v868
    %v957 = vunpack.c.h.b16 %v868
    %v958 = vunpack.c.l.b16 %v869
    %v959 = vunpack.c.h.b16 %v869
    %v960 = vunpack.c.l.b16 %v870
    %v961 = vunpack.c.h.b16 %v870
    %v962 = vunpack.c.l.b16 %v871
    %v963 = vunpack.c.h.b16 %v871
    %v964 = vunpack.c.l.b16 %v872
    %v965 = vunpack.c.h.b16 %v872
    %v966 = vunpack.c.l.b16 %v873
    %v967 = vunpack.c.h.b16 %v873
    %v968 = vunpack.c.l.b16 %v874
    %v969 = vunpack.c.h.b16 %v874
    %v970 = vunpack.c.l.b16 %v875
    %v971 = vunpack.c.h.b16 %v875
    %v972 = vunpack.c.l.b16 %v876
    %v973 = vunpack.c.h.b16 %v876
    %v974 = vunpack.c.l.b16 %v877
    %v975 = vunpack.c.h.b16 %v877
    %v976 = vunpack.c.l.b16 %v878
    %v977 = vunpack.c.h.b16 %v878
    %v978 = vunpack.c.l.b16 %v879
    %v979 = vunpack.c.h.b16 %v879
    %v980 = vunpack.c.l.b16 %v880
    %v981 = vunpack.c.h.b16 %v880
    %v982 = vunpack.c.l.b16 %v881
    %v983 = vunpack.c.h.b16 %v881
    %v984 = vunpack.c.l.b16 %v882
    %v985 = vunpack.c.h.b16 %v882
    %v986 = vunpack.c.l.b16 %v883
    %v987 = vunpack.c.h.b16 %v883
    %v988 = vunpack.c.l.b16 %v884
    %v989 = vunpack.c.h.b16 %v884
    %v990 = vunpack.c.l.b16 %v885
    %v991 = vunpack.c.h.b16 %v885
    %v992 = vunpack.c.l.b16 %v886
    %v993 = vunpack.c.h.b16 %v886
    %v994 = vunpack.c.l.b16 %v887
    %v995 = vunpack.c.h.b16 %v887
    %v996 = vunpack.c.l.b16 %v888
    %v997 = vunpack.c.h.b16 %v888
    %v998 = vunpack.c.l.b16 %v889
    %v999 = vunpack.c.h.b16 %v889
    %v1000 = vunpack.c.l.b16 %v890
    %v1001 = vunpack.c.h.b16 %v890
    %v1002 = vunpack.c.l.b16 %v891
    %v1003 = vunpack.c.h.b16 %v891
    %v1004 = vunpack.c.l.b16 %v892
    %v1005 = vunpack.c.h.b16 %v892
    %v1006 = vunpack.c.l.b16 %v893
    %v1007 = vunpack.c.h.b16 %v893
    %v1008 = vunpack.c.l.b16 %v894
    %v1009 = vunpack.c.h.b16 %v894
    %v1010 = vunpack.c.l.b16 %v895
    %v1011 = vunpack.c.h.b16 %v895
    %v1012 = vunpack.c.l.b16 %v896
    %v1013 = vunpack.c.h.b16 %v896
    %v1014 = vunpack.c.l.b16 %v897
    %v1015 = vunpack.c.h.b16 %v897
    %v1016 = vpack.c.b16 %v956, %v952
    %v1017 = vpack.c.b16 %v957, %v953
    %v1018 = vpack.c.b16 %v958, %v954
    %v1019 = vpack.c.b16 %v959, %v955
    %v1020 = vpack.c.b16 %v964, %v960
    %v1021 = vpack.c.b16 %v965, %v961
    %v1022 = vpack.c.b16 %v966, %v962
    %v1023 = vpack.c.b16 %v967, %v963
    %v1024 = vpack.c.b16 %v972, %v968
    %v1025 = vpack.c.b16 %v973, %v969
    %v1026 = vpack.c.b16 %v974, %v970
    %v1027 = vpack.c.b16 %v975, %v971
    %v1028 = vpack.c.b16 %v980, %v976
    %v1029 = vpack.c.b16 %v981, %v977
    %v1030 = vpack.c.b16 %v982, %v978
    %v1031 = vpack.c.b16 %v983, %v979
    %v1032 = vpack.c.b16 %v988, %v984
    %v1033 = vpack.c.b16 %v989, %v985
    %v1034 = vpack.c.b16 %v990, %v986
    %v1035 = vpack.c.b16 %v991, %v987
    %v1036 = vpack.c.b16 %v996, %v992
    %v1037 = vpack.c.b16 %v997, %v993
    %v1038 = vpack.c.b16 %v998, %v994
    %v1039 = vpack.c.b16 %v999, %v995
    %v1040 = vpack.c.b16 %v1004, %v1000
    %v1041 = vpack.c.b16 %v1005, %v1001
    %v1042 = vpack.c.b16 %v1006, %v1002
    %v1043 = vpack.c.b16 %v1007, %v1003
    %v1044 = vpack.c.b16 %v1012, %v1008
    %v1045 = vpack.c.b16 %v1013, %v1009
    %v1046 = vpack.c.b16 %v1014, %v1010
    %v1047 = vpack.c.b16 %v1015, %v1011
    %1080 = vmatprep.subr.bf16.mxu0 %v1017
    %1081 = vmatpush1.bf16.msra.mxu0 %v1016
    %1082 = vmatprep.subr.bf16.mxu0 %v1021
    %1083 = vmatpush1.bf16.msra.mxu0 %v1020
    %1084 = vmatprep.subr.bf16.mxu0 %v1025
    %1085 = vmatpush1.bf16.msra.mxu0 %v1024
    %1086 = vmatprep.subr.bf16.mxu0 %v1029
    %1087 = vmatpush1.bf16.msra.mxu0 %v1028
    %1088 = vmatprep.subr.bf16.mxu0 %v1033
    %1089 = vmatpush1.bf16.msra.mxu0 %v1032
    %1090 = vmatprep.subr.bf16.mxu0 %v1037
    %1091 = vmatpush1.bf16.msra.mxu0 %v1036
    %1092 = vmatprep.subr.bf16.mxu0 %v1041
    %1093 = vmatpush1.bf16.msra.mxu0 %v1040
    %1094 = vmatprep.subr.bf16.mxu0 %v1045
    %1095 = vmatpush1.bf16.msra.mxu0 %v1044
    %1096 = vmatprep.subr.bf16.mxu0 0
    %1097 = vmatpush1.bf16.msra.mxu0 0
    %1098 = vmatprep.subr.bf16.mxu0 0
    %1099 = vmatpush1.bf16.msra.mxu0 0
    %1100 = vmatprep.subr.bf16.mxu0 0
    %1101 = vmatpush1.bf16.msra.mxu0 0
    %1102 = vmatprep.subr.bf16.mxu0 0
    %1103 = vmatpush1.bf16.msra.mxu0 0
    %1104 = vmatprep.subr.bf16.mxu0 0
    %1105 = vmatpush1.bf16.msra.mxu0 0
    %1106 = vmatprep.subr.bf16.mxu0 0
    %1107 = vmatpush1.bf16.msra.mxu0 0
    %1108 = vmatprep.subr.bf16.mxu0 0
    %1109 = vmatpush1.bf16.msra.mxu0 0
    %1110 = vmatprep.subr.bf16.mxu0 0
    %1111 = vmatpush1.bf16.msra.mxu0 0
    %1112 = vmatprep.mubr.bf16.mxu0 0
    %1113 = vmatmul.mubr.bf16.gmra.mrb[0].mxu0 %v418
    %v1114 = vpop.f32.mrb[0].mxu0
    %v1115 = vadd.f32 %v903, %v1114
    %v1116 = vpop.f32.mrb[0].mxu0
    %v1117 = vadd.f32 %v907, %v1116
    %v1118 = vpop.f32.mrb[0].mxu0
    %v1119 = vadd.f32 %v903, %v1118
    %v1120 = vpop.f32.mrb[0].mxu0
    %v1121 = vadd.f32 %v907, %v1120
    %1122 = vmatprep.mubr.bf16.mxu0 0
    %1123 = vmatmul.mubr.bf16.gmra.mrb[0].mxu0 %v419
    %v1124 = vpop.f32.mrb[0].mxu0
    %v1125 = vadd.f32 %v903, %v1124
    %v1126 = vpop.f32.mrb[0].mxu0
    %v1127 = vadd.f32 %v907, %v1126
    %v1128 = vpop.f32.mrb[0].mxu0
    %v1129 = vadd.f32 %v903, %v1128
    %v1130 = vpop.f32.mrb[0].mxu0
    %v1131 = vadd.f32 %v907, %v1130
    %1132 = vmatprep.mubr.bf16.mxu0 0
    %1133 = vmatmul.mubr.bf16.gmra.mrb[0].mxu0 %v420
    %v1134 = vpop.f32.mrb[0].mxu0
    %v1135 = vadd.f32 %v903, %v1134
    %v1136 = vpop.f32.mrb[0].mxu0
    %v1137 = vadd.f32 %v907, %v1136
    %v1138 = vpop.f32.mrb[0].mxu0
    %v1139 = vadd.f32 %v903, %v1138
    %v1140 = vpop.f32.mrb[0].mxu0
    %v1141 = vadd.f32 %v907, %v1140
    %1142 = vmatprep.mubr.bf16.mxu0 0
    %1143 = vmatmul.mubr.bf16.gmra.mrb[0].mxu0 %v421
    %v1144 = vpop.f32.mrb[0].mxu0
    %v1145 = vadd.f32 %v903, %v1144
    %v1146 = vpop.f32.mrb[0].mxu0
    %v1147 = vadd.f32 %v907, %v1146
    %v1148 = vpop.f32.mrb[0].mxu0
    %v1149 = vadd.f32 %v903, %v1148
    %v1150 = vpop.f32.mrb[0].mxu0
    %v1151 = vadd.f32 %v907, %v1150
    %1152 = vmatprep.mubr.bf16.mxu0 0
    %1153 = vmatmul.mubr.bf16.gmra.mrb[0].mxu0 %v422
    %v1154 = vpop.f32.mrb[0].mxu0
    %v1155 = vadd.f32 %v903, %v1154
    %v1156 = vpop.f32.mrb[0].mxu0
    %v1157 = vadd.f32 %v907, %v1156
    %v1158 = vpop.f32.mrb[0].mxu0
    %v1159 = vadd.f32 %v903, %v1158
    %v1160 = vpop.f32.mrb[0].mxu0
    %v1161 = vadd.f32 %v907, %v1160
    %1162 = vmatprep.mubr.bf16.mxu0 0
    %1163 = vmatmul.mubr.bf16.gmra.mrb[0].mxu0 %v423
    %v1164 = vpop.f32.mrb[0].mxu0
    %v1165 = vadd.f32 %v903, %v1164
    %v1166 = vpop.f32.mrb[0].mxu0
    %v1167 = vadd.f32 %v907, %v1166
    %v1168 = vpop.f32.mrb[0].mxu0
    %v1169 = vadd.f32 %v903, %v1168
    %v1170 = vpop.f32.mrb[0].mxu0
    %v1171 = vadd.f32 %v907, %v1170
    %1172 = vmatprep.mubr.bf16.mxu0 0
    %1173 = vmatmul.mubr.bf16.gmra.mrb[0].mxu0 %v424
    %v1174 = vpop.f32.mrb[0].mxu0
    %v1175 = vadd.f32 %v903, %v1174
    %v1176 = vpop.f32.mrb[0].mxu0
    %v1177 = vadd.f32 %v907, %v1176
    %v1178 = vpop.f32.mrb[0].mxu0
    %v1179 = vadd.f32 %v903, %v1178
    %v1180 = vpop.f32.mrb[0].mxu0
    %v1181 = vadd.f32 %v907, %v1180
    %1182 = vmatprep.mubr.bf16.mxu0 0
    %1183 = vmatmul.mubr.bf16.gmra.mrb[0].mxu0 %v425
    %v1184 = vpop.f32.mrb[0].mxu0
    %v1185 = vadd.f32 %v903, %v1184
    %v1186 = vpop.f32.mrb[0].mxu0
    %v1187 = vadd.f32 %v907, %v1186
    %v1188 = vpop.f32.mrb[0].mxu0
    %v1189 = vadd.f32 %v903, %v1188
    %v1190 = vpop.f32.mrb[0].mxu0
    %v1191 = vadd.f32 %v907, %v1190
    %1192 = vdwg.mxu0
    %1193 = vmatprep.subr.bf16.mxu0 %v1019
    %1194 = vmatpush1.bf16.msra.mxu0 %v1018
    %1195 = vmatprep.subr.bf16.mxu0 %v1023
    %1196 = vmatpush1.bf16.msra.mxu0 %v1022
    %1197 = vmatprep.subr.bf16.mxu0 %v1027
    %1198 = vmatpush1.bf16.msra.mxu0 %v1026
    %1199 = vmatprep.subr.bf16.mxu0 %v1031
    %1200 = vmatpush1.bf16.msra.mxu0 %v1030
    %1201 = vmatprep.subr.bf16.mxu0 %v1035
    %1202 = vmatpush1.bf16.msra.mxu0 %v1034
    %1203 = vmatprep.subr.bf16.mxu0 %v1039
    %1204 = vmatpush1.bf16.msra.mxu0 %v1038
    %1205 = vmatprep.subr.bf16.mxu0 %v1043
    %1206 = vmatpush1.bf16.msra.mxu0 %v1042
    %1207 = vmatprep.subr.bf16.mxu0 %v1047
    %1208 = vmatpush1.bf16.msra.mxu0 %v1046
    %1209 = vmatprep.subr.bf16.mxu0 0
    %1210 = vmatpush1.bf16.msra.mxu0 0
    %1211 = vmatprep.subr.bf16.mxu0 0
    %1212 = vmatpush1.bf16.msra.mxu0 0
    %1213 = vmatprep.subr.bf16.mxu0 0
    %1214 = vmatpush1.bf16.msra.mxu0 0
    %1215 = vmatprep.subr.bf16.mxu0 0
    %1216 = vmatpush1.bf16.msra.mxu0 0
    %1217 = vmatprep.subr.bf16.mxu0 0
    %1218 = vmatpush1.bf16.msra.mxu0 0
    %1219 = vmatprep.subr.bf16.mxu0 0
    %1220 = vmatpush1.bf16.msra.mxu0 0
    %1221 = vmatprep.subr.bf16.mxu0 0
    %1222 = vmatpush1.bf16.msra.mxu0 0
    %1223 = vmatprep.subr.bf16.mxu0 0
    %1224 = vmatpush1.bf16.msra.mxu0 0
    %1225 = vmatprep.mubr.bf16.mxu0 0
    %1226 = vmatmul.mubr.bf16.gmra.mrb[0].mxu0 %v418
    %v1227 = vpop.f32.mrb[0].mxu0
    %v1228 = vadd.f32 %v911, %v1227
    %v1229 = vpop.f32.mrb[0].mxu0
    %v1230 = vadd.f32 %v915, %v1229
    %v1231 = vpop.f32.mrb[0].mxu0
    %v1232 = vadd.f32 %v911, %v1231
    %v1233 = vpop.f32.mrb[0].mxu0
    %v1234 = vadd.f32 %v915, %v1233
    %1235 = vmatprep.mubr.bf16.mxu0 0
    %1236 = vmatmul.mubr.bf16.gmra.mrb[0].mxu0 %v419
    %v1237 = vpop.f32.mrb[0].mxu0
    %v1238 = vadd.f32 %v911, %v1237
    %v1239 = vpop.f32.mrb[0].mxu0
    %v1240 = vadd.f32 %v915, %v1239
    %v1241 = vpop.f32.mrb[0].mxu0
    %v1242 = vadd.f32 %v911, %v1241
    %v1243 = vpop.f32.mrb[0].mxu0
    %v1244 = vadd.f32 %v915, %v1243
    %1245 = vmatprep.mubr.bf16.mxu0 0
    %1246 = vmatmul.mubr.bf16.gmra.mrb[0].mxu0 %v420
    %v1247 = vpop.f32.mrb[0].mxu0
    %v1248 = vadd.f32 %v911, %v1247
    %v1249 = vpop.f32.mrb[0].mxu0
    %v1250 = vadd.f32 %v915, %v1249
    %v1251 = vpop.f32.mrb[0].mxu0
    %v1252 = vadd.f32 %v911, %v1251
    %v1253 = vpop.f32.mrb[0].mxu0
    %v1254 = vadd.f32 %v915, %v1253
    %1255 = vmatprep.mubr.bf16.mxu0 0
    %1256 = vmatmul.mubr.bf16.gmra.mrb[0].mxu0 %v421
    %v1257 = vpop.f32.mrb[0].mxu0
    %v1258 = vadd.f32 %v911, %v1257
    %v1259 = vpop.f32.mrb[0].mxu0
    %v1260 = vadd.f32 %v915, %v1259
    %v1261 = vpop.f32.mrb[0].mxu0
    %v1262 = vadd.f32 %v911, %v1261
    %v1263 = vpop.f32.mrb[0].mxu0
    %v1264 = vadd.f32 %v915, %v1263
    %1265 = vmatprep.mubr.bf16.mxu0 0
    %1266 = vmatmul.mubr.bf16.gmra.mrb[0].mxu0 %v422
    %v1267 = vpop.f32.mrb[0].mxu0
    %v1268 = vadd.f32 %v911, %v1267
    %v1269 = vpop.f32.mrb[0].mxu0
    %v1270 = vadd.f32 %v915, %v1269
    %v1271 = vpop.f32.mrb[0].mxu0
    %v1272 = vadd.f32 %v911, %v1271
    %v1273 = vpop.f32.mrb[0].mxu0
    %v1274 = vadd.f32 %v915, %v1273
    %1275 = vmatprep.mubr.bf16.mxu0 0
    %1276 = vmatmul.mubr.bf16.gmra.mrb[0].mxu0 %v423
    %v1277 = vpop.f32.mrb[0].mxu0
    %v1278 = vadd.f32 %v911, %v1277
    %v1279 = vpop.f32.mrb[0].mxu0
    %v1280 = vadd.f32 %v915, %v1279
    %v1281 = vpop.f32.mrb[0].mxu0
    %v1282 = vadd.f32 %v911, %v1281
    %v1283 = vpop.f32.mrb[0].mxu0
    %v1284 = vadd.f32 %v915, %v1283
    %1285 = vmatprep.mubr.bf16.mxu0 0
    %1286 = vmatmul.mubr.bf16.gmra.mrb[0].mxu0 %v424
    %v1287 = vpop.f32.mrb[0].mxu0
    %v1288 = vadd.f32 %v911, %v1287
    %v1289 = vpop.f32.mrb[0].mxu0
    %v1290 = vadd.f32 %v915, %v1289
    %v1291 = vpop.f32.mrb[0].mxu0
    %v1292 = vadd.f32 %v911, %v1291
    %v1293 = vpop.f32.mrb[0].mxu0
    %v1294 = vadd.f32 %v915, %v1293
    %1295 = vmatprep.mubr.bf16.mxu0 0
    %1296 = vmatmul.mubr.bf16.gmra.mrb[0].mxu0 %v425
    %v1297 = vpop.f32.mrb[0].mxu0
    %v1298 = vadd.f32 %v911, %v1297
    %v1299 = vpop.f32.mrb[0].mxu0
    %v1300 = vadd.f32 %v915, %v1299
    %v1301 = vpop.f32.mrb[0].mxu0
    %v1302 = vadd.f32 %v911, %v1301
    %v1303 = vpop.f32.mrb[0].mxu0
    %v1304 = vadd.f32 %v915, %v1303
    %1305 = vdwg.mxu0
    %v1306 = vxor.u32 %v675, 2147483648
    %v1307 = vxor.u32 %v677, 2147483648
    %v1308 = vxor.u32 %v788, 2147483648
    %v1309 = vxor.u32 %v790, 2147483648
    %v1310 = vxor.u32 %v679, 2147483648
    %v1311 = vxor.u32 %v681, 2147483648
    %v1312 = vxor.u32 %v792, 2147483648
    %v1313 = vxor.u32 %v794, 2147483648
    %v1314 = vxor.u32 %v685, 2147483648
    %v1315 = vxor.u32 %v687, 2147483648
    %v1316 = vxor.u32 %v798, 2147483648
    %v1317 = vxor.u32 %v800, 2147483648
    %v1318 = vxor.u32 %v689, 2147483648
    %v1319 = vxor.u32 %v691, 2147483648
    %v1320 = vxor.u32 %v802, 2147483648
    %v1321 = vxor.u32 %v804, 2147483648
    %v1322 = vxor.u32 %v695, 2147483648
    %v1323 = vxor.u32 %v697, 2147483648
    %v1324 = vxor.u32 %v808, 2147483648
    %v1325 = vxor.u32 %v810, 2147483648
    %v1326 = vxor.u32 %v699, 2147483648
    %v1327 = vxor.u32 %v701, 2147483648
    %v1328 = vxor.u32 %v812, 2147483648
    %v1329 = vxor.u32 %v814, 2147483648
    %v1330 = vxor.u32 %v705, 2147483648
    %v1331 = vxor.u32 %v707, 2147483648
    %v1332 = vxor.u32 %v818, 2147483648
    %v1333 = vxor.u32 %v820, 2147483648
    %v1334 = vxor.u32 %v709, 2147483648
    %v1335 = vxor.u32 %v711, 2147483648
    %v1336 = vxor.u32 %v822, 2147483648
    %v1337 = vxor.u32 %v824, 2147483648
    %v1338 = vxor.u32 %v715, 2147483648
    %v1339 = vxor.u32 %v717, 2147483648
    %v1340 = vxor.u32 %v828, 2147483648
    %v1341 = vxor.u32 %v830, 2147483648
    %v1342 = vxor.u32 %v719, 2147483648
    %v1343 = vxor.u32 %v721, 2147483648
    %v1344 = vxor.u32 %v832, 2147483648
    %v1345 = vxor.u32 %v834, 2147483648
    %v1346 = vxor.u32 %v725, 2147483648
    %v1347 = vxor.u32 %v727, 2147483648
    %v1348 = vxor.u32 %v838, 2147483648
    %v1349 = vxor.u32 %v840, 2147483648
    %v1350 = vxor.u32 %v729, 2147483648
    %v1351 = vxor.u32 %v731, 2147483648
    %v1352 = vxor.u32 %v842, 2147483648
    %v1353 = vxor.u32 %v844, 2147483648
    %v1354 = vxor.u32 %v735, 2147483648
    %v1355 = vxor.u32 %v737, 2147483648
    %v1356 = vxor.u32 %v848, 2147483648
    %v1357 = vxor.u32 %v850, 2147483648
    %v1358 = vxor.u32 %v739, 2147483648
    %v1359 = vxor.u32 %v741, 2147483648
    %v1360 = vxor.u32 %v852, 2147483648
    %v1361 = vxor.u32 %v854, 2147483648
    %v1362 = vxor.u32 %v745, 2147483648
    %v1363 = vxor.u32 %v747, 2147483648
    %v1364 = vxor.u32 %v858, 2147483648
    %v1365 = vxor.u32 %v860, 2147483648
    %v1366 = vxor.u32 %v749, 2147483648
    %v1367 = vxor.u32 %v751, 2147483648
    %v1368 = vxor.u32 %v862, 2147483648
    %v1369 = vxor.u32 %v864, 2147483648
    %v1370 = vmul.f32 %v1306, 1.442695
    %v1371 = vpow.pop %v1370
    %v1372 = vmul.f32 %v1307, 1.442695
    %v1373 = vpow.pop %v1372
    %v1374 = vmul.f32 %v1308, 1.442695
    %v1375 = vpow.pop %v1374
    %v1376 = vmul.f32 %v1309, 1.442695
    %v1377 = vpow.pop %v1376
    %v1378 = vmul.f32 %v1310, 1.442695
    %v1379 = vpow.pop %v1378
    %v1380 = vmul.f32 %v1311, 1.442695
    %v1381 = vpow.pop %v1380
    %v1382 = vmul.f32 %v1312, 1.442695
    %v1383 = vpow.pop %v1382
    %v1384 = vmul.f32 %v1313, 1.442695
    %v1385 = vpow.pop %v1384
    %v1386 = vmul.f32 %v1314, 1.442695
    %v1387 = vpow.pop %v1386
    %v1388 = vmul.f32 %v1315, 1.442695
    %v1389 = vpow.pop %v1388
    %v1390 = vmul.f32 %v1316, 1.442695
    %v1391 = vpow.pop %v1390
    %v1392 = vmul.f32 %v1317, 1.442695
    %v1393 = vpow.pop %v1392
    %v1394 = vmul.f32 %v1318, 1.442695
    %v1395 = vpow.pop %v1394
    %v1396 = vmul.f32 %v1319, 1.442695
    %v1397 = vpow.pop %v1396
    %v1398 = vmul.f32 %v1320, 1.442695
    %v1399 = vpow.pop %v1398
    %v1400 = vmul.f32 %v1321, 1.442695
    %v1401 = vpow.pop %v1400
    %v1402 = vmul.f32 %v1322, 1.442695
    %v1403 = vpow.pop %v1402
    %v1404 = vmul.f32 %v1323, 1.442695
    %v1405 = vpow.pop %v1404
    %v1406 = vmul.f32 %v1324, 1.442695
    %v1407 = vpow.pop %v1406
    %v1408 = vmul.f32 %v1325, 1.442695
    %v1409 = vpow.pop %v1408
    %v1410 = vmul.f32 %v1326, 1.442695
    %v1411 = vpow.pop %v1410
    %v1412 = vmul.f32 %v1327, 1.442695
    %v1413 = vpow.pop %v1412
    %v1414 = vmul.f32 %v1328, 1.442695
    %v1415 = vpow.pop %v1414
    %v1416 = vmul.f32 %v1329, 1.442695
    %v1417 = vpow.pop %v1416
    %v1418 = vmul.f32 %v1330, 1.442695
    %v1419 = vpow.pop %v1418
    %v1420 = vmul.f32 %v1331, 1.442695
    %v1421 = vpow.pop %v1420
    %v1422 = vmul.f32 %v1332, 1.442695
    %v1423 = vpow.pop %v1422
    %v1424 = vmul.f32 %v1333, 1.442695
    %v1425 = vpow.pop %v1424
    %v1426 = vmul.f32 %v1334, 1.442695
    %v1427 = vpow.pop %v1426
    %v1428 = vmul.f32 %v1335, 1.442695
    %v1429 = vpow.pop %v1428
    %v1430 = vmul.f32 %v1336, 1.442695
    %v1431 = vpow.pop %v1430
    %v1432 = vmul.f32 %v1337, 1.442695
    %v1433 = vpow.pop %v1432
    %v1434 = vmul.f32 %v1338, 1.442695
    %v1435 = vpow.pop %v1434
    %v1436 = vmul.f32 %v1339, 1.442695
    %v1437 = vpow.pop %v1436
    %v1438 = vmul.f32 %v1340, 1.442695
    %v1439 = vpow.pop %v1438
    %v1440 = vmul.f32 %v1341, 1.442695
    %v1441 = vpow.pop %v1440
    %v1442 = vmul.f32 %v1342, 1.442695
    %v1443 = vpow.pop %v1442
    %v1444 = vmul.f32 %v1343, 1.442695
    %v1445 = vpow.pop %v1444
    %v1446 = vmul.f32 %v1344, 1.442695
    %v1447 = vpow.pop %v1446
    %v1448 = vmul.f32 %v1345, 1.442695
    %v1449 = vpow.pop %v1448
    %v1450 = vmul.f32 %v1346, 1.442695
    %v1451 = vpow.pop %v1450
    %v1452 = vmul.f32 %v1347, 1.442695
    %v1453 = vpow.pop %v1452
    %v1454 = vmul.f32 %v1348, 1.442695
    %v1455 = vpow.pop %v1454
    %v1456 = vmul.f32 %v1349, 1.442695
    %v1457 = vpow.pop %v1456
    %v1458 = vmul.f32 %v1350, 1.442695
    %v1459 = vpow.pop %v1458
    %v1460 = vmul.f32 %v1351, 1.442695
    %v1461 = vpow.pop %v1460
    %v1462 = vmul.f32 %v1352, 1.442695
    %v1463 = vpow.pop %v1462
    %v1464 = vmul.f32 %v1353, 1.442695
    %v1465 = vpow.pop %v1464
    %v1466 = vmul.f32 %v1354, 1.442695
    %v1467 = vpow.pop %v1466
    %v1468 = vmul.f32 %v1355, 1.442695
    %v1469 = vpow.pop %v1468
    %v1470 = vmul.f32 %v1356, 1.442695
    %v1471 = vpow.pop %v1470
    %v1472 = vmul.f32 %v1357, 1.442695
    %v1473 = vpow.pop %v1472
    %v1474 = vmul.f32 %v1358, 1.442695
    %v1475 = vpow.pop %v1474
    %v1476 = vmul.f32 %v1359, 1.442695
    %v1477 = vpow.pop %v1476
    %v1478 = vmul.f32 %v1360, 1.442695
    %v1479 = vpow.pop %v1478
    %v1480 = vmul.f32 %v1361, 1.442695
    %v1481 = vpow.pop %v1480
    %v1482 = vmul.f32 %v1362, 1.442695
    %v1483 = vpow.pop %v1482
    %v1484 = vmul.f32 %v1363, 1.442695
    %v1485 = vpow.pop %v1484
    %v1486 = vmul.f32 %v1364, 1.442695
    %v1487 = vpow.pop %v1486
    %v1488 = vmul.f32 %v1365, 1.442695
    %v1489 = vpow.pop %v1488
    %v1490 = vmul.f32 %v1366, 1.442695
    %v1491 = vpow.pop %v1490
    %v1492 = vmul.f32 %v1367, 1.442695
    %v1493 = vpow.pop %v1492
    %v1494 = vmul.f32 %v1368, 1.442695
    %v1495 = vpow.pop %v1494
    %v1496 = vmul.f32 %v1369, 1.442695
    %v1497 = vpow.pop %v1496
    %v1498 = vadd.f32 %v1371, 1.0
    %v1499 = vadd.f32 %v1373, 1.0
    %v1500 = vadd.f32 %v1375, 1.0
    %v1501 = vadd.f32 %v1377, 1.0
    %v1502 = vadd.f32 %v1379, 1.0
    %v1503 = vadd.f32 %v1381, 1.0
    %v1504 = vadd.f32 %v1383, 1.0
    %v1505 = vadd.f32 %v1385, 1.0
    %v1506 = vadd.f32 %v1387, 1.0
    %v1507 = vadd.f32 %v1389, 1.0
    %v1508 = vadd.f32 %v1391, 1.0
    %v1509 = vadd.f32 %v1393, 1.0
    %v1510 = vadd.f32 %v1395, 1.0
    %v1511 = vadd.f32 %v1397, 1.0
    %v1512 = vadd.f32 %v1399, 1.0
    %v1513 = vadd.f32 %v1401, 1.0
    %v1514 = vadd.f32 %v1403, 1.0
    %v1515 = vadd.f32 %v1405, 1.0
    %v1516 = vadd.f32 %v1407, 1.0
    %v1517 = vadd.f32 %v1409, 1.0
    %v1518 = vadd.f32 %v1411, 1.0
    %v1519 = vadd.f32 %v1413, 1.0
    %v1520 = vadd.f32 %v1415, 1.0
    %v1521 = vadd.f32 %v1417, 1.0
    %v1522 = vadd.f32 %v1419, 1.0
    %v1523 = vadd.f32 %v1421, 1.0
    %v1524 = vadd.f32 %v1423, 1.0
    %v1525 = vadd.f32 %v1425, 1.0
    %v1526 = vadd.f32 %v1427, 1.0
    %v1527 = vadd.f32 %v1429, 1.0
    %v1528 = vadd.f32 %v1431, 1.0
    %v1529 = vadd.f32 %v1433, 1.0
    %v1530 = vadd.f32 %v1435, 1.0
    %v1531 = vadd.f32 %v1437, 1.0
    %v1532 = vadd.f32 %v1439, 1.0
    %v1533 = vadd.f32 %v1441, 1.0
    %v1534 = vadd.f32 %v1443, 1.0
    %v1535 = vadd.f32 %v1445, 1.0
    %v1536 = vadd.f32 %v1447, 1.0
    %v1537 = vadd.f32 %v1449, 1.0
    %v1538 = vadd.f32 %v1451, 1.0
    %v1539 = vadd.f32 %v1453, 1.0
    %v1540 = vadd.f32 %v1455, 1.0
    %v1541 = vadd.f32 %v1457, 1.0
    %v1542 = vadd.f32 %v1459, 1.0
    %v1543 = vadd.f32 %v1461, 1.0
    %v1544 = vadd.f32 %v1463, 1.0
    %v1545 = vadd.f32 %v1465, 1.0
    %v1546 = vadd.f32 %v1467, 1.0
    %v1547 = vadd.f32 %v1469, 1.0
    %v1548 = vadd.f32 %v1471, 1.0
    %v1549 = vadd.f32 %v1473, 1.0
    %v1550 = vadd.f32 %v1475, 1.0
    %v1551 = vadd.f32 %v1477, 1.0
    %v1552 = vadd.f32 %v1479, 1.0
    %v1553 = vadd.f32 %v1481, 1.0
    %v1554 = vadd.f32 %v1483, 1.0
    %v1555 = vadd.f32 %v1485, 1.0
    %v1556 = vadd.f32 %v1487, 1.0
    %v1557 = vadd.f32 %v1489, 1.0
    %v1558 = vadd.f32 %v1491, 1.0
    %v1559 = vadd.f32 %v1493, 1.0
    %v1560 = vadd.f32 %v1495, 1.0
    %v1561 = vadd.f32 %v1497, 1.0
    %v1562 = vrcp.pop %v1498
    %v1563 = vmul.f32 1.0, %v1562
    %v1564 = vrcp.pop %v1499
    %v1565 = vmul.f32 1.0, %v1564
    %v1566 = vrcp.pop %v1500
    %v1567 = vmul.f32 1.0, %v1566
    %v1568 = vrcp.pop %v1501
    %v1569 = vmul.f32 1.0, %v1568
    %v1570 = vrcp.pop %v1502
    %v1571 = vmul.f32 1.0, %v1570
    %v1572 = vrcp.pop %v1503
    %v1573 = vmul.f32 1.0, %v1572
    %v1574 = vrcp.pop %v1504
    %v1575 = vmul.f32 1.0, %v1574
    %v1576 = vrcp.pop %v1505
    %v1577 = vmul.f32 1.0, %v1576
    %v1578 = vrcp.pop %v1506
    %v1579 = vmul.f32 1.0, %v1578
    %v1580 = vrcp.pop %v1507
    %v1581 = vmul.f32 1.0, %v1580
    %v1582 = vrcp.pop %v1508
    %v1583 = vmul.f32 1.0, %v1582
    %v1584 = vrcp.pop %v1509
    %v1585 = vmul.f32 1.0, %v1584
    %v1586 = vrcp.pop %v1510
    %v1587 = vmul.f32 1.0, %v1586
    %v1588 = vrcp.pop %v1511
    %v1589 = vmul.f32 1.0, %v1588
    %v1590 = vrcp.pop %v1512
    %v1591 = vmul.f32 1.0, %v1590
    %v1592 = vrcp.pop %v1513
    %v1593 = vmul.f32 1.0, %v1592
    %v1594 = vrcp.pop %v1514
    %v1595 = vmul.f32 1.0, %v1594
    %v1596 = vrcp.pop %v1515
    %v1597 = vmul.f32 1.0, %v1596
    %v1598 = vrcp.pop %v1516
    %v1599 = vmul.f32 1.0, %v1598
    %v1600 = vrcp.pop %v1517
    %v1601 = vmul.f32 1.0, %v1600
    %v1602 = vrcp.pop %v1518
    %v1603 = vmul.f32 1.0, %v1602
    %v1604 = vrcp.pop %v1519
    %v1605 = vmul.f32 1.0, %v1604
    %v1606 = vrcp.pop %v1520
    %v1607 = vmul.f32 1.0, %v1606
    %v1608 = vrcp.pop %v1521
    %v1609 = vmul.f32 1.0, %v1608
    %v1610 = vrcp.pop %v1522
    %v1611 = vmul.f32 1.0, %v1610
    %v1612 = vrcp.pop %v1523
    %v1613 = vmul.f32 1.0, %v1612
    %v1614 = vrcp.pop %v1524
    %v1615 = vmul.f32 1.0, %v1614
    %v1616 = vrcp.pop %v1525
    %v1617 = vmul.f32 1.0, %v1616
    %v1618 = vrcp.pop %v1526
    %v1619 = vmul.f32 1.0, %v1618
    %v1620 = vrcp.pop %v1527
    %v1621 = vmul.f32 1.0, %v1620
    %v1622 = vrcp.pop %v1528
    %v1623 = vmul.f32 1.0, %v1622
    %v1624 = vrcp.pop %v1529
    %v1625 = vmul.f32 1.0, %v1624
    %v1626 = vrcp.pop %v1530
    %v1627 = vmul.f32 1.0, %v1626
    %v1628 = vrcp.pop %v1531
    %v1629 = vmul.f32 1.0, %v1628
    %v1630 = vrcp.pop %v1532
    %v1631 = vmul.f32 1.0, %v1630
    %v1632 = vrcp.pop %v1533
    %v1633 = vmul.f32 1.0, %v1632
    %v1634 = vrcp.pop %v1534
    %v1635 = vmul.f32 1.0, %v1634
    %v1636 = vrcp.pop %v1535
    %v1637 = vmul.f32 1.0, %v1636
    %v1638 = vrcp.pop %v1536
    %v1639 = vmul.f32 1.0, %v1638
    %v1640 = vrcp.pop %v1537
    %v1641 = vmul.f32 1.0, %v1640
    %v1642 = vrcp.pop %v1538
    %v1643 = vmul.f32 1.0, %v1642
    %v1644 = vrcp.pop %v1539
    %v1645 = vmul.f32 1.0, %v1644
    %v1646 = vrcp.pop %v1540
    %v1647 = vmul.f32 1.0, %v1646
    %v1648 = vrcp.pop %v1541
    %v1649 = vmul.f32 1.0, %v1648
    %v1650 = vrcp.pop %v1542
    %v1651 = vmul.f32 1.0, %v1650
    %v1652 = vrcp.pop %v1543
    %v1653 = vmul.f32 1.0, %v1652
    %v1654 = vrcp.pop %v1544
    %v1655 = vmul.f32 1.0, %v1654
    %v1656 = vrcp.pop %v1545
    %v1657 = vmul.f32 1.0, %v1656
    %v1658 = vrcp.pop %v1546
    %v1659 = vmul.f32 1.0, %v1658
    %v1660 = vrcp.pop %v1547
    %v1661 = vmul.f32 1.0, %v1660
    %v1662 = vrcp.pop %v1548
    %v1663 = vmul.f32 1.0, %v1662
    %v1664 = vrcp.pop %v1549
    %v1665 = vmul.f32 1.0, %v1664
    %v1666 = vrcp.pop %v1550
    %v1667 = vmul.f32 1.0, %v1666
    %v1668 = vrcp.pop %v1551
    %v1669 = vmul.f32 1.0, %v1668
    %v1670 = vrcp.pop %v1552
    %v1671 = vmul.f32 1.0, %v1670
    %v1672 = vrcp.pop %v1553
    %v1673 = vmul.f32 1.0, %v1672
    %v1674 = vrcp.pop %v1554
    %v1675 = vmul.f32 1.0, %v1674
    %v1676 = vrcp.pop %v1555
    %v1677 = vmul.f32 1.0, %v1676
    %v1678 = vrcp.pop %v1556
    %v1679 = vmul.f32 1.0, %v1678
    %v1680 = vrcp.pop %v1557
    %v1681 = vmul.f32 1.0, %v1680
    %v1682 = vrcp.pop %v1558
    %v1683 = vmul.f32 1.0, %v1682
    %v1684 = vrcp.pop %v1559
    %v1685 = vmul.f32 1.0, %v1684
    %v1686 = vrcp.pop %v1560
    %v1687 = vmul.f32 1.0, %v1686
    %v1688 = vrcp.pop %v1561
    %v1689 = vmul.f32 1.0, %v1688
    %v1690 = vmul.f32 %v675, %v1563
    %v1691 = vmul.f32 %v677, %v1565
    %v1692 = vmul.f32 %v788, %v1567
    %v1693 = vmul.f32 %v790, %v1569
    %v1694 = vmul.f32 %v679, %v1571
    %v1695 = vmul.f32 %v681, %v1573
    %v1696 = vmul.f32 %v792, %v1575
    %v1697 = vmul.f32 %v794, %v1577
    %v1698 = vmul.f32 %v685, %v1579
    %v1699 = vmul.f32 %v687, %v1581
    %v1700 = vmul.f32 %v798, %v1583
    %v1701 = vmul.f32 %v800, %v1585
    %v1702 = vmul.f32 %v689, %v1587
    %v1703 = vmul.f32 %v691, %v1589
    %v1704 = vmul.f32 %v802, %v1591
    %v1705 = vmul.f32 %v804, %v1593
    %v1706 = vmul.f32 %v695, %v1595
    %v1707 = vmul.f32 %v697, %v1597
    %v1708 = vmul.f32 %v808, %v1599
    %v1709 = vmul.f32 %v810, %v1601
    %v1710 = vmul.f32 %v699, %v1603
    %v1711 = vmul.f32 %v701, %v1605
    %v1712 = vmul.f32 %v812, %v1607
    %v1713 = vmul.f32 %v814, %v1609
    %v1714 = vmul.f32 %v705, %v1611
    %v1715 = vmul.f32 %v707, %v1613
    %v1716 = vmul.f32 %v818, %v1615
    %v1717 = vmul.f32 %v820, %v1617
    %v1718 = vmul.f32 %v709, %v1619
    %v1719 = vmul.f32 %v711, %v1621
    %v1720 = vmul.f32 %v822, %v1623
    %v1721 = vmul.f32 %v824, %v1625
    %v1722 = vmul.f32 %v715, %v1627
    %v1723 = vmul.f32 %v717, %v1629
    %v1724 = vmul.f32 %v828, %v1631
    %v1725 = vmul.f32 %v830, %v1633
    %v1726 = vmul.f32 %v719, %v1635
    %v1727 = vmul.f32 %v721, %v1637
    %v1728 = vmul.f32 %v832, %v1639
    %v1729 = vmul.f32 %v834, %v1641
    %v1730 = vmul.f32 %v725, %v1643
    %v1731 = vmul.f32 %v727, %v1645
    %v1732 = vmul.f32 %v838, %v1647
    %v1733 = vmul.f32 %v840, %v1649
    %v1734 = vmul.f32 %v729, %v1651
    %v1735 = vmul.f32 %v731, %v1653
    %v1736 = vmul.f32 %v842, %v1655
    %v1737 = vmul.f32 %v844, %v1657
    %v1738 = vmul.f32 %v735, %v1659
    %v1739 = vmul.f32 %v737, %v1661
    %v1740 = vmul.f32 %v848, %v1663
    %v1741 = vmul.f32 %v850, %v1665
    %v1742 = vmul.f32 %v739, %v1667
    %v1743 = vmul.f32 %v741, %v1669
    %v1744 = vmul.f32 %v852, %v1671
    %v1745 = vmul.f32 %v854, %v1673
    %v1746 = vmul.f32 %v745, %v1675
    %v1747 = vmul.f32 %v747, %v1677
    %v1748 = vmul.f32 %v858, %v1679
    %v1749 = vmul.f32 %v860, %v1681
    %v1750 = vmul.f32 %v749, %v1683
    %v1751 = vmul.f32 %v751, %v1685
    %v1752 = vmul.f32 %v862, %v1687
    %v1753 = vmul.f32 %v864, %v1689
    %v1754 = vmul.f32 %v1690, %v1115
    %v1755 = vmul.f32 %v1691, %v1117
    %v1756 = vmul.f32 %v1692, %v1228
    %v1757 = vmul.f32 %v1693, %v1230
    %v1758 = vmul.f32 %v1694, %v1119
    %v1759 = vmul.f32 %v1695, %v1121
    %v1760 = vmul.f32 %v1696, %v1232
    %v1761 = vmul.f32 %v1697, %v1234
    %v1762 = vmul.f32 %v1698, %v1125
    %v1763 = vmul.f32 %v1699, %v1127
    %v1764 = vmul.f32 %v1700, %v1238
    %v1765 = vmul.f32 %v1701, %v1240
    %v1766 = vmul.f32 %v1702, %v1129
    %v1767 = vmul.f32 %v1703, %v1131
    %v1768 = vmul.f32 %v1704, %v1242
    %v1769 = vmul.f32 %v1705, %v1244
    %v1770 = vmul.f32 %v1706, %v1135
    %v1771 = vmul.f32 %v1707, %v1137
    %v1772 = vmul.f32 %v1708, %v1248
    %v1773 = vmul.f32 %v1709, %v1250
    %v1774 = vmul.f32 %v1710, %v1139
    %v1775 = vmul.f32 %v1711, %v1141
    %v1776 = vmul.f32 %v1712, %v1252
    %v1777 = vmul.f32 %v1713, %v1254
    %v1778 = vmul.f32 %v1714, %v1145
    %v1779 = vmul.f32 %v1715, %v1147
    %v1780 = vmul.f32 %v1716, %v1258
    %v1781 = vmul.f32 %v1717, %v1260
    %v1782 = vmul.f32 %v1718, %v1149
    %v1783 = vmul.f32 %v1719, %v1151
    %v1784 = vmul.f32 %v1720, %v1262
    %v1785 = vmul.f32 %v1721, %v1264
    %v1786 = vmul.f32 %v1722, %v1155
    %v1787 = vmul.f32 %v1723, %v1157
    %v1788 = vmul.f32 %v1724, %v1268
    %v1789 = vmul.f32 %v1725, %v1270
    %v1790 = vmul.f32 %v1726, %v1159
    %v1791 = vmul.f32 %v1727, %v1161
    %v1792 = vmul.f32 %v1728, %v1272
    %v1793 = vmul.f32 %v1729, %v1274
    %v1794 = vmul.f32 %v1730, %v1165
    %v1795 = vmul.f32 %v1731, %v1167
    %v1796 = vmul.f32 %v1732, %v1278
    %v1797 = vmul.f32 %v1733, %v1280
    %v1798 = vmul.f32 %v1734, %v1169
    %v1799 = vmul.f32 %v1735, %v1171
    %v1800 = vmul.f32 %v1736, %v1282
    %v1801 = vmul.f32 %v1737, %v1284
    %v1802 = vmul.f32 %v1738, %v1175
    %v1803 = vmul.f32 %v1739, %v1177
    %v1804 = vmul.f32 %v1740, %v1288
    %v1805 = vmul.f32 %v1741, %v1290
    %v1806 = vmul.f32 %v1742, %v1179
    %v1807 = vmul.f32 %v1743, %v1181
    %v1808 = vmul.f32 %v1744, %v1292
    %v1809 = vmul.f32 %v1745, %v1294
    %v1810 = vmul.f32 %v1746, %v1185
    %v1811 = vmul.f32 %v1747, %v1187
    %v1812 = vmul.f32 %v1748, %v1298
    %v1813 = vmul.f32 %v1749, %v1300
    %v1814 = vmul.f32 %v1750, %v1189
    %v1815 = vmul.f32 %v1751, %v1191
    %v1816 = vmul.f32 %v1752, %v1302
    %v1817 = vmul.f32 %v1753, %v1304
    %v1818 = vpack.c.bf16 %v1758, %v1754
    %v1819 = vpack.c.bf16 %v1759, %v1755
    %v1820 = vpack.c.bf16 %v1760, %v1756
    %v1821 = vpack.c.bf16 %v1761, %v1757
    %v1822 = vpack.c.bf16 %v1766, %v1762
    %v1823 = vpack.c.bf16 %v1767, %v1763
    %v1824 = vpack.c.bf16 %v1768, %v1764
    %v1825 = vpack.c.bf16 %v1769, %v1765
    %v1826 = vpack.c.bf16 %v1774, %v1770
    %v1827 = vpack.c.bf16 %v1775, %v1771
    %v1828 = vpack.c.bf16 %v1776, %v1772
    %v1829 = vpack.c.bf16 %v1777, %v1773
    %v1830 = vpack.c.bf16 %v1782, %v1778
    %v1831 = vpack.c.bf16 %v1783, %v1779
    %v1832 = vpack.c.bf16 %v1784, %v1780
    %v1833 = vpack.c.bf16 %v1785, %v1781
    %v1834 = vpack.c.bf16 %v1790, %v1786
    %v1835 = vpack.c.bf16 %v1791, %v1787
    %v1836 = vpack.c.bf16 %v1792, %v1788
    %v1837 = vpack.c.bf16 %v1793, %v1789
    %v1838 = vpack.c.bf16 %v1798, %v1794
    %v1839 = vpack.c.bf16 %v1799, %v1795
    %v1840 = vpack.c.bf16 %v1800, %v1796
    %v1841 = vpack.c.bf16 %v1801, %v1797
    %v1842 = vpack.c.bf16 %v1806, %v1802
    %v1843 = vpack.c.bf16 %v1807, %v1803
    %v1844 = vpack.c.bf16 %v1808, %v1804
    %v1845 = vpack.c.bf16 %v1809, %v1805
    %v1846 = vpack.c.bf16 %v1814, %v1810
    %v1847 = vpack.c.bf16 %v1815, %v1811
    %v1848 = vpack.c.bf16 %v1816, %v1812
    %v1849 = vpack.c.bf16 %v1817, %v1813
    %v1882 = vunpack.c.l.b16 %v1818
    %v1883 = vunpack.c.l.b16 %v1819
    %v1884 = vunpack.c.l.b16 %v1820
    %v1885 = vunpack.c.l.b16 %v1821
    %v1886 = vunpack.c.h.b16 %v1818
    %v1887 = vunpack.c.h.b16 %v1819
    %v1888 = vunpack.c.h.b16 %v1820
    %v1889 = vunpack.c.h.b16 %v1821
    %v1890 = vunpack.c.l.b16 %v1822
    %v1891 = vunpack.c.l.b16 %v1823
    %v1892 = vunpack.c.l.b16 %v1824
    %v1893 = vunpack.c.l.b16 %v1825
    %v1894 = vunpack.c.h.b16 %v1822
    %v1895 = vunpack.c.h.b16 %v1823
    %v1896 = vunpack.c.h.b16 %v1824
    %v1897 = vunpack.c.h.b16 %v1825
    %v1898 = vunpack.c.l.b16 %v1826
    %v1899 = vunpack.c.l.b16 %v1827
    %v1900 = vunpack.c.l.b16 %v1828
    %v1901 = vunpack.c.l.b16 %v1829
    %v1902 = vunpack.c.h.b16 %v1826
    %v1903 = vunpack.c.h.b16 %v1827
    %v1904 = vunpack.c.h.b16 %v1828
    %v1905 = vunpack.c.h.b16 %v1829
    %v1906 = vunpack.c.l.b16 %v1830
    %v1907 = vunpack.c.l.b16 %v1831
    %v1908 = vunpack.c.l.b16 %v1832
    %v1909 = vunpack.c.l.b16 %v1833
    %v1910 = vunpack.c.h.b16 %v1830
    %v1911 = vunpack.c.h.b16 %v1831
    %v1912 = vunpack.c.h.b16 %v1832
    %v1913 = vunpack.c.h.b16 %v1833
    %v1914 = vunpack.c.l.b16 %v1834
    %v1915 = vunpack.c.l.b16 %v1835
    %v1916 = vunpack.c.l.b16 %v1836
    %v1917 = vunpack.c.l.b16 %v1837
    %v1918 = vunpack.c.h.b16 %v1834
    %v1919 = vunpack.c.h.b16 %v1835
    %v1920 = vunpack.c.h.b16 %v1836
    %v1921 = vunpack.c.h.b16 %v1837
    %v1922 = vunpack.c.l.b16 %v1838
    %v1923 = vunpack.c.l.b16 %v1839
    %v1924 = vunpack.c.l.b16 %v1840
    %v1925 = vunpack.c.l.b16 %v1841
    %v1926 = vunpack.c.h.b16 %v1838
    %v1927 = vunpack.c.h.b16 %v1839
    %v1928 = vunpack.c.h.b16 %v1840
    %v1929 = vunpack.c.h.b16 %v1841
    %v1930 = vunpack.c.l.b16 %v1842
    %v1931 = vunpack.c.l.b16 %v1843
    %v1932 = vunpack.c.l.b16 %v1844
    %v1933 = vunpack.c.l.b16 %v1845
    %v1934 = vunpack.c.h.b16 %v1842
    %v1935 = vunpack.c.h.b16 %v1843
    %v1936 = vunpack.c.h.b16 %v1844
    %v1937 = vunpack.c.h.b16 %v1845
    %v1938 = vunpack.c.l.b16 %v1846
    %v1939 = vunpack.c.l.b16 %v1847
    %v1940 = vunpack.c.l.b16 %v1848
    %v1941 = vunpack.c.l.b16 %v1849
    %v1942 = vunpack.c.h.b16 %v1846
    %v1943 = vunpack.c.h.b16 %v1847
    %v1944 = vunpack.c.h.b16 %v1848
    %v1945 = vunpack.c.h.b16 %v1849
    %v1946 = vpack.c.b16 %v1883, %v1882
    %v1947 = vpack.c.b16 %v1885, %v1884
    %v1948 = vpack.c.b16 %v1887, %v1886
    %v1949 = vpack.c.b16 %v1889, %v1888
    %v1950 = vpack.c.b16 %v1891, %v1890
    %v1951 = vpack.c.b16 %v1893, %v1892
    %v1952 = vpack.c.b16 %v1895, %v1894
    %v1953 = vpack.c.b16 %v1897, %v1896
    %v1954 = vpack.c.b16 %v1899, %v1898
    %v1955 = vpack.c.b16 %v1901, %v1900
    %v1956 = vpack.c.b16 %v1903, %v1902
    %v1957 = vpack.c.b16 %v1905, %v1904
    %v1958 = vpack.c.b16 %v1907, %v1906
    %v1959 = vpack.c.b16 %v1909, %v1908
    %v1960 = vpack.c.b16 %v1911, %v1910
    %v1961 = vpack.c.b16 %v1913, %v1912
    %v1962 = vpack.c.b16 %v1915, %v1914
    %v1963 = vpack.c.b16 %v1917, %v1916
    %v1964 = vpack.c.b16 %v1919, %v1918
    %v1965 = vpack.c.b16 %v1921, %v1920
    %v1966 = vpack.c.b16 %v1923, %v1922
    %v1967 = vpack.c.b16 %v1925, %v1924
    %v1968 = vpack.c.b16 %v1927, %v1926
    %v1969 = vpack.c.b16 %v1929, %v1928
    %v1970 = vpack.c.b16 %v1931, %v1930
    %v1971 = vpack.c.b16 %v1933, %v1932
    %v1972 = vpack.c.b16 %v1935, %v1934
    %v1973 = vpack.c.b16 %v1937, %v1936
    %v1974 = vpack.c.b16 %v1939, %v1938
    %v1975 = vpack.c.b16 %v1941, %v1940
    %v1976 = vpack.c.b16 %v1943, %v1942
    %v1977 = vpack.c.b16 %v1945, %v1944
    %2010 = vst [vmem:[#allocation14] sm:$0xff] %v1946
    %2011 = vst [vmem:[#allocation14 + $0x8] sm:$0xff] %v1947
    %2012 = vst [vmem:[#allocation14 + $0x10] sm:$0xff] %v1948
    %2013 = vst [vmem:[#allocation14 + $0x18] sm:$0xff] %v1949
    %2014 = vst [vmem:[#allocation14 + $0x20] sm:$0xff] %v1950
    %2015 = vst [vmem:[#allocation14 + $0x28] sm:$0xff] %v1951
    %2016 = vst [vmem:[#allocation14 + $0x30] sm:$0xff] %v1952
    %2017 = vst [vmem:[#allocation14 + $0x38] sm:$0xff] %v1953
    %2018 = vst [vmem:[#allocation14 + $0x40] sm:$0xff] %v1954
    %2019 = vst [vmem:[#allocation14 + $0x48] sm:$0xff] %v1955
    %2020 = vst [vmem:[#allocation14 + $0x50] sm:$0xff] %v1956
    %2021 = vst [vmem:[#allocation14 + $0x58] sm:$0xff] %v1957
    %2022 = vst [vmem:[#allocation14 + $0x60] sm:$0xff] %v1958
    %2023 = vst [vmem:[#allocation14 + $0x68] sm:$0xff] %v1959
    %2024 = vst [vmem:[#allocation14 + $0x70] sm:$0xff] %v1960
    %2025 = vst [vmem:[#allocation14 + $0x78] sm:$0xff] %v1961
    %2026 = vst [vmem:[#allocation14 + $0x80] sm:$0xff] %v1962
    %2027 = vst [vmem:[#allocation14 + $0x88] sm:$0xff] %v1963
    %2028 = vst [vmem:[#allocation14 + $0x90] sm:$0xff] %v1964
    %2029 = vst [vmem:[#allocation14 + $0x98] sm:$0xff] %v1965
    %2030 = vst [vmem:[#allocation14 + $0xa0] sm:$0xff] %v1966
    %2031 = vst [vmem:[#allocation14 + $0xa8] sm:$0xff] %v1967
    %2032 = vst [vmem:[#allocation14 + $0xb0] sm:$0xff] %v1968
    %2033 = vst [vmem:[#allocation14 + $0xb8] sm:$0xff] %v1969
    %2034 = vst [vmem:[#allocation14 + $0xc0] sm:$0xff] %v1970
    %2035 = vst [vmem:[#allocation14 + $0xc8] sm:$0xff] %v1971
    %2036 = vst [vmem:[#allocation14 + $0xd0] sm:$0xff] %v1972
    %2037 = vst [vmem:[#allocation14 + $0xd8] sm:$0xff] %v1973
    %2038 = vst [vmem:[#allocation14 + $0xe0] sm:$0xff] %v1974
    %2039 = vst [vmem:[#allocation14 + $0xe8] sm:$0xff] %v1975
    %2040 = vst [vmem:[#allocation14 + $0xf0] sm:$0xff] %v1976
    %2041 = vst [vmem:[#allocation14 + $0xf8] sm:$0xff] %v1977
    // Predicated region
    $region54: #{masked_encoder_forward.16} parent=1 // pred_check
      _
    $region55: #{masked_encoder_forward.16} parent=1 // pred_check_branch
      %2043 = sbr.rel (0) target = $region57
    $region56: #{masked_encoder_forward.16} parent=1 // pred_region
      %s2045 = ssub.s32 4096, 4096
      %2046 = vsyncadd [#allocation5], %s2045
      %s2047 = sshll.u32 [#allocation14], 4
      %s2048 = int_to_ptr.vmem [resolvable:$true] %s2047
      %2053 = dma.vmem_to_hbm [thread:$0]  %s2048, 4096, %s6, [#allocation5], 256, 256, 16
    $region57: #{masked_encoder_forward.16} parent=1 // pred_fallthru
      _
    // Predicated region
    $region58: #{masked_encoder_forward.16} parent=1 // pred_check
      _
    $region59: #{masked_encoder_forward.16} parent=1 // pred_check_branch
      %2055 = sbr.rel (0) target = $region61
    $region60: #{masked_encoder_forward.16} parent=1 // pred_region
      %2056 = dma.done [#allocation5], 4096
    $region61: #{masked_encoder_forward.16} parent=1 // pred_fallthru
      _
    %2057 = vsyncpa [#allocation4], 1
    %2058 = vsyncpa [#allocation7], 1
    %2059 = vsyncpa [#allocation10], 1
    %2060 = vsyncpa [#allocation13], 1
    %2061 = vsyncpa [#allocation5], 1

// kernel: masked_encoder_forward.17
$region0: #{masked_encoder_forward.17}
  #allocation0 [shape = 'u32[]', space=smem, size = 0x4, offset = 0x4, fixed_abs, tag = 'smem constant byte address 0x4 - core index']
  #allocation1 [shape = 'u32[144,128]{1,0:T(1,128)}', space=vmem, size = 0x12000, scoped, tag = 'internal scratch']
  %s0 = inlined_call_operand.hbm [shape: bf16[128,512], index: 0, kind: input, shape index: {}]
  %s1 = inlined_call_operand.hbm [shape: bf16[512,128], index: 1, kind: input, shape index: {}]
  %s2 = inlined_call_operand.hbm [shape: f32[1,128], index: 2, kind: input, shape index: {}]
  %s3 = inlined_call_operand.hbm [shape: bf16[128,128], index: 3, kind: input, shape index: {}]
  %s4 = inlined_call_operand.hbm [shape: bf16[128,128], index: 4, kind: output, shape index: {}]
  %s5 = sld [smem:[#allocation0]]
  $region42: #{masked_encoder_forward.17} parent=0
    _
  %s7 = ssub.s32 1, %s5
  %s8 = scalar_select 0, %s7, %s5
  $region1: #{masked_encoder_forward.17} parent=0
    #allocation2 [shape = 'u8[131072]{0}', space=vmem, size = 0x20000, scoped, tag = 'input window, operand 0, single buffered']
    #allocation3 [shape = 's32[1]{0}', space=sflag, size = 0x4, scoped, tag = 'scoped memory for masked_encoder_forward.17']
    #allocation4 [shape = 's32[1]{0}', space=sflag, size = 0x4, scoped, tag = 'scoped memory for masked_encoder_forward.17']
    #allocation5 [shape = 'u8[131072]{0}', space=vmem, size = 0x20000, scoped, tag = 'input window, operand 1, single buffered']
    #allocation6 [shape = 's32[1]{0}', space=sflag, size = 0x4, scoped, tag = 'scoped memory for masked_encoder_forward.17']
    #allocation7 [shape = 'u8[512]{0}', space=vmem, size = 0x400, scoped, tag = 'input window, operand 2, single buffered']
    #allocation8 [shape = 'u8[32768]{0}', space=vmem, size = 0x8000, scoped, tag = 'input window, operand 3, single buffered']
    #allocation9 [shape = 's32[1]{0}', space=sflag, size = 0x4, scoped, tag = 'scoped memory for masked_encoder_forward.17']
    #allocation10 [shape = 'u8[32768]{0}', space=vmem, size = 0x8000, scoped, tag = 'output window, operand 0, single buffered']
    %9 = vsyncpa [#allocation3], 0
    %10 = vsyncpa [#allocation6], 0
    %11 = vsyncpa [#allocation9], 0
    %12 = vsyncpa [#allocation4], 0
    // Predicated region
    $region2: #{masked_encoder_forward.17} parent=1 // pred_check
      _
    $region3: #{masked_encoder_forward.17} parent=1 // pred_check_branch
      %14 = sbr.rel (0) target = $region5
    $region4: #{masked_encoder_forward.17} parent=1 // pred_region
      %s16 = ssub.s32 4096, 4096
      %17 = vsyncadd [#allocation3], %s16
      %s18 = sshll.u32 [#allocation2], 4
      %s19 = int_to_ptr.vmem [resolvable:$true] %s18
      %24 = dma.hbm_to_vmem [thread:$0]  %s0, 4096, %s19, [#allocation3], 256, 256, 16
    $region5: #{masked_encoder_forward.17} parent=1 // pred_fallthru
      _
    // Predicated region
    $region6: #{masked_encoder_forward.17} parent=1 // pred_check
      _
    $region7: #{masked_encoder_forward.17} parent=1 // pred_check_branch
      %26 = sbr.rel (0) target = $region9
    $region8: #{masked_encoder_forward.17} parent=1 // pred_region
      %s28 = ssub.s32 4096, 4096
      %29 = vsyncadd [#allocation6], %s28
      %s30 = sshll.u32 [#allocation5], 4
      %s31 = int_to_ptr.vmem [resolvable:$true] %s30
      %36 = dma.hbm_to_vmem [thread:$0]  %s1, 4096, %s31, [#allocation6], 64, 64, 4
    $region9: #{masked_encoder_forward.17} parent=1 // pred_fallthru
      _
    // Predicated region
    $region10: #{masked_encoder_forward.17} parent=1 // pred_check
      _
    $region11: #{masked_encoder_forward.17} parent=1 // pred_check_branch
      %38 = sbr.rel (0) target = $region13
    $region12: #{masked_encoder_forward.17} parent=1 // pred_region
      %s40 = ssub.s32 16, 16
      %41 = vsyncadd [#allocation6], %s40
      %s43 = sshll.u32 [#allocation7], 4
      %s44 = int_to_ptr.vmem [resolvable:$true] %s43
      %46 = dma.hbm_to_vmem [thread:$0]  %s2, 16, %s44, [#allocation6]
    $region13: #{masked_encoder_forward.17} parent=1 // pred_fallthru
      _
    // Predicated region
    $region14: #{masked_encoder_forward.17} parent=1 // pred_check
      _
    $region15: #{masked_encoder_forward.17} parent=1 // pred_check_branch
      %48 = sbr.rel (0) target = $region17
    $region16: #{masked_encoder_forward.17} parent=1 // pred_region
      %s50 = ssub.s32 1024, 1024
      %51 = vsyncadd [#allocation9], %s50
      %s52 = sshll.u32 [#allocation8], 4
      %s53 = int_to_ptr.vmem [resolvable:$true] %s52
      %58 = dma.hbm_to_vmem [thread:$0]  %s3, 1024, %s53, [#allocation9], 64, 64, 4
    $region17: #{masked_encoder_forward.17} parent=1 // pred_fallthru
      _
    // Predicated region
    $region18: #{masked_encoder_forward.17} parent=1 // pred_check
      _
    $region19: #{masked_encoder_forward.17} parent=1 // pred_check_branch
      %60 = sbr.rel (0) target = $region21
    $region20: #{masked_encoder_forward.17} parent=1 // pred_region
      %61 = dma.done [#allocation3], 4096
    $region21: #{masked_encoder_forward.17} parent=1 // pred_fallthru
      _
    // Predicated region
    $region22: #{masked_encoder_forward.17} parent=1 // pred_check
      _
    $region23: #{masked_encoder_forward.17} parent=1 // pred_check_branch
      %63 = sbr.rel (0) target = $region25
    $region24: #{masked_encoder_forward.17} parent=1 // pred_region
      %64 = dma.done [#allocation6], 4096
    $region25: #{masked_encoder_forward.17} parent=1 // pred_fallthru
      _
    // Predicated region
    $region26: #{masked_encoder_forward.17} parent=1 // pred_check
      _
    $region27: #{masked_encoder_forward.17} parent=1 // pred_check_branch
      %66 = sbr.rel (0) target = $region29
    $region28: #{masked_encoder_forward.17} parent=1 // pred_region
      %67 = dma.done [#allocation6], 16
    $region29: #{masked_encoder_forward.17} parent=1 // pred_fallthru
      _
    // Predicated region
    $region30: #{masked_encoder_forward.17} parent=1 // pred_check
      _
    $region31: #{masked_encoder_forward.17} parent=1 // pred_check_branch
      %69 = sbr.rel (0) target = $region33
    $region32: #{masked_encoder_forward.17} parent=1 // pred_region
      %70 = dma.done [#allocation9], 1024
    $region33: #{masked_encoder_forward.17} parent=1 // pred_fallthru
      _
    %v72 = vld [vmem:[#allocation2] sm:$0xff]
    %v73 = vld [vmem:[#allocation2 + $0x8] sm:$0xff]
    %v74 = vld [vmem:[#allocation2 + $0x10] sm:$0xff]
    %v75 = vld [vmem:[#allocation2 + $0x18] sm:$0xff]
    %v76 = vld [vmem:[#allocation2 + $0x20] sm:$0xff]
    %v77 = vld [vmem:[#allocation2 + $0x28] sm:$0xff]
    %v78 = vld [vmem:[#allocation2 + $0x30] sm:$0xff]
    %v79 = vld [vmem:[#allocation2 + $0x38] sm:$0xff]
    %v80 = vld [vmem:[#allocation2 + $0x40] sm:$0xff]
    %v81 = vld [vmem:[#allocation2 + $0x48] sm:$0xff]
    %v82 = vld [vmem:[#allocation2 + $0x50] sm:$0xff]
    %v83 = vld [vmem:[#allocation2 + $0x58] sm:$0xff]
    %v84 = vld [vmem:[#allocation2 + $0x60] sm:$0xff]
    %v85 = vld [vmem:[#allocation2 + $0x68] sm:$0xff]
    %v86 = vld [vmem:[#allocation2 + $0x70] sm:$0xff]
    %v87 = vld [vmem:[#allocation2 + $0x78] sm:$0xff]
    %v88 = vld [vmem:[#allocation2 + $0x80] sm:$0xff]
    %v89 = vld [vmem:[#allocation2 + $0x88] sm:$0xff]
    %v90 = vld [vmem:[#allocation2 + $0x90] sm:$0xff]
    %v91 = vld [vmem:[#allocation2 + $0x98] sm:$0xff]
    %v92 = vld [vmem:[#allocation2 + $0xa0] sm:$0xff]
    %v93 = vld [vmem:[#allocation2 + $0xa8] sm:$0xff]
    %v94 = vld [vmem:[#allocation2 + $0xb0] sm:$0xff]
    %v95 = vld [vmem:[#allocation2 + $0xb8] sm:$0xff]
    %v96 = vld [vmem:[#allocation2 + $0xc0] sm:$0xff]
    %v97 = vld [vmem:[#allocation2 + $0xc8] sm:$0xff]
    %v98 = vld [vmem:[#allocation2 + $0xd0] sm:$0xff]
    %v99 = vld [vmem:[#allocation2 + $0xd8] sm:$0xff]
    %v100 = vld [vmem:[#allocation2 + $0xe0] sm:$0xff]
    %v101 = vld [vmem:[#allocation2 + $0xe8] sm:$0xff]
    %v102 = vld [vmem:[#allocation2 + $0xf0] sm:$0xff]
    %v103 = vld [vmem:[#allocation2 + $0xf8] sm:$0xff]
    %v104 = vld [vmem:[#allocation5] sm:$0xf]
    %v105 = vld [vmem:[#allocation5 + $0x4] sm:$0xf]
    %v106 = vld [vmem:[#allocation5 + $0x8] sm:$0xf]
    %v107 = vld [vmem:[#allocation5 + $0xc] sm:$0xf]
    %v108 = vld [vmem:[#allocation5 + $0x10] sm:$0xf]
    %v109 = vld [vmem:[#allocation5 + $0x14] sm:$0xf]
    %v110 = vld [vmem:[#allocation5 + $0x18] sm:$0xf]
    %v111 = vld [vmem:[#allocation5 + $0x1c] sm:$0xf]
    %v112 = vld [vmem:[#allocation5 + $0x20] sm:$0xf]
    %v113 = vld [vmem:[#allocation5 + $0x24] sm:$0xf]
    %v114 = vld [vmem:[#allocation5 + $0x28] sm:$0xf]
    %v115 = vld [vmem:[#allocation5 + $0x2c] sm:$0xf]
    %v116 = vld [vmem:[#allocation5 + $0x30] sm:$0xf]
    %v117 = vld [vmem:[#allocation5 + $0x34] sm:$0xf]
    %v118 = vld [vmem:[#allocation5 + $0x38] sm:$0xf]
    %v119 = vld [vmem:[#allocation5 + $0x3c] sm:$0xf]
    %v120 = vld [vmem:[#allocation5 + $0x40] sm:$0xf]
    %v121 = vld [vmem:[#allocation5 + $0x44] sm:$0xf]
    %v122 = vld [vmem:[#allocation5 + $0x48] sm:$0xf]
    %v123 = vld [vmem:[#allocation5 + $0x4c] sm:$0xf]
    %v124 = vld [vmem:[#allocation5 + $0x50] sm:$0xf]
    %v125 = vld [vmem:[#allocation5 + $0x54] sm:$0xf]
    %v126 = vld [vmem:[#allocation5 + $0x58] sm:$0xf]
    %v127 = vld [vmem:[#allocation5 + $0x5c] sm:$0xf]
    %v128 = vld [vmem:[#allocation5 + $0x60] sm:$0xf]
    %v129 = vld [vmem:[#allocation5 + $0x64] sm:$0xf]
    %v130 = vld [vmem:[#allocation5 + $0x68] sm:$0xf]
    %v131 = vld [vmem:[#allocation5 + $0x6c] sm:$0xf]
    %v132 = vld [vmem:[#allocation5 + $0x70] sm:$0xf]
    %v133 = vld [vmem:[#allocation5 + $0x74] sm:$0xf]
    %v134 = vld [vmem:[#allocation5 + $0x78] sm:$0xf]
    %v135 = vld [vmem:[#allocation5 + $0x7c] sm:$0xf]
    %v136 = vld [vmem:[#allocation5 + $0x80] sm:$0xf]
    %v137 = vld [vmem:[#allocation5 + $0x84] sm:$0xf]
    %v138 = vld [vmem:[#allocation5 + $0x88] sm:$0xf]
    %v139 = vld [vmem:[#allocation5 + $0x8c] sm:$0xf]
    %v140 = vld [vmem:[#allocation5 + $0x90] sm:$0xf]
    %v141 = vld [vmem:[#allocation5 + $0x94] sm:$0xf]
    %v142 = vld [vmem:[#allocation5 + $0x98] sm:$0xf]
    %v143 = vld [vmem:[#allocation5 + $0x9c] sm:$0xf]
    %v144 = vld [vmem:[#allocation5 + $0xa0] sm:$0xf]
    %v145 = vld [vmem:[#allocation5 + $0xa4] sm:$0xf]
    %v146 = vld [vmem:[#allocation5 + $0xa8] sm:$0xf]
    %v147 = vld [vmem:[#allocation5 + $0xac] sm:$0xf]
    %v148 = vld [vmem:[#allocation5 + $0xb0] sm:$0xf]
    %v149 = vld [vmem:[#allocation5 + $0xb4] sm:$0xf]
    %v150 = vld [vmem:[#allocation5 + $0xb8] sm:$0xf]
    %v151 = vld [vmem:[#allocation5 + $0xbc] sm:$0xf]
    %v152 = vld [vmem:[#allocation5 + $0xc0] sm:$0xf]
    %v153 = vld [vmem:[#allocation5 + $0xc4] sm:$0xf]
    %v154 = vld [vmem:[#allocation5 + $0xc8] sm:$0xf]
    %v155 = vld [vmem:[#allocation5 + $0xcc] sm:$0xf]
    %v156 = vld [vmem:[#allocation5 + $0xd0] sm:$0xf]
    %v157 = vld [vmem:[#allocation5 + $0xd4] sm:$0xf]
    %v158 = vld [vmem:[#allocation5 + $0xd8] sm:$0xf]
    %v159 = vld [vmem:[#allocation5 + $0xdc] sm:$0xf]
    %v160 = vld [vmem:[#allocation5 + $0xe0] sm:$0xf]
    %v161 = vld [vmem:[#allocation5 + $0xe4] sm:$0xf]
    %v162 = vld [vmem:[#allocation5 + $0xe8] sm:$0xf]
    %v163 = vld [vmem:[#allocation5 + $0xec] sm:$0xf]
    %v164 = vld [vmem:[#allocation5 + $0xf0] sm:$0xf]
    %v165 = vld [vmem:[#allocation5 + $0xf4] sm:$0xf]
    %v166 = vld [vmem:[#allocation5 + $0xf8] sm:$0xf]
    %v167 = vld [vmem:[#allocation5 + $0xfc] sm:$0xf]
    %v168 = vld [vmem:[#allocation7] sm:$0x1]
    %v170 = vlaneseq
    %v171 = vshrl.u32 %v170, 7
    %v172 = vsub.s32 0, %v171
    %v173 = vrot.slane %v168, %v172
    %v207 = vunpack.c.l.b16 %v72
    %v208 = vunpack.c.h.b16 %v72
    %v209 = vunpack.c.l.b16 %v73
    %v210 = vunpack.c.h.b16 %v73
    %v211 = vunpack.c.l.b16 %v74
    %v212 = vunpack.c.h.b16 %v74
    %v213 = vunpack.c.l.b16 %v75
    %v214 = vunpack.c.h.b16 %v75
    %v215 = vunpack.c.l.b16 %v76
    %v216 = vunpack.c.h.b16 %v76
    %v217 = vunpack.c.l.b16 %v77
    %v218 = vunpack.c.h.b16 %v77
    %v219 = vunpack.c.l.b16 %v78
    %v220 = vunpack.c.h.b16 %v78
    %v221 = vunpack.c.l.b16 %v79
    %v222 = vunpack.c.h.b16 %v79
    %v223 = vunpack.c.l.b16 %v80
    %v224 = vunpack.c.h.b16 %v80
    %v225 = vunpack.c.l.b16 %v81
    %v226 = vunpack.c.h.b16 %v81
    %v227 = vunpack.c.l.b16 %v82
    %v228 = vunpack.c.h.b16 %v82
    %v229 = vunpack.c.l.b16 %v83
    %v230 = vunpack.c.h.b16 %v83
    %v231 = vunpack.c.l.b16 %v84
    %v232 = vunpack.c.h.b16 %v84
    %v233 = vunpack.c.l.b16 %v85
    %v234 = vunpack.c.h.b16 %v85
    %v235 = vunpack.c.l.b16 %v86
    %v236 = vunpack.c.h.b16 %v86
    %v237 = vunpack.c.l.b16 %v87
    %v238 = vunpack.c.h.b16 %v87
    %v239 = vunpack.c.l.b16 %v88
    %v240 = vunpack.c.h.b16 %v88
    %v241 = vunpack.c.l.b16 %v89
    %v242 = vunpack.c.h.b16 %v89
    %v243 = vunpack.c.l.b16 %v90
    %v244 = vunpack.c.h.b16 %v90
    %v245 = vunpack.c.l.b16 %v91
    %v246 = vunpack.c.h.b16 %v91
    %v247 = vunpack.c.l.b16 %v92
    %v248 = vunpack.c.h.b16 %v92
    %v249 = vunpack.c.l.b16 %v93
    %v250 = vunpack.c.h.b16 %v93
    %v251 = vunpack.c.l.b16 %v94
    %v252 = vunpack.c.h.b16 %v94
    %v253 = vunpack.c.l.b16 %v95
    %v254 = vunpack.c.h.b16 %v95
    %v255 = vunpack.c.l.b16 %v96
    %v256 = vunpack.c.h.b16 %v96
    %v257 = vunpack.c.l.b16 %v97
    %v258 = vunpack.c.h.b16 %v97
    %v259 = vunpack.c.l.b16 %v98
    %v260 = vunpack.c.h.b16 %v98
    %v261 = vunpack.c.l.b16 %v99
    %v262 = vunpack.c.h.b16 %v99
    %v263 = vunpack.c.l.b16 %v100
    %v264 = vunpack.c.h.b16 %v100
    %v265 = vunpack.c.l.b16 %v101
    %v266 = vunpack.c.h.b16 %v101
    %v267 = vunpack.c.l.b16 %v102
    %v268 = vunpack.c.h.b16 %v102
    %v269 = vunpack.c.l.b16 %v103
    %v270 = vunpack.c.h.b16 %v103
    %v271 = vpack.c.b16 %v211, %v207
    %v272 = vpack.c.b16 %v212, %v208
    %v273 = vpack.c.b16 %v213, %v209
    %v274 = vpack.c.b16 %v214, %v210
    %v275 = vpack.c.b16 %v219, %v215
    %v276 = vpack.c.b16 %v220, %v216
    %v277 = vpack.c.b16 %v221, %v217
    %v278 = vpack.c.b16 %v222, %v218
    %v279 = vpack.c.b16 %v227, %v223
    %v280 = vpack.c.b16 %v228, %v224
    %v281 = vpack.c.b16 %v229, %v225
    %v282 = vpack.c.b16 %v230, %v226
    %v283 = vpack.c.b16 %v235, %v231
    %v284 = vpack.c.b16 %v236, %v232
    %v285 = vpack.c.b16 %v237, %v233
    %v286 = vpack.c.b16 %v238, %v234
    %v287 = vpack.c.b16 %v243, %v239
    %v288 = vpack.c.b16 %v244, %v240
    %v289 = vpack.c.b16 %v245, %v241
    %v290 = vpack.c.b16 %v246, %v242
    %v291 = vpack.c.b16 %v251, %v247
    %v292 = vpack.c.b16 %v252, %v248
    %v293 = vpack.c.b16 %v253, %v249
    %v294 = vpack.c.b16 %v254, %v250
    %v295 = vpack.c.b16 %v259, %v255
    %v296 = vpack.c.b16 %v260, %v256
    %v297 = vpack.c.b16 %v261, %v257
    %v298 = vpack.c.b16 %v262, %v258
    %v299 = vpack.c.b16 %v267, %v263
    %v300 = vpack.c.b16 %v268, %v264
    %v301 = vpack.c.b16 %v269, %v265
    %v302 = vpack.c.b16 %v270, %v266
    %v399 = vunpack.c.l.b16 %v104
    %v400 = vunpack.c.l.b16 %v105
    %v401 = vunpack.c.l.b16 %v106
    %v402 = vunpack.c.l.b16 %v107
    %v403 = vunpack.c.l.b16 %v108
    %v404 = vunpack.c.l.b16 %v109
    %v405 = vunpack.c.l.b16 %v110
    %v406 = vunpack.c.l.b16 %v111
    %v407 = vunpack.c.l.b16 %v112
    %v408 = vunpack.c.l.b16 %v113
    %v409 = vunpack.c.l.b16 %v114
    %v410 = vunpack.c.l.b16 %v115
    %v411 = vunpack.c.l.b16 %v116
    %v412 = vunpack.c.l.b16 %v117
    %v413 = vunpack.c.l.b16 %v118
    %v414 = vunpack.c.l.b16 %v119
    %v415 = vunpack.c.l.b16 %v120
    %v416 = vunpack.c.l.b16 %v121
    %v417 = vunpack.c.l.b16 %v122
    %v418 = vunpack.c.l.b16 %v123
    %v419 = vunpack.c.l.b16 %v124
    %v420 = vunpack.c.l.b16 %v125
    %v421 = vunpack.c.l.b16 %v126
    %v422 = vunpack.c.l.b16 %v127
    %v423 = vunpack.c.l.b16 %v128
    %v424 = vunpack.c.l.b16 %v129
    %v425 = vunpack.c.l.b16 %v130
    %v426 = vunpack.c.l.b16 %v131
    %v427 = vunpack.c.l.b16 %v132
    %v428 = vunpack.c.l.b16 %v133
    %v429 = vunpack.c.l.b16 %v134
    %v430 = vunpack.c.l.b16 %v135
    %v431 = vunpack.c.l.b16 %v136
    %v432 = vunpack.c.l.b16 %v137
    %v433 = vunpack.c.l.b16 %v138
    %v434 = vunpack.c.l.b16 %v139
    %v435 = vunpack.c.l.b16 %v140
    %v436 = vunpack.c.l.b16 %v141
    %v437 = vunpack.c.l.b16 %v142
    %v438 = vunpack.c.l.b16 %v143
    %v439 = vunpack.c.l.b16 %v144
    %v440 = vunpack.c.l.b16 %v145
    %v441 = vunpack.c.l.b16 %v146
    %v442 = vunpack.c.l.b16 %v147
    %v443 = vunpack.c.l.b16 %v148
    %v444 = vunpack.c.l.b16 %v149
    %v445 = vunpack.c.l.b16 %v150
    %v446 = vunpack.c.l.b16 %v151
    %v447 = vunpack.c.l.b16 %v152
    %v448 = vunpack.c.l.b16 %v153
    %v449 = vunpack.c.l.b16 %v154
    %v450 = vunpack.c.l.b16 %v155
    %v451 = vunpack.c.l.b16 %v156
    %v452 = vunpack.c.l.b16 %v157
    %v453 = vunpack.c.l.b16 %v158
    %v454 = vunpack.c.l.b16 %v159
    %v455 = vunpack.c.l.b16 %v160
    %v456 = vunpack.c.l.b16 %v161
    %v457 = vunpack.c.l.b16 %v162
    %v458 = vunpack.c.l.b16 %v163
    %v459 = vunpack.c.l.b16 %v164
    %v460 = vunpack.c.l.b16 %v165
    %v461 = vunpack.c.l.b16 %v166
    %v462 = vunpack.c.l.b16 %v167
    %v463 = vpack.c.b16 %v400, %v399
    %v464 = vpack.c.b16 %v402, %v401
    %v465 = vpack.c.b16 %v404, %v403
    %v466 = vpack.c.b16 %v406, %v405
    %v467 = vpack.c.b16 %v408, %v407
    %v468 = vpack.c.b16 %v410, %v409
    %v469 = vpack.c.b16 %v412, %v411
    %v470 = vpack.c.b16 %v414, %v413
    %v471 = vpack.c.b16 %v416, %v415
    %v472 = vpack.c.b16 %v418, %v417
    %v473 = vpack.c.b16 %v420, %v419
    %v474 = vpack.c.b16 %v422, %v421
    %v475 = vpack.c.b16 %v424, %v423
    %v476 = vpack.c.b16 %v426, %v425
    %v477 = vpack.c.b16 %v428, %v427
    %v478 = vpack.c.b16 %v430, %v429
    %v479 = vpack.c.b16 %v432, %v431
    %v480 = vpack.c.b16 %v434, %v433
    %v481 = vpack.c.b16 %v436, %v435
    %v482 = vpack.c.b16 %v438, %v437
    %v483 = vpack.c.b16 %v440, %v439
    %v484 = vpack.c.b16 %v442, %v441
    %v485 = vpack.c.b16 %v444, %v443
    %v486 = vpack.c.b16 %v446, %v445
    %v487 = vpack.c.b16 %v448, %v447
    %v488 = vpack.c.b16 %v450, %v449
    %v489 = vpack.c.b16 %v452, %v451
    %v490 = vpack.c.b16 %v454, %v453
    %v491 = vpack.c.b16 %v456, %v455
    %v492 = vpack.c.b16 %v458, %v457
    %v493 = vpack.c.b16 %v460, %v459
    %v494 = vpack.c.b16 %v462, %v461
    %527 = vmatprep.subr.bf16.mxu0 0
    %528 = vmatpush1.bf16.msra.mxu0 %v463
    %529 = vmatprep.subr.bf16.mxu0 0
    %530 = vmatpush1.bf16.msra.mxu0 %v464
    %531 = vmatprep.subr.bf16.mxu0 0
    %532 = vmatpush1.bf16.msra.mxu0 %v465
    %533 = vmatprep.subr.bf16.mxu0 0
    %534 = vmatpush1.bf16.msra.mxu0 %v466
    %535 = vmatprep.subr.bf16.mxu0 0
    %536 = vmatpush1.bf16.msra.mxu0 %v467
    %537 = vmatprep.subr.bf16.mxu0 0
    %538 = vmatpush1.bf16.msra.mxu0 %v468
    %539 = vmatprep.subr.bf16.mxu0 0
    %540 = vmatpush1.bf16.msra.mxu0 %v469
    %541 = vmatprep.subr.bf16.mxu0 0
    %542 = vmatpush1.bf16.msra.mxu0 %v470
    %543 = vmatprep.subr.bf16.mxu0 0
    %544 = vmatpush1.bf16.msra.mxu0 %v471
    %545 = vmatprep.subr.bf16.mxu0 0
    %546 = vmatpush1.bf16.msra.mxu0 %v472
    %547 = vmatprep.subr.bf16.mxu0 0
    %548 = vmatpush1.bf16.msra.mxu0 %v473
    %549 = vmatprep.subr.bf16.mxu0 0
    %550 = vmatpush1.bf16.msra.mxu0 %v474
    %551 = vmatprep.subr.bf16.mxu0 0
    %552 = vmatpush1.bf16.msra.mxu0 %v475
    %553 = vmatprep.subr.bf16.mxu0 0
    %554 = vmatpush1.bf16.msra.mxu0 %v476
    %555 = vmatprep.subr.bf16.mxu0 0
    %556 = vmatpush1.bf16.msra.mxu0 %v477
    %557 = vmatprep.subr.bf16.mxu0 0
    %558 = vmatpush1.bf16.msra.mxu0 %v478
    %559 = vmatprep.mubr.bf16.mxu0 %v272
    %560 = vmatmul.mubr.bf16.gmra.mrb[0].mxu0 %v271
    %v561 = vpop.f32.mrb[0].mxu0
    %v562 = vadd.f32 %v173, %v561
    %v563 = vpop.f32.mrb[0].mxu0
    %v564 = vpop.f32.mrb[0].mxu0
    %v565 = vadd.f32 %v173, %v564
    %v566 = vpop.f32.mrb[0].mxu0
    %567 = vmatprep.mubr.bf16.mxu0 %v276
    %568 = vmatmul.mubr.bf16.gmra.mrb[0].mxu0 %v275
    %v569 = vpop.f32.mrb[0].mxu0
    %v570 = vadd.f32 %v173, %v569
    %v571 = vpop.f32.mrb[0].mxu0
    %v572 = vpop.f32.mrb[0].mxu0
    %v573 = vadd.f32 %v173, %v572
    %v574 = vpop.f32.mrb[0].mxu0
    %575 = vmatprep.mubr.bf16.mxu0 %v280
    %576 = vmatmul.mubr.bf16.gmra.mrb[0].mxu0 %v279
    %v577 = vpop.f32.mrb[0].mxu0
    %v578 = vadd.f32 %v173, %v577
    %v579 = vpop.f32.mrb[0].mxu0
    %v580 = vpop.f32.mrb[0].mxu0
    %v581 = vadd.f32 %v173, %v580
    %v582 = vpop.f32.mrb[0].mxu0
    %583 = vmatprep.mubr.bf16.mxu0 %v284
    %584 = vmatmul.mubr.bf16.gmra.mrb[0].mxu0 %v283
    %v585 = vpop.f32.mrb[0].mxu0
    %v586 = vadd.f32 %v173, %v585
    %v587 = vpop.f32.mrb[0].mxu0
    %v588 = vpop.f32.mrb[0].mxu0
    %v589 = vadd.f32 %v173, %v588
    %v590 = vpop.f32.mrb[0].mxu0
    %591 = vmatprep.mubr.bf16.mxu0 %v288
    %592 = vmatmul.mubr.bf16.gmra.mrb[0].mxu0 %v287
    %v593 = vpop.f32.mrb[0].mxu0
    %v594 = vadd.f32 %v173, %v593
    %v595 = vpop.f32.mrb[0].mxu0
    %v596 = vpop.f32.mrb[0].mxu0
    %v597 = vadd.f32 %v173, %v596
    %v598 = vpop.f32.mrb[0].mxu0
    %599 = vmatprep.mubr.bf16.mxu0 %v292
    %600 = vmatmul.mubr.bf16.gmra.mrb[0].mxu0 %v291
    %v601 = vpop.f32.mrb[0].mxu0
    %v602 = vadd.f32 %v173, %v601
    %v603 = vpop.f32.mrb[0].mxu0
    %v604 = vpop.f32.mrb[0].mxu0
    %v605 = vadd.f32 %v173, %v604
    %v606 = vpop.f32.mrb[0].mxu0
    %607 = vmatprep.mubr.bf16.mxu0 %v296
    %608 = vmatmul.mubr.bf16.gmra.mrb[0].mxu0 %v295
    %v609 = vpop.f32.mrb[0].mxu0
    %v610 = vadd.f32 %v173, %v609
    %v611 = vpop.f32.mrb[0].mxu0
    %v612 = vpop.f32.mrb[0].mxu0
    %v613 = vadd.f32 %v173, %v612
    %v614 = vpop.f32.mrb[0].mxu0
    %615 = vmatprep.mubr.bf16.mxu0 %v300
    %616 = vmatmul.mubr.bf16.gmra.mrb[0].mxu0 %v299
    %v617 = vpop.f32.mrb[0].mxu0
    %v618 = vadd.f32 %v173, %v617
    %v619 = vpop.f32.mrb[0].mxu0
    %v620 = vpop.f32.mrb[0].mxu0
    %v621 = vadd.f32 %v173, %v620
    %v622 = vpop.f32.mrb[0].mxu0
    %623 = vdwg.mxu0
    %624 = vmatprep.subr.bf16.mxu0 0
    %625 = vmatpush1.bf16.msra.mxu0 %v479
    %626 = vmatprep.subr.bf16.mxu0 0
    %627 = vmatpush1.bf16.msra.mxu0 %v480
    %628 = vmatprep.subr.bf16.mxu0 0
    %629 = vmatpush1.bf16.msra.mxu0 %v481
    %630 = vmatprep.subr.bf16.mxu0 0
    %631 = vmatpush1.bf16.msra.mxu0 %v482
    %632 = vmatprep.subr.bf16.mxu0 0
    %633 = vmatpush1.bf16.msra.mxu0 %v483
    %634 = vmatprep.subr.bf16.mxu0 0
    %635 = vmatpush1.bf16.msra.mxu0 %v484
    %636 = vmatprep.subr.bf16.mxu0 0
    %637 = vmatpush1.bf16.msra.mxu0 %v485
    %638 = vmatprep.subr.bf16.mxu0 0
    %639 = vmatpush1.bf16.msra.mxu0 %v486
    %640 = vmatprep.subr.bf16.mxu0 0
    %641 = vmatpush1.bf16.msra.mxu0 %v487
    %642 = vmatprep.subr.bf16.mxu0 0
    %643 = vmatpush1.bf16.msra.mxu0 %v488
    %644 = vmatprep.subr.bf16.mxu0 0
    %645 = vmatpush1.bf16.msra.mxu0 %v489
    %646 = vmatprep.subr.bf16.mxu0 0
    %647 = vmatpush1.bf16.msra.mxu0 %v490
    %648 = vmatprep.subr.bf16.mxu0 0
    %649 = vmatpush1.bf16.msra.mxu0 %v491
    %650 = vmatprep.subr.bf16.mxu0 0
    %651 = vmatpush1.bf16.msra.mxu0 %v492
    %652 = vmatprep.subr.bf16.mxu0 0
    %653 = vmatpush1.bf16.msra.mxu0 %v493
    %654 = vmatprep.subr.bf16.mxu0 0
    %655 = vmatpush1.bf16.msra.mxu0 %v494
    %656 = vmatprep.mubr.bf16.mxu0 %v274
    %657 = vmatmul.mubr.bf16.gmra.mrb[0].mxu0 %v273
    %v658 = vpop.f32.mrb[0].mxu0
    %v659 = vadd.f32 %v562, %v658
    %v660 = vpop.f32.mrb[0].mxu0
    %v661 = vpop.f32.mrb[0].mxu0
    %v662 = vadd.f32 %v565, %v661
    %v663 = vpop.f32.mrb[0].mxu0
    %664 = vmatprep.mubr.bf16.mxu0 %v278
    %665 = vmatmul.mubr.bf16.gmra.mrb[0].mxu0 %v277
    %v666 = vpop.f32.mrb[0].mxu0
    %v667 = vadd.f32 %v570, %v666
    %v668 = vpop.f32.mrb[0].mxu0
    %v669 = vpop.f32.mrb[0].mxu0
    %v670 = vadd.f32 %v573, %v669
    %v671 = vpop.f32.mrb[0].mxu0
    %672 = vmatprep.mubr.bf16.mxu0 %v282
    %673 = vmatmul.mubr.bf16.gmra.mrb[0].mxu0 %v281
    %v674 = vpop.f32.mrb[0].mxu0
    %v675 = vadd.f32 %v578, %v674
    %v676 = vpop.f32.mrb[0].mxu0
    %v677 = vpop.f32.mrb[0].mxu0
    %v678 = vadd.f32 %v581, %v677
    %v679 = vpop.f32.mrb[0].mxu0
    %680 = vmatprep.mubr.bf16.mxu0 %v286
    %681 = vmatmul.mubr.bf16.gmra.mrb[0].mxu0 %v285
    %v682 = vpop.f32.mrb[0].mxu0
    %v683 = vadd.f32 %v586, %v682
    %v684 = vpop.f32.mrb[0].mxu0
    %v685 = vpop.f32.mrb[0].mxu0
    %v686 = vadd.f32 %v589, %v685
    %v687 = vpop.f32.mrb[0].mxu0
    %688 = vmatprep.mubr.bf16.mxu0 %v290
    %689 = vmatmul.mubr.bf16.gmra.mrb[0].mxu0 %v289
    %v690 = vpop.f32.mrb[0].mxu0
    %v691 = vadd.f32 %v594, %v690
    %v692 = vpop.f32.mrb[0].mxu0
    %v693 = vpop.f32.mrb[0].mxu0
    %v694 = vadd.f32 %v597, %v693
    %v695 = vpop.f32.mrb[0].mxu0
    %696 = vmatprep.mubr.bf16.mxu0 %v294
    %697 = vmatmul.mubr.bf16.gmra.mrb[0].mxu0 %v293
    %v698 = vpop.f32.mrb[0].mxu0
    %v699 = vadd.f32 %v602, %v698
    %v700 = vpop.f32.mrb[0].mxu0
    %v701 = vpop.f32.mrb[0].mxu0
    %v702 = vadd.f32 %v605, %v701
    %v703 = vpop.f32.mrb[0].mxu0
    %704 = vmatprep.mubr.bf16.mxu0 %v298
    %705 = vmatmul.mubr.bf16.gmra.mrb[0].mxu0 %v297
    %v706 = vpop.f32.mrb[0].mxu0
    %v707 = vadd.f32 %v610, %v706
    %v708 = vpop.f32.mrb[0].mxu0
    %v709 = vpop.f32.mrb[0].mxu0
    %v710 = vadd.f32 %v613, %v709
    %v711 = vpop.f32.mrb[0].mxu0
    %712 = vmatprep.mubr.bf16.mxu0 %v302
    %713 = vmatmul.mubr.bf16.gmra.mrb[0].mxu0 %v301
    %v714 = vpop.f32.mrb[0].mxu0
    %v715 = vadd.f32 %v618, %v714
    %v716 = vpop.f32.mrb[0].mxu0
    %v717 = vpop.f32.mrb[0].mxu0
    %v718 = vadd.f32 %v621, %v717
    %v719 = vpop.f32.mrb[0].mxu0
    %720 = vdwg.mxu0
    %v721 = vld [vmem:[#allocation8] sm:$0xf]
    %v722 = vld [vmem:[#allocation8 + $0x4] sm:$0xf]
    %v723 = vld [vmem:[#allocation8 + $0x8] sm:$0xf]
    %v724 = vld [vmem:[#allocation8 + $0xc] sm:$0xf]
    %v725 = vld [vmem:[#allocation8 + $0x10] sm:$0xf]
    %v726 = vld [vmem:[#allocation8 + $0x14] sm:$0xf]
    %v727 = vld [vmem:[#allocation8 + $0x18] sm:$0xf]
    %v728 = vld [vmem:[#allocation8 + $0x1c] sm:$0xf]
    %v729 = vld [vmem:[#allocation8 + $0x20] sm:$0xf]
    %v730 = vld [vmem:[#allocation8 + $0x24] sm:$0xf]
    %v731 = vld [vmem:[#allocation8 + $0x28] sm:$0xf]
    %v732 = vld [vmem:[#allocation8 + $0x2c] sm:$0xf]
    %v733 = vld [vmem:[#allocation8 + $0x30] sm:$0xf]
    %v734 = vld [vmem:[#allocation8 + $0x34] sm:$0xf]
    %v735 = vld [vmem:[#allocation8 + $0x38] sm:$0xf]
    %v736 = vld [vmem:[#allocation8 + $0x3c] sm:$0xf]
    %v737 = vunpack.c.l.bf16 %v721
    %v738 = vunpack.c.l.bf16 %v722
    %v739 = vunpack.c.l.bf16 %v723
    %v740 = vunpack.c.l.bf16 %v724
    %v741 = vunpack.c.l.bf16 %v725
    %v742 = vunpack.c.l.bf16 %v726
    %v743 = vunpack.c.l.bf16 %v727
    %v744 = vunpack.c.l.bf16 %v728
    %v745 = vunpack.c.l.bf16 %v729
    %v746 = vunpack.c.l.bf16 %v730
    %v747 = vunpack.c.l.bf16 %v731
    %v748 = vunpack.c.l.bf16 %v732
    %v749 = vunpack.c.l.bf16 %v733
    %v750 = vunpack.c.l.bf16 %v734
    %v751 = vunpack.c.l.bf16 %v735
    %v752 = vunpack.c.l.bf16 %v736
    %v753 = vadd.f32 %v659, %v737
    %v754 = vadd.f32 %v662, %v738
    %v755 = vadd.f32 %v667, %v739
    %v756 = vadd.f32 %v670, %v740
    %v757 = vadd.f32 %v675, %v741
    %v758 = vadd.f32 %v678, %v742
    %v759 = vadd.f32 %v683, %v743
    %v760 = vadd.f32 %v686, %v744
    %v761 = vadd.f32 %v691, %v745
    %v762 = vadd.f32 %v694, %v746
    %v763 = vadd.f32 %v699, %v747
    %v764 = vadd.f32 %v702, %v748
    %v765 = vadd.f32 %v707, %v749
    %v766 = vadd.f32 %v710, %v750
    %v767 = vadd.f32 %v715, %v751
    %v768 = vadd.f32 %v718, %v752
    %v769 = vpack.c.bf16 %v754, %v753
    %v770 = vpack.c.bf16 %v756, %v755
    %v771 = vpack.c.bf16 %v758, %v757
    %v772 = vpack.c.bf16 %v760, %v759
    %v773 = vpack.c.bf16 %v762, %v761
    %v774 = vpack.c.bf16 %v764, %v763
    %v775 = vpack.c.bf16 %v766, %v765
    %v776 = vpack.c.bf16 %v768, %v767
    %v785 = vunpack.c.l.b16 %v769
    %v786 = vunpack.c.h.b16 %v769
    %v787 = vunpack.c.l.b16 %v770
    %v788 = vunpack.c.h.b16 %v770
    %v789 = vunpack.c.l.b16 %v771
    %v790 = vunpack.c.h.b16 %v771
    %v791 = vunpack.c.l.b16 %v772
    %v792 = vunpack.c.h.b16 %v772
    %v793 = vunpack.c.l.b16 %v773
    %v794 = vunpack.c.h.b16 %v773
    %v795 = vunpack.c.l.b16 %v774
    %v796 = vunpack.c.h.b16 %v774
    %v797 = vunpack.c.l.b16 %v775
    %v798 = vunpack.c.h.b16 %v775
    %v799 = vunpack.c.l.b16 %v776
    %v800 = vunpack.c.h.b16 %v776
    %v801 = vpack.c.b16 %v785, %v785
    %v802 = vpack.c.b16 %v786, %v786
    %v803 = vpack.c.b16 %v787, %v787
    %v804 = vpack.c.b16 %v788, %v788
    %v805 = vpack.c.b16 %v789, %v789
    %v806 = vpack.c.b16 %v790, %v790
    %v807 = vpack.c.b16 %v791, %v791
    %v808 = vpack.c.b16 %v792, %v792
    %v809 = vpack.c.b16 %v793, %v793
    %v810 = vpack.c.b16 %v794, %v794
    %v811 = vpack.c.b16 %v795, %v795
    %v812 = vpack.c.b16 %v796, %v796
    %v813 = vpack.c.b16 %v797, %v797
    %v814 = vpack.c.b16 %v798, %v798
    %v815 = vpack.c.b16 %v799, %v799
    %v816 = vpack.c.b16 %v800, %v800
    %833 = vst [vmem:[#allocation10] sm:$0xf] %v801
    %834 = vst [vmem:[#allocation10 + $0x4] sm:$0xf] %v802
    %835 = vst [vmem:[#allocation10 + $0x8] sm:$0xf] %v803
    %836 = vst [vmem:[#allocation10 + $0xc] sm:$0xf] %v804
    %837 = vst [vmem:[#allocation10 + $0x10] sm:$0xf] %v805
    %838 = vst [vmem:[#allocation10 + $0x14] sm:$0xf] %v806
    %839 = vst [vmem:[#allocation10 + $0x18] sm:$0xf] %v807
    %840 = vst [vmem:[#allocation10 + $0x1c] sm:$0xf] %v808
    %841 = vst [vmem:[#allocation10 + $0x20] sm:$0xf] %v809
    %842 = vst [vmem:[#allocation10 + $0x24] sm:$0xf] %v810
    %843 = vst [vmem:[#allocation10 + $0x28] sm:$0xf] %v811
    %844 = vst [vmem:[#allocation10 + $0x2c] sm:$0xf] %v812
    %845 = vst [vmem:[#allocation10 + $0x30] sm:$0xf] %v813
    %846 = vst [vmem:[#allocation10 + $0x34] sm:$0xf] %v814
    %847 = vst [vmem:[#allocation10 + $0x38] sm:$0xf] %v815
    %848 = vst [vmem:[#allocation10 + $0x3c] sm:$0xf] %v816
    // Predicated region
    $region34: #{masked_encoder_forward.17} parent=1 // pred_check
      _
    $region35: #{masked_encoder_forward.17} parent=1 // pred_check_branch
      %850 = sbr.rel (0) target = $region37
    $region36: #{masked_encoder_forward.17} parent=1 // pred_region
      %s852 = ssub.s32 1024, 1024
      %853 = vsyncadd [#allocation4], %s852
      %s854 = sshll.u32 [#allocation10], 4
      %s855 = int_to_ptr.vmem [resolvable:$true] %s854
      %860 = dma.vmem_to_hbm [thread:$0]  %s855, 1024, %s4, [#allocation4], 64, 64, 4
    $region37: #{masked_encoder_forward.17} parent=1 // pred_fallthru
      _
    // Predicated region
    $region38: #{masked_encoder_forward.17} parent=1 // pred_check
      _
    $region39: #{masked_encoder_forward.17} parent=1 // pred_check_branch
      %862 = sbr.rel (0) target = $region41
    $region40: #{masked_encoder_forward.17} parent=1 // pred_region
      %863 = dma.done [#allocation4], 1024
    $region41: #{masked_encoder_forward.17} parent=1 // pred_fallthru
      _
    %864 = vsyncpa [#allocation3], 1
    %865 = vsyncpa [#allocation6], 1
    %866 = vsyncpa [#allocation9], 1
    %867 = vsyncpa [#allocation4], 1

// kernel: masked_encoder_forward.23
$region0: #{masked_encoder_forward.23}
  #allocation0 [shape = 'u32[]', space=smem, size = 0x4, offset = 0x4, fixed_abs, tag = 'smem constant byte address 0x4 - core index']
  #allocation1 [shape = 'u32[144,128]{1,0:T(1,128)}', space=vmem, size = 0x12000, scoped, tag = 'internal scratch']
  %s0 = inlined_call_operand.hbm [shape: bf16[128,128], index: 0, kind: input, shape index: {}]
  %s1 = inlined_call_operand.hbm [shape: f32[1,128], index: 1, kind: input, shape index: {}]
  %s2 = inlined_call_operand.hbm [shape: f32[128,128], index: 2, kind: output, shape index: {}]
  %s3 = sld [smem:[#allocation0]]
  $region26: #{masked_encoder_forward.23} parent=0
    _
  %s5 = ssub.s32 1, %s3
  %s6 = scalar_select 0, %s5, %s3
  $region1: #{masked_encoder_forward.23} parent=0
    #allocation2 [shape = 'u8[32768]{0}', space=vmem, size = 0x8000, scoped, tag = 'input window, operand 0, single buffered']
    #allocation3 [shape = 's32[1]{0}', space=sflag, size = 0x4, scoped, tag = 'scoped memory for masked_encoder_forward.23']
    #allocation4 [shape = 's32[1]{0}', space=sflag, size = 0x4, scoped, tag = 'scoped memory for masked_encoder_forward.23']
    #allocation5 [shape = 'u8[512]{0}', space=vmem, size = 0x400, scoped, tag = 'input window, operand 1, single buffered']
    #allocation6 [shape = 's32[1]{0}', space=sflag, size = 0x4, scoped, tag = 'scoped memory for masked_encoder_forward.23']
    #allocation7 [shape = 'u8[65536]{0}', space=vmem, size = 0x10000, scoped, tag = 'output window, operand 0, single buffered']
    %7 = vsyncpa [#allocation3], 0
    %8 = vsyncpa [#allocation6], 0
    %9 = vsyncpa [#allocation4], 0
    // Predicated region
    $region2: #{masked_encoder_forward.23} parent=1 // pred_check
      _
    $region3: #{masked_encoder_forward.23} parent=1 // pred_check_branch
      %11 = sbr.rel (0) target = $region5
    $region4: #{masked_encoder_forward.23} parent=1 // pred_region
      %s13 = ssub.s32 1024, 1024
      %14 = vsyncadd [#allocation3], %s13
      %s15 = sshll.u32 [#allocation2], 4
      %s16 = int_to_ptr.vmem [resolvable:$true] %s15
      %21 = dma.hbm_to_vmem [thread:$0]  %s0, 1024, %s16, [#allocation3], 64, 64, 4
    $region5: #{masked_encoder_forward.23} parent=1 // pred_fallthru
      _
    // Predicated region
    $region6: #{masked_encoder_forward.23} parent=1 // pred_check
      _
    $region7: #{masked_encoder_forward.23} parent=1 // pred_check_branch
      %23 = sbr.rel (0) target = $region9
    $region8: #{masked_encoder_forward.23} parent=1 // pred_region
      %s25 = ssub.s32 16, 16
      %26 = vsyncadd [#allocation6], %s25
      %s28 = sshll.u32 [#allocation5], 4
      %s29 = int_to_ptr.vmem [resolvable:$true] %s28
      %31 = dma.hbm_to_vmem [thread:$0]  %s1, 16, %s29, [#allocation6]
    $region9: #{masked_encoder_forward.23} parent=1 // pred_fallthru
      _
    // Predicated region
    $region10: #{masked_encoder_forward.23} parent=1 // pred_check
      _
    $region11: #{masked_encoder_forward.23} parent=1 // pred_check_branch
      %33 = sbr.rel (0) target = $region13
    $region12: #{masked_encoder_forward.23} parent=1 // pred_region
      %34 = dma.done [#allocation3], 1024
    $region13: #{masked_encoder_forward.23} parent=1 // pred_fallthru
      _
    // Predicated region
    $region14: #{masked_encoder_forward.23} parent=1 // pred_check
      _
    $region15: #{masked_encoder_forward.23} parent=1 // pred_check_branch
      %36 = sbr.rel (0) target = $region17
    $region16: #{masked_encoder_forward.23} parent=1 // pred_region
      %37 = dma.done [#allocation6], 16
    $region17: #{masked_encoder_forward.23} parent=1 // pred_fallthru
      _
    %v38 = vld [vmem:[#allocation2] sm:$0xf]
    %v39 = vld [vmem:[#allocation2 + $0x4] sm:$0xf]
    %v40 = vld [vmem:[#allocation2 + $0x8] sm:$0xf]
    %v41 = vld [vmem:[#allocation2 + $0xc] sm:$0xf]
    %v42 = vld [vmem:[#allocation2 + $0x10] sm:$0xf]
    %v43 = vld [vmem:[#allocation2 + $0x14] sm:$0xf]
    %v44 = vld [vmem:[#allocation2 + $0x18] sm:$0xf]
    %v45 = vld [vmem:[#allocation2 + $0x1c] sm:$0xf]
    %v46 = vld [vmem:[#allocation2 + $0x20] sm:$0xf]
    %v47 = vld [vmem:[#allocation2 + $0x24] sm:$0xf]
    %v48 = vld [vmem:[#allocation2 + $0x28] sm:$0xf]
    %v49 = vld [vmem:[#allocation2 + $0x2c] sm:$0xf]
    %v50 = vld [vmem:[#allocation2 + $0x30] sm:$0xf]
    %v51 = vld [vmem:[#allocation2 + $0x34] sm:$0xf]
    %v52 = vld [vmem:[#allocation2 + $0x38] sm:$0xf]
    %v53 = vld [vmem:[#allocation2 + $0x3c] sm:$0xf]
    %v54 = vunpack.c.l.bf16 %v38
    %v55 = vunpack.c.l.bf16 %v39
    %v56 = vunpack.c.l.bf16 %v40
    %v57 = vunpack.c.l.bf16 %v41
    %v58 = vunpack.c.l.bf16 %v42
    %v59 = vunpack.c.l.bf16 %v43
    %v60 = vunpack.c.l.bf16 %v44
    %v61 = vunpack.c.l.bf16 %v45
    %v62 = vunpack.c.l.bf16 %v46
    %v63 = vunpack.c.l.bf16 %v47
    %v64 = vunpack.c.l.bf16 %v48
    %v65 = vunpack.c.l.bf16 %v49
    %v66 = vunpack.c.l.bf16 %v50
    %v67 = vunpack.c.l.bf16 %v51
    %v68 = vunpack.c.l.bf16 %v52
    %v69 = vunpack.c.l.bf16 %v53
    %v70 = vmul.f32 %v54, %v54
    %v71 = vmul.f32 %v55, %v55
    %v72 = vmul.f32 %v56, %v56
    %v73 = vmul.f32 %v57, %v57
    %v74 = vmul.f32 %v58, %v58
    %v75 = vmul.f32 %v59, %v59
    %v76 = vmul.f32 %v60, %v60
    %v77 = vmul.f32 %v61, %v61
    %v78 = vmul.f32 %v62, %v62
    %v79 = vmul.f32 %v63, %v63
    %v80 = vmul.f32 %v64, %v64
    %v81 = vmul.f32 %v65, %v65
    %v82 = vmul.f32 %v66, %v66
    %v83 = vmul.f32 %v67, %v67
    %v84 = vmul.f32 %v68, %v68
    %v85 = vmul.f32 %v69, %v69
    %86 = vadd.xlane.f32.xlu0 %v70
    %v87 = vpop.xlane.xlu0 %86
    %88 = vadd.xlane.f32.xlu0 %v71
    %v89 = vpop.xlane.xlu0 %88
    %90 = vadd.xlane.f32.xlu0 %v72
    %v91 = vpop.xlane.xlu0 %90
    %92 = vadd.xlane.f32.xlu0 %v73
    %v93 = vpop.xlane.xlu0 %92
    %94 = vadd.xlane.f32.xlu0 %v74
    %v95 = vpop.xlane.xlu0 %94
    %96 = vadd.xlane.f32.xlu0 %v75
    %v97 = vpop.xlane.xlu0 %96
    %98 = vadd.xlane.f32.xlu0 %v76
    %v99 = vpop.xlane.xlu0 %98
    %100 = vadd.xlane.f32.xlu0 %v77
    %v101 = vpop.xlane.xlu0 %100
    %102 = vadd.xlane.f32.xlu0 %v78
    %v103 = vpop.xlane.xlu0 %102
    %104 = vadd.xlane.f32.xlu0 %v79
    %v105 = vpop.xlane.xlu0 %104
    %106 = vadd.xlane.f32.xlu0 %v80
    %v107 = vpop.xlane.xlu0 %106
    %108 = vadd.xlane.f32.xlu0 %v81
    %v109 = vpop.xlane.xlu0 %108
    %110 = vadd.xlane.f32.xlu0 %v82
    %v111 = vpop.xlane.xlu0 %110
    %112 = vadd.xlane.f32.xlu0 %v83
    %v113 = vpop.xlane.xlu0 %112
    %114 = vadd.xlane.f32.xlu0 %v84
    %v115 = vpop.xlane.xlu0 %114
    %116 = vadd.xlane.f32.xlu0 %v85
    %v117 = vpop.xlane.xlu0 %116
    %v118 = vrcp.pop 128.0
    %v119 = vmul.f32 %v87, %v118
    %v120 = vmul.f32 %v89, %v118
    %v121 = vmul.f32 %v91, %v118
    %v122 = vmul.f32 %v93, %v118
    %v123 = vmul.f32 %v95, %v118
    %v124 = vmul.f32 %v97, %v118
    %v125 = vmul.f32 %v99, %v118
    %v126 = vmul.f32 %v101, %v118
    %v127 = vmul.f32 %v103, %v118
    %v128 = vmul.f32 %v105, %v118
    %v129 = vmul.f32 %v107, %v118
    %v130 = vmul.f32 %v109, %v118
    %v131 = vmul.f32 %v111, %v118
    %v132 = vmul.f32 %v113, %v118
    %v133 = vmul.f32 %v115, %v118
    %v134 = vmul.f32 %v117, %v118
    %v135 = vadd.f32 %v119, 1e-05
    %v136 = vadd.f32 %v120, 1e-05
    %v137 = vadd.f32 %v121, 1e-05
    %v138 = vadd.f32 %v122, 1e-05
    %v139 = vadd.f32 %v123, 1e-05
    %v140 = vadd.f32 %v124, 1e-05
    %v141 = vadd.f32 %v125, 1e-05
    %v142 = vadd.f32 %v126, 1e-05
    %v143 = vadd.f32 %v127, 1e-05
    %v144 = vadd.f32 %v128, 1e-05
    %v145 = vadd.f32 %v129, 1e-05
    %v146 = vadd.f32 %v130, 1e-05
    %v147 = vadd.f32 %v131, 1e-05
    %v148 = vadd.f32 %v132, 1e-05
    %v149 = vadd.f32 %v133, 1e-05
    %v150 = vadd.f32 %v134, 1e-05
    %v151 = vrsqrt.pop %v135
    %v152 = vrsqrt.pop %v136
    %v153 = vrsqrt.pop %v137
    %v154 = vrsqrt.pop %v138
    %v155 = vrsqrt.pop %v139
    %v156 = vrsqrt.pop %v140
    %v157 = vrsqrt.pop %v141
    %v158 = vrsqrt.pop %v142
    %v159 = vrsqrt.pop %v143
    %v160 = vrsqrt.pop %v144
    %v161 = vrsqrt.pop %v145
    %v162 = vrsqrt.pop %v146
    %v163 = vrsqrt.pop %v147
    %v164 = vrsqrt.pop %v148
    %v165 = vrsqrt.pop %v149
    %v166 = vrsqrt.pop %v150
    %v167 = vmul.f32 %v54, %v151
    %v168 = vmul.f32 %v55, %v152
    %v169 = vmul.f32 %v56, %v153
    %v170 = vmul.f32 %v57, %v154
    %v171 = vmul.f32 %v58, %v155
    %v172 = vmul.f32 %v59, %v156
    %v173 = vmul.f32 %v60, %v157
    %v174 = vmul.f32 %v61, %v158
    %v175 = vmul.f32 %v62, %v159
    %v176 = vmul.f32 %v63, %v160
    %v177 = vmul.f32 %v64, %v161
    %v178 = vmul.f32 %v65, %v162
    %v179 = vmul.f32 %v66, %v163
    %v180 = vmul.f32 %v67, %v164
    %v181 = vmul.f32 %v68, %v165
    %v182 = vmul.f32 %v69, %v166
    %v183 = vld [vmem:[#allocation5] sm:$0x1]
    %v185 = vlaneseq
    %v186 = vshrl.u32 %v185, 7
    %v187 = vsub.s32 0, %v186
    %v188 = vrot.slane %v183, %v187
    %v190 = vmul.f32 %v167, %v188
    %v191 = vmul.f32 %v168, %v188
    %v192 = vmul.f32 %v169, %v188
    %v193 = vmul.f32 %v170, %v188
    %v194 = vmul.f32 %v171, %v188
    %v195 = vmul.f32 %v172, %v188
    %v196 = vmul.f32 %v173, %v188
    %v197 = vmul.f32 %v174, %v188
    %v198 = vmul.f32 %v175, %v188
    %v199 = vmul.f32 %v176, %v188
    %v200 = vmul.f32 %v177, %v188
    %v201 = vmul.f32 %v178, %v188
    %v202 = vmul.f32 %v179, %v188
    %v203 = vmul.f32 %v180, %v188
    %v204 = vmul.f32 %v181, %v188
    %v205 = vmul.f32 %v182, %v188
    %206 = vst [vmem:[#allocation7] sm:$0xff] %v190
    %207 = vst [vmem:[#allocation7 + $0x8] sm:$0xff] %v191
    %208 = vst [vmem:[#allocation7 + $0x10] sm:$0xff] %v192
    %209 = vst [vmem:[#allocation7 + $0x18] sm:$0xff] %v193
    %210 = vst [vmem:[#allocation7 + $0x20] sm:$0xff] %v194
    %211 = vst [vmem:[#allocation7 + $0x28] sm:$0xff] %v195
    %212 = vst [vmem:[#allocation7 + $0x30] sm:$0xff] %v196
    %213 = vst [vmem:[#allocation7 + $0x38] sm:$0xff] %v197
    %214 = vst [vmem:[#allocation7 + $0x40] sm:$0xff] %v198
    %215 = vst [vmem:[#allocation7 + $0x48] sm:$0xff] %v199
    %216 = vst [vmem:[#allocation7 + $0x50] sm:$0xff] %v200
    %217 = vst [vmem:[#allocation7 + $0x58] sm:$0xff] %v201
    %218 = vst [vmem:[#allocation7 + $0x60] sm:$0xff] %v202
    %219 = vst [vmem:[#allocation7 + $0x68] sm:$0xff] %v203
    %220 = vst [vmem:[#allocation7 + $0x70] sm:$0xff] %v204
    %221 = vst [vmem:[#allocation7 + $0x78] sm:$0xff] %v205
    // Predicated region
    $region18: #{masked_encoder_forward.23} parent=1 // pred_check
      _
    $region19: #{masked_encoder_forward.23} parent=1 // pred_check_branch
      %223 = sbr.rel (0) target = $region21
    $region20: #{masked_encoder_forward.23} parent=1 // pred_region
      %s225 = ssub.s32 2048, 2048
      %226 = vsyncadd [#allocation4], %s225
      %s227 = sshll.u32 [#allocation7], 4
      %s228 = int_to_ptr.vmem [resolvable:$true] %s227
      %233 = dma.vmem_to_hbm [thread:$0]  %s228, 2048, %s2, [#allocation4], 128, 128, 8
    $region21: #{masked_encoder_forward.23} parent=1 // pred_fallthru
      _
    // Predicated region
    $region22: #{masked_encoder_forward.23} parent=1 // pred_check
      _
    $region23: #{masked_encoder_forward.23} parent=1 // pred_check_branch
      %235 = sbr.rel (0) target = $region25
    $region24: #{masked_encoder_forward.23} parent=1 // pred_region
      %236 = dma.done [#allocation4], 2048
    $region25: #{masked_encoder_forward.23} parent=1 // pred_fallthru
      _
    %237 = vsyncpa [#allocation3], 1
    %238 = vsyncpa [#allocation6], 1
    %239 = vsyncpa [#allocation4], 1

</llo_original>
